<compile_context>
chip_gen: v7x
topology: tpu7x:2x2x1
jax: 0.10.0
libtpu: 0.0.40
codegen_flags: <defaults>
</compile_context>

<pallas_src>
import jax
import jax.numpy as jnp
import numpy as np
from jax import lax
from jax.experimental import pallas as pl
from jax.experimental.pallas import tpu as pltpu

# Problem sizes (small reaction-diffusion style setup).
B, C, H, W = 2, 4, 16, 16
HID = 32

CP = 8                      # packed channel count: rows 0..3 aug, rows 4..7 phy
assert 2 * C == CP
GH, GW = H + 4, W + 4       # 2-halo padded spatial grid (20 x 20)
G = GH * GW                 # flat pixels per batch element (400)
LANES = 896                 # B * G = 800 rounded up to a multiple of 128

# 3x3 tap offsets in the flat (row-major, 2-halo padded) pixel coordinate.
OFFS = tuple((ky - 1) * GW + (kx - 1) for ky in range(3) for kx in range(3))
LAP_OFFS = (-GW, -1, 1, GW)   # laplacian neighbours, all members of OFFS


def _shift(v, off):
    """result[:, i] = v[:, (i + off) % LANES].

    Circular wrap only touches pixels that are masked out / never extracted
    (the 2-halo padding + 96-lane zero tail cover the max offset GW+1 = 21).
    Lane rotation runs on the XLU, leaving vld/vst/VALU slots free.
    """
    if off == 0:
        return v
    return pltpu.roll(v, (-off) % LANES, 1)


def forecaster_kernel(x_ref, mask_ref, w1_ref, w2_ref, scal_ref, o_ref):
    x = x_ref[...]            # (CP, LANES): rows 0..3 = x_aug, rows 4..7 = x_phy
    mask = mask_ref[...]      # (1,  LANES): 1.0 on interior HxW pixels
    scal = scal_ref[...]      # (56, 1) packed small parameters
    b1c = scal[0:HID, :]                        # (HID, 1) conv1 bias
    b2c = scal[HID:HID + CP, :]                 # (CP, 1)  rows 4..7 = conv2 bias
    ac = scal[HID + CP:HID + 2 * CP, :]         # (CP, 1)  rows 4..7 = a
    bma = scal[HID + 2 * CP:HID + 3 * CP, :]    # (CP, 1)  rows 4..7 = b - 4a

    # ---- conv1 (9 per-tap MXU matmuls over the rolled 7-vreg input) ---------
    # The physics laplacian reuses the very same tap rolls (offsets +-1, +-GW).
    h = None
    lap = None
    for t, off in enumerate(OFFS):
        xr = _shift(x, off)                                       # (CP, LANES)
        contrib = jnp.dot(w1_ref[t], xr,
                          preferred_element_type=jnp.float32)     # (HID, LANES)
        h = contrib if h is None else h + contrib
        if off in LAP_OFFS:
            lap = xr if lap is None else lap + xr

    # ReLU + re-impose the zero halo conv2 must see (no VMEM scratch needed).
    hm = jnp.maximum(h + b1c, 0.0) * mask                         # (HID, LANES)

    # ---- conv2 (9 per-tap matmuls; roll the SMALL partial product) ----------
    res = None
    for t, off in enumerate(OFFS):
        part = jnp.dot(w2_ref[t], hm,
                       preferred_element_type=jnp.float32)        # (CP, LANES)
        part = _shift(part, off)
        res = part if res is None else res + part
    res = res + b2c                           # rows 4..7 now hold res_aug

    # ---- model_phy: a * lap + b * x, nonzero only on the phy sublanes -------
    res = res + ac * lap + bma * x            # bma = b - 4a folds the -4x term

    o_ref[...] = res                          # full (8, 896) unmasked store


def prepare_params(params):
    """One-time parameter preparation (hoisted out of the per-call path)."""
    a, b, w1, b1, w2, b2 = params

    # conv1 per-tap weights (9, HID, CP): input cols 0..3 are the real aug
    # channels, cols 4..7 (where x_phy is packed) are zero.
    w1p = jnp.pad(w1, ((0, 0), (0, 0), (0, CP - C), (0, 0)))      # (3,3,CP,HID)
    w1_taps = jnp.transpose(w1p, (0, 1, 3, 2)).reshape(9, HID, CP)

    # conv2 per-tap weights (9, CP, HID): output rows 4..7 hold channels 0..3
    # (rows 0..3 zero) so the result lands directly on the physics sublanes.
    w2t = jnp.transpose(w2, (0, 1, 3, 2)).reshape(9, C, HID)
    w2_taps = jnp.pad(w2t, ((0, 0), (CP - C, 0), (0, 0)))          # (9,CP,HID)

    # Packed small-parameter slab: [b1 | pad,b2 | pad,a | pad,(b-4a)] -> (56,1)
    zc = jnp.zeros((CP - C,), jnp.float32)
    scal = jnp.concatenate(
        [b1,
         jnp.concatenate([zc, b2]),
         jnp.concatenate([zc, a]),
         jnp.concatenate([zc, b - 4.0 * a])]).reshape(-1, 1)

    # Interior mask over the flat pixel coordinate: 1.0 on the HxW image
    # pixels, 0.0 on the halo ring / lane tail (gives conv2 its zero padding).
    m = np.zeros((1, LANES), np.float32)
    for bb in range(B):
        for gy in range(2, 2 + H):
            base = bb * G + gy * GW + 2
            m[0, base:base + W] = 1.0

    return (jnp.asarray(m), w1_taps, w2_taps, scal)


def _pack_inputs(x_phy, x_aug):
    """NCHW pair -> (CP, LANES): rows 0..3 = x_aug channels, rows 4..7 = x_phy
    channels, 2-halo spatial zero padding, zero lane tail."""
    xt = jnp.concatenate([x_aug, x_phy], axis=1)                   # (B, CP, H, W)
    xt = jnp.transpose(xt, (1, 0, 2, 3))                           # (CP, B, H, W)
    xt = jnp.pad(xt, ((0, 0), (0, 0), (2, 2), (2, 2)))             # (CP, B, GH, GW)
    flat = xt.reshape(CP, B * G)
    return jnp.pad(flat, ((0, 0), (0, LANES - B * G)))             # (CP, LANES)


@jax.jit
def forecaster(x_phy, x_aug, prepared):
    """x_phy, x_aug: (B, C, H, W) NCHW float32 (PyTorch convention)."""
    mask, w1_taps, w2_taps, scal = prepared
    x = _pack_inputs(x_phy, x_aug)

    vmem = pltpu.MemorySpace.VMEM
    out_flat = pl.pallas_call(
        forecaster_kernel,
        out_shape=jax.ShapeDtypeStruct((CP, LANES), jnp.float32),
        in_specs=[pl.BlockSpec(memory_space=vmem) for _ in range(5)],
        out_specs=pl.BlockSpec(memory_space=vmem),
    )(x, mask, w1_taps, w2_taps, scal)

    out = out_flat[CP - C:CP, :B * G].reshape(C, B, GH, GW)[:, :, 2:2 + H, 2:2 + W]
    return jnp.transpose(out, (1, 0, 2, 3))                         # back to NCHW


def reference_forward(x_phy, x_aug, params):
    """Pure-JAX reference matching the PyTorch semantics."""
    a, b, w1, b1, w2, b2 = params
    xp = jnp.transpose(x_phy, (0, 2, 3, 1))
    xa = jnp.transpose(x_aug, (0, 2, 3, 1))

    xpp = jnp.pad(xp, ((0, 0), (1, 1), (1, 1), (0, 0)))
    lap = (xpp[:, 0:H, 1:W + 1] + xpp[:, 2:H + 2, 1:W + 1]
           + xpp[:, 1:H + 1, 0:W] + xpp[:, 1:H + 1, 2:W + 2] - 4.0 * xp)
    res_phy = a[None, None, None, :] * lap + b[None, None, None, :] * xp

    dn1 = lax.conv_dimension_numbers(xa.shape, w1.shape, ('NHWC', 'HWIO', 'NHWC'))
    h = lax.conv_general_dilated(xa, w1, (1, 1), 'SAME', dimension_numbers=dn1) + b1
    h = jnp.maximum(h, 0.0)
    dn2 = lax.conv_dimension_numbers(h.shape, w2.shape, ('NHWC', 'HWIO', 'NHWC'))
    res_aug = lax.conv_general_dilated(h, w2, (1, 1), 'SAME',
                                       dimension_numbers=dn2) + b2

    return jnp.transpose(res_phy + res_aug, (0, 3, 1, 2))


if __name__ == "__main__":
    key = jax.random.PRNGKey(0)
    ks = jax.random.split(key, 8)
    a = (jax.random.normal(ks[0], (C,)) * 0.1).astype(jnp.float32)
    b = (jax.random.normal(ks[1], (C,)) * 0.1).astype(jnp.float32)
    w1 = (jax.random.normal(ks[2], (3, 3, C, HID)) / (3 * 3 * C) ** 0.5).astype(jnp.float32)
    b1 = (jax.random.normal(ks[3], (HID,)) * 0.01).astype(jnp.float32)
    w2 = (jax.random.normal(ks[4], (3, 3, HID, C)) / (3 * 3 * HID) ** 0.5).astype(jnp.float32)
    b2 = (jax.random.normal(ks[5], (C,)) * 0.01).astype(jnp.float32)
    params = (a, b, w1, b1, w2, b2)
    prepared = prepare_params(params)

    x_phy = jax.random.normal(ks[6], (B, C, H, W), dtype=jnp.float32)
    x_aug = jax.random.normal(ks[7], (B, C, H, W), dtype=jnp.float32)

    out = jax.block_until_ready(forecaster(x_phy, x_aug, prepared))
    ref = jax.block_until_ready(reference_forward(x_phy, x_aug, params))

    assert out.shape == (B, C, H, W)
    assert jnp.allclose(out, ref, atol=1e-4, rtol=1e-4), "mismatch vs reference"
    print("KERNEL_OK")
</pallas_src>

<mosaic_0001>
module attributes {stable_mosaic.version = 11 : i64} {
  func.func @forecaster_kernel(%arg0: memref<8x896xf32, #tpu.memory_space<vmem>>, %arg1: memref<1x896xf32, #tpu.memory_space<vmem>>, %arg2: memref<9x32x8xf32, #tpu.memory_space<vmem>>, %arg3: memref<9x8x32xf32, #tpu.memory_space<vmem>>, %arg4: memref<56x1xf32, #tpu.memory_space<vmem>>, %arg5: memref<8x896xf32, #tpu.memory_space<vmem>>) attributes {dimension_semantics = [], scalar_prefetch = 0 : i64, scratch_operands = 0 : i64, tpu.core_type = #tpu.core_type<tc>} {
    %c0 = arith.constant 0 : index
    %c0_0 = arith.constant 0 : index
    %0 = vector.load %arg0[%c0, %c0_0] : memref<8x896xf32, #tpu.memory_space<vmem>>, vector<8x896xf32>
    %c0_1 = arith.constant 0 : index
    %c0_2 = arith.constant 0 : index
    %1 = vector.load %arg1[%c0_1, %c0_2] : memref<1x896xf32, #tpu.memory_space<vmem>>, vector<1x896xf32>
    %c0_3 = arith.constant 0 : index
    %c0_4 = arith.constant 0 : index
    %2 = vector.load %arg4[%c0_3, %c0_4] : memref<56x1xf32, #tpu.memory_space<vmem>>, vector<56x1xf32>
    %3 = vector.extract_strided_slice %2 {offsets = [0, 0], sizes = [32, 1], strides = [1, 1]} : vector<56x1xf32> to vector<32x1xf32>
    %4 = vector.extract_strided_slice %2 {offsets = [32, 0], sizes = [8, 1], strides = [1, 1]} : vector<56x1xf32> to vector<8x1xf32>
    %5 = vector.extract_strided_slice %2 {offsets = [40, 0], sizes = [8, 1], strides = [1, 1]} : vector<56x1xf32> to vector<8x1xf32>
    %6 = vector.extract_strided_slice %2 {offsets = [48, 0], sizes = [8, 1], strides = [1, 1]} : vector<56x1xf32> to vector<8x1xf32>
    %c21_i32 = arith.constant 21 : i32
    %7 = tpu.dynamic_rotate %0 by %c21_i32 dim 1 : vector<8x896xf32>, i32 -> vector<8x896xf32>
    %c0_5 = arith.constant 0 : index
    %c0_6 = arith.constant 0 : index
    %c0_7 = arith.constant 0 : index
    %8 = vector.load %arg2[%c0_5, %c0_6, %c0_7] : memref<9x32x8xf32, #tpu.memory_space<vmem>>, vector<1x32x8xf32>
    %9 = vector.shape_cast %8 : vector<1x32x8xf32> to vector<32x8xf32>
    %cst = arith.constant dense<0.000000e+00> : vector<32x896xf32>
    %10 = tpu.matmul %9, %7, %cst {dimension_numbers = #tpu.dot_dimension_numbers<[1], [0], [0], [1], [0, 0, 1, 1], [], []>} : vector<32x8xf32>, vector<8x896xf32>, vector<32x896xf32> -> vector<32x896xf32>
    %c20_i32 = arith.constant 20 : i32
    %11 = tpu.dynamic_rotate %0 by %c20_i32 dim 1 : vector<8x896xf32>, i32 -> vector<8x896xf32>
    %c1 = arith.constant 1 : index
    %c0_8 = arith.constant 0 : index
    %c0_9 = arith.constant 0 : index
    %12 = vector.load %arg2[%c1, %c0_8, %c0_9] : memref<9x32x8xf32, #tpu.memory_space<vmem>>, vector<1x32x8xf32>
    %13 = vector.shape_cast %12 : vector<1x32x8xf32> to vector<32x8xf32>
    %cst_10 = arith.constant dense<0.000000e+00> : vector<32x896xf32>
    %14 = tpu.matmul %13, %11, %cst_10 {dimension_numbers = #tpu.dot_dimension_numbers<[1], [0], [0], [1], [0, 0, 1, 1], [], []>} : vector<32x8xf32>, vector<8x896xf32>, vector<32x896xf32> -> vector<32x896xf32>
    %15 = arith.addf %10, %14 : vector<32x896xf32>
    %c19_i32 = arith.constant 19 : i32
    %16 = tpu.dynamic_rotate %0 by %c19_i32 dim 1 : vector<8x896xf32>, i32 -> vector<8x896xf32>
    %c2 = arith.constant 2 : index
    %c0_11 = arith.constant 0 : index
    %c0_12 = arith.constant 0 : index
    %17 = vector.load %arg2[%c2, %c0_11, %c0_12] : memref<9x32x8xf32, #tpu.memory_space<vmem>>, vector<1x32x8xf32>
    %18 = vector.shape_cast %17 : vector<1x32x8xf32> to vector<32x8xf32>
    %cst_13 = arith.constant dense<0.000000e+00> : vector<32x896xf32>
    %19 = tpu.matmul %18, %16, %cst_13 {dimension_numbers = #tpu.dot_dimension_numbers<[1], [0], [0], [1], [0, 0, 1, 1], [], []>} : vector<32x8xf32>, vector<8x896xf32>, vector<32x896xf32> -> vector<32x896xf32>
    %20 = arith.addf %15, %19 : vector<32x896xf32>
    %c1_i32 = arith.constant 1 : i32
    %21 = tpu.dynamic_rotate %0 by %c1_i32 dim 1 : vector<8x896xf32>, i32 -> vector<8x896xf32>
    %c3 = arith.constant 3 : index
    %c0_14 = arith.constant 0 : index
    %c0_15 = arith.constant 0 : index
    %22 = vector.load %arg2[%c3, %c0_14, %c0_15] : memref<9x32x8xf32, #tpu.memory_space<vmem>>, vector<1x32x8xf32>
    %23 = vector.shape_cast %22 : vector<1x32x8xf32> to vector<32x8xf32>
    %cst_16 = arith.constant dense<0.000000e+00> : vector<32x896xf32>
    %24 = tpu.matmul %23, %21, %cst_16 {dimension_numbers = #tpu.dot_dimension_numbers<[1], [0], [0], [1], [0, 0, 1, 1], [], []>} : vector<32x8xf32>, vector<8x896xf32>, vector<32x896xf32> -> vector<32x896xf32>
    %25 = arith.addf %20, %24 : vector<32x896xf32>
    %26 = arith.addf %11, %21 : vector<8x896xf32>
    %c4 = arith.constant 4 : index
    %c0_17 = arith.constant 0 : index
    %c0_18 = arith.constant 0 : index
    %27 = vector.load %arg2[%c4, %c0_17, %c0_18] : memref<9x32x8xf32, #tpu.memory_space<vmem>>, vector<1x32x8xf32>
    %28 = vector.shape_cast %27 : vector<1x32x8xf32> to vector<32x8xf32>
    %cst_19 = arith.constant dense<0.000000e+00> : vector<32x896xf32>
    %29 = tpu.matmul %28, %0, %cst_19 {dimension_numbers = #tpu.dot_dimension_numbers<[1], [0], [0], [1], [0, 0, 1, 1], [], []>} : vector<32x8xf32>, vector<8x896xf32>, vector<32x896xf32> -> vector<32x896xf32>
    %30 = arith.addf %25, %29 : vector<32x896xf32>
    %c895_i32 = arith.constant 895 : i32
    %31 = tpu.dynamic_rotate %0 by %c895_i32 dim 1 : vector<8x896xf32>, i32 -> vector<8x896xf32>
    %c5 = arith.constant 5 : index
    %c0_20 = arith.constant 0 : index
    %c0_21 = arith.constant 0 : index
    %32 = vector.load %arg2[%c5, %c0_20, %c0_21] : memref<9x32x8xf32, #tpu.memory_space<vmem>>, vector<1x32x8xf32>
    %33 = vector.shape_cast %32 : vector<1x32x8xf32> to vector<32x8xf32>
    %cst_22 = arith.constant dense<0.000000e+00> : vector<32x896xf32>
    %34 = tpu.matmul %33, %31, %cst_22 {dimension_numbers = #tpu.dot_dimension_numbers<[1], [0], [0], [1], [0, 0, 1, 1], [], []>} : vector<32x8xf32>, vector<8x896xf32>, vector<32x896xf32> -> vector<32x896xf32>
    %35 = arith.addf %30, %34 : vector<32x896xf32>
    %36 = arith.addf %26, %31 : vector<8x896xf32>
    %c877_i32 = arith.constant 877 : i32
    %37 = tpu.dynamic_rotate %0 by %c877_i32 dim 1 : vector<8x896xf32>, i32 -> vector<8x896xf32>
    %c6 = arith.constant 6 : index
    %c0_23 = arith.constant 0 : index
    %c0_24 = arith.constant 0 : index
    %38 = vector.load %arg2[%c6, %c0_23, %c0_24] : memref<9x32x8xf32, #tpu.memory_space<vmem>>, vector<1x32x8xf32>
    %39 = vector.shape_cast %38 : vector<1x32x8xf32> to vector<32x8xf32>
    %cst_25 = arith.constant dense<0.000000e+00> : vector<32x896xf32>
    %40 = tpu.matmul %39, %37, %cst_25 {dimension_numbers = #tpu.dot_dimension_numbers<[1], [0], [0], [1], [0, 0, 1, 1], [], []>} : vector<32x8xf32>, vector<8x896xf32>, vector<32x896xf32> -> vector<32x896xf32>
    %41 = arith.addf %35, %40 : vector<32x896xf32>
    %c876_i32 = arith.constant 876 : i32
    %42 = tpu.dynamic_rotate %0 by %c876_i32 dim 1 : vector<8x896xf32>, i32 -> vector<8x896xf32>
    %c7 = arith.constant 7 : index
    %c0_26 = arith.constant 0 : index
    %c0_27 = arith.constant 0 : index
    %43 = vector.load %arg2[%c7, %c0_26, %c0_27] : memref<9x32x8xf32, #tpu.memory_space<vmem>>, vector<1x32x8xf32>
    %44 = vector.shape_cast %43 : vector<1x32x8xf32> to vector<32x8xf32>
    %cst_28 = arith.constant dense<0.000000e+00> : vector<32x896xf32>
    %45 = tpu.matmul %44, %42, %cst_28 {dimension_numbers = #tpu.dot_dimension_numbers<[1], [0], [0], [1], [0, 0, 1, 1], [], []>} : vector<32x8xf32>, vector<8x896xf32>, vector<32x896xf32> -> vector<32x896xf32>
    %46 = arith.addf %41, %45 : vector<32x896xf32>
    %47 = arith.addf %36, %42 : vector<8x896xf32>
    %c875_i32 = arith.constant 875 : i32
    %48 = tpu.dynamic_rotate %0 by %c875_i32 dim 1 : vector<8x896xf32>, i32 -> vector<8x896xf32>
    %c8 = arith.constant 8 : index
    %c0_29 = arith.constant 0 : index
    %c0_30 = arith.constant 0 : index
    %49 = vector.load %arg2[%c8, %c0_29, %c0_30] : memref<9x32x8xf32, #tpu.memory_space<vmem>>, vector<1x32x8xf32>
    %50 = vector.shape_cast %49 : vector<1x32x8xf32> to vector<32x8xf32>
    %cst_31 = arith.constant dense<0.000000e+00> : vector<32x896xf32>
    %51 = tpu.matmul %50, %48, %cst_31 {dimension_numbers = #tpu.dot_dimension_numbers<[1], [0], [0], [1], [0, 0, 1, 1], [], []>} : vector<32x8xf32>, vector<8x896xf32>, vector<32x896xf32> -> vector<32x896xf32>
    %52 = arith.addf %46, %51 : vector<32x896xf32>
    %53 = vector.broadcast %3 : vector<32x1xf32> to vector<32x896xf32>
    %54 = arith.addf %52, %53 : vector<32x896xf32>
    %cst_32 = arith.constant 0.000000e+00 : f32
    %55 = vector.broadcast %cst_32 : f32 to vector<32x896xf32>
    %56 = arith.maximumf %54, %55 : vector<32x896xf32>
    %57 = vector.broadcast %1 : vector<1x896xf32> to vector<32x896xf32>
    %58 = arith.mulf %56, %57 : vector<32x896xf32>
    %c0_33 = arith.constant 0 : index
    %c0_34 = arith.constant 0 : index
    %c0_35 = arith.constant 0 : index
    %59 = vector.load %arg3[%c0_33, %c0_34, %c0_35] : memref<9x8x32xf32, #tpu.memory_space<vmem>>, vector<1x8x32xf32>
    %60 = vector.shape_cast %59 : vector<1x8x32xf32> to vector<8x32xf32>
    %cst_36 = arith.constant dense<0.000000e+00> : vector<8x896xf32>
    %61 = tpu.matmul %60, %58, %cst_36 {dimension_numbers = #tpu.dot_dimension_numbers<[1], [0], [0], [1], [0, 0, 1, 1], [], []>} : vector<8x32xf32>, vector<32x896xf32>, vector<8x896xf32> -> vector<8x896xf32>
    %c21_i32_37 = arith.constant 21 : i32
    %62 = tpu.dynamic_rotate %61 by %c21_i32_37 dim 1 : vector<8x896xf32>, i32 -> vector<8x896xf32>
    %c1_38 = arith.constant 1 : index
    %c0_39 = arith.constant 0 : index
    %c0_40 = arith.constant 0 : index
    %63 = vector.load %arg3[%c1_38, %c0_39, %c0_40] : memref<9x8x32xf32, #tpu.memory_space<vmem>>, vector<1x8x32xf32>
    %64 = vector.shape_cast %63 : vector<1x8x32xf32> to vector<8x32xf32>
    %cst_41 = arith.constant dense<0.000000e+00> : vector<8x896xf32>
    %65 = tpu.matmul %64, %58, %cst_41 {dimension_numbers = #tpu.dot_dimension_numbers<[1], [0], [0], [1], [0, 0, 1, 1], [], []>} : vector<8x32xf32>, vector<32x896xf32>, vector<8x896xf32> -> vector<8x896xf32>
    %c20_i32_42 = arith.constant 20 : i32
    %66 = tpu.dynamic_rotate %65 by %c20_i32_42 dim 1 : vector<8x896xf32>, i32 -> vector<8x896xf32>
    %67 = arith.addf %62, %66 : vector<8x896xf32>
    %c2_43 = arith.constant 2 : index
    %c0_44 = arith.constant 0 : index
    %c0_45 = arith.constant 0 : index
    %68 = vector.load %arg3[%c2_43, %c0_44, %c0_45] : memref<9x8x32xf32, #tpu.memory_space<vmem>>, vector<1x8x32xf32>
    %69 = vector.shape_cast %68 : vector<1x8x32xf32> to vector<8x32xf32>
    %cst_46 = arith.constant dense<0.000000e+00> : vector<8x896xf32>
    %70 = tpu.matmul %69, %58, %cst_46 {dimension_numbers = #tpu.dot_dimension_numbers<[1], [0], [0], [1], [0, 0, 1, 1], [], []>} : vector<8x32xf32>, vector<32x896xf32>, vector<8x896xf32> -> vector<8x896xf32>
    %c19_i32_47 = arith.constant 19 : i32
    %71 = tpu.dynamic_rotate %70 by %c19_i32_47 dim 1 : vector<8x896xf32>, i32 -> vector<8x896xf32>
    %72 = arith.addf %67, %71 : vector<8x896xf32>
    %c3_48 = arith.constant 3 : index
    %c0_49 = arith.constant 0 : index
    %c0_50 = arith.constant 0 : index
    %73 = vector.load %arg3[%c3_48, %c0_49, %c0_50] : memref<9x8x32xf32, #tpu.memory_space<vmem>>, vector<1x8x32xf32>
    %74 = vector.shape_cast %73 : vector<1x8x32xf32> to vector<8x32xf32>
    %cst_51 = arith.constant dense<0.000000e+00> : vector<8x896xf32>
    %75 = tpu.matmul %74, %58, %cst_51 {dimension_numbers = #tpu.dot_dimension_numbers<[1], [0], [0], [1], [0, 0, 1, 1], [], []>} : vector<8x32xf32>, vector<32x896xf32>, vector<8x896xf32> -> vector<8x896xf32>
    %c1_i32_52 = arith.constant 1 : i32
    %76 = tpu.dynamic_rotate %75 by %c1_i32_52 dim 1 : vector<8x896xf32>, i32 -> vector<8x896xf32>
    %77 = arith.addf %72, %76 : vector<8x896xf32>
    %c4_53 = arith.constant 4 : index
    %c0_54 = arith.constant 0 : index
    %c0_55 = arith.constant 0 : index
    %78 = vector.load %arg3[%c4_53, %c0_54, %c0_55] : memref<9x8x32xf32, #tpu.memory_space<vmem>>, vector<1x8x32xf32>
    %79 = vector.shape_cast %78 : vector<1x8x32xf32> to vector<8x32xf32>
    %cst_56 = arith.constant dense<0.000000e+00> : vector<8x896xf32>
    %80 = tpu.matmul %79, %58, %cst_56 {dimension_numbers = #tpu.dot_dimension_numbers<[1], [0], [0], [1], [0, 0, 1, 1], [], []>} : vector<8x32xf32>, vector<32x896xf32>, vector<8x896xf32> -> vector<8x896xf32>
    %81 = arith.addf %77, %80 : vector<8x896xf32>
    %c5_57 = arith.constant 5 : index
    %c0_58 = arith.constant 0 : index
    %c0_59 = arith.constant 0 : index
    %82 = vector.load %arg3[%c5_57, %c0_58, %c0_59] : memref<9x8x32xf32, #tpu.memory_space<vmem>>, vector<1x8x32xf32>
    %83 = vector.shape_cast %82 : vector<1x8x32xf32> to vector<8x32xf32>
    %cst_60 = arith.constant dense<0.000000e+00> : vector<8x896xf32>
    %84 = tpu.matmul %83, %58, %cst_60 {dimension_numbers = #tpu.dot_dimension_numbers<[1], [0], [0], [1], [0, 0, 1, 1], [], []>} : vector<8x32xf32>, vector<32x896xf32>, vector<8x896xf32> -> vector<8x896xf32>
    %c895_i32_61 = arith.constant 895 : i32
    %85 = tpu.dynamic_rotate %84 by %c895_i32_61 dim 1 : vector<8x896xf32>, i32 -> vector<8x896xf32>
    %86 = arith.addf %81, %85 : vector<8x896xf32>
    %c6_62 = arith.constant 6 : index
    %c0_63 = arith.constant 0 : index
    %c0_64 = arith.constant 0 : index
    %87 = vector.load %arg3[%c6_62, %c0_63, %c0_64] : memref<9x8x32xf32, #tpu.memory_space<vmem>>, vector<1x8x32xf32>
    %88 = vector.shape_cast %87 : vector<1x8x32xf32> to vector<8x32xf32>
    %cst_65 = arith.constant dense<0.000000e+00> : vector<8x896xf32>
    %89 = tpu.matmul %88, %58, %cst_65 {dimension_numbers = #tpu.dot_dimension_numbers<[1], [0], [0], [1], [0, 0, 1, 1], [], []>} : vector<8x32xf32>, vector<32x896xf32>, vector<8x896xf32> -> vector<8x896xf32>
    %c877_i32_66 = arith.constant 877 : i32
    %90 = tpu.dynamic_rotate %89 by %c877_i32_66 dim 1 : vector<8x896xf32>, i32 -> vector<8x896xf32>
    %91 = arith.addf %86, %90 : vector<8x896xf32>
    %c7_67 = arith.constant 7 : index
    %c0_68 = arith.constant 0 : index
    %c0_69 = arith.constant 0 : index
    %92 = vector.load %arg3[%c7_67, %c0_68, %c0_69] : memref<9x8x32xf32, #tpu.memory_space<vmem>>, vector<1x8x32xf32>
    %93 = vector.shape_cast %92 : vector<1x8x32xf32> to vector<8x32xf32>
    %cst_70 = arith.constant dense<0.000000e+00> : vector<8x896xf32>
    %94 = tpu.matmul %93, %58, %cst_70 {dimension_numbers = #tpu.dot_dimension_numbers<[1], [0], [0], [1], [0, 0, 1, 1], [], []>} : vector<8x32xf32>, vector<32x896xf32>, vector<8x896xf32> -> vector<8x896xf32>
    %c876_i32_71 = arith.constant 876 : i32
    %95 = tpu.dynamic_rotate %94 by %c876_i32_71 dim 1 : vector<8x896xf32>, i32 -> vector<8x896xf32>
    %96 = arith.addf %91, %95 : vector<8x896xf32>
    %c8_72 = arith.constant 8 : index
    %c0_73 = arith.constant 0 : index
    %c0_74 = arith.constant 0 : index
    %97 = vector.load %arg3[%c8_72, %c0_73, %c0_74] : memref<9x8x32xf32, #tpu.memory_space<vmem>>, vector<1x8x32xf32>
    %98 = vector.shape_cast %97 : vector<1x8x32xf32> to vector<8x32xf32>
    %cst_75 = arith.constant dense<0.000000e+00> : vector<8x896xf32>
    %99 = tpu.matmul %98, %58, %cst_75 {dimension_numbers = #tpu.dot_dimension_numbers<[1], [0], [0], [1], [0, 0, 1, 1], [], []>} : vector<8x32xf32>, vector<32x896xf32>, vector<8x896xf32> -> vector<8x896xf32>
    %c875_i32_76 = arith.constant 875 : i32
    %100 = tpu.dynamic_rotate %99 by %c875_i32_76 dim 1 : vector<8x896xf32>, i32 -> vector<8x896xf32>
    %101 = arith.addf %96, %100 : vector<8x896xf32>
    %102 = vector.broadcast %4 : vector<8x1xf32> to vector<8x896xf32>
    %103 = arith.addf %101, %102 : vector<8x896xf32>
    %104 = vector.broadcast %5 : vector<8x1xf32> to vector<8x896xf32>
    %105 = arith.mulf %104, %47 : vector<8x896xf32>
    %106 = arith.addf %103, %105 : vector<8x896xf32>
    %107 = vector.broadcast %6 : vector<8x1xf32> to vector<8x896xf32>
    %108 = arith.mulf %107, %0 : vector<8x896xf32>
    %109 = arith.addf %106, %108 : vector<8x896xf32>
    %c0_77 = arith.constant 0 : index
    %c0_78 = arith.constant 0 : index
    %110 = vector.load %arg5[%c0_77, %c0_78] : memref<8x896xf32, #tpu.memory_space<vmem>>, vector<8x896xf32>
    tpu.vector_store %arg5[%c0_77, %c0_78], %109 {strides = array<i32>} : memref<8x896xf32, #tpu.memory_space<vmem>>, vector<8x896xf32>,
    return
  }
}

</mosaic_0001>

<llo_original>
// kernel: forecaster.1
$region0: #{forecaster.1}
  #allocation0 [shape = 'u32[]', space=smem, size = 0x4, offset = 0x4, fixed_abs, tag = 'smem constant byte address 0x4 - core index']
  #allocation1 [shape = 'u32[144,128]{1,0:T(1,128)}', space=vmem, size = 0x12000, scoped, tag = 'internal scratch']
  %s0 = inlined_call_operand.vmem [shape: f32[8,896], index: 0, kind: input, shape index: {}]
  %s1 = inlined_call_operand.vmem [shape: f32[1,896], index: 1, kind: input, shape index: {}]
  %s2 = inlined_call_operand.vmem [shape: f32[9,32,8], index: 2, kind: input, shape index: {}]
  %s3 = inlined_call_operand.vmem [shape: f32[9,8,32], index: 3, kind: input, shape index: {}]
  %s4 = inlined_call_operand.vmem [shape: f32[56,1], index: 4, kind: input, shape index: {}]
  %s5 = inlined_call_operand.vmem [shape: f32[8,896], index: 5, kind: output, shape index: {}]
  %s6 = sld [smem:[#allocation0]]
  $region30: #{forecaster.1} parent=0
    _
  %s8 = ssub.s32 1, %s6
  %s9 = scalar_select 0, %s8, %s6
  // Predicated region
  $region2: #{forecaster.1} parent=0 // pred_check
    _
  $region3: #{forecaster.1} parent=0 // pred_check_branch
    %11 = sbr.rel (0) target = $region5
  $region4: #{forecaster.1} parent=0 // pred_region
    _
  $region5: #{forecaster.1} parent=0 // pred_fallthru
    _
  // Predicated region
  $region6: #{forecaster.1} parent=0 // pred_check
    _
  $region7: #{forecaster.1} parent=0 // pred_check_branch
    %13 = sbr.rel (0) target = $region9
  $region8: #{forecaster.1} parent=0 // pred_region
    _
  $region9: #{forecaster.1} parent=0 // pred_fallthru
    _
  // Predicated region
  $region10: #{forecaster.1} parent=0 // pred_check
    _
  $region11: #{forecaster.1} parent=0 // pred_check_branch
    %15 = sbr.rel (0) target = $region13
  $region12: #{forecaster.1} parent=0 // pred_region
    _
  $region13: #{forecaster.1} parent=0 // pred_fallthru
    _
  // Predicated region
  $region14: #{forecaster.1} parent=0 // pred_check
    _
  $region15: #{forecaster.1} parent=0 // pred_check_branch
    %17 = sbr.rel (0) target = $region17
  $region16: #{forecaster.1} parent=0 // pred_region
    _
  $region17: #{forecaster.1} parent=0 // pred_fallthru
    _
  // Predicated region
  $region18: #{forecaster.1} parent=0 // pred_check
    _
  $region19: #{forecaster.1} parent=0 // pred_check_branch
    %19 = sbr.rel (0) target = $region21
  $region20: #{forecaster.1} parent=0 // pred_region
    _
  $region21: #{forecaster.1} parent=0 // pred_fallthru
    _
  %v20 = vld [vmem:[%s0] sm:$0xff]
  %v21 = vld [vmem:[%s0 + $0x8] sm:$0xff]
  %v22 = vld [vmem:[%s0 + $0x10] sm:$0xff]
  %v23 = vld [vmem:[%s0 + $0x18] sm:$0xff]
  %v24 = vld [vmem:[%s0 + $0x20] sm:$0xff]
  %v25 = vld [vmem:[%s0 + $0x28] sm:$0xff]
  %v26 = vld [vmem:[%s0 + $0x30] sm:$0xff]
  %v27 = vld [vmem:[%s1] sm:$0xff]
  %v28 = vld [vmem:[%s4] sm:$0xff]
  %v29 = vld [vmem:[%s4 + $0x8] sm:$0xff]
  %v30 = vld [vmem:[%s4 + $0x10] sm:$0xff]
  %v31 = vld [vmem:[%s4 + $0x18] sm:$0xff]
  %v32 = vld [vmem:[%s4 + $0x20] sm:$0xff]
  %v33 = vld [vmem:[%s4 + $0x28] sm:$0xff]
  %v34 = vld [vmem:[%s4 + $0x30] sm:$0xff]
  %35 = vrot.lane.b32.xlu0 %v20, 21
  %v36 = vpop.permute.xlu0 %35
  %37 = vrot.lane.b32.xlu0 %v21, 21
  %v38 = vpop.permute.xlu0 %37
  %39 = vrot.lane.b32.xlu0 %v22, 21
  %v40 = vpop.permute.xlu0 %39
  %41 = vrot.lane.b32.xlu0 %v23, 21
  %v42 = vpop.permute.xlu0 %41
  %43 = vrot.lane.b32.xlu0 %v24, 21
  %v44 = vpop.permute.xlu0 %43
  %45 = vrot.lane.b32.xlu0 %v25, 21
  %v46 = vpop.permute.xlu0 %45
  %47 = vrot.lane.b32.xlu0 %v26, 21
  %v48 = vpop.permute.xlu0 %47
  %v49 = vlaneseq
  %v50 = vand.u32 %v49, 127
  %vm51 = vcmp.lt.s32.totalorder %v50, 21
  %v52 = vsel %vm51, %v46, %v48
  %v53 = vsel %vm51, %v44, %v46
  %v54 = vsel %vm51, %v42, %v44
  %v55 = vsel %vm51, %v40, %v42
  %v56 = vsel %vm51, %v38, %v40
  %v57 = vsel %vm51, %v36, %v38
  %v58 = vsel %vm51, %v48, %v36
  %v59 = vld [vmem:[%s2] sm:$0xff]
  %v60 = vld [vmem:[%s2 + $0x8] sm:$0xff]
  %v61 = vld [vmem:[%s2 + $0x10] sm:$0xff]
  %v62 = vld [vmem:[%s2 + $0x18] sm:$0xff]
  %63 = vrot.lane.b32.xlu0 %v20, 20
  %v64 = vpop.permute.xlu0 %63
  %65 = vrot.lane.b32.xlu0 %v21, 20
  %v66 = vpop.permute.xlu0 %65
  %67 = vrot.lane.b32.xlu0 %v22, 20
  %v68 = vpop.permute.xlu0 %67
  %69 = vrot.lane.b32.xlu0 %v23, 20
  %v70 = vpop.permute.xlu0 %69
  %71 = vrot.lane.b32.xlu0 %v24, 20
  %v72 = vpop.permute.xlu0 %71
  %73 = vrot.lane.b32.xlu0 %v25, 20
  %v74 = vpop.permute.xlu0 %73
  %75 = vrot.lane.b32.xlu0 %v26, 20
  %v76 = vpop.permute.xlu0 %75
  %vm77 = vcmp.lt.s32.totalorder %v50, 20
  %v78 = vsel %vm77, %v74, %v76
  %v79 = vsel %vm77, %v72, %v74
  %v80 = vsel %vm77, %v70, %v72
  %v81 = vsel %vm77, %v68, %v70
  %v82 = vsel %vm77, %v66, %v68
  %v83 = vsel %vm77, %v64, %v66
  %v84 = vsel %vm77, %v76, %v64
  %s85 = scalar_lea.vmem %s2, 32
  %v86 = vld [vmem:[%s85] sm:$0xff]
  %v87 = vld [vmem:[%s85 + $0x8] sm:$0xff]
  %v88 = vld [vmem:[%s85 + $0x10] sm:$0xff]
  %v89 = vld [vmem:[%s85 + $0x18] sm:$0xff]
  %vm90 = vcmask 64512
  %v92 = vsel %vm90, %v86, 0
  %v95 = vsel %vm90, %v87, 0
  %v98 = vsel %vm90, %v88, 0
  %v101 = vsel %vm90, %v89, 0
  %103 = vmatprep.subr.mxu0 %v83
  %104 = vmatpush1.msra.mxu0 %v84
  %105 = vmatprep.subr.mxu0 0.0
  %106 = vmatpush1.msra.mxu0 0.0
  %107 = vmatprep.subr.mxu0 0.0
  %108 = vmatpush1.msra.mxu0 0.0
  %109 = vmatprep.subr.mxu0 0.0
  %110 = vmatpush1.msra.mxu0 0.0
  %111 = vmatprep.subr.mxu0 0.0
  %112 = vmatpush1.msra.mxu0 0.0
  %113 = vmatprep.subr.mxu0 0.0
  %114 = vmatpush1.msra.mxu0 0.0
  %115 = vmatprep.subr.mxu0 0.0
  %116 = vmatpush1.msra.mxu0 0.0
  %117 = vmatprep.subr.mxu0 0.0
  %118 = vmatpush1.msra.mxu0 0.0
  %119 = vmatprep.subr.mxu0 0.0
  %120 = vmatpush1.msra.mxu0 0.0
  %121 = vmatprep.subr.mxu0 0.0
  %122 = vmatpush1.msra.mxu0 0.0
  %123 = vmatprep.subr.mxu0 0.0
  %124 = vmatpush1.msra.mxu0 0.0
  %125 = vmatprep.subr.mxu0 0.0
  %126 = vmatpush1.msra.mxu0 0.0
  %127 = vmatprep.subr.mxu0 0.0
  %128 = vmatpush1.msra.mxu0 0.0
  %129 = vmatprep.subr.mxu0 0.0
  %130 = vmatpush1.msra.mxu0 0.0
  %131 = vmatprep.subr.mxu0 0.0
  %132 = vmatpush1.msra.mxu0 0.0
  %133 = vmatprep.subr.mxu0 0.0
  %134 = vmatpush1.msra.mxu0 0.0
  %135 = vmatprep.subr.mxu0 0.0
  %136 = vmatpush1.msra.mxu0 0.0
  %137 = vmatprep.subr.mxu0 0.0
  %138 = vmatpush1.msra.mxu0 0.0
  %139 = vmatprep.subr.mxu0 0.0
  %140 = vmatpush1.msra.mxu0 0.0
  %141 = vmatprep.subr.mxu0 0.0
  %142 = vmatpush1.msra.mxu0 0.0
  %143 = vmatprep.subr.mxu0 0.0
  %144 = vmatpush1.msra.mxu0 0.0
  %145 = vmatprep.subr.mxu0 0.0
  %146 = vmatpush1.msra.mxu0 0.0
  %147 = vmatprep.subr.mxu0 0.0
  %148 = vmatpush1.msra.mxu0 0.0
  %149 = vmatprep.subr.mxu0 0.0
  %150 = vmatpush1.msra.mxu0 0.0
  %151 = vmatprep.subr.mxu0 0.0
  %152 = vmatpush1.msra.mxu0 0.0
  %153 = vmatprep.subr.mxu0 0.0
  %154 = vmatpush1.msra.mxu0 0.0
  %155 = vmatprep.subr.mxu0 0.0
  %156 = vmatpush1.msra.mxu0 0.0
  %157 = vmatprep.subr.mxu0 0.0
  %158 = vmatpush1.msra.mxu0 0.0
  %159 = vmatprep.subr.mxu0 0.0
  %160 = vmatpush1.msra.mxu0 0.0
  %161 = vmatprep.subr.mxu0 0.0
  %162 = vmatpush1.msra.mxu0 0.0
  %163 = vmatprep.subr.mxu0 0.0
  %164 = vmatpush1.msra.mxu0 0.0
  %165 = vmatprep.subr.mxu0 0.0
  %166 = vmatpush1.msra.mxu0 0.0
  %167 = vmatprep.mubr.f32.mxu0 0.0
  %168 = vmatmul.mubr.f32.gmra.mrb[0].mxu0 %v92
  %v169 = vpop.f32.mrb[0].mxu0
  %v170 = vadd.f32 0.0, %v169
  %v171 = vpop.f32.mrb[0].mxu0
  %v172 = vadd.f32 0.0, %v171
  %173 = vmatprep.mubr.f32.mxu0 0.0
  %174 = vmatmul.mubr.f32.gmra.mrb[0].mxu0 %v95
  %v175 = vpop.f32.mrb[0].mxu0
  %v176 = vadd.f32 0.0, %v175
  %v177 = vpop.f32.mrb[0].mxu0
  %v178 = vadd.f32 0.0, %v177
  %179 = vmatprep.mubr.f32.mxu0 0.0
  %180 = vmatmul.mubr.f32.gmra.mrb[0].mxu0 %v98
  %v181 = vpop.f32.mrb[0].mxu0
  %v182 = vadd.f32 0.0, %v181
  %v183 = vpop.f32.mrb[0].mxu0
  %v184 = vadd.f32 0.0, %v183
  %185 = vmatprep.mubr.f32.mxu0 0.0
  %186 = vmatmul.mubr.f32.gmra.mrb[0].mxu0 %v101
  %v187 = vpop.f32.mrb[0].mxu0
  %v188 = vadd.f32 0.0, %v187
  %v189 = vpop.f32.mrb[0].mxu0
  %v190 = vadd.f32 0.0, %v189
  %191 = vdwg.mxu0
  %192 = vmatprep.subr.mxu0 %v81
  %193 = vmatpush1.msra.mxu0 %v82
  %194 = vmatprep.subr.mxu0 0.0
  %195 = vmatpush1.msra.mxu0 0.0
  %196 = vmatprep.subr.mxu0 0.0
  %197 = vmatpush1.msra.mxu0 0.0
  %198 = vmatprep.subr.mxu0 0.0
  %199 = vmatpush1.msra.mxu0 0.0
  %200 = vmatprep.subr.mxu0 0.0
  %201 = vmatpush1.msra.mxu0 0.0
  %202 = vmatprep.subr.mxu0 0.0
  %203 = vmatpush1.msra.mxu0 0.0
  %204 = vmatprep.subr.mxu0 0.0
  %205 = vmatpush1.msra.mxu0 0.0
  %206 = vmatprep.subr.mxu0 0.0
  %207 = vmatpush1.msra.mxu0 0.0
  %208 = vmatprep.subr.mxu0 0.0
  %209 = vmatpush1.msra.mxu0 0.0
  %210 = vmatprep.subr.mxu0 0.0
  %211 = vmatpush1.msra.mxu0 0.0
  %212 = vmatprep.subr.mxu0 0.0
  %213 = vmatpush1.msra.mxu0 0.0
  %214 = vmatprep.subr.mxu0 0.0
  %215 = vmatpush1.msra.mxu0 0.0
  %216 = vmatprep.subr.mxu0 0.0
  %217 = vmatpush1.msra.mxu0 0.0
  %218 = vmatprep.subr.mxu0 0.0
  %219 = vmatpush1.msra.mxu0 0.0
  %220 = vmatprep.subr.mxu0 0.0
  %221 = vmatpush1.msra.mxu0 0.0
  %222 = vmatprep.subr.mxu0 0.0
  %223 = vmatpush1.msra.mxu0 0.0
  %224 = vmatprep.subr.mxu0 0.0
  %225 = vmatpush1.msra.mxu0 0.0
  %226 = vmatprep.subr.mxu0 0.0
  %227 = vmatpush1.msra.mxu0 0.0
  %228 = vmatprep.subr.mxu0 0.0
  %229 = vmatpush1.msra.mxu0 0.0
  %230 = vmatprep.subr.mxu0 0.0
  %231 = vmatpush1.msra.mxu0 0.0
  %232 = vmatprep.subr.mxu0 0.0
  %233 = vmatpush1.msra.mxu0 0.0
  %234 = vmatprep.subr.mxu0 0.0
  %235 = vmatpush1.msra.mxu0 0.0
  %236 = vmatprep.subr.mxu0 0.0
  %237 = vmatpush1.msra.mxu0 0.0
  %238 = vmatprep.subr.mxu0 0.0
  %239 = vmatpush1.msra.mxu0 0.0
  %240 = vmatprep.subr.mxu0 0.0
  %241 = vmatpush1.msra.mxu0 0.0
  %242 = vmatprep.subr.mxu0 0.0
  %243 = vmatpush1.msra.mxu0 0.0
  %244 = vmatprep.subr.mxu0 0.0
  %245 = vmatpush1.msra.mxu0 0.0
  %246 = vmatprep.subr.mxu0 0.0
  %247 = vmatpush1.msra.mxu0 0.0
  %248 = vmatprep.subr.mxu0 0.0
  %249 = vmatpush1.msra.mxu0 0.0
  %250 = vmatprep.subr.mxu0 0.0
  %251 = vmatpush1.msra.mxu0 0.0
  %252 = vmatprep.subr.mxu0 0.0
  %253 = vmatpush1.msra.mxu0 0.0
  %254 = vmatprep.subr.mxu0 0.0
  %255 = vmatpush1.msra.mxu0 0.0
  %256 = vmatprep.mubr.f32.mxu0 0.0
  %257 = vmatmul.mubr.f32.gmra.mrb[0].mxu0 %v92
  %v258 = vpop.f32.mrb[0].mxu0
  %v259 = vadd.f32 0.0, %v258
  %v260 = vpop.f32.mrb[0].mxu0
  %v261 = vadd.f32 0.0, %v260
  %262 = vmatprep.mubr.f32.mxu0 0.0
  %263 = vmatmul.mubr.f32.gmra.mrb[0].mxu0 %v95
  %v264 = vpop.f32.mrb[0].mxu0
  %v265 = vadd.f32 0.0, %v264
  %v266 = vpop.f32.mrb[0].mxu0
  %v267 = vadd.f32 0.0, %v266
  %268 = vmatprep.mubr.f32.mxu0 0.0
  %269 = vmatmul.mubr.f32.gmra.mrb[0].mxu0 %v98
  %v270 = vpop.f32.mrb[0].mxu0
  %v271 = vadd.f32 0.0, %v270
  %v272 = vpop.f32.mrb[0].mxu0
  %v273 = vadd.f32 0.0, %v272
  %274 = vmatprep.mubr.f32.mxu0 0.0
  %275 = vmatmul.mubr.f32.gmra.mrb[0].mxu0 %v101
  %v276 = vpop.f32.mrb[0].mxu0
  %v277 = vadd.f32 0.0, %v276
  %v278 = vpop.f32.mrb[0].mxu0
  %v279 = vadd.f32 0.0, %v278
  %280 = vdwg.mxu0
  %281 = vmatprep.subr.mxu0 %v79
  %282 = vmatpush1.msra.mxu0 %v80
  %283 = vmatprep.subr.mxu0 0.0
  %284 = vmatpush1.msra.mxu0 0.0
  %285 = vmatprep.subr.mxu0 0.0
  %286 = vmatpush1.msra.mxu0 0.0
  %287 = vmatprep.subr.mxu0 0.0
  %288 = vmatpush1.msra.mxu0 0.0
  %289 = vmatprep.subr.mxu0 0.0
  %290 = vmatpush1.msra.mxu0 0.0
  %291 = vmatprep.subr.mxu0 0.0
  %292 = vmatpush1.msra.mxu0 0.0
  %293 = vmatprep.subr.mxu0 0.0
  %294 = vmatpush1.msra.mxu0 0.0
  %295 = vmatprep.subr.mxu0 0.0
  %296 = vmatpush1.msra.mxu0 0.0
  %297 = vmatprep.subr.mxu0 0.0
  %298 = vmatpush1.msra.mxu0 0.0
  %299 = vmatprep.subr.mxu0 0.0
  %300 = vmatpush1.msra.mxu0 0.0
  %301 = vmatprep.subr.mxu0 0.0
  %302 = vmatpush1.msra.mxu0 0.0
  %303 = vmatprep.subr.mxu0 0.0
  %304 = vmatpush1.msra.mxu0 0.0
  %305 = vmatprep.subr.mxu0 0.0
  %306 = vmatpush1.msra.mxu0 0.0
  %307 = vmatprep.subr.mxu0 0.0
  %308 = vmatpush1.msra.mxu0 0.0
  %309 = vmatprep.subr.mxu0 0.0
  %310 = vmatpush1.msra.mxu0 0.0
  %311 = vmatprep.subr.mxu0 0.0
  %312 = vmatpush1.msra.mxu0 0.0
  %313 = vmatprep.subr.mxu0 0.0
  %314 = vmatpush1.msra.mxu0 0.0
  %315 = vmatprep.subr.mxu0 0.0
  %316 = vmatpush1.msra.mxu0 0.0
  %317 = vmatprep.subr.mxu0 0.0
  %318 = vmatpush1.msra.mxu0 0.0
  %319 = vmatprep.subr.mxu0 0.0
  %320 = vmatpush1.msra.mxu0 0.0
  %321 = vmatprep.subr.mxu0 0.0
  %322 = vmatpush1.msra.mxu0 0.0
  %323 = vmatprep.subr.mxu0 0.0
  %324 = vmatpush1.msra.mxu0 0.0
  %325 = vmatprep.subr.mxu0 0.0
  %326 = vmatpush1.msra.mxu0 0.0
  %327 = vmatprep.subr.mxu0 0.0
  %328 = vmatpush1.msra.mxu0 0.0
  %329 = vmatprep.subr.mxu0 0.0
  %330 = vmatpush1.msra.mxu0 0.0
  %331 = vmatprep.subr.mxu0 0.0
  %332 = vmatpush1.msra.mxu0 0.0
  %333 = vmatprep.subr.mxu0 0.0
  %334 = vmatpush1.msra.mxu0 0.0
  %335 = vmatprep.subr.mxu0 0.0
  %336 = vmatpush1.msra.mxu0 0.0
  %337 = vmatprep.subr.mxu0 0.0
  %338 = vmatpush1.msra.mxu0 0.0
  %339 = vmatprep.subr.mxu0 0.0
  %340 = vmatpush1.msra.mxu0 0.0
  %341 = vmatprep.subr.mxu0 0.0
  %342 = vmatpush1.msra.mxu0 0.0
  %343 = vmatprep.subr.mxu0 0.0
  %344 = vmatpush1.msra.mxu0 0.0
  %345 = vmatprep.mubr.f32.mxu0 0.0
  %346 = vmatmul.mubr.f32.gmra.mrb[0].mxu0 %v92
  %v347 = vpop.f32.mrb[0].mxu0
  %v348 = vadd.f32 0.0, %v347
  %v349 = vpop.f32.mrb[0].mxu0
  %v350 = vadd.f32 0.0, %v349
  %351 = vmatprep.mubr.f32.mxu0 0.0
  %352 = vmatmul.mubr.f32.gmra.mrb[0].mxu0 %v95
  %v353 = vpop.f32.mrb[0].mxu0
  %v354 = vadd.f32 0.0, %v353
  %v355 = vpop.f32.mrb[0].mxu0
  %v356 = vadd.f32 0.0, %v355
  %357 = vmatprep.mubr.f32.mxu0 0.0
  %358 = vmatmul.mubr.f32.gmra.mrb[0].mxu0 %v98
  %v359 = vpop.f32.mrb[0].mxu0
  %v360 = vadd.f32 0.0, %v359
  %v361 = vpop.f32.mrb[0].mxu0
  %v362 = vadd.f32 0.0, %v361
  %363 = vmatprep.mubr.f32.mxu0 0.0
  %364 = vmatmul.mubr.f32.gmra.mrb[0].mxu0 %v101
  %v365 = vpop.f32.mrb[0].mxu0
  %v366 = vadd.f32 0.0, %v365
  %v367 = vpop.f32.mrb[0].mxu0
  %v368 = vadd.f32 0.0, %v367
  %369 = vdwg.mxu0
  %370 = vmatprep.subr.mxu0 0.0
  %371 = vmatpush1.msra.mxu0 %v78
  %372 = vmatprep.subr.mxu0 0.0
  %373 = vmatpush1.msra.mxu0 0.0
  %374 = vmatprep.subr.mxu0 0.0
  %375 = vmatpush1.msra.mxu0 0.0
  %376 = vmatprep.subr.mxu0 0.0
  %377 = vmatpush1.msra.mxu0 0.0
  %378 = vmatprep.subr.mxu0 0.0
  %379 = vmatpush1.msra.mxu0 0.0
  %380 = vmatprep.subr.mxu0 0.0
  %381 = vmatpush1.msra.mxu0 0.0
  %382 = vmatprep.subr.mxu0 0.0
  %383 = vmatpush1.msra.mxu0 0.0
  %384 = vmatprep.subr.mxu0 0.0
  %385 = vmatpush1.msra.mxu0 0.0
  %386 = vmatprep.subr.mxu0 0.0
  %387 = vmatpush1.msra.mxu0 0.0
  %388 = vmatprep.subr.mxu0 0.0
  %389 = vmatpush1.msra.mxu0 0.0
  %390 = vmatprep.subr.mxu0 0.0
  %391 = vmatpush1.msra.mxu0 0.0
  %392 = vmatprep.subr.mxu0 0.0
  %393 = vmatpush1.msra.mxu0 0.0
  %394 = vmatprep.subr.mxu0 0.0
  %395 = vmatpush1.msra.mxu0 0.0
  %396 = vmatprep.subr.mxu0 0.0
  %397 = vmatpush1.msra.mxu0 0.0
  %398 = vmatprep.subr.mxu0 0.0
  %399 = vmatpush1.msra.mxu0 0.0
  %400 = vmatprep.subr.mxu0 0.0
  %401 = vmatpush1.msra.mxu0 0.0
  %402 = vmatprep.subr.mxu0 0.0
  %403 = vmatpush1.msra.mxu0 0.0
  %404 = vmatprep.subr.mxu0 0.0
  %405 = vmatpush1.msra.mxu0 0.0
  %406 = vmatprep.subr.mxu0 0.0
  %407 = vmatpush1.msra.mxu0 0.0
  %408 = vmatprep.subr.mxu0 0.0
  %409 = vmatpush1.msra.mxu0 0.0
  %410 = vmatprep.subr.mxu0 0.0
  %411 = vmatpush1.msra.mxu0 0.0
  %412 = vmatprep.subr.mxu0 0.0
  %413 = vmatpush1.msra.mxu0 0.0
  %414 = vmatprep.subr.mxu0 0.0
  %415 = vmatpush1.msra.mxu0 0.0
  %416 = vmatprep.subr.mxu0 0.0
  %417 = vmatpush1.msra.mxu0 0.0
  %418 = vmatprep.subr.mxu0 0.0
  %419 = vmatpush1.msra.mxu0 0.0
  %420 = vmatprep.subr.mxu0 0.0
  %421 = vmatpush1.msra.mxu0 0.0
  %422 = vmatprep.subr.mxu0 0.0
  %423 = vmatpush1.msra.mxu0 0.0
  %424 = vmatprep.subr.mxu0 0.0
  %425 = vmatpush1.msra.mxu0 0.0
  %426 = vmatprep.subr.mxu0 0.0
  %427 = vmatpush1.msra.mxu0 0.0
  %428 = vmatprep.subr.mxu0 0.0
  %429 = vmatpush1.msra.mxu0 0.0
  %430 = vmatprep.subr.mxu0 0.0
  %431 = vmatpush1.msra.mxu0 0.0
  %432 = vmatprep.subr.mxu0 0.0
  %433 = vmatpush1.msra.mxu0 0.0
  %434 = vmatprep.mubr.f32.mxu0 0.0
  %435 = vmatmul.mubr.f32.gmra.mrb[0].mxu0 %v92
  %v436 = vpop.f32.mrb[0].mxu0
  %v437 = vadd.f32 0.0, %v436
  %v438 = vpop.f32.mrb[0].mxu0
  %439 = vmatprep.mubr.f32.mxu0 0.0
  %440 = vmatmul.mubr.f32.gmra.mrb[0].mxu0 %v95
  %v441 = vpop.f32.mrb[0].mxu0
  %v442 = vadd.f32 0.0, %v441
  %v443 = vpop.f32.mrb[0].mxu0
  %444 = vmatprep.mubr.f32.mxu0 0.0
  %445 = vmatmul.mubr.f32.gmra.mrb[0].mxu0 %v98
  %v446 = vpop.f32.mrb[0].mxu0
  %v447 = vadd.f32 0.0, %v446
  %v448 = vpop.f32.mrb[0].mxu0
  %449 = vmatprep.mubr.f32.mxu0 0.0
  %450 = vmatmul.mubr.f32.gmra.mrb[0].mxu0 %v101
  %v451 = vpop.f32.mrb[0].mxu0
  %v452 = vadd.f32 0.0, %v451
  %v453 = vpop.f32.mrb[0].mxu0
  %454 = vdwg.mxu0
  %v456 = vsel %vm90, %v59, 0
  %v459 = vsel %vm90, %v60, 0
  %v462 = vsel %vm90, %v61, 0
  %v465 = vsel %vm90, %v62, 0
  %467 = vmatprep.subr.mxu0 %v57
  %468 = vmatpush1.msra.mxu0 %v58
  %469 = vmatprep.subr.mxu0 0.0
  %470 = vmatpush1.msra.mxu0 0.0
  %471 = vmatprep.subr.mxu0 0.0
  %472 = vmatpush1.msra.mxu0 0.0
  %473 = vmatprep.subr.mxu0 0.0
  %474 = vmatpush1.msra.mxu0 0.0
  %475 = vmatprep.subr.mxu0 0.0
  %476 = vmatpush1.msra.mxu0 0.0
  %477 = vmatprep.subr.mxu0 0.0
  %478 = vmatpush1.msra.mxu0 0.0
  %479 = vmatprep.subr.mxu0 0.0
  %480 = vmatpush1.msra.mxu0 0.0
  %481 = vmatprep.subr.mxu0 0.0
  %482 = vmatpush1.msra.mxu0 0.0
  %483 = vmatprep.subr.mxu0 0.0
  %484 = vmatpush1.msra.mxu0 0.0
  %485 = vmatprep.subr.mxu0 0.0
  %486 = vmatpush1.msra.mxu0 0.0
  %487 = vmatprep.subr.mxu0 0.0
  %488 = vmatpush1.msra.mxu0 0.0
  %489 = vmatprep.subr.mxu0 0.0
  %490 = vmatpush1.msra.mxu0 0.0
  %491 = vmatprep.subr.mxu0 0.0
  %492 = vmatpush1.msra.mxu0 0.0
  %493 = vmatprep.subr.mxu0 0.0
  %494 = vmatpush1.msra.mxu0 0.0
  %495 = vmatprep.subr.mxu0 0.0
  %496 = vmatpush1.msra.mxu0 0.0
  %497 = vmatprep.subr.mxu0 0.0
  %498 = vmatpush1.msra.mxu0 0.0
  %499 = vmatprep.subr.mxu0 0.0
  %500 = vmatpush1.msra.mxu0 0.0
  %501 = vmatprep.subr.mxu0 0.0
  %502 = vmatpush1.msra.mxu0 0.0
  %503 = vmatprep.subr.mxu0 0.0
  %504 = vmatpush1.msra.mxu0 0.0
  %505 = vmatprep.subr.mxu0 0.0
  %506 = vmatpush1.msra.mxu0 0.0
  %507 = vmatprep.subr.mxu0 0.0
  %508 = vmatpush1.msra.mxu0 0.0
  %509 = vmatprep.subr.mxu0 0.0
  %510 = vmatpush1.msra.mxu0 0.0
  %511 = vmatprep.subr.mxu0 0.0
  %512 = vmatpush1.msra.mxu0 0.0
  %513 = vmatprep.subr.mxu0 0.0
  %514 = vmatpush1.msra.mxu0 0.0
  %515 = vmatprep.subr.mxu0 0.0
  %516 = vmatpush1.msra.mxu0 0.0
  %517 = vmatprep.subr.mxu0 0.0
  %518 = vmatpush1.msra.mxu0 0.0
  %519 = vmatprep.subr.mxu0 0.0
  %520 = vmatpush1.msra.mxu0 0.0
  %521 = vmatprep.subr.mxu0 0.0
  %522 = vmatpush1.msra.mxu0 0.0
  %523 = vmatprep.subr.mxu0 0.0
  %524 = vmatpush1.msra.mxu0 0.0
  %525 = vmatprep.subr.mxu0 0.0
  %526 = vmatpush1.msra.mxu0 0.0
  %527 = vmatprep.subr.mxu0 0.0
  %528 = vmatpush1.msra.mxu0 0.0
  %529 = vmatprep.subr.mxu0 0.0
  %530 = vmatpush1.msra.mxu0 0.0
  %531 = vmatprep.mubr.f32.mxu0 0.0
  %532 = vmatmul.mubr.f32.gmra.mrb[0].mxu0 %v456
  %v533 = vpop.f32.mrb[0].mxu0
  %v534 = vadd.f32 %v170, %v533
  %v535 = vpop.f32.mrb[0].mxu0
  %v536 = vadd.f32 %v172, %v535
  %537 = vmatprep.mubr.f32.mxu0 0.0
  %538 = vmatmul.mubr.f32.gmra.mrb[0].mxu0 %v459
  %v539 = vpop.f32.mrb[0].mxu0
  %v540 = vadd.f32 %v176, %v539
  %v541 = vpop.f32.mrb[0].mxu0
  %v542 = vadd.f32 %v178, %v541
  %543 = vmatprep.mubr.f32.mxu0 0.0
  %544 = vmatmul.mubr.f32.gmra.mrb[0].mxu0 %v462
  %v545 = vpop.f32.mrb[0].mxu0
  %v546 = vadd.f32 %v182, %v545
  %v547 = vpop.f32.mrb[0].mxu0
  %v548 = vadd.f32 %v184, %v547
  %549 = vmatprep.mubr.f32.mxu0 0.0
  %550 = vmatmul.mubr.f32.gmra.mrb[0].mxu0 %v465
  %v551 = vpop.f32.mrb[0].mxu0
  %v552 = vadd.f32 %v188, %v551
  %v553 = vpop.f32.mrb[0].mxu0
  %v554 = vadd.f32 %v190, %v553
  %555 = vdwg.mxu0
  %556 = vmatprep.subr.mxu0 %v55
  %557 = vmatpush1.msra.mxu0 %v56
  %558 = vmatprep.subr.mxu0 0.0
  %559 = vmatpush1.msra.mxu0 0.0
  %560 = vmatprep.subr.mxu0 0.0
  %561 = vmatpush1.msra.mxu0 0.0
  %562 = vmatprep.subr.mxu0 0.0
  %563 = vmatpush1.msra.mxu0 0.0
  %564 = vmatprep.subr.mxu0 0.0
  %565 = vmatpush1.msra.mxu0 0.0
  %566 = vmatprep.subr.mxu0 0.0
  %567 = vmatpush1.msra.mxu0 0.0
  %568 = vmatprep.subr.mxu0 0.0
  %569 = vmatpush1.msra.mxu0 0.0
  %570 = vmatprep.subr.mxu0 0.0
  %571 = vmatpush1.msra.mxu0 0.0
  %572 = vmatprep.subr.mxu0 0.0
  %573 = vmatpush1.msra.mxu0 0.0
  %574 = vmatprep.subr.mxu0 0.0
  %575 = vmatpush1.msra.mxu0 0.0
  %576 = vmatprep.subr.mxu0 0.0
  %577 = vmatpush1.msra.mxu0 0.0
  %578 = vmatprep.subr.mxu0 0.0
  %579 = vmatpush1.msra.mxu0 0.0
  %580 = vmatprep.subr.mxu0 0.0
  %581 = vmatpush1.msra.mxu0 0.0
  %582 = vmatprep.subr.mxu0 0.0
  %583 = vmatpush1.msra.mxu0 0.0
  %584 = vmatprep.subr.mxu0 0.0
  %585 = vmatpush1.msra.mxu0 0.0
  %586 = vmatprep.subr.mxu0 0.0
  %587 = vmatpush1.msra.mxu0 0.0
  %588 = vmatprep.subr.mxu0 0.0
  %589 = vmatpush1.msra.mxu0 0.0
  %590 = vmatprep.subr.mxu0 0.0
  %591 = vmatpush1.msra.mxu0 0.0
  %592 = vmatprep.subr.mxu0 0.0
  %593 = vmatpush1.msra.mxu0 0.0
  %594 = vmatprep.subr.mxu0 0.0
  %595 = vmatpush1.msra.mxu0 0.0
  %596 = vmatprep.subr.mxu0 0.0
  %597 = vmatpush1.msra.mxu0 0.0
  %598 = vmatprep.subr.mxu0 0.0
  %599 = vmatpush1.msra.mxu0 0.0
  %600 = vmatprep.subr.mxu0 0.0
  %601 = vmatpush1.msra.mxu0 0.0
  %602 = vmatprep.subr.mxu0 0.0
  %603 = vmatpush1.msra.mxu0 0.0
  %604 = vmatprep.subr.mxu0 0.0
  %605 = vmatpush1.msra.mxu0 0.0
  %606 = vmatprep.subr.mxu0 0.0
  %607 = vmatpush1.msra.mxu0 0.0
  %608 = vmatprep.subr.mxu0 0.0
  %609 = vmatpush1.msra.mxu0 0.0
  %610 = vmatprep.subr.mxu0 0.0
  %611 = vmatpush1.msra.mxu0 0.0
  %612 = vmatprep.subr.mxu0 0.0
  %613 = vmatpush1.msra.mxu0 0.0
  %614 = vmatprep.subr.mxu0 0.0
  %615 = vmatpush1.msra.mxu0 0.0
  %616 = vmatprep.subr.mxu0 0.0
  %617 = vmatpush1.msra.mxu0 0.0
  %618 = vmatprep.subr.mxu0 0.0
  %619 = vmatpush1.msra.mxu0 0.0
  %620 = vmatprep.mubr.f32.mxu0 0.0
  %621 = vmatmul.mubr.f32.gmra.mrb[0].mxu0 %v456
  %v622 = vpop.f32.mrb[0].mxu0
  %v623 = vadd.f32 %v259, %v622
  %v624 = vpop.f32.mrb[0].mxu0
  %v625 = vadd.f32 %v261, %v624
  %626 = vmatprep.mubr.f32.mxu0 0.0
  %627 = vmatmul.mubr.f32.gmra.mrb[0].mxu0 %v459
  %v628 = vpop.f32.mrb[0].mxu0
  %v629 = vadd.f32 %v265, %v628
  %v630 = vpop.f32.mrb[0].mxu0
  %v631 = vadd.f32 %v267, %v630
  %632 = vmatprep.mubr.f32.mxu0 0.0
  %633 = vmatmul.mubr.f32.gmra.mrb[0].mxu0 %v462
  %v634 = vpop.f32.mrb[0].mxu0
  %v635 = vadd.f32 %v271, %v634
  %v636 = vpop.f32.mrb[0].mxu0
  %v637 = vadd.f32 %v273, %v636
  %638 = vmatprep.mubr.f32.mxu0 0.0
  %639 = vmatmul.mubr.f32.gmra.mrb[0].mxu0 %v465
  %v640 = vpop.f32.mrb[0].mxu0
  %v641 = vadd.f32 %v277, %v640
  %v642 = vpop.f32.mrb[0].mxu0
  %v643 = vadd.f32 %v279, %v642
  %644 = vdwg.mxu0
  %645 = vmatprep.subr.mxu0 %v53
  %646 = vmatpush1.msra.mxu0 %v54
  %647 = vmatprep.subr.mxu0 0.0
  %648 = vmatpush1.msra.mxu0 0.0
  %649 = vmatprep.subr.mxu0 0.0
  %650 = vmatpush1.msra.mxu0 0.0
  %651 = vmatprep.subr.mxu0 0.0
  %652 = vmatpush1.msra.mxu0 0.0
  %653 = vmatprep.subr.mxu0 0.0
  %654 = vmatpush1.msra.mxu0 0.0
  %655 = vmatprep.subr.mxu0 0.0
  %656 = vmatpush1.msra.mxu0 0.0
  %657 = vmatprep.subr.mxu0 0.0
  %658 = vmatpush1.msra.mxu0 0.0
  %659 = vmatprep.subr.mxu0 0.0
  %660 = vmatpush1.msra.mxu0 0.0
  %661 = vmatprep.subr.mxu0 0.0
  %662 = vmatpush1.msra.mxu0 0.0
  %663 = vmatprep.subr.mxu0 0.0
  %664 = vmatpush1.msra.mxu0 0.0
  %665 = vmatprep.subr.mxu0 0.0
  %666 = vmatpush1.msra.mxu0 0.0
  %667 = vmatprep.subr.mxu0 0.0
  %668 = vmatpush1.msra.mxu0 0.0
  %669 = vmatprep.subr.mxu0 0.0
  %670 = vmatpush1.msra.mxu0 0.0
  %671 = vmatprep.subr.mxu0 0.0
  %672 = vmatpush1.msra.mxu0 0.0
  %673 = vmatprep.subr.mxu0 0.0
  %674 = vmatpush1.msra.mxu0 0.0
  %675 = vmatprep.subr.mxu0 0.0
  %676 = vmatpush1.msra.mxu0 0.0
  %677 = vmatprep.subr.mxu0 0.0
  %678 = vmatpush1.msra.mxu0 0.0
  %679 = vmatprep.subr.mxu0 0.0
  %680 = vmatpush1.msra.mxu0 0.0
  %681 = vmatprep.subr.mxu0 0.0
  %682 = vmatpush1.msra.mxu0 0.0
  %683 = vmatprep.subr.mxu0 0.0
  %684 = vmatpush1.msra.mxu0 0.0
  %685 = vmatprep.subr.mxu0 0.0
  %686 = vmatpush1.msra.mxu0 0.0
  %687 = vmatprep.subr.mxu0 0.0
  %688 = vmatpush1.msra.mxu0 0.0
  %689 = vmatprep.subr.mxu0 0.0
  %690 = vmatpush1.msra.mxu0 0.0
  %691 = vmatprep.subr.mxu0 0.0
  %692 = vmatpush1.msra.mxu0 0.0
  %693 = vmatprep.subr.mxu0 0.0
  %694 = vmatpush1.msra.mxu0 0.0
  %695 = vmatprep.subr.mxu0 0.0
  %696 = vmatpush1.msra.mxu0 0.0
  %697 = vmatprep.subr.mxu0 0.0
  %698 = vmatpush1.msra.mxu0 0.0
  %699 = vmatprep.subr.mxu0 0.0
  %700 = vmatpush1.msra.mxu0 0.0
  %701 = vmatprep.subr.mxu0 0.0
  %702 = vmatpush1.msra.mxu0 0.0
  %703 = vmatprep.subr.mxu0 0.0
  %704 = vmatpush1.msra.mxu0 0.0
  %705 = vmatprep.subr.mxu0 0.0
  %706 = vmatpush1.msra.mxu0 0.0
  %707 = vmatprep.subr.mxu0 0.0
  %708 = vmatpush1.msra.mxu0 0.0
  %709 = vmatprep.mubr.f32.mxu0 0.0
  %710 = vmatmul.mubr.f32.gmra.mrb[0].mxu0 %v456
  %v711 = vpop.f32.mrb[0].mxu0
  %v712 = vadd.f32 %v348, %v711
  %v713 = vpop.f32.mrb[0].mxu0
  %v714 = vadd.f32 %v350, %v713
  %715 = vmatprep.mubr.f32.mxu0 0.0
  %716 = vmatmul.mubr.f32.gmra.mrb[0].mxu0 %v459
  %v717 = vpop.f32.mrb[0].mxu0
  %v718 = vadd.f32 %v354, %v717
  %v719 = vpop.f32.mrb[0].mxu0
  %v720 = vadd.f32 %v356, %v719
  %721 = vmatprep.mubr.f32.mxu0 0.0
  %722 = vmatmul.mubr.f32.gmra.mrb[0].mxu0 %v462
  %v723 = vpop.f32.mrb[0].mxu0
  %v724 = vadd.f32 %v360, %v723
  %v725 = vpop.f32.mrb[0].mxu0
  %v726 = vadd.f32 %v362, %v725
  %727 = vmatprep.mubr.f32.mxu0 0.0
  %728 = vmatmul.mubr.f32.gmra.mrb[0].mxu0 %v465
  %v729 = vpop.f32.mrb[0].mxu0
  %v730 = vadd.f32 %v366, %v729
  %v731 = vpop.f32.mrb[0].mxu0
  %v732 = vadd.f32 %v368, %v731
  %733 = vdwg.mxu0
  %734 = vmatprep.subr.mxu0 0.0
  %735 = vmatpush1.msra.mxu0 %v52
  %736 = vmatprep.subr.mxu0 0.0
  %737 = vmatpush1.msra.mxu0 0.0
  %738 = vmatprep.subr.mxu0 0.0
  %739 = vmatpush1.msra.mxu0 0.0
  %740 = vmatprep.subr.mxu0 0.0
  %741 = vmatpush1.msra.mxu0 0.0
  %742 = vmatprep.subr.mxu0 0.0
  %743 = vmatpush1.msra.mxu0 0.0
  %744 = vmatprep.subr.mxu0 0.0
  %745 = vmatpush1.msra.mxu0 0.0
  %746 = vmatprep.subr.mxu0 0.0
  %747 = vmatpush1.msra.mxu0 0.0
  %748 = vmatprep.subr.mxu0 0.0
  %749 = vmatpush1.msra.mxu0 0.0
  %750 = vmatprep.subr.mxu0 0.0
  %751 = vmatpush1.msra.mxu0 0.0
  %752 = vmatprep.subr.mxu0 0.0
  %753 = vmatpush1.msra.mxu0 0.0
  %754 = vmatprep.subr.mxu0 0.0
  %755 = vmatpush1.msra.mxu0 0.0
  %756 = vmatprep.subr.mxu0 0.0
  %757 = vmatpush1.msra.mxu0 0.0
  %758 = vmatprep.subr.mxu0 0.0
  %759 = vmatpush1.msra.mxu0 0.0
  %760 = vmatprep.subr.mxu0 0.0
  %761 = vmatpush1.msra.mxu0 0.0
  %762 = vmatprep.subr.mxu0 0.0
  %763 = vmatpush1.msra.mxu0 0.0
  %764 = vmatprep.subr.mxu0 0.0
  %765 = vmatpush1.msra.mxu0 0.0
  %766 = vmatprep.subr.mxu0 0.0
  %767 = vmatpush1.msra.mxu0 0.0
  %768 = vmatprep.subr.mxu0 0.0
  %769 = vmatpush1.msra.mxu0 0.0
  %770 = vmatprep.subr.mxu0 0.0
  %771 = vmatpush1.msra.mxu0 0.0
  %772 = vmatprep.subr.mxu0 0.0
  %773 = vmatpush1.msra.mxu0 0.0
  %774 = vmatprep.subr.mxu0 0.0
  %775 = vmatpush1.msra.mxu0 0.0
  %776 = vmatprep.subr.mxu0 0.0
  %777 = vmatpush1.msra.mxu0 0.0
  %778 = vmatprep.subr.mxu0 0.0
  %779 = vmatpush1.msra.mxu0 0.0
  %780 = vmatprep.subr.mxu0 0.0
  %781 = vmatpush1.msra.mxu0 0.0
  %782 = vmatprep.subr.mxu0 0.0
  %783 = vmatpush1.msra.mxu0 0.0
  %784 = vmatprep.subr.mxu0 0.0
  %785 = vmatpush1.msra.mxu0 0.0
  %786 = vmatprep.subr.mxu0 0.0
  %787 = vmatpush1.msra.mxu0 0.0
  %788 = vmatprep.subr.mxu0 0.0
  %789 = vmatpush1.msra.mxu0 0.0
  %790 = vmatprep.subr.mxu0 0.0
  %791 = vmatpush1.msra.mxu0 0.0
  %792 = vmatprep.subr.mxu0 0.0
  %793 = vmatpush1.msra.mxu0 0.0
  %794 = vmatprep.subr.mxu0 0.0
  %795 = vmatpush1.msra.mxu0 0.0
  %796 = vmatprep.subr.mxu0 0.0
  %797 = vmatpush1.msra.mxu0 0.0
  %798 = vmatprep.mubr.f32.mxu0 0.0
  %799 = vmatmul.mubr.f32.gmra.mrb[0].mxu0 %v456
  %v800 = vpop.f32.mrb[0].mxu0
  %v801 = vadd.f32 %v437, %v800
  %v802 = vpop.f32.mrb[0].mxu0
  %803 = vmatprep.mubr.f32.mxu0 0.0
  %804 = vmatmul.mubr.f32.gmra.mrb[0].mxu0 %v459
  %v805 = vpop.f32.mrb[0].mxu0
  %v806 = vadd.f32 %v442, %v805
  %v807 = vpop.f32.mrb[0].mxu0
  %808 = vmatprep.mubr.f32.mxu0 0.0
  %809 = vmatmul.mubr.f32.gmra.mrb[0].mxu0 %v462
  %v810 = vpop.f32.mrb[0].mxu0
  %v811 = vadd.f32 %v447, %v810
  %v812 = vpop.f32.mrb[0].mxu0
  %813 = vmatprep.mubr.f32.mxu0 0.0
  %814 = vmatmul.mubr.f32.gmra.mrb[0].mxu0 %v465
  %v815 = vpop.f32.mrb[0].mxu0
  %v816 = vadd.f32 %v452, %v815
  %v817 = vpop.f32.mrb[0].mxu0
  %818 = vdwg.mxu0
  %819 = vrot.lane.b32.xlu0 %v20, 19
  %v820 = vpop.permute.xlu0 %819
  %821 = vrot.lane.b32.xlu0 %v21, 19
  %v822 = vpop.permute.xlu0 %821
  %823 = vrot.lane.b32.xlu0 %v22, 19
  %v824 = vpop.permute.xlu0 %823
  %825 = vrot.lane.b32.xlu0 %v23, 19
  %v826 = vpop.permute.xlu0 %825
  %827 = vrot.lane.b32.xlu0 %v24, 19
  %v828 = vpop.permute.xlu0 %827
  %829 = vrot.lane.b32.xlu0 %v25, 19
  %v830 = vpop.permute.xlu0 %829
  %831 = vrot.lane.b32.xlu0 %v26, 19
  %v832 = vpop.permute.xlu0 %831
  %vm833 = vcmp.lt.s32.totalorder %v50, 19
  %v834 = vsel %vm833, %v830, %v832
  %v835 = vsel %vm833, %v828, %v830
  %v836 = vsel %vm833, %v826, %v828
  %v837 = vsel %vm833, %v824, %v826
  %v838 = vsel %vm833, %v822, %v824
  %v839 = vsel %vm833, %v820, %v822
  %v840 = vsel %vm833, %v832, %v820
  %s841 = scalar_lea.vmem %s2, 64
  %v842 = vld [vmem:[%s841] sm:$0xff]
  %v843 = vld [vmem:[%s841 + $0x8] sm:$0xff]
  %v844 = vld [vmem:[%s841 + $0x10] sm:$0xff]
  %v845 = vld [vmem:[%s841 + $0x18] sm:$0xff]
  %v847 = vsel %vm90, %v842, 0
  %v850 = vsel %vm90, %v843, 0
  %v853 = vsel %vm90, %v844, 0
  %v856 = vsel %vm90, %v845, 0
  %858 = vmatprep.subr.mxu0 %v839
  %859 = vmatpush1.msra.mxu0 %v840
  %860 = vmatprep.subr.mxu0 0.0
  %861 = vmatpush1.msra.mxu0 0.0
  %862 = vmatprep.subr.mxu0 0.0
  %863 = vmatpush1.msra.mxu0 0.0
  %864 = vmatprep.subr.mxu0 0.0
  %865 = vmatpush1.msra.mxu0 0.0
  %866 = vmatprep.subr.mxu0 0.0
  %867 = vmatpush1.msra.mxu0 0.0
  %868 = vmatprep.subr.mxu0 0.0
  %869 = vmatpush1.msra.mxu0 0.0
  %870 = vmatprep.subr.mxu0 0.0
  %871 = vmatpush1.msra.mxu0 0.0
  %872 = vmatprep.subr.mxu0 0.0
  %873 = vmatpush1.msra.mxu0 0.0
  %874 = vmatprep.subr.mxu0 0.0
  %875 = vmatpush1.msra.mxu0 0.0
  %876 = vmatprep.subr.mxu0 0.0
  %877 = vmatpush1.msra.mxu0 0.0
  %878 = vmatprep.subr.mxu0 0.0
  %879 = vmatpush1.msra.mxu0 0.0
  %880 = vmatprep.subr.mxu0 0.0
  %881 = vmatpush1.msra.mxu0 0.0
  %882 = vmatprep.subr.mxu0 0.0
  %883 = vmatpush1.msra.mxu0 0.0
  %884 = vmatprep.subr.mxu0 0.0
  %885 = vmatpush1.msra.mxu0 0.0
  %886 = vmatprep.subr.mxu0 0.0
  %887 = vmatpush1.msra.mxu0 0.0
  %888 = vmatprep.subr.mxu0 0.0
  %889 = vmatpush1.msra.mxu0 0.0
  %890 = vmatprep.subr.mxu0 0.0
  %891 = vmatpush1.msra.mxu0 0.0
  %892 = vmatprep.subr.mxu0 0.0
  %893 = vmatpush1.msra.mxu0 0.0
  %894 = vmatprep.subr.mxu0 0.0
  %895 = vmatpush1.msra.mxu0 0.0
  %896 = vmatprep.subr.mxu0 0.0
  %897 = vmatpush1.msra.mxu0 0.0
  %898 = vmatprep.subr.mxu0 0.0
  %899 = vmatpush1.msra.mxu0 0.0
  %900 = vmatprep.subr.mxu0 0.0
  %901 = vmatpush1.msra.mxu0 0.0
  %902 = vmatprep.subr.mxu0 0.0
  %903 = vmatpush1.msra.mxu0 0.0
  %904 = vmatprep.subr.mxu0 0.0
  %905 = vmatpush1.msra.mxu0 0.0
  %906 = vmatprep.subr.mxu0 0.0
  %907 = vmatpush1.msra.mxu0 0.0
  %908 = vmatprep.subr.mxu0 0.0
  %909 = vmatpush1.msra.mxu0 0.0
  %910 = vmatprep.subr.mxu0 0.0
  %911 = vmatpush1.msra.mxu0 0.0
  %912 = vmatprep.subr.mxu0 0.0
  %913 = vmatpush1.msra.mxu0 0.0
  %914 = vmatprep.subr.mxu0 0.0
  %915 = vmatpush1.msra.mxu0 0.0
  %916 = vmatprep.subr.mxu0 0.0
  %917 = vmatpush1.msra.mxu0 0.0
  %918 = vmatprep.subr.mxu0 0.0
  %919 = vmatpush1.msra.mxu0 0.0
  %920 = vmatprep.subr.mxu0 0.0
  %921 = vmatpush1.msra.mxu0 0.0
  %922 = vmatprep.mubr.f32.mxu0 0.0
  %923 = vmatmul.mubr.f32.gmra.mrb[0].mxu0 %v847
  %v924 = vpop.f32.mrb[0].mxu0
  %v925 = vadd.f32 0.0, %v924
  %v926 = vpop.f32.mrb[0].mxu0
  %v927 = vadd.f32 0.0, %v926
  %928 = vmatprep.mubr.f32.mxu0 0.0
  %929 = vmatmul.mubr.f32.gmra.mrb[0].mxu0 %v850
  %v930 = vpop.f32.mrb[0].mxu0
  %v931 = vadd.f32 0.0, %v930
  %v932 = vpop.f32.mrb[0].mxu0
  %v933 = vadd.f32 0.0, %v932
  %934 = vmatprep.mubr.f32.mxu0 0.0
  %935 = vmatmul.mubr.f32.gmra.mrb[0].mxu0 %v853
  %v936 = vpop.f32.mrb[0].mxu0
  %v937 = vadd.f32 0.0, %v936
  %v938 = vpop.f32.mrb[0].mxu0
  %v939 = vadd.f32 0.0, %v938
  %940 = vmatprep.mubr.f32.mxu0 0.0
  %941 = vmatmul.mubr.f32.gmra.mrb[0].mxu0 %v856
  %v942 = vpop.f32.mrb[0].mxu0
  %v943 = vadd.f32 0.0, %v942
  %v944 = vpop.f32.mrb[0].mxu0
  %v945 = vadd.f32 0.0, %v944
  %946 = vdwg.mxu0
  %947 = vmatprep.subr.mxu0 %v837
  %948 = vmatpush1.msra.mxu0 %v838
  %949 = vmatprep.subr.mxu0 0.0
  %950 = vmatpush1.msra.mxu0 0.0
  %951 = vmatprep.subr.mxu0 0.0
  %952 = vmatpush1.msra.mxu0 0.0
  %953 = vmatprep.subr.mxu0 0.0
  %954 = vmatpush1.msra.mxu0 0.0
  %955 = vmatprep.subr.mxu0 0.0
  %956 = vmatpush1.msra.mxu0 0.0
  %957 = vmatprep.subr.mxu0 0.0
  %958 = vmatpush1.msra.mxu0 0.0
  %959 = vmatprep.subr.mxu0 0.0
  %960 = vmatpush1.msra.mxu0 0.0
  %961 = vmatprep.subr.mxu0 0.0
  %962 = vmatpush1.msra.mxu0 0.0
  %963 = vmatprep.subr.mxu0 0.0
  %964 = vmatpush1.msra.mxu0 0.0
  %965 = vmatprep.subr.mxu0 0.0
  %966 = vmatpush1.msra.mxu0 0.0
  %967 = vmatprep.subr.mxu0 0.0
  %968 = vmatpush1.msra.mxu0 0.0
  %969 = vmatprep.subr.mxu0 0.0
  %970 = vmatpush1.msra.mxu0 0.0
  %971 = vmatprep.subr.mxu0 0.0
  %972 = vmatpush1.msra.mxu0 0.0
  %973 = vmatprep.subr.mxu0 0.0
  %974 = vmatpush1.msra.mxu0 0.0
  %975 = vmatprep.subr.mxu0 0.0
  %976 = vmatpush1.msra.mxu0 0.0
  %977 = vmatprep.subr.mxu0 0.0
  %978 = vmatpush1.msra.mxu0 0.0
  %979 = vmatprep.subr.mxu0 0.0
  %980 = vmatpush1.msra.mxu0 0.0
  %981 = vmatprep.subr.mxu0 0.0
  %982 = vmatpush1.msra.mxu0 0.0
  %983 = vmatprep.subr.mxu0 0.0
  %984 = vmatpush1.msra.mxu0 0.0
  %985 = vmatprep.subr.mxu0 0.0
  %986 = vmatpush1.msra.mxu0 0.0
  %987 = vmatprep.subr.mxu0 0.0
  %988 = vmatpush1.msra.mxu0 0.0
  %989 = vmatprep.subr.mxu0 0.0
  %990 = vmatpush1.msra.mxu0 0.0
  %991 = vmatprep.subr.mxu0 0.0
  %992 = vmatpush1.msra.mxu0 0.0
  %993 = vmatprep.subr.mxu0 0.0
  %994 = vmatpush1.msra.mxu0 0.0
  %995 = vmatprep.subr.mxu0 0.0
  %996 = vmatpush1.msra.mxu0 0.0
  %997 = vmatprep.subr.mxu0 0.0
  %998 = vmatpush1.msra.mxu0 0.0
  %999 = vmatprep.subr.mxu0 0.0
  %1000 = vmatpush1.msra.mxu0 0.0
  %1001 = vmatprep.subr.mxu0 0.0
  %1002 = vmatpush1.msra.mxu0 0.0
  %1003 = vmatprep.subr.mxu0 0.0
  %1004 = vmatpush1.msra.mxu0 0.0
  %1005 = vmatprep.subr.mxu0 0.0
  %1006 = vmatpush1.msra.mxu0 0.0
  %1007 = vmatprep.subr.mxu0 0.0
  %1008 = vmatpush1.msra.mxu0 0.0
  %1009 = vmatprep.subr.mxu0 0.0
  %1010 = vmatpush1.msra.mxu0 0.0
  %1011 = vmatprep.mubr.f32.mxu0 0.0
  %1012 = vmatmul.mubr.f32.gmra.mrb[0].mxu0 %v847
  %v1013 = vpop.f32.mrb[0].mxu0
  %v1014 = vadd.f32 0.0, %v1013
  %v1015 = vpop.f32.mrb[0].mxu0
  %v1016 = vadd.f32 0.0, %v1015
  %1017 = vmatprep.mubr.f32.mxu0 0.0
  %1018 = vmatmul.mubr.f32.gmra.mrb[0].mxu0 %v850
  %v1019 = vpop.f32.mrb[0].mxu0
  %v1020 = vadd.f32 0.0, %v1019
  %v1021 = vpop.f32.mrb[0].mxu0
  %v1022 = vadd.f32 0.0, %v1021
  %1023 = vmatprep.mubr.f32.mxu0 0.0
  %1024 = vmatmul.mubr.f32.gmra.mrb[0].mxu0 %v853
  %v1025 = vpop.f32.mrb[0].mxu0
  %v1026 = vadd.f32 0.0, %v1025
  %v1027 = vpop.f32.mrb[0].mxu0
  %v1028 = vadd.f32 0.0, %v1027
  %1029 = vmatprep.mubr.f32.mxu0 0.0
  %1030 = vmatmul.mubr.f32.gmra.mrb[0].mxu0 %v856
  %v1031 = vpop.f32.mrb[0].mxu0
  %v1032 = vadd.f32 0.0, %v1031
  %v1033 = vpop.f32.mrb[0].mxu0
  %v1034 = vadd.f32 0.0, %v1033
  %1035 = vdwg.mxu0
  %1036 = vmatprep.subr.mxu0 %v835
  %1037 = vmatpush1.msra.mxu0 %v836
  %1038 = vmatprep.subr.mxu0 0.0
  %1039 = vmatpush1.msra.mxu0 0.0
  %1040 = vmatprep.subr.mxu0 0.0
  %1041 = vmatpush1.msra.mxu0 0.0
  %1042 = vmatprep.subr.mxu0 0.0
  %1043 = vmatpush1.msra.mxu0 0.0
  %1044 = vmatprep.subr.mxu0 0.0
  %1045 = vmatpush1.msra.mxu0 0.0
  %1046 = vmatprep.subr.mxu0 0.0
  %1047 = vmatpush1.msra.mxu0 0.0
  %1048 = vmatprep.subr.mxu0 0.0
  %1049 = vmatpush1.msra.mxu0 0.0
  %1050 = vmatprep.subr.mxu0 0.0
  %1051 = vmatpush1.msra.mxu0 0.0
  %1052 = vmatprep.subr.mxu0 0.0
  %1053 = vmatpush1.msra.mxu0 0.0
  %1054 = vmatprep.subr.mxu0 0.0
  %1055 = vmatpush1.msra.mxu0 0.0
  %1056 = vmatprep.subr.mxu0 0.0
  %1057 = vmatpush1.msra.mxu0 0.0
  %1058 = vmatprep.subr.mxu0 0.0
  %1059 = vmatpush1.msra.mxu0 0.0
  %1060 = vmatprep.subr.mxu0 0.0
  %1061 = vmatpush1.msra.mxu0 0.0
  %1062 = vmatprep.subr.mxu0 0.0
  %1063 = vmatpush1.msra.mxu0 0.0
  %1064 = vmatprep.subr.mxu0 0.0
  %1065 = vmatpush1.msra.mxu0 0.0
  %1066 = vmatprep.subr.mxu0 0.0
  %1067 = vmatpush1.msra.mxu0 0.0
  %1068 = vmatprep.subr.mxu0 0.0
  %1069 = vmatpush1.msra.mxu0 0.0
  %1070 = vmatprep.subr.mxu0 0.0
  %1071 = vmatpush1.msra.mxu0 0.0
  %1072 = vmatprep.subr.mxu0 0.0
  %1073 = vmatpush1.msra.mxu0 0.0
  %1074 = vmatprep.subr.mxu0 0.0
  %1075 = vmatpush1.msra.mxu0 0.0
  %1076 = vmatprep.subr.mxu0 0.0
  %1077 = vmatpush1.msra.mxu0 0.0
  %1078 = vmatprep.subr.mxu0 0.0
  %1079 = vmatpush1.msra.mxu0 0.0
  %1080 = vmatprep.subr.mxu0 0.0
  %1081 = vmatpush1.msra.mxu0 0.0
  %1082 = vmatprep.subr.mxu0 0.0
  %1083 = vmatpush1.msra.mxu0 0.0
  %1084 = vmatprep.subr.mxu0 0.0
  %1085 = vmatpush1.msra.mxu0 0.0
  %1086 = vmatprep.subr.mxu0 0.0
  %1087 = vmatpush1.msra.mxu0 0.0
  %1088 = vmatprep.subr.mxu0 0.0
  %1089 = vmatpush1.msra.mxu0 0.0
  %1090 = vmatprep.subr.mxu0 0.0
  %1091 = vmatpush1.msra.mxu0 0.0
  %1092 = vmatprep.subr.mxu0 0.0
  %1093 = vmatpush1.msra.mxu0 0.0
  %1094 = vmatprep.subr.mxu0 0.0
  %1095 = vmatpush1.msra.mxu0 0.0
  %1096 = vmatprep.subr.mxu0 0.0
  %1097 = vmatpush1.msra.mxu0 0.0
  %1098 = vmatprep.subr.mxu0 0.0
  %1099 = vmatpush1.msra.mxu0 0.0
  %1100 = vmatprep.mubr.f32.mxu0 0.0
  %1101 = vmatmul.mubr.f32.gmra.mrb[0].mxu0 %v847
  %v1102 = vpop.f32.mrb[0].mxu0
  %v1103 = vadd.f32 0.0, %v1102
  %v1104 = vpop.f32.mrb[0].mxu0
  %v1105 = vadd.f32 0.0, %v1104
  %1106 = vmatprep.mubr.f32.mxu0 0.0
  %1107 = vmatmul.mubr.f32.gmra.mrb[0].mxu0 %v850
  %v1108 = vpop.f32.mrb[0].mxu0
  %v1109 = vadd.f32 0.0, %v1108
  %v1110 = vpop.f32.mrb[0].mxu0
  %v1111 = vadd.f32 0.0, %v1110
  %1112 = vmatprep.mubr.f32.mxu0 0.0
  %1113 = vmatmul.mubr.f32.gmra.mrb[0].mxu0 %v853
  %v1114 = vpop.f32.mrb[0].mxu0
  %v1115 = vadd.f32 0.0, %v1114
  %v1116 = vpop.f32.mrb[0].mxu0
  %v1117 = vadd.f32 0.0, %v1116
  %1118 = vmatprep.mubr.f32.mxu0 0.0
  %1119 = vmatmul.mubr.f32.gmra.mrb[0].mxu0 %v856
  %v1120 = vpop.f32.mrb[0].mxu0
  %v1121 = vadd.f32 0.0, %v1120
  %v1122 = vpop.f32.mrb[0].mxu0
  %v1123 = vadd.f32 0.0, %v1122
  %1124 = vdwg.mxu0
  %1125 = vmatprep.subr.mxu0 0.0
  %1126 = vmatpush1.msra.mxu0 %v834
  %1127 = vmatprep.subr.mxu0 0.0
  %1128 = vmatpush1.msra.mxu0 0.0
  %1129 = vmatprep.subr.mxu0 0.0
  %1130 = vmatpush1.msra.mxu0 0.0
  %1131 = vmatprep.subr.mxu0 0.0
  %1132 = vmatpush1.msra.mxu0 0.0
  %1133 = vmatprep.subr.mxu0 0.0
  %1134 = vmatpush1.msra.mxu0 0.0
  %1135 = vmatprep.subr.mxu0 0.0
  %1136 = vmatpush1.msra.mxu0 0.0
  %1137 = vmatprep.subr.mxu0 0.0
  %1138 = vmatpush1.msra.mxu0 0.0
  %1139 = vmatprep.subr.mxu0 0.0
  %1140 = vmatpush1.msra.mxu0 0.0
  %1141 = vmatprep.subr.mxu0 0.0
  %1142 = vmatpush1.msra.mxu0 0.0
  %1143 = vmatprep.subr.mxu0 0.0
  %1144 = vmatpush1.msra.mxu0 0.0
  %1145 = vmatprep.subr.mxu0 0.0
  %1146 = vmatpush1.msra.mxu0 0.0
  %1147 = vmatprep.subr.mxu0 0.0
  %1148 = vmatpush1.msra.mxu0 0.0
  %1149 = vmatprep.subr.mxu0 0.0
  %1150 = vmatpush1.msra.mxu0 0.0
  %1151 = vmatprep.subr.mxu0 0.0
  %1152 = vmatpush1.msra.mxu0 0.0
  %1153 = vmatprep.subr.mxu0 0.0
  %1154 = vmatpush1.msra.mxu0 0.0
  %1155 = vmatprep.subr.mxu0 0.0
  %1156 = vmatpush1.msra.mxu0 0.0
  %1157 = vmatprep.subr.mxu0 0.0
  %1158 = vmatpush1.msra.mxu0 0.0
  %1159 = vmatprep.subr.mxu0 0.0
  %1160 = vmatpush1.msra.mxu0 0.0
  %1161 = vmatprep.subr.mxu0 0.0
  %1162 = vmatpush1.msra.mxu0 0.0
  %1163 = vmatprep.subr.mxu0 0.0
  %1164 = vmatpush1.msra.mxu0 0.0
  %1165 = vmatprep.subr.mxu0 0.0
  %1166 = vmatpush1.msra.mxu0 0.0
  %1167 = vmatprep.subr.mxu0 0.0
  %1168 = vmatpush1.msra.mxu0 0.0
  %1169 = vmatprep.subr.mxu0 0.0
  %1170 = vmatpush1.msra.mxu0 0.0
  %1171 = vmatprep.subr.mxu0 0.0
  %1172 = vmatpush1.msra.mxu0 0.0
  %1173 = vmatprep.subr.mxu0 0.0
  %1174 = vmatpush1.msra.mxu0 0.0
  %1175 = vmatprep.subr.mxu0 0.0
  %1176 = vmatpush1.msra.mxu0 0.0
  %1177 = vmatprep.subr.mxu0 0.0
  %1178 = vmatpush1.msra.mxu0 0.0
  %1179 = vmatprep.subr.mxu0 0.0
  %1180 = vmatpush1.msra.mxu0 0.0
  %1181 = vmatprep.subr.mxu0 0.0
  %1182 = vmatpush1.msra.mxu0 0.0
  %1183 = vmatprep.subr.mxu0 0.0
  %1184 = vmatpush1.msra.mxu0 0.0
  %1185 = vmatprep.subr.mxu0 0.0
  %1186 = vmatpush1.msra.mxu0 0.0
  %1187 = vmatprep.subr.mxu0 0.0
  %1188 = vmatpush1.msra.mxu0 0.0
  %1189 = vmatprep.mubr.f32.mxu0 0.0
  %1190 = vmatmul.mubr.f32.gmra.mrb[0].mxu0 %v847
  %v1191 = vpop.f32.mrb[0].mxu0
  %v1192 = vadd.f32 0.0, %v1191
  %v1193 = vpop.f32.mrb[0].mxu0
  %1194 = vmatprep.mubr.f32.mxu0 0.0
  %1195 = vmatmul.mubr.f32.gmra.mrb[0].mxu0 %v850
  %v1196 = vpop.f32.mrb[0].mxu0
  %v1197 = vadd.f32 0.0, %v1196
  %v1198 = vpop.f32.mrb[0].mxu0
  %1199 = vmatprep.mubr.f32.mxu0 0.0
  %1200 = vmatmul.mubr.f32.gmra.mrb[0].mxu0 %v853
  %v1201 = vpop.f32.mrb[0].mxu0
  %v1202 = vadd.f32 0.0, %v1201
  %v1203 = vpop.f32.mrb[0].mxu0
  %1204 = vmatprep.mubr.f32.mxu0 0.0
  %1205 = vmatmul.mubr.f32.gmra.mrb[0].mxu0 %v856
  %v1206 = vpop.f32.mrb[0].mxu0
  %v1207 = vadd.f32 0.0, %v1206
  %v1208 = vpop.f32.mrb[0].mxu0
  %1209 = vdwg.mxu0
  %v1210 = vadd.f32 %v534, %v925
  %v1211 = vadd.f32 %v536, %v927
  %v1212 = vadd.f32 %v623, %v1014
  %v1213 = vadd.f32 %v625, %v1016
  %v1214 = vadd.f32 %v712, %v1103
  %v1215 = vadd.f32 %v714, %v1105
  %v1216 = vadd.f32 %v801, %v1192
  %v1217 = vadd.f32 %v540, %v931
  %v1218 = vadd.f32 %v542, %v933
  %v1219 = vadd.f32 %v629, %v1020
  %v1220 = vadd.f32 %v631, %v1022
  %v1221 = vadd.f32 %v718, %v1109
  %v1222 = vadd.f32 %v720, %v1111
  %v1223 = vadd.f32 %v806, %v1197
  %v1224 = vadd.f32 %v546, %v937
  %v1225 = vadd.f32 %v548, %v939
  %v1226 = vadd.f32 %v635, %v1026
  %v1227 = vadd.f32 %v637, %v1028
  %v1228 = vadd.f32 %v724, %v1115
  %v1229 = vadd.f32 %v726, %v1117
  %v1230 = vadd.f32 %v811, %v1202
  %v1231 = vadd.f32 %v552, %v943
  %v1232 = vadd.f32 %v554, %v945
  %v1233 = vadd.f32 %v641, %v1032
  %v1234 = vadd.f32 %v643, %v1034
  %v1235 = vadd.f32 %v730, %v1121
  %v1236 = vadd.f32 %v732, %v1123
  %v1237 = vadd.f32 %v816, %v1207
  %1238 = vrot.lane.b32.xlu0 %v20, 1
  %v1239 = vpop.permute.xlu0 %1238
  %1240 = vrot.lane.b32.xlu0 %v21, 1
  %v1241 = vpop.permute.xlu0 %1240
  %1242 = vrot.lane.b32.xlu0 %v22, 1
  %v1243 = vpop.permute.xlu0 %1242
  %1244 = vrot.lane.b32.xlu0 %v23, 1
  %v1245 = vpop.permute.xlu0 %1244
  %1246 = vrot.lane.b32.xlu0 %v24, 1
  %v1247 = vpop.permute.xlu0 %1246
  %1248 = vrot.lane.b32.xlu0 %v25, 1
  %v1249 = vpop.permute.xlu0 %1248
  %1250 = vrot.lane.b32.xlu0 %v26, 1
  %v1251 = vpop.permute.xlu0 %1250
  %vm1252 = vcmp.lt.s32.totalorder %v50, 1
  %v1253 = vsel %vm1252, %v1249, %v1251
  %v1254 = vsel %vm1252, %v1247, %v1249
  %v1255 = vsel %vm1252, %v1245, %v1247
  %v1256 = vsel %vm1252, %v1243, %v1245
  %v1257 = vsel %vm1252, %v1241, %v1243
  %v1258 = vsel %vm1252, %v1239, %v1241
  %v1259 = vsel %vm1252, %v1251, %v1239
  %s1260 = scalar_lea.vmem %s2, 96
  %v1261 = vld [vmem:[%s1260] sm:$0xff]
  %v1262 = vld [vmem:[%s1260 + $0x8] sm:$0xff]
  %v1263 = vld [vmem:[%s1260 + $0x10] sm:$0xff]
  %v1264 = vld [vmem:[%s1260 + $0x18] sm:$0xff]
  %v1266 = vsel %vm90, %v1261, 0
  %v1269 = vsel %vm90, %v1262, 0
  %v1272 = vsel %vm90, %v1263, 0
  %v1275 = vsel %vm90, %v1264, 0
  %1277 = vmatprep.subr.mxu0 %v1258
  %1278 = vmatpush1.msra.mxu0 %v1259
  %1279 = vmatprep.subr.mxu0 0.0
  %1280 = vmatpush1.msra.mxu0 0.0
  %1281 = vmatprep.subr.mxu0 0.0
  %1282 = vmatpush1.msra.mxu0 0.0
  %1283 = vmatprep.subr.mxu0 0.0
  %1284 = vmatpush1.msra.mxu0 0.0
  %1285 = vmatprep.subr.mxu0 0.0
  %1286 = vmatpush1.msra.mxu0 0.0
  %1287 = vmatprep.subr.mxu0 0.0
  %1288 = vmatpush1.msra.mxu0 0.0
  %1289 = vmatprep.subr.mxu0 0.0
  %1290 = vmatpush1.msra.mxu0 0.0
  %1291 = vmatprep.subr.mxu0 0.0
  %1292 = vmatpush1.msra.mxu0 0.0
  %1293 = vmatprep.subr.mxu0 0.0
  %1294 = vmatpush1.msra.mxu0 0.0
  %1295 = vmatprep.subr.mxu0 0.0
  %1296 = vmatpush1.msra.mxu0 0.0
  %1297 = vmatprep.subr.mxu0 0.0
  %1298 = vmatpush1.msra.mxu0 0.0
  %1299 = vmatprep.subr.mxu0 0.0
  %1300 = vmatpush1.msra.mxu0 0.0
  %1301 = vmatprep.subr.mxu0 0.0
  %1302 = vmatpush1.msra.mxu0 0.0
  %1303 = vmatprep.subr.mxu0 0.0
  %1304 = vmatpush1.msra.mxu0 0.0
  %1305 = vmatprep.subr.mxu0 0.0
  %1306 = vmatpush1.msra.mxu0 0.0
  %1307 = vmatprep.subr.mxu0 0.0
  %1308 = vmatpush1.msra.mxu0 0.0
  %1309 = vmatprep.subr.mxu0 0.0
  %1310 = vmatpush1.msra.mxu0 0.0
  %1311 = vmatprep.subr.mxu0 0.0
  %1312 = vmatpush1.msra.mxu0 0.0
  %1313 = vmatprep.subr.mxu0 0.0
  %1314 = vmatpush1.msra.mxu0 0.0
  %1315 = vmatprep.subr.mxu0 0.0
  %1316 = vmatpush1.msra.mxu0 0.0
  %1317 = vmatprep.subr.mxu0 0.0
  %1318 = vmatpush1.msra.mxu0 0.0
  %1319 = vmatprep.subr.mxu0 0.0
  %1320 = vmatpush1.msra.mxu0 0.0
  %1321 = vmatprep.subr.mxu0 0.0
  %1322 = vmatpush1.msra.mxu0 0.0
  %1323 = vmatprep.subr.mxu0 0.0
  %1324 = vmatpush1.msra.mxu0 0.0
  %1325 = vmatprep.subr.mxu0 0.0
  %1326 = vmatpush1.msra.mxu0 0.0
  %1327 = vmatprep.subr.mxu0 0.0
  %1328 = vmatpush1.msra.mxu0 0.0
  %1329 = vmatprep.subr.mxu0 0.0
  %1330 = vmatpush1.msra.mxu0 0.0
  %1331 = vmatprep.subr.mxu0 0.0
  %1332 = vmatpush1.msra.mxu0 0.0
  %1333 = vmatprep.subr.mxu0 0.0
  %1334 = vmatpush1.msra.mxu0 0.0
  %1335 = vmatprep.subr.mxu0 0.0
  %1336 = vmatpush1.msra.mxu0 0.0
  %1337 = vmatprep.subr.mxu0 0.0
  %1338 = vmatpush1.msra.mxu0 0.0
  %1339 = vmatprep.subr.mxu0 0.0
  %1340 = vmatpush1.msra.mxu0 0.0
  %1341 = vmatprep.mubr.f32.mxu0 0.0
  %1342 = vmatmul.mubr.f32.gmra.mrb[0].mxu0 %v1266
  %v1343 = vpop.f32.mrb[0].mxu0
  %v1344 = vadd.f32 0.0, %v1343
  %v1345 = vpop.f32.mrb[0].mxu0
  %v1346 = vadd.f32 0.0, %v1345
  %1347 = vmatprep.mubr.f32.mxu0 0.0
  %1348 = vmatmul.mubr.f32.gmra.mrb[0].mxu0 %v1269
  %v1349 = vpop.f32.mrb[0].mxu0
  %v1350 = vadd.f32 0.0, %v1349
  %v1351 = vpop.f32.mrb[0].mxu0
  %v1352 = vadd.f32 0.0, %v1351
  %1353 = vmatprep.mubr.f32.mxu0 0.0
  %1354 = vmatmul.mubr.f32.gmra.mrb[0].mxu0 %v1272
  %v1355 = vpop.f32.mrb[0].mxu0
  %v1356 = vadd.f32 0.0, %v1355
  %v1357 = vpop.f32.mrb[0].mxu0
  %v1358 = vadd.f32 0.0, %v1357
  %1359 = vmatprep.mubr.f32.mxu0 0.0
  %1360 = vmatmul.mubr.f32.gmra.mrb[0].mxu0 %v1275
  %v1361 = vpop.f32.mrb[0].mxu0
  %v1362 = vadd.f32 0.0, %v1361
  %v1363 = vpop.f32.mrb[0].mxu0
  %v1364 = vadd.f32 0.0, %v1363
  %1365 = vdwg.mxu0
  %1366 = vmatprep.subr.mxu0 %v1256
  %1367 = vmatpush1.msra.mxu0 %v1257
  %1368 = vmatprep.subr.mxu0 0.0
  %1369 = vmatpush1.msra.mxu0 0.0
  %1370 = vmatprep.subr.mxu0 0.0
  %1371 = vmatpush1.msra.mxu0 0.0
  %1372 = vmatprep.subr.mxu0 0.0
  %1373 = vmatpush1.msra.mxu0 0.0
  %1374 = vmatprep.subr.mxu0 0.0
  %1375 = vmatpush1.msra.mxu0 0.0
  %1376 = vmatprep.subr.mxu0 0.0
  %1377 = vmatpush1.msra.mxu0 0.0
  %1378 = vmatprep.subr.mxu0 0.0
  %1379 = vmatpush1.msra.mxu0 0.0
  %1380 = vmatprep.subr.mxu0 0.0
  %1381 = vmatpush1.msra.mxu0 0.0
  %1382 = vmatprep.subr.mxu0 0.0
  %1383 = vmatpush1.msra.mxu0 0.0
  %1384 = vmatprep.subr.mxu0 0.0
  %1385 = vmatpush1.msra.mxu0 0.0
  %1386 = vmatprep.subr.mxu0 0.0
  %1387 = vmatpush1.msra.mxu0 0.0
  %1388 = vmatprep.subr.mxu0 0.0
  %1389 = vmatpush1.msra.mxu0 0.0
  %1390 = vmatprep.subr.mxu0 0.0
  %1391 = vmatpush1.msra.mxu0 0.0
  %1392 = vmatprep.subr.mxu0 0.0
  %1393 = vmatpush1.msra.mxu0 0.0
  %1394 = vmatprep.subr.mxu0 0.0
  %1395 = vmatpush1.msra.mxu0 0.0
  %1396 = vmatprep.subr.mxu0 0.0
  %1397 = vmatpush1.msra.mxu0 0.0
  %1398 = vmatprep.subr.mxu0 0.0
  %1399 = vmatpush1.msra.mxu0 0.0
  %1400 = vmatprep.subr.mxu0 0.0
  %1401 = vmatpush1.msra.mxu0 0.0
  %1402 = vmatprep.subr.mxu0 0.0
  %1403 = vmatpush1.msra.mxu0 0.0
  %1404 = vmatprep.subr.mxu0 0.0
  %1405 = vmatpush1.msra.mxu0 0.0
  %1406 = vmatprep.subr.mxu0 0.0
  %1407 = vmatpush1.msra.mxu0 0.0
  %1408 = vmatprep.subr.mxu0 0.0
  %1409 = vmatpush1.msra.mxu0 0.0
  %1410 = vmatprep.subr.mxu0 0.0
  %1411 = vmatpush1.msra.mxu0 0.0
  %1412 = vmatprep.subr.mxu0 0.0
  %1413 = vmatpush1.msra.mxu0 0.0
  %1414 = vmatprep.subr.mxu0 0.0
  %1415 = vmatpush1.msra.mxu0 0.0
  %1416 = vmatprep.subr.mxu0 0.0
  %1417 = vmatpush1.msra.mxu0 0.0
  %1418 = vmatprep.subr.mxu0 0.0
  %1419 = vmatpush1.msra.mxu0 0.0
  %1420 = vmatprep.subr.mxu0 0.0
  %1421 = vmatpush1.msra.mxu0 0.0
  %1422 = vmatprep.subr.mxu0 0.0
  %1423 = vmatpush1.msra.mxu0 0.0
  %1424 = vmatprep.subr.mxu0 0.0
  %1425 = vmatpush1.msra.mxu0 0.0
  %1426 = vmatprep.subr.mxu0 0.0
  %1427 = vmatpush1.msra.mxu0 0.0
  %1428 = vmatprep.subr.mxu0 0.0
  %1429 = vmatpush1.msra.mxu0 0.0
  %1430 = vmatprep.mubr.f32.mxu0 0.0
  %1431 = vmatmul.mubr.f32.gmra.mrb[0].mxu0 %v1266
  %v1432 = vpop.f32.mrb[0].mxu0
  %v1433 = vadd.f32 0.0, %v1432
  %v1434 = vpop.f32.mrb[0].mxu0
  %v1435 = vadd.f32 0.0, %v1434
  %1436 = vmatprep.mubr.f32.mxu0 0.0
  %1437 = vmatmul.mubr.f32.gmra.mrb[0].mxu0 %v1269
  %v1438 = vpop.f32.mrb[0].mxu0
  %v1439 = vadd.f32 0.0, %v1438
  %v1440 = vpop.f32.mrb[0].mxu0
  %v1441 = vadd.f32 0.0, %v1440
  %1442 = vmatprep.mubr.f32.mxu0 0.0
  %1443 = vmatmul.mubr.f32.gmra.mrb[0].mxu0 %v1272
  %v1444 = vpop.f32.mrb[0].mxu0
  %v1445 = vadd.f32 0.0, %v1444
  %v1446 = vpop.f32.mrb[0].mxu0
  %v1447 = vadd.f32 0.0, %v1446
  %1448 = vmatprep.mubr.f32.mxu0 0.0
  %1449 = vmatmul.mubr.f32.gmra.mrb[0].mxu0 %v1275
  %v1450 = vpop.f32.mrb[0].mxu0
  %v1451 = vadd.f32 0.0, %v1450
  %v1452 = vpop.f32.mrb[0].mxu0
  %v1453 = vadd.f32 0.0, %v1452
  %1454 = vdwg.mxu0
  %1455 = vmatprep.subr.mxu0 %v1254
  %1456 = vmatpush1.msra.mxu0 %v1255
  %1457 = vmatprep.subr.mxu0 0.0
  %1458 = vmatpush1.msra.mxu0 0.0
  %1459 = vmatprep.subr.mxu0 0.0
  %1460 = vmatpush1.msra.mxu0 0.0
  %1461 = vmatprep.subr.mxu0 0.0
  %1462 = vmatpush1.msra.mxu0 0.0
  %1463 = vmatprep.subr.mxu0 0.0
  %1464 = vmatpush1.msra.mxu0 0.0
  %1465 = vmatprep.subr.mxu0 0.0
  %1466 = vmatpush1.msra.mxu0 0.0
  %1467 = vmatprep.subr.mxu0 0.0
  %1468 = vmatpush1.msra.mxu0 0.0
  %1469 = vmatprep.subr.mxu0 0.0
  %1470 = vmatpush1.msra.mxu0 0.0
  %1471 = vmatprep.subr.mxu0 0.0
  %1472 = vmatpush1.msra.mxu0 0.0
  %1473 = vmatprep.subr.mxu0 0.0
  %1474 = vmatpush1.msra.mxu0 0.0
  %1475 = vmatprep.subr.mxu0 0.0
  %1476 = vmatpush1.msra.mxu0 0.0
  %1477 = vmatprep.subr.mxu0 0.0
  %1478 = vmatpush1.msra.mxu0 0.0
  %1479 = vmatprep.subr.mxu0 0.0
  %1480 = vmatpush1.msra.mxu0 0.0
  %1481 = vmatprep.subr.mxu0 0.0
  %1482 = vmatpush1.msra.mxu0 0.0
  %1483 = vmatprep.subr.mxu0 0.0
  %1484 = vmatpush1.msra.mxu0 0.0
  %1485 = vmatprep.subr.mxu0 0.0
  %1486 = vmatpush1.msra.mxu0 0.0
  %1487 = vmatprep.subr.mxu0 0.0
  %1488 = vmatpush1.msra.mxu0 0.0
  %1489 = vmatprep.subr.mxu0 0.0
  %1490 = vmatpush1.msra.mxu0 0.0
  %1491 = vmatprep.subr.mxu0 0.0
  %1492 = vmatpush1.msra.mxu0 0.0
  %1493 = vmatprep.subr.mxu0 0.0
  %1494 = vmatpush1.msra.mxu0 0.0
  %1495 = vmatprep.subr.mxu0 0.0
  %1496 = vmatpush1.msra.mxu0 0.0
  %1497 = vmatprep.subr.mxu0 0.0
  %1498 = vmatpush1.msra.mxu0 0.0
  %1499 = vmatprep.subr.mxu0 0.0
  %1500 = vmatpush1.msra.mxu0 0.0
  %1501 = vmatprep.subr.mxu0 0.0
  %1502 = vmatpush1.msra.mxu0 0.0
  %1503 = vmatprep.subr.mxu0 0.0
  %1504 = vmatpush1.msra.mxu0 0.0
  %1505 = vmatprep.subr.mxu0 0.0
  %1506 = vmatpush1.msra.mxu0 0.0
  %1507 = vmatprep.subr.mxu0 0.0
  %1508 = vmatpush1.msra.mxu0 0.0
  %1509 = vmatprep.subr.mxu0 0.0
  %1510 = vmatpush1.msra.mxu0 0.0
  %1511 = vmatprep.subr.mxu0 0.0
  %1512 = vmatpush1.msra.mxu0 0.0
  %1513 = vmatprep.subr.mxu0 0.0
  %1514 = vmatpush1.msra.mxu0 0.0
  %1515 = vmatprep.subr.mxu0 0.0
  %1516 = vmatpush1.msra.mxu0 0.0
  %1517 = vmatprep.subr.mxu0 0.0
  %1518 = vmatpush1.msra.mxu0 0.0
  %1519 = vmatprep.mubr.f32.mxu0 0.0
  %1520 = vmatmul.mubr.f32.gmra.mrb[0].mxu0 %v1266
  %v1521 = vpop.f32.mrb[0].mxu0
  %v1522 = vadd.f32 0.0, %v1521
  %v1523 = vpop.f32.mrb[0].mxu0
  %v1524 = vadd.f32 0.0, %v1523
  %1525 = vmatprep.mubr.f32.mxu0 0.0
  %1526 = vmatmul.mubr.f32.gmra.mrb[0].mxu0 %v1269
  %v1527 = vpop.f32.mrb[0].mxu0
  %v1528 = vadd.f32 0.0, %v1527
  %v1529 = vpop.f32.mrb[0].mxu0
  %v1530 = vadd.f32 0.0, %v1529
  %1531 = vmatprep.mubr.f32.mxu0 0.0
  %1532 = vmatmul.mubr.f32.gmra.mrb[0].mxu0 %v1272
  %v1533 = vpop.f32.mrb[0].mxu0
  %v1534 = vadd.f32 0.0, %v1533
  %v1535 = vpop.f32.mrb[0].mxu0
  %v1536 = vadd.f32 0.0, %v1535
  %1537 = vmatprep.mubr.f32.mxu0 0.0
  %1538 = vmatmul.mubr.f32.gmra.mrb[0].mxu0 %v1275
  %v1539 = vpop.f32.mrb[0].mxu0
  %v1540 = vadd.f32 0.0, %v1539
  %v1541 = vpop.f32.mrb[0].mxu0
  %v1542 = vadd.f32 0.0, %v1541
  %1543 = vdwg.mxu0
  %1544 = vmatprep.subr.mxu0 0.0
  %1545 = vmatpush1.msra.mxu0 %v1253
  %1546 = vmatprep.subr.mxu0 0.0
  %1547 = vmatpush1.msra.mxu0 0.0
  %1548 = vmatprep.subr.mxu0 0.0
  %1549 = vmatpush1.msra.mxu0 0.0
  %1550 = vmatprep.subr.mxu0 0.0
  %1551 = vmatpush1.msra.mxu0 0.0
  %1552 = vmatprep.subr.mxu0 0.0
  %1553 = vmatpush1.msra.mxu0 0.0
  %1554 = vmatprep.subr.mxu0 0.0
  %1555 = vmatpush1.msra.mxu0 0.0
  %1556 = vmatprep.subr.mxu0 0.0
  %1557 = vmatpush1.msra.mxu0 0.0
  %1558 = vmatprep.subr.mxu0 0.0
  %1559 = vmatpush1.msra.mxu0 0.0
  %1560 = vmatprep.subr.mxu0 0.0
  %1561 = vmatpush1.msra.mxu0 0.0
  %1562 = vmatprep.subr.mxu0 0.0
  %1563 = vmatpush1.msra.mxu0 0.0
  %1564 = vmatprep.subr.mxu0 0.0
  %1565 = vmatpush1.msra.mxu0 0.0
  %1566 = vmatprep.subr.mxu0 0.0
  %1567 = vmatpush1.msra.mxu0 0.0
  %1568 = vmatprep.subr.mxu0 0.0
  %1569 = vmatpush1.msra.mxu0 0.0
  %1570 = vmatprep.subr.mxu0 0.0
  %1571 = vmatpush1.msra.mxu0 0.0
  %1572 = vmatprep.subr.mxu0 0.0
  %1573 = vmatpush1.msra.mxu0 0.0
  %1574 = vmatprep.subr.mxu0 0.0
  %1575 = vmatpush1.msra.mxu0 0.0
  %1576 = vmatprep.subr.mxu0 0.0
  %1577 = vmatpush1.msra.mxu0 0.0
  %1578 = vmatprep.subr.mxu0 0.0
  %1579 = vmatpush1.msra.mxu0 0.0
  %1580 = vmatprep.subr.mxu0 0.0
  %1581 = vmatpush1.msra.mxu0 0.0
  %1582 = vmatprep.subr.mxu0 0.0
  %1583 = vmatpush1.msra.mxu0 0.0
  %1584 = vmatprep.subr.mxu0 0.0
  %1585 = vmatpush1.msra.mxu0 0.0
  %1586 = vmatprep.subr.mxu0 0.0
  %1587 = vmatpush1.msra.mxu0 0.0
  %1588 = vmatprep.subr.mxu0 0.0
  %1589 = vmatpush1.msra.mxu0 0.0
  %1590 = vmatprep.subr.mxu0 0.0
  %1591 = vmatpush1.msra.mxu0 0.0
  %1592 = vmatprep.subr.mxu0 0.0
  %1593 = vmatpush1.msra.mxu0 0.0
  %1594 = vmatprep.subr.mxu0 0.0
  %1595 = vmatpush1.msra.mxu0 0.0
  %1596 = vmatprep.subr.mxu0 0.0
  %1597 = vmatpush1.msra.mxu0 0.0
  %1598 = vmatprep.subr.mxu0 0.0
  %1599 = vmatpush1.msra.mxu0 0.0
  %1600 = vmatprep.subr.mxu0 0.0
  %1601 = vmatpush1.msra.mxu0 0.0
  %1602 = vmatprep.subr.mxu0 0.0
  %1603 = vmatpush1.msra.mxu0 0.0
  %1604 = vmatprep.subr.mxu0 0.0
  %1605 = vmatpush1.msra.mxu0 0.0
  %1606 = vmatprep.subr.mxu0 0.0
  %1607 = vmatpush1.msra.mxu0 0.0
  %1608 = vmatprep.mubr.f32.mxu0 0.0
  %1609 = vmatmul.mubr.f32.gmra.mrb[0].mxu0 %v1266
  %v1610 = vpop.f32.mrb[0].mxu0
  %v1611 = vadd.f32 0.0, %v1610
  %v1612 = vpop.f32.mrb[0].mxu0
  %1613 = vmatprep.mubr.f32.mxu0 0.0
  %1614 = vmatmul.mubr.f32.gmra.mrb[0].mxu0 %v1269
  %v1615 = vpop.f32.mrb[0].mxu0
  %v1616 = vadd.f32 0.0, %v1615
  %v1617 = vpop.f32.mrb[0].mxu0
  %1618 = vmatprep.mubr.f32.mxu0 0.0
  %1619 = vmatmul.mubr.f32.gmra.mrb[0].mxu0 %v1272
  %v1620 = vpop.f32.mrb[0].mxu0
  %v1621 = vadd.f32 0.0, %v1620
  %v1622 = vpop.f32.mrb[0].mxu0
  %1623 = vmatprep.mubr.f32.mxu0 0.0
  %1624 = vmatmul.mubr.f32.gmra.mrb[0].mxu0 %v1275
  %v1625 = vpop.f32.mrb[0].mxu0
  %v1626 = vadd.f32 0.0, %v1625
  %v1627 = vpop.f32.mrb[0].mxu0
  %1628 = vdwg.mxu0
  %v1629 = vadd.f32 %v1210, %v1344
  %v1630 = vadd.f32 %v1211, %v1346
  %v1631 = vadd.f32 %v1212, %v1433
  %v1632 = vadd.f32 %v1213, %v1435
  %v1633 = vadd.f32 %v1214, %v1522
  %v1634 = vadd.f32 %v1215, %v1524
  %v1635 = vadd.f32 %v1216, %v1611
  %v1636 = vadd.f32 %v1217, %v1350
  %v1637 = vadd.f32 %v1218, %v1352
  %v1638 = vadd.f32 %v1219, %v1439
  %v1639 = vadd.f32 %v1220, %v1441
  %v1640 = vadd.f32 %v1221, %v1528
  %v1641 = vadd.f32 %v1222, %v1530
  %v1642 = vadd.f32 %v1223, %v1616
  %v1643 = vadd.f32 %v1224, %v1356
  %v1644 = vadd.f32 %v1225, %v1358
  %v1645 = vadd.f32 %v1226, %v1445
  %v1646 = vadd.f32 %v1227, %v1447
  %v1647 = vadd.f32 %v1228, %v1534
  %v1648 = vadd.f32 %v1229, %v1536
  %v1649 = vadd.f32 %v1230, %v1621
  %v1650 = vadd.f32 %v1231, %v1362
  %v1651 = vadd.f32 %v1232, %v1364
  %v1652 = vadd.f32 %v1233, %v1451
  %v1653 = vadd.f32 %v1234, %v1453
  %v1654 = vadd.f32 %v1235, %v1540
  %v1655 = vadd.f32 %v1236, %v1542
  %v1656 = vadd.f32 %v1237, %v1626
  %v1657 = vadd.f32 %v84, %v1259
  %v1658 = vadd.f32 %v83, %v1258
  %v1659 = vadd.f32 %v82, %v1257
  %v1660 = vadd.f32 %v81, %v1256
  %v1661 = vadd.f32 %v80, %v1255
  %v1662 = vadd.f32 %v79, %v1254
  %v1663 = vadd.f32 %v78, %v1253
  %s1664 = scalar_lea.vmem %s2, 128
  %v1665 = vld [vmem:[%s1664] sm:$0xff]
  %v1666 = vld [vmem:[%s1664 + $0x8] sm:$0xff]
  %v1667 = vld [vmem:[%s1664 + $0x10] sm:$0xff]
  %v1668 = vld [vmem:[%s1664 + $0x18] sm:$0xff]
  %v1670 = vsel %vm90, %v1665, 0
  %v1673 = vsel %vm90, %v1666, 0
  %v1676 = vsel %vm90, %v1667, 0
  %v1679 = vsel %vm90, %v1668, 0
  %1681 = vmatprep.subr.mxu0 %v21
  %1682 = vmatpush1.msra.mxu0 %v20
  %1683 = vmatprep.subr.mxu0 0.0
  %1684 = vmatpush1.msra.mxu0 0.0
  %1685 = vmatprep.subr.mxu0 0.0
  %1686 = vmatpush1.msra.mxu0 0.0
  %1687 = vmatprep.subr.mxu0 0.0
  %1688 = vmatpush1.msra.mxu0 0.0
  %1689 = vmatprep.subr.mxu0 0.0
  %1690 = vmatpush1.msra.mxu0 0.0
  %1691 = vmatprep.subr.mxu0 0.0
  %1692 = vmatpush1.msra.mxu0 0.0
  %1693 = vmatprep.subr.mxu0 0.0
  %1694 = vmatpush1.msra.mxu0 0.0
  %1695 = vmatprep.subr.mxu0 0.0
  %1696 = vmatpush1.msra.mxu0 0.0
  %1697 = vmatprep.subr.mxu0 0.0
  %1698 = vmatpush1.msra.mxu0 0.0
  %1699 = vmatprep.subr.mxu0 0.0
  %1700 = vmatpush1.msra.mxu0 0.0
  %1701 = vmatprep.subr.mxu0 0.0
  %1702 = vmatpush1.msra.mxu0 0.0
  %1703 = vmatprep.subr.mxu0 0.0
  %1704 = vmatpush1.msra.mxu0 0.0
  %1705 = vmatprep.subr.mxu0 0.0
  %1706 = vmatpush1.msra.mxu0 0.0
  %1707 = vmatprep.subr.mxu0 0.0
  %1708 = vmatpush1.msra.mxu0 0.0
  %1709 = vmatprep.subr.mxu0 0.0
  %1710 = vmatpush1.msra.mxu0 0.0
  %1711 = vmatprep.subr.mxu0 0.0
  %1712 = vmatpush1.msra.mxu0 0.0
  %1713 = vmatprep.subr.mxu0 0.0
  %1714 = vmatpush1.msra.mxu0 0.0
  %1715 = vmatprep.subr.mxu0 0.0
  %1716 = vmatpush1.msra.mxu0 0.0
  %1717 = vmatprep.subr.mxu0 0.0
  %1718 = vmatpush1.msra.mxu0 0.0
  %1719 = vmatprep.subr.mxu0 0.0
  %1720 = vmatpush1.msra.mxu0 0.0
  %1721 = vmatprep.subr.mxu0 0.0
  %1722 = vmatpush1.msra.mxu0 0.0
  %1723 = vmatprep.subr.mxu0 0.0
  %1724 = vmatpush1.msra.mxu0 0.0
  %1725 = vmatprep.subr.mxu0 0.0
  %1726 = vmatpush1.msra.mxu0 0.0
  %1727 = vmatprep.subr.mxu0 0.0
  %1728 = vmatpush1.msra.mxu0 0.0
  %1729 = vmatprep.subr.mxu0 0.0
  %1730 = vmatpush1.msra.mxu0 0.0
  %1731 = vmatprep.subr.mxu0 0.0
  %1732 = vmatpush1.msra.mxu0 0.0
  %1733 = vmatprep.subr.mxu0 0.0
  %1734 = vmatpush1.msra.mxu0 0.0
  %1735 = vmatprep.subr.mxu0 0.0
  %1736 = vmatpush1.msra.mxu0 0.0
  %1737 = vmatprep.subr.mxu0 0.0
  %1738 = vmatpush1.msra.mxu0 0.0
  %1739 = vmatprep.subr.mxu0 0.0
  %1740 = vmatpush1.msra.mxu0 0.0
  %1741 = vmatprep.subr.mxu0 0.0
  %1742 = vmatpush1.msra.mxu0 0.0
  %1743 = vmatprep.subr.mxu0 0.0
  %1744 = vmatpush1.msra.mxu0 0.0
  %1745 = vmatprep.mubr.f32.mxu0 0.0
  %1746 = vmatmul.mubr.f32.gmra.mrb[0].mxu0 %v1670
  %v1747 = vpop.f32.mrb[0].mxu0
  %v1748 = vadd.f32 0.0, %v1747
  %v1749 = vpop.f32.mrb[0].mxu0
  %v1750 = vadd.f32 0.0, %v1749
  %1751 = vmatprep.mubr.f32.mxu0 0.0
  %1752 = vmatmul.mubr.f32.gmra.mrb[0].mxu0 %v1673
  %v1753 = vpop.f32.mrb[0].mxu0
  %v1754 = vadd.f32 0.0, %v1753
  %v1755 = vpop.f32.mrb[0].mxu0
  %v1756 = vadd.f32 0.0, %v1755
  %1757 = vmatprep.mubr.f32.mxu0 0.0
  %1758 = vmatmul.mubr.f32.gmra.mrb[0].mxu0 %v1676
  %v1759 = vpop.f32.mrb[0].mxu0
  %v1760 = vadd.f32 0.0, %v1759
  %v1761 = vpop.f32.mrb[0].mxu0
  %v1762 = vadd.f32 0.0, %v1761
  %1763 = vmatprep.mubr.f32.mxu0 0.0
  %1764 = vmatmul.mubr.f32.gmra.mrb[0].mxu0 %v1679
  %v1765 = vpop.f32.mrb[0].mxu0
  %v1766 = vadd.f32 0.0, %v1765
  %v1767 = vpop.f32.mrb[0].mxu0
  %v1768 = vadd.f32 0.0, %v1767
  %1769 = vdwg.mxu0
  %1770 = vmatprep.subr.mxu0 %v23
  %1771 = vmatpush1.msra.mxu0 %v22
  %1772 = vmatprep.subr.mxu0 0.0
  %1773 = vmatpush1.msra.mxu0 0.0
  %1774 = vmatprep.subr.mxu0 0.0
  %1775 = vmatpush1.msra.mxu0 0.0
  %1776 = vmatprep.subr.mxu0 0.0
  %1777 = vmatpush1.msra.mxu0 0.0
  %1778 = vmatprep.subr.mxu0 0.0
  %1779 = vmatpush1.msra.mxu0 0.0
  %1780 = vmatprep.subr.mxu0 0.0
  %1781 = vmatpush1.msra.mxu0 0.0
  %1782 = vmatprep.subr.mxu0 0.0
  %1783 = vmatpush1.msra.mxu0 0.0
  %1784 = vmatprep.subr.mxu0 0.0
  %1785 = vmatpush1.msra.mxu0 0.0
  %1786 = vmatprep.subr.mxu0 0.0
  %1787 = vmatpush1.msra.mxu0 0.0
  %1788 = vmatprep.subr.mxu0 0.0
  %1789 = vmatpush1.msra.mxu0 0.0
  %1790 = vmatprep.subr.mxu0 0.0
  %1791 = vmatpush1.msra.mxu0 0.0
  %1792 = vmatprep.subr.mxu0 0.0
  %1793 = vmatpush1.msra.mxu0 0.0
  %1794 = vmatprep.subr.mxu0 0.0
  %1795 = vmatpush1.msra.mxu0 0.0
  %1796 = vmatprep.subr.mxu0 0.0
  %1797 = vmatpush1.msra.mxu0 0.0
  %1798 = vmatprep.subr.mxu0 0.0
  %1799 = vmatpush1.msra.mxu0 0.0
  %1800 = vmatprep.subr.mxu0 0.0
  %1801 = vmatpush1.msra.mxu0 0.0
  %1802 = vmatprep.subr.mxu0 0.0
  %1803 = vmatpush1.msra.mxu0 0.0
  %1804 = vmatprep.subr.mxu0 0.0
  %1805 = vmatpush1.msra.mxu0 0.0
  %1806 = vmatprep.subr.mxu0 0.0
  %1807 = vmatpush1.msra.mxu0 0.0
  %1808 = vmatprep.subr.mxu0 0.0
  %1809 = vmatpush1.msra.mxu0 0.0
  %1810 = vmatprep.subr.mxu0 0.0
  %1811 = vmatpush1.msra.mxu0 0.0
  %1812 = vmatprep.subr.mxu0 0.0
  %1813 = vmatpush1.msra.mxu0 0.0
  %1814 = vmatprep.subr.mxu0 0.0
  %1815 = vmatpush1.msra.mxu0 0.0
  %1816 = vmatprep.subr.mxu0 0.0
  %1817 = vmatpush1.msra.mxu0 0.0
  %1818 = vmatprep.subr.mxu0 0.0
  %1819 = vmatpush1.msra.mxu0 0.0
  %1820 = vmatprep.subr.mxu0 0.0
  %1821 = vmatpush1.msra.mxu0 0.0
  %1822 = vmatprep.subr.mxu0 0.0
  %1823 = vmatpush1.msra.mxu0 0.0
  %1824 = vmatprep.subr.mxu0 0.0
  %1825 = vmatpush1.msra.mxu0 0.0
  %1826 = vmatprep.subr.mxu0 0.0
  %1827 = vmatpush1.msra.mxu0 0.0
  %1828 = vmatprep.subr.mxu0 0.0
  %1829 = vmatpush1.msra.mxu0 0.0
  %1830 = vmatprep.subr.mxu0 0.0
  %1831 = vmatpush1.msra.mxu0 0.0
  %1832 = vmatprep.subr.mxu0 0.0
  %1833 = vmatpush1.msra.mxu0 0.0
  %1834 = vmatprep.mubr.f32.mxu0 0.0
  %1835 = vmatmul.mubr.f32.gmra.mrb[0].mxu0 %v1670
  %v1836 = vpop.f32.mrb[0].mxu0
  %v1837 = vadd.f32 0.0, %v1836
  %v1838 = vpop.f32.mrb[0].mxu0
  %v1839 = vadd.f32 0.0, %v1838
  %1840 = vmatprep.mubr.f32.mxu0 0.0
  %1841 = vmatmul.mubr.f32.gmra.mrb[0].mxu0 %v1673
  %v1842 = vpop.f32.mrb[0].mxu0
  %v1843 = vadd.f32 0.0, %v1842
  %v1844 = vpop.f32.mrb[0].mxu0
  %v1845 = vadd.f32 0.0, %v1844
  %1846 = vmatprep.mubr.f32.mxu0 0.0
  %1847 = vmatmul.mubr.f32.gmra.mrb[0].mxu0 %v1676
  %v1848 = vpop.f32.mrb[0].mxu0
  %v1849 = vadd.f32 0.0, %v1848
  %v1850 = vpop.f32.mrb[0].mxu0
  %v1851 = vadd.f32 0.0, %v1850
  %1852 = vmatprep.mubr.f32.mxu0 0.0
  %1853 = vmatmul.mubr.f32.gmra.mrb[0].mxu0 %v1679
  %v1854 = vpop.f32.mrb[0].mxu0
  %v1855 = vadd.f32 0.0, %v1854
  %v1856 = vpop.f32.mrb[0].mxu0
  %v1857 = vadd.f32 0.0, %v1856
  %1858 = vdwg.mxu0
  %1859 = vmatprep.subr.mxu0 %v25
  %1860 = vmatpush1.msra.mxu0 %v24
  %1861 = vmatprep.subr.mxu0 0.0
  %1862 = vmatpush1.msra.mxu0 0.0
  %1863 = vmatprep.subr.mxu0 0.0
  %1864 = vmatpush1.msra.mxu0 0.0
  %1865 = vmatprep.subr.mxu0 0.0
  %1866 = vmatpush1.msra.mxu0 0.0
  %1867 = vmatprep.subr.mxu0 0.0
  %1868 = vmatpush1.msra.mxu0 0.0
  %1869 = vmatprep.subr.mxu0 0.0
  %1870 = vmatpush1.msra.mxu0 0.0
  %1871 = vmatprep.subr.mxu0 0.0
  %1872 = vmatpush1.msra.mxu0 0.0
  %1873 = vmatprep.subr.mxu0 0.0
  %1874 = vmatpush1.msra.mxu0 0.0
  %1875 = vmatprep.subr.mxu0 0.0
  %1876 = vmatpush1.msra.mxu0 0.0
  %1877 = vmatprep.subr.mxu0 0.0
  %1878 = vmatpush1.msra.mxu0 0.0
  %1879 = vmatprep.subr.mxu0 0.0
  %1880 = vmatpush1.msra.mxu0 0.0
  %1881 = vmatprep.subr.mxu0 0.0
  %1882 = vmatpush1.msra.mxu0 0.0
  %1883 = vmatprep.subr.mxu0 0.0
  %1884 = vmatpush1.msra.mxu0 0.0
  %1885 = vmatprep.subr.mxu0 0.0
  %1886 = vmatpush1.msra.mxu0 0.0
  %1887 = vmatprep.subr.mxu0 0.0
  %1888 = vmatpush1.msra.mxu0 0.0
  %1889 = vmatprep.subr.mxu0 0.0
  %1890 = vmatpush1.msra.mxu0 0.0
  %1891 = vmatprep.subr.mxu0 0.0
  %1892 = vmatpush1.msra.mxu0 0.0
  %1893 = vmatprep.subr.mxu0 0.0
  %1894 = vmatpush1.msra.mxu0 0.0
  %1895 = vmatprep.subr.mxu0 0.0
  %1896 = vmatpush1.msra.mxu0 0.0
  %1897 = vmatprep.subr.mxu0 0.0
  %1898 = vmatpush1.msra.mxu0 0.0
  %1899 = vmatprep.subr.mxu0 0.0
  %1900 = vmatpush1.msra.mxu0 0.0
  %1901 = vmatprep.subr.mxu0 0.0
  %1902 = vmatpush1.msra.mxu0 0.0
  %1903 = vmatprep.subr.mxu0 0.0
  %1904 = vmatpush1.msra.mxu0 0.0
  %1905 = vmatprep.subr.mxu0 0.0
  %1906 = vmatpush1.msra.mxu0 0.0
  %1907 = vmatprep.subr.mxu0 0.0
  %1908 = vmatpush1.msra.mxu0 0.0
  %1909 = vmatprep.subr.mxu0 0.0
  %1910 = vmatpush1.msra.mxu0 0.0
  %1911 = vmatprep.subr.mxu0 0.0
  %1912 = vmatpush1.msra.mxu0 0.0
  %1913 = vmatprep.subr.mxu0 0.0
  %1914 = vmatpush1.msra.mxu0 0.0
  %1915 = vmatprep.subr.mxu0 0.0
  %1916 = vmatpush1.msra.mxu0 0.0
  %1917 = vmatprep.subr.mxu0 0.0
  %1918 = vmatpush1.msra.mxu0 0.0
  %1919 = vmatprep.subr.mxu0 0.0
  %1920 = vmatpush1.msra.mxu0 0.0
  %1921 = vmatprep.subr.mxu0 0.0
  %1922 = vmatpush1.msra.mxu0 0.0
  %1923 = vmatprep.mubr.f32.mxu0 0.0
  %1924 = vmatmul.mubr.f32.gmra.mrb[0].mxu0 %v1670
  %v1925 = vpop.f32.mrb[0].mxu0
  %v1926 = vadd.f32 0.0, %v1925
  %v1927 = vpop.f32.mrb[0].mxu0
  %v1928 = vadd.f32 0.0, %v1927
  %1929 = vmatprep.mubr.f32.mxu0 0.0
  %1930 = vmatmul.mubr.f32.gmra.mrb[0].mxu0 %v1673
  %v1931 = vpop.f32.mrb[0].mxu0
  %v1932 = vadd.f32 0.0, %v1931
  %v1933 = vpop.f32.mrb[0].mxu0
  %v1934 = vadd.f32 0.0, %v1933
  %1935 = vmatprep.mubr.f32.mxu0 0.0
  %1936 = vmatmul.mubr.f32.gmra.mrb[0].mxu0 %v1676
  %v1937 = vpop.f32.mrb[0].mxu0
  %v1938 = vadd.f32 0.0, %v1937
  %v1939 = vpop.f32.mrb[0].mxu0
  %v1940 = vadd.f32 0.0, %v1939
  %1941 = vmatprep.mubr.f32.mxu0 0.0
  %1942 = vmatmul.mubr.f32.gmra.mrb[0].mxu0 %v1679
  %v1943 = vpop.f32.mrb[0].mxu0
  %v1944 = vadd.f32 0.0, %v1943
  %v1945 = vpop.f32.mrb[0].mxu0
  %v1946 = vadd.f32 0.0, %v1945
  %1947 = vdwg.mxu0
  %1948 = vmatprep.subr.mxu0 0.0
  %1949 = vmatpush1.msra.mxu0 %v26
  %1950 = vmatprep.subr.mxu0 0.0
  %1951 = vmatpush1.msra.mxu0 0.0
  %1952 = vmatprep.subr.mxu0 0.0
  %1953 = vmatpush1.msra.mxu0 0.0
  %1954 = vmatprep.subr.mxu0 0.0
  %1955 = vmatpush1.msra.mxu0 0.0
  %1956 = vmatprep.subr.mxu0 0.0
  %1957 = vmatpush1.msra.mxu0 0.0
  %1958 = vmatprep.subr.mxu0 0.0
  %1959 = vmatpush1.msra.mxu0 0.0
  %1960 = vmatprep.subr.mxu0 0.0
  %1961 = vmatpush1.msra.mxu0 0.0
  %1962 = vmatprep.subr.mxu0 0.0
  %1963 = vmatpush1.msra.mxu0 0.0
  %1964 = vmatprep.subr.mxu0 0.0
  %1965 = vmatpush1.msra.mxu0 0.0
  %1966 = vmatprep.subr.mxu0 0.0
  %1967 = vmatpush1.msra.mxu0 0.0
  %1968 = vmatprep.subr.mxu0 0.0
  %1969 = vmatpush1.msra.mxu0 0.0
  %1970 = vmatprep.subr.mxu0 0.0
  %1971 = vmatpush1.msra.mxu0 0.0
  %1972 = vmatprep.subr.mxu0 0.0
  %1973 = vmatpush1.msra.mxu0 0.0
  %1974 = vmatprep.subr.mxu0 0.0
  %1975 = vmatpush1.msra.mxu0 0.0
  %1976 = vmatprep.subr.mxu0 0.0
  %1977 = vmatpush1.msra.mxu0 0.0
  %1978 = vmatprep.subr.mxu0 0.0
  %1979 = vmatpush1.msra.mxu0 0.0
  %1980 = vmatprep.subr.mxu0 0.0
  %1981 = vmatpush1.msra.mxu0 0.0
  %1982 = vmatprep.subr.mxu0 0.0
  %1983 = vmatpush1.msra.mxu0 0.0
  %1984 = vmatprep.subr.mxu0 0.0
  %1985 = vmatpush1.msra.mxu0 0.0
  %1986 = vmatprep.subr.mxu0 0.0
  %1987 = vmatpush1.msra.mxu0 0.0
  %1988 = vmatprep.subr.mxu0 0.0
  %1989 = vmatpush1.msra.mxu0 0.0
  %1990 = vmatprep.subr.mxu0 0.0
  %1991 = vmatpush1.msra.mxu0 0.0
  %1992 = vmatprep.subr.mxu0 0.0
  %1993 = vmatpush1.msra.mxu0 0.0
  %1994 = vmatprep.subr.mxu0 0.0
  %1995 = vmatpush1.msra.mxu0 0.0
  %1996 = vmatprep.subr.mxu0 0.0
  %1997 = vmatpush1.msra.mxu0 0.0
  %1998 = vmatprep.subr.mxu0 0.0
  %1999 = vmatpush1.msra.mxu0 0.0
  %2000 = vmatprep.subr.mxu0 0.0
  %2001 = vmatpush1.msra.mxu0 0.0
  %2002 = vmatprep.subr.mxu0 0.0
  %2003 = vmatpush1.msra.mxu0 0.0
  %2004 = vmatprep.subr.mxu0 0.0
  %2005 = vmatpush1.msra.mxu0 0.0
  %2006 = vmatprep.subr.mxu0 0.0
  %2007 = vmatpush1.msra.mxu0 0.0
  %2008 = vmatprep.subr.mxu0 0.0
  %2009 = vmatpush1.msra.mxu0 0.0
  %2010 = vmatprep.subr.mxu0 0.0
  %2011 = vmatpush1.msra.mxu0 0.0
  %2012 = vmatprep.mubr.f32.mxu0 0.0
  %2013 = vmatmul.mubr.f32.gmra.mrb[0].mxu0 %v1670
  %v2014 = vpop.f32.mrb[0].mxu0
  %v2015 = vadd.f32 0.0, %v2014
  %v2016 = vpop.f32.mrb[0].mxu0
  %2017 = vmatprep.mubr.f32.mxu0 0.0
  %2018 = vmatmul.mubr.f32.gmra.mrb[0].mxu0 %v1673
  %v2019 = vpop.f32.mrb[0].mxu0
  %v2020 = vadd.f32 0.0, %v2019
  %v2021 = vpop.f32.mrb[0].mxu0
  %2022 = vmatprep.mubr.f32.mxu0 0.0
  %2023 = vmatmul.mubr.f32.gmra.mrb[0].mxu0 %v1676
  %v2024 = vpop.f32.mrb[0].mxu0
  %v2025 = vadd.f32 0.0, %v2024
  %v2026 = vpop.f32.mrb[0].mxu0
  %2027 = vmatprep.mubr.f32.mxu0 0.0
  %2028 = vmatmul.mubr.f32.gmra.mrb[0].mxu0 %v1679
  %v2029 = vpop.f32.mrb[0].mxu0
  %v2030 = vadd.f32 0.0, %v2029
  %v2031 = vpop.f32.mrb[0].mxu0
  %2032 = vdwg.mxu0
  %v2033 = vadd.f32 %v1629, %v1748
  %v2034 = vadd.f32 %v1630, %v1750
  %v2035 = vadd.f32 %v1631, %v1837
  %v2036 = vadd.f32 %v1632, %v1839
  %v2037 = vadd.f32 %v1633, %v1926
  %v2038 = vadd.f32 %v1634, %v1928
  %v2039 = vadd.f32 %v1635, %v2015
  %v2040 = vadd.f32 %v1636, %v1754
  %v2041 = vadd.f32 %v1637, %v1756
  %v2042 = vadd.f32 %v1638, %v1843
  %v2043 = vadd.f32 %v1639, %v1845
  %v2044 = vadd.f32 %v1640, %v1932
  %v2045 = vadd.f32 %v1641, %v1934
  %v2046 = vadd.f32 %v1642, %v2020
  %v2047 = vadd.f32 %v1643, %v1760
  %v2048 = vadd.f32 %v1644, %v1762
  %v2049 = vadd.f32 %v1645, %v1849
  %v2050 = vadd.f32 %v1646, %v1851
  %v2051 = vadd.f32 %v1647, %v1938
  %v2052 = vadd.f32 %v1648, %v1940
  %v2053 = vadd.f32 %v1649, %v2025
  %v2054 = vadd.f32 %v1650, %v1766
  %v2055 = vadd.f32 %v1651, %v1768
  %v2056 = vadd.f32 %v1652, %v1855
  %v2057 = vadd.f32 %v1653, %v1857
  %v2058 = vadd.f32 %v1654, %v1944
  %v2059 = vadd.f32 %v1655, %v1946
  %v2060 = vadd.f32 %v1656, %v2030
  %2061 = vrot.lane.b32.xlu0 %v20, 127
  %v2062 = vpop.permute.xlu0 %2061
  %2063 = vrot.lane.b32.xlu0 %v21, 127
  %v2064 = vpop.permute.xlu0 %2063
  %2065 = vrot.lane.b32.xlu0 %v22, 127
  %v2066 = vpop.permute.xlu0 %2065
  %2067 = vrot.lane.b32.xlu0 %v23, 127
  %v2068 = vpop.permute.xlu0 %2067
  %2069 = vrot.lane.b32.xlu0 %v24, 127
  %v2070 = vpop.permute.xlu0 %2069
  %2071 = vrot.lane.b32.xlu0 %v25, 127
  %v2072 = vpop.permute.xlu0 %2071
  %2073 = vrot.lane.b32.xlu0 %v26, 127
  %v2074 = vpop.permute.xlu0 %2073
  %vm2075 = vcmp.lt.s32.totalorder %v50, 127
  %v2076 = vsel %vm2075, %v2072, %v2074
  %v2077 = vsel %vm2075, %v2070, %v2072
  %v2078 = vsel %vm2075, %v2068, %v2070
  %v2079 = vsel %vm2075, %v2066, %v2068
  %v2080 = vsel %vm2075, %v2064, %v2066
  %v2081 = vsel %vm2075, %v2062, %v2064
  %v2082 = vsel %vm2075, %v2074, %v2062
  %s2083 = scalar_lea.vmem %s2, 160
  %v2084 = vld [vmem:[%s2083] sm:$0xff]
  %v2085 = vld [vmem:[%s2083 + $0x8] sm:$0xff]
  %v2086 = vld [vmem:[%s2083 + $0x10] sm:$0xff]
  %v2087 = vld [vmem:[%s2083 + $0x18] sm:$0xff]
  %v2089 = vsel %vm90, %v2084, 0
  %v2092 = vsel %vm90, %v2085, 0
  %v2095 = vsel %vm90, %v2086, 0
  %v2098 = vsel %vm90, %v2087, 0
  %2100 = vmatprep.subr.mxu0 %v2080
  %2101 = vmatpush1.msra.mxu0 %v2081
  %2102 = vmatprep.subr.mxu0 0.0
  %2103 = vmatpush1.msra.mxu0 0.0
  %2104 = vmatprep.subr.mxu0 0.0
  %2105 = vmatpush1.msra.mxu0 0.0
  %2106 = vmatprep.subr.mxu0 0.0
  %2107 = vmatpush1.msra.mxu0 0.0
  %2108 = vmatprep.subr.mxu0 0.0
  %2109 = vmatpush1.msra.mxu0 0.0
  %2110 = vmatprep.subr.mxu0 0.0
  %2111 = vmatpush1.msra.mxu0 0.0
  %2112 = vmatprep.subr.mxu0 0.0
  %2113 = vmatpush1.msra.mxu0 0.0
  %2114 = vmatprep.subr.mxu0 0.0
  %2115 = vmatpush1.msra.mxu0 0.0
  %2116 = vmatprep.subr.mxu0 0.0
  %2117 = vmatpush1.msra.mxu0 0.0
  %2118 = vmatprep.subr.mxu0 0.0
  %2119 = vmatpush1.msra.mxu0 0.0
  %2120 = vmatprep.subr.mxu0 0.0
  %2121 = vmatpush1.msra.mxu0 0.0
  %2122 = vmatprep.subr.mxu0 0.0
  %2123 = vmatpush1.msra.mxu0 0.0
  %2124 = vmatprep.subr.mxu0 0.0
  %2125 = vmatpush1.msra.mxu0 0.0
  %2126 = vmatprep.subr.mxu0 0.0
  %2127 = vmatpush1.msra.mxu0 0.0
  %2128 = vmatprep.subr.mxu0 0.0
  %2129 = vmatpush1.msra.mxu0 0.0
  %2130 = vmatprep.subr.mxu0 0.0
  %2131 = vmatpush1.msra.mxu0 0.0
  %2132 = vmatprep.subr.mxu0 0.0
  %2133 = vmatpush1.msra.mxu0 0.0
  %2134 = vmatprep.subr.mxu0 0.0
  %2135 = vmatpush1.msra.mxu0 0.0
  %2136 = vmatprep.subr.mxu0 0.0
  %2137 = vmatpush1.msra.mxu0 0.0
  %2138 = vmatprep.subr.mxu0 0.0
  %2139 = vmatpush1.msra.mxu0 0.0
  %2140 = vmatprep.subr.mxu0 0.0
  %2141 = vmatpush1.msra.mxu0 0.0
  %2142 = vmatprep.subr.mxu0 0.0
  %2143 = vmatpush1.msra.mxu0 0.0
  %2144 = vmatprep.subr.mxu0 0.0
  %2145 = vmatpush1.msra.mxu0 0.0
  %2146 = vmatprep.subr.mxu0 0.0
  %2147 = vmatpush1.msra.mxu0 0.0
  %2148 = vmatprep.subr.mxu0 0.0
  %2149 = vmatpush1.msra.mxu0 0.0
  %2150 = vmatprep.subr.mxu0 0.0
  %2151 = vmatpush1.msra.mxu0 0.0
  %2152 = vmatprep.subr.mxu0 0.0
  %2153 = vmatpush1.msra.mxu0 0.0
  %2154 = vmatprep.subr.mxu0 0.0
  %2155 = vmatpush1.msra.mxu0 0.0
  %2156 = vmatprep.subr.mxu0 0.0
  %2157 = vmatpush1.msra.mxu0 0.0
  %2158 = vmatprep.subr.mxu0 0.0
  %2159 = vmatpush1.msra.mxu0 0.0
  %2160 = vmatprep.subr.mxu0 0.0
  %2161 = vmatpush1.msra.mxu0 0.0
  %2162 = vmatprep.subr.mxu0 0.0
  %2163 = vmatpush1.msra.mxu0 0.0
  %2164 = vmatprep.mubr.f32.mxu0 0.0
  %2165 = vmatmul.mubr.f32.gmra.mrb[0].mxu0 %v2089
  %v2166 = vpop.f32.mrb[0].mxu0
  %v2167 = vadd.f32 0.0, %v2166
  %v2168 = vpop.f32.mrb[0].mxu0
  %v2169 = vadd.f32 0.0, %v2168
  %2170 = vmatprep.mubr.f32.mxu0 0.0
  %2171 = vmatmul.mubr.f32.gmra.mrb[0].mxu0 %v2092
  %v2172 = vpop.f32.mrb[0].mxu0
  %v2173 = vadd.f32 0.0, %v2172
  %v2174 = vpop.f32.mrb[0].mxu0
  %v2175 = vadd.f32 0.0, %v2174
  %2176 = vmatprep.mubr.f32.mxu0 0.0
  %2177 = vmatmul.mubr.f32.gmra.mrb[0].mxu0 %v2095
  %v2178 = vpop.f32.mrb[0].mxu0
  %v2179 = vadd.f32 0.0, %v2178
  %v2180 = vpop.f32.mrb[0].mxu0
  %v2181 = vadd.f32 0.0, %v2180
  %2182 = vmatprep.mubr.f32.mxu0 0.0
  %2183 = vmatmul.mubr.f32.gmra.mrb[0].mxu0 %v2098
  %v2184 = vpop.f32.mrb[0].mxu0
  %v2185 = vadd.f32 0.0, %v2184
  %v2186 = vpop.f32.mrb[0].mxu0
  %v2187 = vadd.f32 0.0, %v2186
  %2188 = vdwg.mxu0
  %2189 = vmatprep.subr.mxu0 %v2078
  %2190 = vmatpush1.msra.mxu0 %v2079
  %2191 = vmatprep.subr.mxu0 0.0
  %2192 = vmatpush1.msra.mxu0 0.0
  %2193 = vmatprep.subr.mxu0 0.0
  %2194 = vmatpush1.msra.mxu0 0.0
  %2195 = vmatprep.subr.mxu0 0.0
  %2196 = vmatpush1.msra.mxu0 0.0
  %2197 = vmatprep.subr.mxu0 0.0
  %2198 = vmatpush1.msra.mxu0 0.0
  %2199 = vmatprep.subr.mxu0 0.0
  %2200 = vmatpush1.msra.mxu0 0.0
  %2201 = vmatprep.subr.mxu0 0.0
  %2202 = vmatpush1.msra.mxu0 0.0
  %2203 = vmatprep.subr.mxu0 0.0
  %2204 = vmatpush1.msra.mxu0 0.0
  %2205 = vmatprep.subr.mxu0 0.0
  %2206 = vmatpush1.msra.mxu0 0.0
  %2207 = vmatprep.subr.mxu0 0.0
  %2208 = vmatpush1.msra.mxu0 0.0
  %2209 = vmatprep.subr.mxu0 0.0
  %2210 = vmatpush1.msra.mxu0 0.0
  %2211 = vmatprep.subr.mxu0 0.0
  %2212 = vmatpush1.msra.mxu0 0.0
  %2213 = vmatprep.subr.mxu0 0.0
  %2214 = vmatpush1.msra.mxu0 0.0
  %2215 = vmatprep.subr.mxu0 0.0
  %2216 = vmatpush1.msra.mxu0 0.0
  %2217 = vmatprep.subr.mxu0 0.0
  %2218 = vmatpush1.msra.mxu0 0.0
  %2219 = vmatprep.subr.mxu0 0.0
  %2220 = vmatpush1.msra.mxu0 0.0
  %2221 = vmatprep.subr.mxu0 0.0
  %2222 = vmatpush1.msra.mxu0 0.0
  %2223 = vmatprep.subr.mxu0 0.0
  %2224 = vmatpush1.msra.mxu0 0.0
  %2225 = vmatprep.subr.mxu0 0.0
  %2226 = vmatpush1.msra.mxu0 0.0
  %2227 = vmatprep.subr.mxu0 0.0
  %2228 = vmatpush1.msra.mxu0 0.0
  %2229 = vmatprep.subr.mxu0 0.0
  %2230 = vmatpush1.msra.mxu0 0.0
  %2231 = vmatprep.subr.mxu0 0.0
  %2232 = vmatpush1.msra.mxu0 0.0
  %2233 = vmatprep.subr.mxu0 0.0
  %2234 = vmatpush1.msra.mxu0 0.0
  %2235 = vmatprep.subr.mxu0 0.0
  %2236 = vmatpush1.msra.mxu0 0.0
  %2237 = vmatprep.subr.mxu0 0.0
  %2238 = vmatpush1.msra.mxu0 0.0
  %2239 = vmatprep.subr.mxu0 0.0
  %2240 = vmatpush1.msra.mxu0 0.0
  %2241 = vmatprep.subr.mxu0 0.0
  %2242 = vmatpush1.msra.mxu0 0.0
  %2243 = vmatprep.subr.mxu0 0.0
  %2244 = vmatpush1.msra.mxu0 0.0
  %2245 = vmatprep.subr.mxu0 0.0
  %2246 = vmatpush1.msra.mxu0 0.0
  %2247 = vmatprep.subr.mxu0 0.0
  %2248 = vmatpush1.msra.mxu0 0.0
  %2249 = vmatprep.subr.mxu0 0.0
  %2250 = vmatpush1.msra.mxu0 0.0
  %2251 = vmatprep.subr.mxu0 0.0
  %2252 = vmatpush1.msra.mxu0 0.0
  %2253 = vmatprep.mubr.f32.mxu0 0.0
  %2254 = vmatmul.mubr.f32.gmra.mrb[0].mxu0 %v2089
  %v2255 = vpop.f32.mrb[0].mxu0
  %v2256 = vadd.f32 0.0, %v2255
  %v2257 = vpop.f32.mrb[0].mxu0
  %v2258 = vadd.f32 0.0, %v2257
  %2259 = vmatprep.mubr.f32.mxu0 0.0
  %2260 = vmatmul.mubr.f32.gmra.mrb[0].mxu0 %v2092
  %v2261 = vpop.f32.mrb[0].mxu0
  %v2262 = vadd.f32 0.0, %v2261
  %v2263 = vpop.f32.mrb[0].mxu0
  %v2264 = vadd.f32 0.0, %v2263
  %2265 = vmatprep.mubr.f32.mxu0 0.0
  %2266 = vmatmul.mubr.f32.gmra.mrb[0].mxu0 %v2095
  %v2267 = vpop.f32.mrb[0].mxu0
  %v2268 = vadd.f32 0.0, %v2267
  %v2269 = vpop.f32.mrb[0].mxu0
  %v2270 = vadd.f32 0.0, %v2269
  %2271 = vmatprep.mubr.f32.mxu0 0.0
  %2272 = vmatmul.mubr.f32.gmra.mrb[0].mxu0 %v2098
  %v2273 = vpop.f32.mrb[0].mxu0
  %v2274 = vadd.f32 0.0, %v2273
  %v2275 = vpop.f32.mrb[0].mxu0
  %v2276 = vadd.f32 0.0, %v2275
  %2277 = vdwg.mxu0
  %2278 = vmatprep.subr.mxu0 %v2076
  %2279 = vmatpush1.msra.mxu0 %v2077
  %2280 = vmatprep.subr.mxu0 0.0
  %2281 = vmatpush1.msra.mxu0 0.0
  %2282 = vmatprep.subr.mxu0 0.0
  %2283 = vmatpush1.msra.mxu0 0.0
  %2284 = vmatprep.subr.mxu0 0.0
  %2285 = vmatpush1.msra.mxu0 0.0
  %2286 = vmatprep.subr.mxu0 0.0
  %2287 = vmatpush1.msra.mxu0 0.0
  %2288 = vmatprep.subr.mxu0 0.0
  %2289 = vmatpush1.msra.mxu0 0.0
  %2290 = vmatprep.subr.mxu0 0.0
  %2291 = vmatpush1.msra.mxu0 0.0
  %2292 = vmatprep.subr.mxu0 0.0
  %2293 = vmatpush1.msra.mxu0 0.0
  %2294 = vmatprep.subr.mxu0 0.0
  %2295 = vmatpush1.msra.mxu0 0.0
  %2296 = vmatprep.subr.mxu0 0.0
  %2297 = vmatpush1.msra.mxu0 0.0
  %2298 = vmatprep.subr.mxu0 0.0
  %2299 = vmatpush1.msra.mxu0 0.0
  %2300 = vmatprep.subr.mxu0 0.0
  %2301 = vmatpush1.msra.mxu0 0.0
  %2302 = vmatprep.subr.mxu0 0.0
  %2303 = vmatpush1.msra.mxu0 0.0
  %2304 = vmatprep.subr.mxu0 0.0
  %2305 = vmatpush1.msra.mxu0 0.0
  %2306 = vmatprep.subr.mxu0 0.0
  %2307 = vmatpush1.msra.mxu0 0.0
  %2308 = vmatprep.subr.mxu0 0.0
  %2309 = vmatpush1.msra.mxu0 0.0
  %2310 = vmatprep.subr.mxu0 0.0
  %2311 = vmatpush1.msra.mxu0 0.0
  %2312 = vmatprep.subr.mxu0 0.0
  %2313 = vmatpush1.msra.mxu0 0.0
  %2314 = vmatprep.subr.mxu0 0.0
  %2315 = vmatpush1.msra.mxu0 0.0
  %2316 = vmatprep.subr.mxu0 0.0
  %2317 = vmatpush1.msra.mxu0 0.0
  %2318 = vmatprep.subr.mxu0 0.0
  %2319 = vmatpush1.msra.mxu0 0.0
  %2320 = vmatprep.subr.mxu0 0.0
  %2321 = vmatpush1.msra.mxu0 0.0
  %2322 = vmatprep.subr.mxu0 0.0
  %2323 = vmatpush1.msra.mxu0 0.0
  %2324 = vmatprep.subr.mxu0 0.0
  %2325 = vmatpush1.msra.mxu0 0.0
  %2326 = vmatprep.subr.mxu0 0.0
  %2327 = vmatpush1.msra.mxu0 0.0
  %2328 = vmatprep.subr.mxu0 0.0
  %2329 = vmatpush1.msra.mxu0 0.0
  %2330 = vmatprep.subr.mxu0 0.0
  %2331 = vmatpush1.msra.mxu0 0.0
  %2332 = vmatprep.subr.mxu0 0.0
  %2333 = vmatpush1.msra.mxu0 0.0
  %2334 = vmatprep.subr.mxu0 0.0
  %2335 = vmatpush1.msra.mxu0 0.0
  %2336 = vmatprep.subr.mxu0 0.0
  %2337 = vmatpush1.msra.mxu0 0.0
  %2338 = vmatprep.subr.mxu0 0.0
  %2339 = vmatpush1.msra.mxu0 0.0
  %2340 = vmatprep.subr.mxu0 0.0
  %2341 = vmatpush1.msra.mxu0 0.0
  %2342 = vmatprep.mubr.f32.mxu0 0.0
  %2343 = vmatmul.mubr.f32.gmra.mrb[0].mxu0 %v2089
  %v2344 = vpop.f32.mrb[0].mxu0
  %v2345 = vadd.f32 0.0, %v2344
  %v2346 = vpop.f32.mrb[0].mxu0
  %v2347 = vadd.f32 0.0, %v2346
  %2348 = vmatprep.mubr.f32.mxu0 0.0
  %2349 = vmatmul.mubr.f32.gmra.mrb[0].mxu0 %v2092
  %v2350 = vpop.f32.mrb[0].mxu0
  %v2351 = vadd.f32 0.0, %v2350
  %v2352 = vpop.f32.mrb[0].mxu0
  %v2353 = vadd.f32 0.0, %v2352
  %2354 = vmatprep.mubr.f32.mxu0 0.0
  %2355 = vmatmul.mubr.f32.gmra.mrb[0].mxu0 %v2095
  %v2356 = vpop.f32.mrb[0].mxu0
  %v2357 = vadd.f32 0.0, %v2356
  %v2358 = vpop.f32.mrb[0].mxu0
  %v2359 = vadd.f32 0.0, %v2358
  %2360 = vmatprep.mubr.f32.mxu0 0.0
  %2361 = vmatmul.mubr.f32.gmra.mrb[0].mxu0 %v2098
  %v2362 = vpop.f32.mrb[0].mxu0
  %v2363 = vadd.f32 0.0, %v2362
  %v2364 = vpop.f32.mrb[0].mxu0
  %v2365 = vadd.f32 0.0, %v2364
  %2366 = vdwg.mxu0
  %2367 = vmatprep.subr.mxu0 0.0
  %2368 = vmatpush1.msra.mxu0 %v2082
  %2369 = vmatprep.subr.mxu0 0.0
  %2370 = vmatpush1.msra.mxu0 0.0
  %2371 = vmatprep.subr.mxu0 0.0
  %2372 = vmatpush1.msra.mxu0 0.0
  %2373 = vmatprep.subr.mxu0 0.0
  %2374 = vmatpush1.msra.mxu0 0.0
  %2375 = vmatprep.subr.mxu0 0.0
  %2376 = vmatpush1.msra.mxu0 0.0
  %2377 = vmatprep.subr.mxu0 0.0
  %2378 = vmatpush1.msra.mxu0 0.0
  %2379 = vmatprep.subr.mxu0 0.0
  %2380 = vmatpush1.msra.mxu0 0.0
  %2381 = vmatprep.subr.mxu0 0.0
  %2382 = vmatpush1.msra.mxu0 0.0
  %2383 = vmatprep.subr.mxu0 0.0
  %2384 = vmatpush1.msra.mxu0 0.0
  %2385 = vmatprep.subr.mxu0 0.0
  %2386 = vmatpush1.msra.mxu0 0.0
  %2387 = vmatprep.subr.mxu0 0.0
  %2388 = vmatpush1.msra.mxu0 0.0
  %2389 = vmatprep.subr.mxu0 0.0
  %2390 = vmatpush1.msra.mxu0 0.0
  %2391 = vmatprep.subr.mxu0 0.0
  %2392 = vmatpush1.msra.mxu0 0.0
  %2393 = vmatprep.subr.mxu0 0.0
  %2394 = vmatpush1.msra.mxu0 0.0
  %2395 = vmatprep.subr.mxu0 0.0
  %2396 = vmatpush1.msra.mxu0 0.0
  %2397 = vmatprep.subr.mxu0 0.0
  %2398 = vmatpush1.msra.mxu0 0.0
  %2399 = vmatprep.subr.mxu0 0.0
  %2400 = vmatpush1.msra.mxu0 0.0
  %2401 = vmatprep.subr.mxu0 0.0
  %2402 = vmatpush1.msra.mxu0 0.0
  %2403 = vmatprep.subr.mxu0 0.0
  %2404 = vmatpush1.msra.mxu0 0.0
  %2405 = vmatprep.subr.mxu0 0.0
  %2406 = vmatpush1.msra.mxu0 0.0
  %2407 = vmatprep.subr.mxu0 0.0
  %2408 = vmatpush1.msra.mxu0 0.0
  %2409 = vmatprep.subr.mxu0 0.0
  %2410 = vmatpush1.msra.mxu0 0.0
  %2411 = vmatprep.subr.mxu0 0.0
  %2412 = vmatpush1.msra.mxu0 0.0
  %2413 = vmatprep.subr.mxu0 0.0
  %2414 = vmatpush1.msra.mxu0 0.0
  %2415 = vmatprep.subr.mxu0 0.0
  %2416 = vmatpush1.msra.mxu0 0.0
  %2417 = vmatprep.subr.mxu0 0.0
  %2418 = vmatpush1.msra.mxu0 0.0
  %2419 = vmatprep.subr.mxu0 0.0
  %2420 = vmatpush1.msra.mxu0 0.0
  %2421 = vmatprep.subr.mxu0 0.0
  %2422 = vmatpush1.msra.mxu0 0.0
  %2423 = vmatprep.subr.mxu0 0.0
  %2424 = vmatpush1.msra.mxu0 0.0
  %2425 = vmatprep.subr.mxu0 0.0
  %2426 = vmatpush1.msra.mxu0 0.0
  %2427 = vmatprep.subr.mxu0 0.0
  %2428 = vmatpush1.msra.mxu0 0.0
  %2429 = vmatprep.subr.mxu0 0.0
  %2430 = vmatpush1.msra.mxu0 0.0
  %2431 = vmatprep.mubr.f32.mxu0 0.0
  %2432 = vmatmul.mubr.f32.gmra.mrb[0].mxu0 %v2089
  %v2433 = vpop.f32.mrb[0].mxu0
  %v2434 = vadd.f32 0.0, %v2433
  %v2435 = vpop.f32.mrb[0].mxu0
  %2436 = vmatprep.mubr.f32.mxu0 0.0
  %2437 = vmatmul.mubr.f32.gmra.mrb[0].mxu0 %v2092
  %v2438 = vpop.f32.mrb[0].mxu0
  %v2439 = vadd.f32 0.0, %v2438
  %v2440 = vpop.f32.mrb[0].mxu0
  %2441 = vmatprep.mubr.f32.mxu0 0.0
  %2442 = vmatmul.mubr.f32.gmra.mrb[0].mxu0 %v2095
  %v2443 = vpop.f32.mrb[0].mxu0
  %v2444 = vadd.f32 0.0, %v2443
  %v2445 = vpop.f32.mrb[0].mxu0
  %2446 = vmatprep.mubr.f32.mxu0 0.0
  %2447 = vmatmul.mubr.f32.gmra.mrb[0].mxu0 %v2098
  %v2448 = vpop.f32.mrb[0].mxu0
  %v2449 = vadd.f32 0.0, %v2448
  %v2450 = vpop.f32.mrb[0].mxu0
  %2451 = vdwg.mxu0
  %v2452 = vadd.f32 %v2033, %v2167
  %v2453 = vadd.f32 %v2034, %v2169
  %v2454 = vadd.f32 %v2035, %v2256
  %v2455 = vadd.f32 %v2036, %v2258
  %v2456 = vadd.f32 %v2037, %v2345
  %v2457 = vadd.f32 %v2038, %v2347
  %v2458 = vadd.f32 %v2039, %v2434
  %v2459 = vadd.f32 %v2040, %v2173
  %v2460 = vadd.f32 %v2041, %v2175
  %v2461 = vadd.f32 %v2042, %v2262
  %v2462 = vadd.f32 %v2043, %v2264
  %v2463 = vadd.f32 %v2044, %v2351
  %v2464 = vadd.f32 %v2045, %v2353
  %v2465 = vadd.f32 %v2046, %v2439
  %v2466 = vadd.f32 %v2047, %v2179
  %v2467 = vadd.f32 %v2048, %v2181
  %v2468 = vadd.f32 %v2049, %v2268
  %v2469 = vadd.f32 %v2050, %v2270
  %v2470 = vadd.f32 %v2051, %v2357
  %v2471 = vadd.f32 %v2052, %v2359
  %v2472 = vadd.f32 %v2053, %v2444
  %v2473 = vadd.f32 %v2054, %v2185
  %v2474 = vadd.f32 %v2055, %v2187
  %v2475 = vadd.f32 %v2056, %v2274
  %v2476 = vadd.f32 %v2057, %v2276
  %v2477 = vadd.f32 %v2058, %v2363
  %v2478 = vadd.f32 %v2059, %v2365
  %v2479 = vadd.f32 %v2060, %v2449
  %v2480 = vadd.f32 %v1657, %v2081
  %v2481 = vadd.f32 %v1658, %v2080
  %v2482 = vadd.f32 %v1659, %v2079
  %v2483 = vadd.f32 %v1660, %v2078
  %v2484 = vadd.f32 %v1661, %v2077
  %v2485 = vadd.f32 %v1662, %v2076
  %v2486 = vadd.f32 %v1663, %v2082
  %2487 = vrot.lane.b32.xlu0 %v20, 109
  %v2488 = vpop.permute.xlu0 %2487
  %2489 = vrot.lane.b32.xlu0 %v21, 109
  %v2490 = vpop.permute.xlu0 %2489
  %2491 = vrot.lane.b32.xlu0 %v22, 109
  %v2492 = vpop.permute.xlu0 %2491
  %2493 = vrot.lane.b32.xlu0 %v23, 109
  %v2494 = vpop.permute.xlu0 %2493
  %2495 = vrot.lane.b32.xlu0 %v24, 109
  %v2496 = vpop.permute.xlu0 %2495
  %2497 = vrot.lane.b32.xlu0 %v25, 109
  %v2498 = vpop.permute.xlu0 %2497
  %2499 = vrot.lane.b32.xlu0 %v26, 109
  %v2500 = vpop.permute.xlu0 %2499
  %vm2501 = vcmp.lt.s32.totalorder %v50, 109
  %v2502 = vsel %vm2501, %v2498, %v2500
  %v2503 = vsel %vm2501, %v2496, %v2498
  %v2504 = vsel %vm2501, %v2494, %v2496
  %v2505 = vsel %vm2501, %v2492, %v2494
  %v2506 = vsel %vm2501, %v2490, %v2492
  %v2507 = vsel %vm2501, %v2488, %v2490
  %v2508 = vsel %vm2501, %v2500, %v2488
  %s2509 = scalar_lea.vmem %s2, 192
  %v2510 = vld [vmem:[%s2509] sm:$0xff]
  %v2511 = vld [vmem:[%s2509 + $0x8] sm:$0xff]
  %v2512 = vld [vmem:[%s2509 + $0x10] sm:$0xff]
  %v2513 = vld [vmem:[%s2509 + $0x18] sm:$0xff]
  %v2515 = vsel %vm90, %v2510, 0
  %v2518 = vsel %vm90, %v2511, 0
  %v2521 = vsel %vm90, %v2512, 0
  %v2524 = vsel %vm90, %v2513, 0
  %2526 = vmatprep.subr.mxu0 %v2506
  %2527 = vmatpush1.msra.mxu0 %v2507
  %2528 = vmatprep.subr.mxu0 0.0
  %2529 = vmatpush1.msra.mxu0 0.0
  %2530 = vmatprep.subr.mxu0 0.0
  %2531 = vmatpush1.msra.mxu0 0.0
  %2532 = vmatprep.subr.mxu0 0.0
  %2533 = vmatpush1.msra.mxu0 0.0
  %2534 = vmatprep.subr.mxu0 0.0
  %2535 = vmatpush1.msra.mxu0 0.0
  %2536 = vmatprep.subr.mxu0 0.0
  %2537 = vmatpush1.msra.mxu0 0.0
  %2538 = vmatprep.subr.mxu0 0.0
  %2539 = vmatpush1.msra.mxu0 0.0
  %2540 = vmatprep.subr.mxu0 0.0
  %2541 = vmatpush1.msra.mxu0 0.0
  %2542 = vmatprep.subr.mxu0 0.0
  %2543 = vmatpush1.msra.mxu0 0.0
  %2544 = vmatprep.subr.mxu0 0.0
  %2545 = vmatpush1.msra.mxu0 0.0
  %2546 = vmatprep.subr.mxu0 0.0
  %2547 = vmatpush1.msra.mxu0 0.0
  %2548 = vmatprep.subr.mxu0 0.0
  %2549 = vmatpush1.msra.mxu0 0.0
  %2550 = vmatprep.subr.mxu0 0.0
  %2551 = vmatpush1.msra.mxu0 0.0
  %2552 = vmatprep.subr.mxu0 0.0
  %2553 = vmatpush1.msra.mxu0 0.0
  %2554 = vmatprep.subr.mxu0 0.0
  %2555 = vmatpush1.msra.mxu0 0.0
  %2556 = vmatprep.subr.mxu0 0.0
  %2557 = vmatpush1.msra.mxu0 0.0
  %2558 = vmatprep.subr.mxu0 0.0
  %2559 = vmatpush1.msra.mxu0 0.0
  %2560 = vmatprep.subr.mxu0 0.0
  %2561 = vmatpush1.msra.mxu0 0.0
  %2562 = vmatprep.subr.mxu0 0.0
  %2563 = vmatpush1.msra.mxu0 0.0
  %2564 = vmatprep.subr.mxu0 0.0
  %2565 = vmatpush1.msra.mxu0 0.0
  %2566 = vmatprep.subr.mxu0 0.0
  %2567 = vmatpush1.msra.mxu0 0.0
  %2568 = vmatprep.subr.mxu0 0.0
  %2569 = vmatpush1.msra.mxu0 0.0
  %2570 = vmatprep.subr.mxu0 0.0
  %2571 = vmatpush1.msra.mxu0 0.0
  %2572 = vmatprep.subr.mxu0 0.0
  %2573 = vmatpush1.msra.mxu0 0.0
  %2574 = vmatprep.subr.mxu0 0.0
  %2575 = vmatpush1.msra.mxu0 0.0
  %2576 = vmatprep.subr.mxu0 0.0
  %2577 = vmatpush1.msra.mxu0 0.0
  %2578 = vmatprep.subr.mxu0 0.0
  %2579 = vmatpush1.msra.mxu0 0.0
  %2580 = vmatprep.subr.mxu0 0.0
  %2581 = vmatpush1.msra.mxu0 0.0
  %2582 = vmatprep.subr.mxu0 0.0
  %2583 = vmatpush1.msra.mxu0 0.0
  %2584 = vmatprep.subr.mxu0 0.0
  %2585 = vmatpush1.msra.mxu0 0.0
  %2586 = vmatprep.subr.mxu0 0.0
  %2587 = vmatpush1.msra.mxu0 0.0
  %2588 = vmatprep.subr.mxu0 0.0
  %2589 = vmatpush1.msra.mxu0 0.0
  %2590 = vmatprep.mubr.f32.mxu0 0.0
  %2591 = vmatmul.mubr.f32.gmra.mrb[0].mxu0 %v2515
  %v2592 = vpop.f32.mrb[0].mxu0
  %v2593 = vadd.f32 0.0, %v2592
  %v2594 = vpop.f32.mrb[0].mxu0
  %v2595 = vadd.f32 0.0, %v2594
  %2596 = vmatprep.mubr.f32.mxu0 0.0
  %2597 = vmatmul.mubr.f32.gmra.mrb[0].mxu0 %v2518
  %v2598 = vpop.f32.mrb[0].mxu0
  %v2599 = vadd.f32 0.0, %v2598
  %v2600 = vpop.f32.mrb[0].mxu0
  %v2601 = vadd.f32 0.0, %v2600
  %2602 = vmatprep.mubr.f32.mxu0 0.0
  %2603 = vmatmul.mubr.f32.gmra.mrb[0].mxu0 %v2521
  %v2604 = vpop.f32.mrb[0].mxu0
  %v2605 = vadd.f32 0.0, %v2604
  %v2606 = vpop.f32.mrb[0].mxu0
  %v2607 = vadd.f32 0.0, %v2606
  %2608 = vmatprep.mubr.f32.mxu0 0.0
  %2609 = vmatmul.mubr.f32.gmra.mrb[0].mxu0 %v2524
  %v2610 = vpop.f32.mrb[0].mxu0
  %v2611 = vadd.f32 0.0, %v2610
  %v2612 = vpop.f32.mrb[0].mxu0
  %v2613 = vadd.f32 0.0, %v2612
  %2614 = vdwg.mxu0
  %2615 = vmatprep.subr.mxu0 %v2504
  %2616 = vmatpush1.msra.mxu0 %v2505
  %2617 = vmatprep.subr.mxu0 0.0
  %2618 = vmatpush1.msra.mxu0 0.0
  %2619 = vmatprep.subr.mxu0 0.0
  %2620 = vmatpush1.msra.mxu0 0.0
  %2621 = vmatprep.subr.mxu0 0.0
  %2622 = vmatpush1.msra.mxu0 0.0
  %2623 = vmatprep.subr.mxu0 0.0
  %2624 = vmatpush1.msra.mxu0 0.0
  %2625 = vmatprep.subr.mxu0 0.0
  %2626 = vmatpush1.msra.mxu0 0.0
  %2627 = vmatprep.subr.mxu0 0.0
  %2628 = vmatpush1.msra.mxu0 0.0
  %2629 = vmatprep.subr.mxu0 0.0
  %2630 = vmatpush1.msra.mxu0 0.0
  %2631 = vmatprep.subr.mxu0 0.0
  %2632 = vmatpush1.msra.mxu0 0.0
  %2633 = vmatprep.subr.mxu0 0.0
  %2634 = vmatpush1.msra.mxu0 0.0
  %2635 = vmatprep.subr.mxu0 0.0
  %2636 = vmatpush1.msra.mxu0 0.0
  %2637 = vmatprep.subr.mxu0 0.0
  %2638 = vmatpush1.msra.mxu0 0.0
  %2639 = vmatprep.subr.mxu0 0.0
  %2640 = vmatpush1.msra.mxu0 0.0
  %2641 = vmatprep.subr.mxu0 0.0
  %2642 = vmatpush1.msra.mxu0 0.0
  %2643 = vmatprep.subr.mxu0 0.0
  %2644 = vmatpush1.msra.mxu0 0.0
  %2645 = vmatprep.subr.mxu0 0.0
  %2646 = vmatpush1.msra.mxu0 0.0
  %2647 = vmatprep.subr.mxu0 0.0
  %2648 = vmatpush1.msra.mxu0 0.0
  %2649 = vmatprep.subr.mxu0 0.0
  %2650 = vmatpush1.msra.mxu0 0.0
  %2651 = vmatprep.subr.mxu0 0.0
  %2652 = vmatpush1.msra.mxu0 0.0
  %2653 = vmatprep.subr.mxu0 0.0
  %2654 = vmatpush1.msra.mxu0 0.0
  %2655 = vmatprep.subr.mxu0 0.0
  %2656 = vmatpush1.msra.mxu0 0.0
  %2657 = vmatprep.subr.mxu0 0.0
  %2658 = vmatpush1.msra.mxu0 0.0
  %2659 = vmatprep.subr.mxu0 0.0
  %2660 = vmatpush1.msra.mxu0 0.0
  %2661 = vmatprep.subr.mxu0 0.0
  %2662 = vmatpush1.msra.mxu0 0.0
  %2663 = vmatprep.subr.mxu0 0.0
  %2664 = vmatpush1.msra.mxu0 0.0
  %2665 = vmatprep.subr.mxu0 0.0
  %2666 = vmatpush1.msra.mxu0 0.0
  %2667 = vmatprep.subr.mxu0 0.0
  %2668 = vmatpush1.msra.mxu0 0.0
  %2669 = vmatprep.subr.mxu0 0.0
  %2670 = vmatpush1.msra.mxu0 0.0
  %2671 = vmatprep.subr.mxu0 0.0
  %2672 = vmatpush1.msra.mxu0 0.0
  %2673 = vmatprep.subr.mxu0 0.0
  %2674 = vmatpush1.msra.mxu0 0.0
  %2675 = vmatprep.subr.mxu0 0.0
  %2676 = vmatpush1.msra.mxu0 0.0
  %2677 = vmatprep.subr.mxu0 0.0
  %2678 = vmatpush1.msra.mxu0 0.0
  %2679 = vmatprep.mubr.f32.mxu0 0.0
  %2680 = vmatmul.mubr.f32.gmra.mrb[0].mxu0 %v2515
  %v2681 = vpop.f32.mrb[0].mxu0
  %v2682 = vadd.f32 0.0, %v2681
  %v2683 = vpop.f32.mrb[0].mxu0
  %v2684 = vadd.f32 0.0, %v2683
  %2685 = vmatprep.mubr.f32.mxu0 0.0
  %2686 = vmatmul.mubr.f32.gmra.mrb[0].mxu0 %v2518
  %v2687 = vpop.f32.mrb[0].mxu0
  %v2688 = vadd.f32 0.0, %v2687
  %v2689 = vpop.f32.mrb[0].mxu0
  %v2690 = vadd.f32 0.0, %v2689
  %2691 = vmatprep.mubr.f32.mxu0 0.0
  %2692 = vmatmul.mubr.f32.gmra.mrb[0].mxu0 %v2521
  %v2693 = vpop.f32.mrb[0].mxu0
  %v2694 = vadd.f32 0.0, %v2693
  %v2695 = vpop.f32.mrb[0].mxu0
  %v2696 = vadd.f32 0.0, %v2695
  %2697 = vmatprep.mubr.f32.mxu0 0.0
  %2698 = vmatmul.mubr.f32.gmra.mrb[0].mxu0 %v2524
  %v2699 = vpop.f32.mrb[0].mxu0
  %v2700 = vadd.f32 0.0, %v2699
  %v2701 = vpop.f32.mrb[0].mxu0
  %v2702 = vadd.f32 0.0, %v2701
  %2703 = vdwg.mxu0
  %2704 = vmatprep.subr.mxu0 %v2502
  %2705 = vmatpush1.msra.mxu0 %v2503
  %2706 = vmatprep.subr.mxu0 0.0
  %2707 = vmatpush1.msra.mxu0 0.0
  %2708 = vmatprep.subr.mxu0 0.0
  %2709 = vmatpush1.msra.mxu0 0.0
  %2710 = vmatprep.subr.mxu0 0.0
  %2711 = vmatpush1.msra.mxu0 0.0
  %2712 = vmatprep.subr.mxu0 0.0
  %2713 = vmatpush1.msra.mxu0 0.0
  %2714 = vmatprep.subr.mxu0 0.0
  %2715 = vmatpush1.msra.mxu0 0.0
  %2716 = vmatprep.subr.mxu0 0.0
  %2717 = vmatpush1.msra.mxu0 0.0
  %2718 = vmatprep.subr.mxu0 0.0
  %2719 = vmatpush1.msra.mxu0 0.0
  %2720 = vmatprep.subr.mxu0 0.0
  %2721 = vmatpush1.msra.mxu0 0.0
  %2722 = vmatprep.subr.mxu0 0.0
  %2723 = vmatpush1.msra.mxu0 0.0
  %2724 = vmatprep.subr.mxu0 0.0
  %2725 = vmatpush1.msra.mxu0 0.0
  %2726 = vmatprep.subr.mxu0 0.0
  %2727 = vmatpush1.msra.mxu0 0.0
  %2728 = vmatprep.subr.mxu0 0.0
  %2729 = vmatpush1.msra.mxu0 0.0
  %2730 = vmatprep.subr.mxu0 0.0
  %2731 = vmatpush1.msra.mxu0 0.0
  %2732 = vmatprep.subr.mxu0 0.0
  %2733 = vmatpush1.msra.mxu0 0.0
  %2734 = vmatprep.subr.mxu0 0.0
  %2735 = vmatpush1.msra.mxu0 0.0
  %2736 = vmatprep.subr.mxu0 0.0
  %2737 = vmatpush1.msra.mxu0 0.0
  %2738 = vmatprep.subr.mxu0 0.0
  %2739 = vmatpush1.msra.mxu0 0.0
  %2740 = vmatprep.subr.mxu0 0.0
  %2741 = vmatpush1.msra.mxu0 0.0
  %2742 = vmatprep.subr.mxu0 0.0
  %2743 = vmatpush1.msra.mxu0 0.0
  %2744 = vmatprep.subr.mxu0 0.0
  %2745 = vmatpush1.msra.mxu0 0.0
  %2746 = vmatprep.subr.mxu0 0.0
  %2747 = vmatpush1.msra.mxu0 0.0
  %2748 = vmatprep.subr.mxu0 0.0
  %2749 = vmatpush1.msra.mxu0 0.0
  %2750 = vmatprep.subr.mxu0 0.0
  %2751 = vmatpush1.msra.mxu0 0.0
  %2752 = vmatprep.subr.mxu0 0.0
  %2753 = vmatpush1.msra.mxu0 0.0
  %2754 = vmatprep.subr.mxu0 0.0
  %2755 = vmatpush1.msra.mxu0 0.0
  %2756 = vmatprep.subr.mxu0 0.0
  %2757 = vmatpush1.msra.mxu0 0.0
  %2758 = vmatprep.subr.mxu0 0.0
  %2759 = vmatpush1.msra.mxu0 0.0
  %2760 = vmatprep.subr.mxu0 0.0
  %2761 = vmatpush1.msra.mxu0 0.0
  %2762 = vmatprep.subr.mxu0 0.0
  %2763 = vmatpush1.msra.mxu0 0.0
  %2764 = vmatprep.subr.mxu0 0.0
  %2765 = vmatpush1.msra.mxu0 0.0
  %2766 = vmatprep.subr.mxu0 0.0
  %2767 = vmatpush1.msra.mxu0 0.0
  %2768 = vmatprep.mubr.f32.mxu0 0.0
  %2769 = vmatmul.mubr.f32.gmra.mrb[0].mxu0 %v2515
  %v2770 = vpop.f32.mrb[0].mxu0
  %v2771 = vadd.f32 0.0, %v2770
  %v2772 = vpop.f32.mrb[0].mxu0
  %v2773 = vadd.f32 0.0, %v2772
  %2774 = vmatprep.mubr.f32.mxu0 0.0
  %2775 = vmatmul.mubr.f32.gmra.mrb[0].mxu0 %v2518
  %v2776 = vpop.f32.mrb[0].mxu0
  %v2777 = vadd.f32 0.0, %v2776
  %v2778 = vpop.f32.mrb[0].mxu0
  %v2779 = vadd.f32 0.0, %v2778
  %2780 = vmatprep.mubr.f32.mxu0 0.0
  %2781 = vmatmul.mubr.f32.gmra.mrb[0].mxu0 %v2521
  %v2782 = vpop.f32.mrb[0].mxu0
  %v2783 = vadd.f32 0.0, %v2782
  %v2784 = vpop.f32.mrb[0].mxu0
  %v2785 = vadd.f32 0.0, %v2784
  %2786 = vmatprep.mubr.f32.mxu0 0.0
  %2787 = vmatmul.mubr.f32.gmra.mrb[0].mxu0 %v2524
  %v2788 = vpop.f32.mrb[0].mxu0
  %v2789 = vadd.f32 0.0, %v2788
  %v2790 = vpop.f32.mrb[0].mxu0
  %v2791 = vadd.f32 0.0, %v2790
  %2792 = vdwg.mxu0
  %2793 = vmatprep.subr.mxu0 0.0
  %2794 = vmatpush1.msra.mxu0 %v2508
  %2795 = vmatprep.subr.mxu0 0.0
  %2796 = vmatpush1.msra.mxu0 0.0
  %2797 = vmatprep.subr.mxu0 0.0
  %2798 = vmatpush1.msra.mxu0 0.0
  %2799 = vmatprep.subr.mxu0 0.0
  %2800 = vmatpush1.msra.mxu0 0.0
  %2801 = vmatprep.subr.mxu0 0.0
  %2802 = vmatpush1.msra.mxu0 0.0
  %2803 = vmatprep.subr.mxu0 0.0
  %2804 = vmatpush1.msra.mxu0 0.0
  %2805 = vmatprep.subr.mxu0 0.0
  %2806 = vmatpush1.msra.mxu0 0.0
  %2807 = vmatprep.subr.mxu0 0.0
  %2808 = vmatpush1.msra.mxu0 0.0
  %2809 = vmatprep.subr.mxu0 0.0
  %2810 = vmatpush1.msra.mxu0 0.0
  %2811 = vmatprep.subr.mxu0 0.0
  %2812 = vmatpush1.msra.mxu0 0.0
  %2813 = vmatprep.subr.mxu0 0.0
  %2814 = vmatpush1.msra.mxu0 0.0
  %2815 = vmatprep.subr.mxu0 0.0
  %2816 = vmatpush1.msra.mxu0 0.0
  %2817 = vmatprep.subr.mxu0 0.0
  %2818 = vmatpush1.msra.mxu0 0.0
  %2819 = vmatprep.subr.mxu0 0.0
  %2820 = vmatpush1.msra.mxu0 0.0
  %2821 = vmatprep.subr.mxu0 0.0
  %2822 = vmatpush1.msra.mxu0 0.0
  %2823 = vmatprep.subr.mxu0 0.0
  %2824 = vmatpush1.msra.mxu0 0.0
  %2825 = vmatprep.subr.mxu0 0.0
  %2826 = vmatpush1.msra.mxu0 0.0
  %2827 = vmatprep.subr.mxu0 0.0
  %2828 = vmatpush1.msra.mxu0 0.0
  %2829 = vmatprep.subr.mxu0 0.0
  %2830 = vmatpush1.msra.mxu0 0.0
  %2831 = vmatprep.subr.mxu0 0.0
  %2832 = vmatpush1.msra.mxu0 0.0
  %2833 = vmatprep.subr.mxu0 0.0
  %2834 = vmatpush1.msra.mxu0 0.0
  %2835 = vmatprep.subr.mxu0 0.0
  %2836 = vmatpush1.msra.mxu0 0.0
  %2837 = vmatprep.subr.mxu0 0.0
  %2838 = vmatpush1.msra.mxu0 0.0
  %2839 = vmatprep.subr.mxu0 0.0
  %2840 = vmatpush1.msra.mxu0 0.0
  %2841 = vmatprep.subr.mxu0 0.0
  %2842 = vmatpush1.msra.mxu0 0.0
  %2843 = vmatprep.subr.mxu0 0.0
  %2844 = vmatpush1.msra.mxu0 0.0
  %2845 = vmatprep.subr.mxu0 0.0
  %2846 = vmatpush1.msra.mxu0 0.0
  %2847 = vmatprep.subr.mxu0 0.0
  %2848 = vmatpush1.msra.mxu0 0.0
  %2849 = vmatprep.subr.mxu0 0.0
  %2850 = vmatpush1.msra.mxu0 0.0
  %2851 = vmatprep.subr.mxu0 0.0
  %2852 = vmatpush1.msra.mxu0 0.0
  %2853 = vmatprep.subr.mxu0 0.0
  %2854 = vmatpush1.msra.mxu0 0.0
  %2855 = vmatprep.subr.mxu0 0.0
  %2856 = vmatpush1.msra.mxu0 0.0
  %2857 = vmatprep.mubr.f32.mxu0 0.0
  %2858 = vmatmul.mubr.f32.gmra.mrb[0].mxu0 %v2515
  %v2859 = vpop.f32.mrb[0].mxu0
  %v2860 = vadd.f32 0.0, %v2859
  %v2861 = vpop.f32.mrb[0].mxu0
  %2862 = vmatprep.mubr.f32.mxu0 0.0
  %2863 = vmatmul.mubr.f32.gmra.mrb[0].mxu0 %v2518
  %v2864 = vpop.f32.mrb[0].mxu0
  %v2865 = vadd.f32 0.0, %v2864
  %v2866 = vpop.f32.mrb[0].mxu0
  %2867 = vmatprep.mubr.f32.mxu0 0.0
  %2868 = vmatmul.mubr.f32.gmra.mrb[0].mxu0 %v2521
  %v2869 = vpop.f32.mrb[0].mxu0
  %v2870 = vadd.f32 0.0, %v2869
  %v2871 = vpop.f32.mrb[0].mxu0
  %2872 = vmatprep.mubr.f32.mxu0 0.0
  %2873 = vmatmul.mubr.f32.gmra.mrb[0].mxu0 %v2524
  %v2874 = vpop.f32.mrb[0].mxu0
  %v2875 = vadd.f32 0.0, %v2874
  %v2876 = vpop.f32.mrb[0].mxu0
  %2877 = vdwg.mxu0
  %v2878 = vadd.f32 %v2452, %v2593
  %v2879 = vadd.f32 %v2453, %v2595
  %v2880 = vadd.f32 %v2454, %v2682
  %v2881 = vadd.f32 %v2455, %v2684
  %v2882 = vadd.f32 %v2456, %v2771
  %v2883 = vadd.f32 %v2457, %v2773
  %v2884 = vadd.f32 %v2458, %v2860
  %v2885 = vadd.f32 %v2459, %v2599
  %v2886 = vadd.f32 %v2460, %v2601
  %v2887 = vadd.f32 %v2461, %v2688
  %v2888 = vadd.f32 %v2462, %v2690
  %v2889 = vadd.f32 %v2463, %v2777
  %v2890 = vadd.f32 %v2464, %v2779
  %v2891 = vadd.f32 %v2465, %v2865
  %v2892 = vadd.f32 %v2466, %v2605
  %v2893 = vadd.f32 %v2467, %v2607
  %v2894 = vadd.f32 %v2468, %v2694
  %v2895 = vadd.f32 %v2469, %v2696
  %v2896 = vadd.f32 %v2470, %v2783
  %v2897 = vadd.f32 %v2471, %v2785
  %v2898 = vadd.f32 %v2472, %v2870
  %v2899 = vadd.f32 %v2473, %v2611
  %v2900 = vadd.f32 %v2474, %v2613
  %v2901 = vadd.f32 %v2475, %v2700
  %v2902 = vadd.f32 %v2476, %v2702
  %v2903 = vadd.f32 %v2477, %v2789
  %v2904 = vadd.f32 %v2478, %v2791
  %v2905 = vadd.f32 %v2479, %v2875
  %2906 = vrot.lane.b32.xlu0 %v20, 108
  %v2907 = vpop.permute.xlu0 %2906
  %2908 = vrot.lane.b32.xlu0 %v21, 108
  %v2909 = vpop.permute.xlu0 %2908
  %2910 = vrot.lane.b32.xlu0 %v22, 108
  %v2911 = vpop.permute.xlu0 %2910
  %2912 = vrot.lane.b32.xlu0 %v23, 108
  %v2913 = vpop.permute.xlu0 %2912
  %2914 = vrot.lane.b32.xlu0 %v24, 108
  %v2915 = vpop.permute.xlu0 %2914
  %2916 = vrot.lane.b32.xlu0 %v25, 108
  %v2917 = vpop.permute.xlu0 %2916
  %2918 = vrot.lane.b32.xlu0 %v26, 108
  %v2919 = vpop.permute.xlu0 %2918
  %vm2920 = vcmp.lt.s32.totalorder %v50, 108
  %v2921 = vsel %vm2920, %v2917, %v2919
  %v2922 = vsel %vm2920, %v2915, %v2917
  %v2923 = vsel %vm2920, %v2913, %v2915
  %v2924 = vsel %vm2920, %v2911, %v2913
  %v2925 = vsel %vm2920, %v2909, %v2911
  %v2926 = vsel %vm2920, %v2907, %v2909
  %v2927 = vsel %vm2920, %v2919, %v2907
  %s2928 = scalar_lea.vmem %s2, 224
  %v2929 = vld [vmem:[%s2928] sm:$0xff]
  %v2930 = vld [vmem:[%s2928 + $0x8] sm:$0xff]
  %v2931 = vld [vmem:[%s2928 + $0x10] sm:$0xff]
  %v2932 = vld [vmem:[%s2928 + $0x18] sm:$0xff]
  %v2934 = vsel %vm90, %v2929, 0
  %v2937 = vsel %vm90, %v2930, 0
  %v2940 = vsel %vm90, %v2931, 0
  %v2943 = vsel %vm90, %v2932, 0
  %2945 = vmatprep.subr.mxu0 %v2925
  %2946 = vmatpush1.msra.mxu0 %v2926
  %2947 = vmatprep.subr.mxu0 0.0
  %2948 = vmatpush1.msra.mxu0 0.0
  %2949 = vmatprep.subr.mxu0 0.0
  %2950 = vmatpush1.msra.mxu0 0.0
  %2951 = vmatprep.subr.mxu0 0.0
  %2952 = vmatpush1.msra.mxu0 0.0
  %2953 = vmatprep.subr.mxu0 0.0
  %2954 = vmatpush1.msra.mxu0 0.0
  %2955 = vmatprep.subr.mxu0 0.0
  %2956 = vmatpush1.msra.mxu0 0.0
  %2957 = vmatprep.subr.mxu0 0.0
  %2958 = vmatpush1.msra.mxu0 0.0
  %2959 = vmatprep.subr.mxu0 0.0
  %2960 = vmatpush1.msra.mxu0 0.0
  %2961 = vmatprep.subr.mxu0 0.0
  %2962 = vmatpush1.msra.mxu0 0.0
  %2963 = vmatprep.subr.mxu0 0.0
  %2964 = vmatpush1.msra.mxu0 0.0
  %2965 = vmatprep.subr.mxu0 0.0
  %2966 = vmatpush1.msra.mxu0 0.0
  %2967 = vmatprep.subr.mxu0 0.0
  %2968 = vmatpush1.msra.mxu0 0.0
  %2969 = vmatprep.subr.mxu0 0.0
  %2970 = vmatpush1.msra.mxu0 0.0
  %2971 = vmatprep.subr.mxu0 0.0
  %2972 = vmatpush1.msra.mxu0 0.0
  %2973 = vmatprep.subr.mxu0 0.0
  %2974 = vmatpush1.msra.mxu0 0.0
  %2975 = vmatprep.subr.mxu0 0.0
  %2976 = vmatpush1.msra.mxu0 0.0
  %2977 = vmatprep.subr.mxu0 0.0
  %2978 = vmatpush1.msra.mxu0 0.0
  %2979 = vmatprep.subr.mxu0 0.0
  %2980 = vmatpush1.msra.mxu0 0.0
  %2981 = vmatprep.subr.mxu0 0.0
  %2982 = vmatpush1.msra.mxu0 0.0
  %2983 = vmatprep.subr.mxu0 0.0
  %2984 = vmatpush1.msra.mxu0 0.0
  %2985 = vmatprep.subr.mxu0 0.0
  %2986 = vmatpush1.msra.mxu0 0.0
  %2987 = vmatprep.subr.mxu0 0.0
  %2988 = vmatpush1.msra.mxu0 0.0
  %2989 = vmatprep.subr.mxu0 0.0
  %2990 = vmatpush1.msra.mxu0 0.0
  %2991 = vmatprep.subr.mxu0 0.0
  %2992 = vmatpush1.msra.mxu0 0.0
  %2993 = vmatprep.subr.mxu0 0.0
  %2994 = vmatpush1.msra.mxu0 0.0
  %2995 = vmatprep.subr.mxu0 0.0
  %2996 = vmatpush1.msra.mxu0 0.0
  %2997 = vmatprep.subr.mxu0 0.0
  %2998 = vmatpush1.msra.mxu0 0.0
  %2999 = vmatprep.subr.mxu0 0.0
  %3000 = vmatpush1.msra.mxu0 0.0
  %3001 = vmatprep.subr.mxu0 0.0
  %3002 = vmatpush1.msra.mxu0 0.0
  %3003 = vmatprep.subr.mxu0 0.0
  %3004 = vmatpush1.msra.mxu0 0.0
  %3005 = vmatprep.subr.mxu0 0.0
  %3006 = vmatpush1.msra.mxu0 0.0
  %3007 = vmatprep.subr.mxu0 0.0
  %3008 = vmatpush1.msra.mxu0 0.0
  %3009 = vmatprep.mubr.f32.mxu0 0.0
  %3010 = vmatmul.mubr.f32.gmra.mrb[0].mxu0 %v2934
  %v3011 = vpop.f32.mrb[0].mxu0
  %v3012 = vadd.f32 0.0, %v3011
  %v3013 = vpop.f32.mrb[0].mxu0
  %v3014 = vadd.f32 0.0, %v3013
  %3015 = vmatprep.mubr.f32.mxu0 0.0
  %3016 = vmatmul.mubr.f32.gmra.mrb[0].mxu0 %v2937
  %v3017 = vpop.f32.mrb[0].mxu0
  %v3018 = vadd.f32 0.0, %v3017
  %v3019 = vpop.f32.mrb[0].mxu0
  %v3020 = vadd.f32 0.0, %v3019
  %3021 = vmatprep.mubr.f32.mxu0 0.0
  %3022 = vmatmul.mubr.f32.gmra.mrb[0].mxu0 %v2940
  %v3023 = vpop.f32.mrb[0].mxu0
  %v3024 = vadd.f32 0.0, %v3023
  %v3025 = vpop.f32.mrb[0].mxu0
  %v3026 = vadd.f32 0.0, %v3025
  %3027 = vmatprep.mubr.f32.mxu0 0.0
  %3028 = vmatmul.mubr.f32.gmra.mrb[0].mxu0 %v2943
  %v3029 = vpop.f32.mrb[0].mxu0
  %v3030 = vadd.f32 0.0, %v3029
  %v3031 = vpop.f32.mrb[0].mxu0
  %v3032 = vadd.f32 0.0, %v3031
  %3033 = vdwg.mxu0
  %3034 = vmatprep.subr.mxu0 %v2923
  %3035 = vmatpush1.msra.mxu0 %v2924
  %3036 = vmatprep.subr.mxu0 0.0
  %3037 = vmatpush1.msra.mxu0 0.0
  %3038 = vmatprep.subr.mxu0 0.0
  %3039 = vmatpush1.msra.mxu0 0.0
  %3040 = vmatprep.subr.mxu0 0.0
  %3041 = vmatpush1.msra.mxu0 0.0
  %3042 = vmatprep.subr.mxu0 0.0
  %3043 = vmatpush1.msra.mxu0 0.0
  %3044 = vmatprep.subr.mxu0 0.0
  %3045 = vmatpush1.msra.mxu0 0.0
  %3046 = vmatprep.subr.mxu0 0.0
  %3047 = vmatpush1.msra.mxu0 0.0
  %3048 = vmatprep.subr.mxu0 0.0
  %3049 = vmatpush1.msra.mxu0 0.0
  %3050 = vmatprep.subr.mxu0 0.0
  %3051 = vmatpush1.msra.mxu0 0.0
  %3052 = vmatprep.subr.mxu0 0.0
  %3053 = vmatpush1.msra.mxu0 0.0
  %3054 = vmatprep.subr.mxu0 0.0
  %3055 = vmatpush1.msra.mxu0 0.0
  %3056 = vmatprep.subr.mxu0 0.0
  %3057 = vmatpush1.msra.mxu0 0.0
  %3058 = vmatprep.subr.mxu0 0.0
  %3059 = vmatpush1.msra.mxu0 0.0
  %3060 = vmatprep.subr.mxu0 0.0
  %3061 = vmatpush1.msra.mxu0 0.0
  %3062 = vmatprep.subr.mxu0 0.0
  %3063 = vmatpush1.msra.mxu0 0.0
  %3064 = vmatprep.subr.mxu0 0.0
  %3065 = vmatpush1.msra.mxu0 0.0
  %3066 = vmatprep.subr.mxu0 0.0
  %3067 = vmatpush1.msra.mxu0 0.0
  %3068 = vmatprep.subr.mxu0 0.0
  %3069 = vmatpush1.msra.mxu0 0.0
  %3070 = vmatprep.subr.mxu0 0.0
  %3071 = vmatpush1.msra.mxu0 0.0
  %3072 = vmatprep.subr.mxu0 0.0
  %3073 = vmatpush1.msra.mxu0 0.0
  %3074 = vmatprep.subr.mxu0 0.0
  %3075 = vmatpush1.msra.mxu0 0.0
  %3076 = vmatprep.subr.mxu0 0.0
  %3077 = vmatpush1.msra.mxu0 0.0
  %3078 = vmatprep.subr.mxu0 0.0
  %3079 = vmatpush1.msra.mxu0 0.0
  %3080 = vmatprep.subr.mxu0 0.0
  %3081 = vmatpush1.msra.mxu0 0.0
  %3082 = vmatprep.subr.mxu0 0.0
  %3083 = vmatpush1.msra.mxu0 0.0
  %3084 = vmatprep.subr.mxu0 0.0
  %3085 = vmatpush1.msra.mxu0 0.0
  %3086 = vmatprep.subr.mxu0 0.0
  %3087 = vmatpush1.msra.mxu0 0.0
  %3088 = vmatprep.subr.mxu0 0.0
  %3089 = vmatpush1.msra.mxu0 0.0
  %3090 = vmatprep.subr.mxu0 0.0
  %3091 = vmatpush1.msra.mxu0 0.0
  %3092 = vmatprep.subr.mxu0 0.0
  %3093 = vmatpush1.msra.mxu0 0.0
  %3094 = vmatprep.subr.mxu0 0.0
  %3095 = vmatpush1.msra.mxu0 0.0
  %3096 = vmatprep.subr.mxu0 0.0
  %3097 = vmatpush1.msra.mxu0 0.0
  %3098 = vmatprep.mubr.f32.mxu0 0.0
  %3099 = vmatmul.mubr.f32.gmra.mrb[0].mxu0 %v2934
  %v3100 = vpop.f32.mrb[0].mxu0
  %v3101 = vadd.f32 0.0, %v3100
  %v3102 = vpop.f32.mrb[0].mxu0
  %v3103 = vadd.f32 0.0, %v3102
  %3104 = vmatprep.mubr.f32.mxu0 0.0
  %3105 = vmatmul.mubr.f32.gmra.mrb[0].mxu0 %v2937
  %v3106 = vpop.f32.mrb[0].mxu0
  %v3107 = vadd.f32 0.0, %v3106
  %v3108 = vpop.f32.mrb[0].mxu0
  %v3109 = vadd.f32 0.0, %v3108
  %3110 = vmatprep.mubr.f32.mxu0 0.0
  %3111 = vmatmul.mubr.f32.gmra.mrb[0].mxu0 %v2940
  %v3112 = vpop.f32.mrb[0].mxu0
  %v3113 = vadd.f32 0.0, %v3112
  %v3114 = vpop.f32.mrb[0].mxu0
  %v3115 = vadd.f32 0.0, %v3114
  %3116 = vmatprep.mubr.f32.mxu0 0.0
  %3117 = vmatmul.mubr.f32.gmra.mrb[0].mxu0 %v2943
  %v3118 = vpop.f32.mrb[0].mxu0
  %v3119 = vadd.f32 0.0, %v3118
  %v3120 = vpop.f32.mrb[0].mxu0
  %v3121 = vadd.f32 0.0, %v3120
  %3122 = vdwg.mxu0
  %3123 = vmatprep.subr.mxu0 %v2921
  %3124 = vmatpush1.msra.mxu0 %v2922
  %3125 = vmatprep.subr.mxu0 0.0
  %3126 = vmatpush1.msra.mxu0 0.0
  %3127 = vmatprep.subr.mxu0 0.0
  %3128 = vmatpush1.msra.mxu0 0.0
  %3129 = vmatprep.subr.mxu0 0.0
  %3130 = vmatpush1.msra.mxu0 0.0
  %3131 = vmatprep.subr.mxu0 0.0
  %3132 = vmatpush1.msra.mxu0 0.0
  %3133 = vmatprep.subr.mxu0 0.0
  %3134 = vmatpush1.msra.mxu0 0.0
  %3135 = vmatprep.subr.mxu0 0.0
  %3136 = vmatpush1.msra.mxu0 0.0
  %3137 = vmatprep.subr.mxu0 0.0
  %3138 = vmatpush1.msra.mxu0 0.0
  %3139 = vmatprep.subr.mxu0 0.0
  %3140 = vmatpush1.msra.mxu0 0.0
  %3141 = vmatprep.subr.mxu0 0.0
  %3142 = vmatpush1.msra.mxu0 0.0
  %3143 = vmatprep.subr.mxu0 0.0
  %3144 = vmatpush1.msra.mxu0 0.0
  %3145 = vmatprep.subr.mxu0 0.0
  %3146 = vmatpush1.msra.mxu0 0.0
  %3147 = vmatprep.subr.mxu0 0.0
  %3148 = vmatpush1.msra.mxu0 0.0
  %3149 = vmatprep.subr.mxu0 0.0
  %3150 = vmatpush1.msra.mxu0 0.0
  %3151 = vmatprep.subr.mxu0 0.0
  %3152 = vmatpush1.msra.mxu0 0.0
  %3153 = vmatprep.subr.mxu0 0.0
  %3154 = vmatpush1.msra.mxu0 0.0
  %3155 = vmatprep.subr.mxu0 0.0
  %3156 = vmatpush1.msra.mxu0 0.0
  %3157 = vmatprep.subr.mxu0 0.0
  %3158 = vmatpush1.msra.mxu0 0.0
  %3159 = vmatprep.subr.mxu0 0.0
  %3160 = vmatpush1.msra.mxu0 0.0
  %3161 = vmatprep.subr.mxu0 0.0
  %3162 = vmatpush1.msra.mxu0 0.0
  %3163 = vmatprep.subr.mxu0 0.0
  %3164 = vmatpush1.msra.mxu0 0.0
  %3165 = vmatprep.subr.mxu0 0.0
  %3166 = vmatpush1.msra.mxu0 0.0
  %3167 = vmatprep.subr.mxu0 0.0
  %3168 = vmatpush1.msra.mxu0 0.0
  %3169 = vmatprep.subr.mxu0 0.0
  %3170 = vmatpush1.msra.mxu0 0.0
  %3171 = vmatprep.subr.mxu0 0.0
  %3172 = vmatpush1.msra.mxu0 0.0
  %3173 = vmatprep.subr.mxu0 0.0
  %3174 = vmatpush1.msra.mxu0 0.0
  %3175 = vmatprep.subr.mxu0 0.0
  %3176 = vmatpush1.msra.mxu0 0.0
  %3177 = vmatprep.subr.mxu0 0.0
  %3178 = vmatpush1.msra.mxu0 0.0
  %3179 = vmatprep.subr.mxu0 0.0
  %3180 = vmatpush1.msra.mxu0 0.0
  %3181 = vmatprep.subr.mxu0 0.0
  %3182 = vmatpush1.msra.mxu0 0.0
  %3183 = vmatprep.subr.mxu0 0.0
  %3184 = vmatpush1.msra.mxu0 0.0
  %3185 = vmatprep.subr.mxu0 0.0
  %3186 = vmatpush1.msra.mxu0 0.0
  %3187 = vmatprep.mubr.f32.mxu0 0.0
  %3188 = vmatmul.mubr.f32.gmra.mrb[0].mxu0 %v2934
  %v3189 = vpop.f32.mrb[0].mxu0
  %v3190 = vadd.f32 0.0, %v3189
  %v3191 = vpop.f32.mrb[0].mxu0
  %v3192 = vadd.f32 0.0, %v3191
  %3193 = vmatprep.mubr.f32.mxu0 0.0
  %3194 = vmatmul.mubr.f32.gmra.mrb[0].mxu0 %v2937
  %v3195 = vpop.f32.mrb[0].mxu0
  %v3196 = vadd.f32 0.0, %v3195
  %v3197 = vpop.f32.mrb[0].mxu0
  %v3198 = vadd.f32 0.0, %v3197
  %3199 = vmatprep.mubr.f32.mxu0 0.0
  %3200 = vmatmul.mubr.f32.gmra.mrb[0].mxu0 %v2940
  %v3201 = vpop.f32.mrb[0].mxu0
  %v3202 = vadd.f32 0.0, %v3201
  %v3203 = vpop.f32.mrb[0].mxu0
  %v3204 = vadd.f32 0.0, %v3203
  %3205 = vmatprep.mubr.f32.mxu0 0.0
  %3206 = vmatmul.mubr.f32.gmra.mrb[0].mxu0 %v2943
  %v3207 = vpop.f32.mrb[0].mxu0
  %v3208 = vadd.f32 0.0, %v3207
  %v3209 = vpop.f32.mrb[0].mxu0
  %v3210 = vadd.f32 0.0, %v3209
  %3211 = vdwg.mxu0
  %3212 = vmatprep.subr.mxu0 0.0
  %3213 = vmatpush1.msra.mxu0 %v2927
  %3214 = vmatprep.subr.mxu0 0.0
  %3215 = vmatpush1.msra.mxu0 0.0
  %3216 = vmatprep.subr.mxu0 0.0
  %3217 = vmatpush1.msra.mxu0 0.0
  %3218 = vmatprep.subr.mxu0 0.0
  %3219 = vmatpush1.msra.mxu0 0.0
  %3220 = vmatprep.subr.mxu0 0.0
  %3221 = vmatpush1.msra.mxu0 0.0
  %3222 = vmatprep.subr.mxu0 0.0
  %3223 = vmatpush1.msra.mxu0 0.0
  %3224 = vmatprep.subr.mxu0 0.0
  %3225 = vmatpush1.msra.mxu0 0.0
  %3226 = vmatprep.subr.mxu0 0.0
  %3227 = vmatpush1.msra.mxu0 0.0
  %3228 = vmatprep.subr.mxu0 0.0
  %3229 = vmatpush1.msra.mxu0 0.0
  %3230 = vmatprep.subr.mxu0 0.0
  %3231 = vmatpush1.msra.mxu0 0.0
  %3232 = vmatprep.subr.mxu0 0.0
  %3233 = vmatpush1.msra.mxu0 0.0
  %3234 = vmatprep.subr.mxu0 0.0
  %3235 = vmatpush1.msra.mxu0 0.0
  %3236 = vmatprep.subr.mxu0 0.0
  %3237 = vmatpush1.msra.mxu0 0.0
  %3238 = vmatprep.subr.mxu0 0.0
  %3239 = vmatpush1.msra.mxu0 0.0
  %3240 = vmatprep.subr.mxu0 0.0
  %3241 = vmatpush1.msra.mxu0 0.0
  %3242 = vmatprep.subr.mxu0 0.0
  %3243 = vmatpush1.msra.mxu0 0.0
  %3244 = vmatprep.subr.mxu0 0.0
  %3245 = vmatpush1.msra.mxu0 0.0
  %3246 = vmatprep.subr.mxu0 0.0
  %3247 = vmatpush1.msra.mxu0 0.0
  %3248 = vmatprep.subr.mxu0 0.0
  %3249 = vmatpush1.msra.mxu0 0.0
  %3250 = vmatprep.subr.mxu0 0.0
  %3251 = vmatpush1.msra.mxu0 0.0
  %3252 = vmatprep.subr.mxu0 0.0
  %3253 = vmatpush1.msra.mxu0 0.0
  %3254 = vmatprep.subr.mxu0 0.0
  %3255 = vmatpush1.msra.mxu0 0.0
  %3256 = vmatprep.subr.mxu0 0.0
  %3257 = vmatpush1.msra.mxu0 0.0
  %3258 = vmatprep.subr.mxu0 0.0
  %3259 = vmatpush1.msra.mxu0 0.0
  %3260 = vmatprep.subr.mxu0 0.0
  %3261 = vmatpush1.msra.mxu0 0.0
  %3262 = vmatprep.subr.mxu0 0.0
  %3263 = vmatpush1.msra.mxu0 0.0
  %3264 = vmatprep.subr.mxu0 0.0
  %3265 = vmatpush1.msra.mxu0 0.0
  %3266 = vmatprep.subr.mxu0 0.0
  %3267 = vmatpush1.msra.mxu0 0.0
  %3268 = vmatprep.subr.mxu0 0.0
  %3269 = vmatpush1.msra.mxu0 0.0
  %3270 = vmatprep.subr.mxu0 0.0
  %3271 = vmatpush1.msra.mxu0 0.0
  %3272 = vmatprep.subr.mxu0 0.0
  %3273 = vmatpush1.msra.mxu0 0.0
  %3274 = vmatprep.subr.mxu0 0.0
  %3275 = vmatpush1.msra.mxu0 0.0
  %3276 = vmatprep.mubr.f32.mxu0 0.0
  %3277 = vmatmul.mubr.f32.gmra.mrb[0].mxu0 %v2934
  %v3278 = vpop.f32.mrb[0].mxu0
  %v3279 = vadd.f32 0.0, %v3278
  %v3280 = vpop.f32.mrb[0].mxu0
  %3281 = vmatprep.mubr.f32.mxu0 0.0
  %3282 = vmatmul.mubr.f32.gmra.mrb[0].mxu0 %v2937
  %v3283 = vpop.f32.mrb[0].mxu0
  %v3284 = vadd.f32 0.0, %v3283
  %v3285 = vpop.f32.mrb[0].mxu0
  %3286 = vmatprep.mubr.f32.mxu0 0.0
  %3287 = vmatmul.mubr.f32.gmra.mrb[0].mxu0 %v2940
  %v3288 = vpop.f32.mrb[0].mxu0
  %v3289 = vadd.f32 0.0, %v3288
  %v3290 = vpop.f32.mrb[0].mxu0
  %3291 = vmatprep.mubr.f32.mxu0 0.0
  %3292 = vmatmul.mubr.f32.gmra.mrb[0].mxu0 %v2943
  %v3293 = vpop.f32.mrb[0].mxu0
  %v3294 = vadd.f32 0.0, %v3293
  %v3295 = vpop.f32.mrb[0].mxu0
  %3296 = vdwg.mxu0
  %v3297 = vadd.f32 %v2878, %v3012
  %v3298 = vadd.f32 %v2879, %v3014
  %v3299 = vadd.f32 %v2880, %v3101
  %v3300 = vadd.f32 %v2881, %v3103
  %v3301 = vadd.f32 %v2882, %v3190
  %v3302 = vadd.f32 %v2883, %v3192
  %v3303 = vadd.f32 %v2884, %v3279
  %v3304 = vadd.f32 %v2885, %v3018
  %v3305 = vadd.f32 %v2886, %v3020
  %v3306 = vadd.f32 %v2887, %v3107
  %v3307 = vadd.f32 %v2888, %v3109
  %v3308 = vadd.f32 %v2889, %v3196
  %v3309 = vadd.f32 %v2890, %v3198
  %v3310 = vadd.f32 %v2891, %v3284
  %v3311 = vadd.f32 %v2892, %v3024
  %v3312 = vadd.f32 %v2893, %v3026
  %v3313 = vadd.f32 %v2894, %v3113
  %v3314 = vadd.f32 %v2895, %v3115
  %v3315 = vadd.f32 %v2896, %v3202
  %v3316 = vadd.f32 %v2897, %v3204
  %v3317 = vadd.f32 %v2898, %v3289
  %v3318 = vadd.f32 %v2899, %v3030
  %v3319 = vadd.f32 %v2900, %v3032
  %v3320 = vadd.f32 %v2901, %v3119
  %v3321 = vadd.f32 %v2902, %v3121
  %v3322 = vadd.f32 %v2903, %v3208
  %v3323 = vadd.f32 %v2904, %v3210
  %v3324 = vadd.f32 %v2905, %v3294
  %v3325 = vadd.f32 %v2480, %v2926
  %v3326 = vadd.f32 %v2481, %v2925
  %v3327 = vadd.f32 %v2482, %v2924
  %v3328 = vadd.f32 %v2483, %v2923
  %v3329 = vadd.f32 %v2484, %v2922
  %v3330 = vadd.f32 %v2485, %v2921
  %v3331 = vadd.f32 %v2486, %v2927
  %3332 = vrot.lane.b32.xlu0 %v20, 107
  %v3333 = vpop.permute.xlu0 %3332
  %3334 = vrot.lane.b32.xlu0 %v21, 107
  %v3335 = vpop.permute.xlu0 %3334
  %3336 = vrot.lane.b32.xlu0 %v22, 107
  %v3337 = vpop.permute.xlu0 %3336
  %3338 = vrot.lane.b32.xlu0 %v23, 107
  %v3339 = vpop.permute.xlu0 %3338
  %3340 = vrot.lane.b32.xlu0 %v24, 107
  %v3341 = vpop.permute.xlu0 %3340
  %3342 = vrot.lane.b32.xlu0 %v25, 107
  %v3343 = vpop.permute.xlu0 %3342
  %3344 = vrot.lane.b32.xlu0 %v26, 107
  %v3345 = vpop.permute.xlu0 %3344
  %vm3346 = vcmp.lt.s32.totalorder %v50, 107
  %v3347 = vsel %vm3346, %v3343, %v3345
  %v3348 = vsel %vm3346, %v3341, %v3343
  %v3349 = vsel %vm3346, %v3339, %v3341
  %v3350 = vsel %vm3346, %v3337, %v3339
  %v3351 = vsel %vm3346, %v3335, %v3337
  %v3352 = vsel %vm3346, %v3333, %v3335
  %v3353 = vsel %vm3346, %v3345, %v3333
  %s3354 = scalar_lea.vmem %s2, 256
  %v3355 = vld [vmem:[%s3354] sm:$0xff]
  %v3356 = vld [vmem:[%s3354 + $0x8] sm:$0xff]
  %v3357 = vld [vmem:[%s3354 + $0x10] sm:$0xff]
  %v3358 = vld [vmem:[%s3354 + $0x18] sm:$0xff]
  %v3360 = vsel %vm90, %v3355, 0
  %v3363 = vsel %vm90, %v3356, 0
  %v3366 = vsel %vm90, %v3357, 0
  %v3369 = vsel %vm90, %v3358, 0
  %3371 = vmatprep.subr.mxu0 %v3351
  %3372 = vmatpush1.msra.mxu0 %v3352
  %3373 = vmatprep.subr.mxu0 0.0
  %3374 = vmatpush1.msra.mxu0 0.0
  %3375 = vmatprep.subr.mxu0 0.0
  %3376 = vmatpush1.msra.mxu0 0.0
  %3377 = vmatprep.subr.mxu0 0.0
  %3378 = vmatpush1.msra.mxu0 0.0
  %3379 = vmatprep.subr.mxu0 0.0
  %3380 = vmatpush1.msra.mxu0 0.0
  %3381 = vmatprep.subr.mxu0 0.0
  %3382 = vmatpush1.msra.mxu0 0.0
  %3383 = vmatprep.subr.mxu0 0.0
  %3384 = vmatpush1.msra.mxu0 0.0
  %3385 = vmatprep.subr.mxu0 0.0
  %3386 = vmatpush1.msra.mxu0 0.0
  %3387 = vmatprep.subr.mxu0 0.0
  %3388 = vmatpush1.msra.mxu0 0.0
  %3389 = vmatprep.subr.mxu0 0.0
  %3390 = vmatpush1.msra.mxu0 0.0
  %3391 = vmatprep.subr.mxu0 0.0
  %3392 = vmatpush1.msra.mxu0 0.0
  %3393 = vmatprep.subr.mxu0 0.0
  %3394 = vmatpush1.msra.mxu0 0.0
  %3395 = vmatprep.subr.mxu0 0.0
  %3396 = vmatpush1.msra.mxu0 0.0
  %3397 = vmatprep.subr.mxu0 0.0
  %3398 = vmatpush1.msra.mxu0 0.0
  %3399 = vmatprep.subr.mxu0 0.0
  %3400 = vmatpush1.msra.mxu0 0.0
  %3401 = vmatprep.subr.mxu0 0.0
  %3402 = vmatpush1.msra.mxu0 0.0
  %3403 = vmatprep.subr.mxu0 0.0
  %3404 = vmatpush1.msra.mxu0 0.0
  %3405 = vmatprep.subr.mxu0 0.0
  %3406 = vmatpush1.msra.mxu0 0.0
  %3407 = vmatprep.subr.mxu0 0.0
  %3408 = vmatpush1.msra.mxu0 0.0
  %3409 = vmatprep.subr.mxu0 0.0
  %3410 = vmatpush1.msra.mxu0 0.0
  %3411 = vmatprep.subr.mxu0 0.0
  %3412 = vmatpush1.msra.mxu0 0.0
  %3413 = vmatprep.subr.mxu0 0.0
  %3414 = vmatpush1.msra.mxu0 0.0
  %3415 = vmatprep.subr.mxu0 0.0
  %3416 = vmatpush1.msra.mxu0 0.0
  %3417 = vmatprep.subr.mxu0 0.0
  %3418 = vmatpush1.msra.mxu0 0.0
  %3419 = vmatprep.subr.mxu0 0.0
  %3420 = vmatpush1.msra.mxu0 0.0
  %3421 = vmatprep.subr.mxu0 0.0
  %3422 = vmatpush1.msra.mxu0 0.0
  %3423 = vmatprep.subr.mxu0 0.0
  %3424 = vmatpush1.msra.mxu0 0.0
  %3425 = vmatprep.subr.mxu0 0.0
  %3426 = vmatpush1.msra.mxu0 0.0
  %3427 = vmatprep.subr.mxu0 0.0
  %3428 = vmatpush1.msra.mxu0 0.0
  %3429 = vmatprep.subr.mxu0 0.0
  %3430 = vmatpush1.msra.mxu0 0.0
  %3431 = vmatprep.subr.mxu0 0.0
  %3432 = vmatpush1.msra.mxu0 0.0
  %3433 = vmatprep.subr.mxu0 0.0
  %3434 = vmatpush1.msra.mxu0 0.0
  %3435 = vmatprep.mubr.f32.mxu0 0.0
  %3436 = vmatmul.mubr.f32.gmra.mrb[0].mxu0 %v3360
  %v3437 = vpop.f32.mrb[0].mxu0
  %v3438 = vadd.f32 0.0, %v3437
  %v3439 = vpop.f32.mrb[0].mxu0
  %v3440 = vadd.f32 0.0, %v3439
  %3441 = vmatprep.mubr.f32.mxu0 0.0
  %3442 = vmatmul.mubr.f32.gmra.mrb[0].mxu0 %v3363
  %v3443 = vpop.f32.mrb[0].mxu0
  %v3444 = vadd.f32 0.0, %v3443
  %v3445 = vpop.f32.mrb[0].mxu0
  %v3446 = vadd.f32 0.0, %v3445
  %3447 = vmatprep.mubr.f32.mxu0 0.0
  %3448 = vmatmul.mubr.f32.gmra.mrb[0].mxu0 %v3366
  %v3449 = vpop.f32.mrb[0].mxu0
  %v3450 = vadd.f32 0.0, %v3449
  %v3451 = vpop.f32.mrb[0].mxu0
  %v3452 = vadd.f32 0.0, %v3451
  %3453 = vmatprep.mubr.f32.mxu0 0.0
  %3454 = vmatmul.mubr.f32.gmra.mrb[0].mxu0 %v3369
  %v3455 = vpop.f32.mrb[0].mxu0
  %v3456 = vadd.f32 0.0, %v3455
  %v3457 = vpop.f32.mrb[0].mxu0
  %v3458 = vadd.f32 0.0, %v3457
  %3459 = vdwg.mxu0
  %3460 = vmatprep.subr.mxu0 %v3349
  %3461 = vmatpush1.msra.mxu0 %v3350
  %3462 = vmatprep.subr.mxu0 0.0
  %3463 = vmatpush1.msra.mxu0 0.0
  %3464 = vmatprep.subr.mxu0 0.0
  %3465 = vmatpush1.msra.mxu0 0.0
  %3466 = vmatprep.subr.mxu0 0.0
  %3467 = vmatpush1.msra.mxu0 0.0
  %3468 = vmatprep.subr.mxu0 0.0
  %3469 = vmatpush1.msra.mxu0 0.0
  %3470 = vmatprep.subr.mxu0 0.0
  %3471 = vmatpush1.msra.mxu0 0.0
  %3472 = vmatprep.subr.mxu0 0.0
  %3473 = vmatpush1.msra.mxu0 0.0
  %3474 = vmatprep.subr.mxu0 0.0
  %3475 = vmatpush1.msra.mxu0 0.0
  %3476 = vmatprep.subr.mxu0 0.0
  %3477 = vmatpush1.msra.mxu0 0.0
  %3478 = vmatprep.subr.mxu0 0.0
  %3479 = vmatpush1.msra.mxu0 0.0
  %3480 = vmatprep.subr.mxu0 0.0
  %3481 = vmatpush1.msra.mxu0 0.0
  %3482 = vmatprep.subr.mxu0 0.0
  %3483 = vmatpush1.msra.mxu0 0.0
  %3484 = vmatprep.subr.mxu0 0.0
  %3485 = vmatpush1.msra.mxu0 0.0
  %3486 = vmatprep.subr.mxu0 0.0
  %3487 = vmatpush1.msra.mxu0 0.0
  %3488 = vmatprep.subr.mxu0 0.0
  %3489 = vmatpush1.msra.mxu0 0.0
  %3490 = vmatprep.subr.mxu0 0.0
  %3491 = vmatpush1.msra.mxu0 0.0
  %3492 = vmatprep.subr.mxu0 0.0
  %3493 = vmatpush1.msra.mxu0 0.0
  %3494 = vmatprep.subr.mxu0 0.0
  %3495 = vmatpush1.msra.mxu0 0.0
  %3496 = vmatprep.subr.mxu0 0.0
  %3497 = vmatpush1.msra.mxu0 0.0
  %3498 = vmatprep.subr.mxu0 0.0
  %3499 = vmatpush1.msra.mxu0 0.0
  %3500 = vmatprep.subr.mxu0 0.0
  %3501 = vmatpush1.msra.mxu0 0.0
  %3502 = vmatprep.subr.mxu0 0.0
  %3503 = vmatpush1.msra.mxu0 0.0
  %3504 = vmatprep.subr.mxu0 0.0
  %3505 = vmatpush1.msra.mxu0 0.0
  %3506 = vmatprep.subr.mxu0 0.0
  %3507 = vmatpush1.msra.mxu0 0.0
  %3508 = vmatprep.subr.mxu0 0.0
  %3509 = vmatpush1.msra.mxu0 0.0
  %3510 = vmatprep.subr.mxu0 0.0
  %3511 = vmatpush1.msra.mxu0 0.0
  %3512 = vmatprep.subr.mxu0 0.0
  %3513 = vmatpush1.msra.mxu0 0.0
  %3514 = vmatprep.subr.mxu0 0.0
  %3515 = vmatpush1.msra.mxu0 0.0
  %3516 = vmatprep.subr.mxu0 0.0
  %3517 = vmatpush1.msra.mxu0 0.0
  %3518 = vmatprep.subr.mxu0 0.0
  %3519 = vmatpush1.msra.mxu0 0.0
  %3520 = vmatprep.subr.mxu0 0.0
  %3521 = vmatpush1.msra.mxu0 0.0
  %3522 = vmatprep.subr.mxu0 0.0
  %3523 = vmatpush1.msra.mxu0 0.0
  %3524 = vmatprep.mubr.f32.mxu0 0.0
  %3525 = vmatmul.mubr.f32.gmra.mrb[0].mxu0 %v3360
  %v3526 = vpop.f32.mrb[0].mxu0
  %v3527 = vadd.f32 0.0, %v3526
  %v3528 = vpop.f32.mrb[0].mxu0
  %v3529 = vadd.f32 0.0, %v3528
  %3530 = vmatprep.mubr.f32.mxu0 0.0
  %3531 = vmatmul.mubr.f32.gmra.mrb[0].mxu0 %v3363
  %v3532 = vpop.f32.mrb[0].mxu0
  %v3533 = vadd.f32 0.0, %v3532
  %v3534 = vpop.f32.mrb[0].mxu0
  %v3535 = vadd.f32 0.0, %v3534
  %3536 = vmatprep.mubr.f32.mxu0 0.0
  %3537 = vmatmul.mubr.f32.gmra.mrb[0].mxu0 %v3366
  %v3538 = vpop.f32.mrb[0].mxu0
  %v3539 = vadd.f32 0.0, %v3538
  %v3540 = vpop.f32.mrb[0].mxu0
  %v3541 = vadd.f32 0.0, %v3540
  %3542 = vmatprep.mubr.f32.mxu0 0.0
  %3543 = vmatmul.mubr.f32.gmra.mrb[0].mxu0 %v3369
  %v3544 = vpop.f32.mrb[0].mxu0
  %v3545 = vadd.f32 0.0, %v3544
  %v3546 = vpop.f32.mrb[0].mxu0
  %v3547 = vadd.f32 0.0, %v3546
  %3548 = vdwg.mxu0
  %3549 = vmatprep.subr.mxu0 %v3347
  %3550 = vmatpush1.msra.mxu0 %v3348
  %3551 = vmatprep.subr.mxu0 0.0
  %3552 = vmatpush1.msra.mxu0 0.0
  %3553 = vmatprep.subr.mxu0 0.0
  %3554 = vmatpush1.msra.mxu0 0.0
  %3555 = vmatprep.subr.mxu0 0.0
  %3556 = vmatpush1.msra.mxu0 0.0
  %3557 = vmatprep.subr.mxu0 0.0
  %3558 = vmatpush1.msra.mxu0 0.0
  %3559 = vmatprep.subr.mxu0 0.0
  %3560 = vmatpush1.msra.mxu0 0.0
  %3561 = vmatprep.subr.mxu0 0.0
  %3562 = vmatpush1.msra.mxu0 0.0
  %3563 = vmatprep.subr.mxu0 0.0
  %3564 = vmatpush1.msra.mxu0 0.0
  %3565 = vmatprep.subr.mxu0 0.0
  %3566 = vmatpush1.msra.mxu0 0.0
  %3567 = vmatprep.subr.mxu0 0.0
  %3568 = vmatpush1.msra.mxu0 0.0
  %3569 = vmatprep.subr.mxu0 0.0
  %3570 = vmatpush1.msra.mxu0 0.0
  %3571 = vmatprep.subr.mxu0 0.0
  %3572 = vmatpush1.msra.mxu0 0.0
  %3573 = vmatprep.subr.mxu0 0.0
  %3574 = vmatpush1.msra.mxu0 0.0
  %3575 = vmatprep.subr.mxu0 0.0
  %3576 = vmatpush1.msra.mxu0 0.0
  %3577 = vmatprep.subr.mxu0 0.0
  %3578 = vmatpush1.msra.mxu0 0.0
  %3579 = vmatprep.subr.mxu0 0.0
  %3580 = vmatpush1.msra.mxu0 0.0
  %3581 = vmatprep.subr.mxu0 0.0
  %3582 = vmatpush1.msra.mxu0 0.0
  %3583 = vmatprep.subr.mxu0 0.0
  %3584 = vmatpush1.msra.mxu0 0.0
  %3585 = vmatprep.subr.mxu0 0.0
  %3586 = vmatpush1.msra.mxu0 0.0
  %3587 = vmatprep.subr.mxu0 0.0
  %3588 = vmatpush1.msra.mxu0 0.0
  %3589 = vmatprep.subr.mxu0 0.0
  %3590 = vmatpush1.msra.mxu0 0.0
  %3591 = vmatprep.subr.mxu0 0.0
  %3592 = vmatpush1.msra.mxu0 0.0
  %3593 = vmatprep.subr.mxu0 0.0
  %3594 = vmatpush1.msra.mxu0 0.0
  %3595 = vmatprep.subr.mxu0 0.0
  %3596 = vmatpush1.msra.mxu0 0.0
  %3597 = vmatprep.subr.mxu0 0.0
  %3598 = vmatpush1.msra.mxu0 0.0
  %3599 = vmatprep.subr.mxu0 0.0
  %3600 = vmatpush1.msra.mxu0 0.0
  %3601 = vmatprep.subr.mxu0 0.0
  %3602 = vmatpush1.msra.mxu0 0.0
  %3603 = vmatprep.subr.mxu0 0.0
  %3604 = vmatpush1.msra.mxu0 0.0
  %3605 = vmatprep.subr.mxu0 0.0
  %3606 = vmatpush1.msra.mxu0 0.0
  %3607 = vmatprep.subr.mxu0 0.0
  %3608 = vmatpush1.msra.mxu0 0.0
  %3609 = vmatprep.subr.mxu0 0.0
  %3610 = vmatpush1.msra.mxu0 0.0
  %3611 = vmatprep.subr.mxu0 0.0
  %3612 = vmatpush1.msra.mxu0 0.0
  %3613 = vmatprep.mubr.f32.mxu0 0.0
  %3614 = vmatmul.mubr.f32.gmra.mrb[0].mxu0 %v3360
  %v3615 = vpop.f32.mrb[0].mxu0
  %v3616 = vadd.f32 0.0, %v3615
  %v3617 = vpop.f32.mrb[0].mxu0
  %v3618 = vadd.f32 0.0, %v3617
  %3619 = vmatprep.mubr.f32.mxu0 0.0
  %3620 = vmatmul.mubr.f32.gmra.mrb[0].mxu0 %v3363
  %v3621 = vpop.f32.mrb[0].mxu0
  %v3622 = vadd.f32 0.0, %v3621
  %v3623 = vpop.f32.mrb[0].mxu0
  %v3624 = vadd.f32 0.0, %v3623
  %3625 = vmatprep.mubr.f32.mxu0 0.0
  %3626 = vmatmul.mubr.f32.gmra.mrb[0].mxu0 %v3366
  %v3627 = vpop.f32.mrb[0].mxu0
  %v3628 = vadd.f32 0.0, %v3627
  %v3629 = vpop.f32.mrb[0].mxu0
  %v3630 = vadd.f32 0.0, %v3629
  %3631 = vmatprep.mubr.f32.mxu0 0.0
  %3632 = vmatmul.mubr.f32.gmra.mrb[0].mxu0 %v3369
  %v3633 = vpop.f32.mrb[0].mxu0
  %v3634 = vadd.f32 0.0, %v3633
  %v3635 = vpop.f32.mrb[0].mxu0
  %v3636 = vadd.f32 0.0, %v3635
  %3637 = vdwg.mxu0
  %3638 = vmatprep.subr.mxu0 0.0
  %3639 = vmatpush1.msra.mxu0 %v3353
  %3640 = vmatprep.subr.mxu0 0.0
  %3641 = vmatpush1.msra.mxu0 0.0
  %3642 = vmatprep.subr.mxu0 0.0
  %3643 = vmatpush1.msra.mxu0 0.0
  %3644 = vmatprep.subr.mxu0 0.0
  %3645 = vmatpush1.msra.mxu0 0.0
  %3646 = vmatprep.subr.mxu0 0.0
  %3647 = vmatpush1.msra.mxu0 0.0
  %3648 = vmatprep.subr.mxu0 0.0
  %3649 = vmatpush1.msra.mxu0 0.0
  %3650 = vmatprep.subr.mxu0 0.0
  %3651 = vmatpush1.msra.mxu0 0.0
  %3652 = vmatprep.subr.mxu0 0.0
  %3653 = vmatpush1.msra.mxu0 0.0
  %3654 = vmatprep.subr.mxu0 0.0
  %3655 = vmatpush1.msra.mxu0 0.0
  %3656 = vmatprep.subr.mxu0 0.0
  %3657 = vmatpush1.msra.mxu0 0.0
  %3658 = vmatprep.subr.mxu0 0.0
  %3659 = vmatpush1.msra.mxu0 0.0
  %3660 = vmatprep.subr.mxu0 0.0
  %3661 = vmatpush1.msra.mxu0 0.0
  %3662 = vmatprep.subr.mxu0 0.0
  %3663 = vmatpush1.msra.mxu0 0.0
  %3664 = vmatprep.subr.mxu0 0.0
  %3665 = vmatpush1.msra.mxu0 0.0
  %3666 = vmatprep.subr.mxu0 0.0
  %3667 = vmatpush1.msra.mxu0 0.0
  %3668 = vmatprep.subr.mxu0 0.0
  %3669 = vmatpush1.msra.mxu0 0.0
  %3670 = vmatprep.subr.mxu0 0.0
  %3671 = vmatpush1.msra.mxu0 0.0
  %3672 = vmatprep.subr.mxu0 0.0
  %3673 = vmatpush1.msra.mxu0 0.0
  %3674 = vmatprep.subr.mxu0 0.0
  %3675 = vmatpush1.msra.mxu0 0.0
  %3676 = vmatprep.subr.mxu0 0.0
  %3677 = vmatpush1.msra.mxu0 0.0
  %3678 = vmatprep.subr.mxu0 0.0
  %3679 = vmatpush1.msra.mxu0 0.0
  %3680 = vmatprep.subr.mxu0 0.0
  %3681 = vmatpush1.msra.mxu0 0.0
  %3682 = vmatprep.subr.mxu0 0.0
  %3683 = vmatpush1.msra.mxu0 0.0
  %3684 = vmatprep.subr.mxu0 0.0
  %3685 = vmatpush1.msra.mxu0 0.0
  %3686 = vmatprep.subr.mxu0 0.0
  %3687 = vmatpush1.msra.mxu0 0.0
  %3688 = vmatprep.subr.mxu0 0.0
  %3689 = vmatpush1.msra.mxu0 0.0
  %3690 = vmatprep.subr.mxu0 0.0
  %3691 = vmatpush1.msra.mxu0 0.0
  %3692 = vmatprep.subr.mxu0 0.0
  %3693 = vmatpush1.msra.mxu0 0.0
  %3694 = vmatprep.subr.mxu0 0.0
  %3695 = vmatpush1.msra.mxu0 0.0
  %3696 = vmatprep.subr.mxu0 0.0
  %3697 = vmatpush1.msra.mxu0 0.0
  %3698 = vmatprep.subr.mxu0 0.0
  %3699 = vmatpush1.msra.mxu0 0.0
  %3700 = vmatprep.subr.mxu0 0.0
  %3701 = vmatpush1.msra.mxu0 0.0
  %3702 = vmatprep.mubr.f32.mxu0 0.0
  %3703 = vmatmul.mubr.f32.gmra.mrb[0].mxu0 %v3360
  %v3704 = vpop.f32.mrb[0].mxu0
  %v3705 = vadd.f32 0.0, %v3704
  %v3706 = vpop.f32.mrb[0].mxu0
  %3707 = vmatprep.mubr.f32.mxu0 0.0
  %3708 = vmatmul.mubr.f32.gmra.mrb[0].mxu0 %v3363
  %v3709 = vpop.f32.mrb[0].mxu0
  %v3710 = vadd.f32 0.0, %v3709
  %v3711 = vpop.f32.mrb[0].mxu0
  %3712 = vmatprep.mubr.f32.mxu0 0.0
  %3713 = vmatmul.mubr.f32.gmra.mrb[0].mxu0 %v3366
  %v3714 = vpop.f32.mrb[0].mxu0
  %v3715 = vadd.f32 0.0, %v3714
  %v3716 = vpop.f32.mrb[0].mxu0
  %3717 = vmatprep.mubr.f32.mxu0 0.0
  %3718 = vmatmul.mubr.f32.gmra.mrb[0].mxu0 %v3369
  %v3719 = vpop.f32.mrb[0].mxu0
  %v3720 = vadd.f32 0.0, %v3719
  %v3721 = vpop.f32.mrb[0].mxu0
  %3722 = vdwg.mxu0
  %v3723 = vadd.f32 %v3297, %v3438
  %v3724 = vadd.f32 %v3298, %v3440
  %v3725 = vadd.f32 %v3299, %v3527
  %v3726 = vadd.f32 %v3300, %v3529
  %v3727 = vadd.f32 %v3301, %v3616
  %v3728 = vadd.f32 %v3302, %v3618
  %v3729 = vadd.f32 %v3303, %v3705
  %v3730 = vadd.f32 %v3304, %v3444
  %v3731 = vadd.f32 %v3305, %v3446
  %v3732 = vadd.f32 %v3306, %v3533
  %v3733 = vadd.f32 %v3307, %v3535
  %v3734 = vadd.f32 %v3308, %v3622
  %v3735 = vadd.f32 %v3309, %v3624
  %v3736 = vadd.f32 %v3310, %v3710
  %v3737 = vadd.f32 %v3311, %v3450
  %v3738 = vadd.f32 %v3312, %v3452
  %v3739 = vadd.f32 %v3313, %v3539
  %v3740 = vadd.f32 %v3314, %v3541
  %v3741 = vadd.f32 %v3315, %v3628
  %v3742 = vadd.f32 %v3316, %v3630
  %v3743 = vadd.f32 %v3317, %v3715
  %v3744 = vadd.f32 %v3318, %v3456
  %v3745 = vadd.f32 %v3319, %v3458
  %v3746 = vadd.f32 %v3320, %v3545
  %v3747 = vadd.f32 %v3321, %v3547
  %v3748 = vadd.f32 %v3322, %v3634
  %v3749 = vadd.f32 %v3323, %v3636
  %v3750 = vadd.f32 %v3324, %v3720
  %3752 = vset.pattern.permute.xlu0 0
  %3753 = vperm.xlu0 %3752, %v28
  %v3754 = vpop.permute.xlu0 %3753
  %3757 = vset.pattern.permute.xlu0 0
  %3758 = vperm.xlu0 %3757, %v29
  %v3759 = vpop.permute.xlu0 %3758
  %3762 = vset.pattern.permute.xlu0 0
  %3763 = vperm.xlu0 %3762, %v30
  %v3764 = vpop.permute.xlu0 %3763
  %3767 = vset.pattern.permute.xlu0 0
  %3768 = vperm.xlu0 %3767, %v31
  %v3769 = vpop.permute.xlu0 %3768
  %v3771 = vadd.f32 %v3723, %v3754
  %v3772 = vadd.f32 %v3724, %v3754
  %v3773 = vadd.f32 %v3725, %v3754
  %v3774 = vadd.f32 %v3726, %v3754
  %v3775 = vadd.f32 %v3727, %v3754
  %v3776 = vadd.f32 %v3728, %v3754
  %v3777 = vadd.f32 %v3729, %v3754
  %v3778 = vadd.f32 %v3730, %v3759
  %v3779 = vadd.f32 %v3731, %v3759
  %v3780 = vadd.f32 %v3732, %v3759
  %v3781 = vadd.f32 %v3733, %v3759
  %v3782 = vadd.f32 %v3734, %v3759
  %v3783 = vadd.f32 %v3735, %v3759
  %v3784 = vadd.f32 %v3736, %v3759
  %v3785 = vadd.f32 %v3737, %v3764
  %v3786 = vadd.f32 %v3738, %v3764
  %v3787 = vadd.f32 %v3739, %v3764
  %v3788 = vadd.f32 %v3740, %v3764
  %v3789 = vadd.f32 %v3741, %v3764
  %v3790 = vadd.f32 %v3742, %v3764
  %v3791 = vadd.f32 %v3743, %v3764
  %v3792 = vadd.f32 %v3744, %v3769
  %v3793 = vadd.f32 %v3745, %v3769
  %v3794 = vadd.f32 %v3746, %v3769
  %v3795 = vadd.f32 %v3747, %v3769
  %v3796 = vadd.f32 %v3748, %v3769
  %v3797 = vadd.f32 %v3749, %v3769
  %v3798 = vadd.f32 %v3750, %v3769
  %v3799 = vmax.f32 %v3771, 0.0
  %v3800 = vmax.f32 %v3772, 0.0
  %v3801 = vmax.f32 %v3773, 0.0
  %v3802 = vmax.f32 %v3774, 0.0
  %v3803 = vmax.f32 %v3775, 0.0
  %v3804 = vmax.f32 %v3776, 0.0
  %v3805 = vmax.f32 %v3777, 0.0
  %v3806 = vmax.f32 %v3778, 0.0
  %v3807 = vmax.f32 %v3779, 0.0
  %v3808 = vmax.f32 %v3780, 0.0
  %v3809 = vmax.f32 %v3781, 0.0
  %v3810 = vmax.f32 %v3782, 0.0
  %v3811 = vmax.f32 %v3783, 0.0
  %v3812 = vmax.f32 %v3784, 0.0
  %v3813 = vmax.f32 %v3785, 0.0
  %v3814 = vmax.f32 %v3786, 0.0
  %v3815 = vmax.f32 %v3787, 0.0
  %v3816 = vmax.f32 %v3788, 0.0
  %v3817 = vmax.f32 %v3789, 0.0
  %v3818 = vmax.f32 %v3790, 0.0
  %v3819 = vmax.f32 %v3791, 0.0
  %v3820 = vmax.f32 %v3792, 0.0
  %v3821 = vmax.f32 %v3793, 0.0
  %v3822 = vmax.f32 %v3794, 0.0
  %v3823 = vmax.f32 %v3795, 0.0
  %v3824 = vmax.f32 %v3796, 0.0
  %v3825 = vmax.f32 %v3797, 0.0
  %v3826 = vmax.f32 %v3798, 0.0
  %v3828 = vlaneseq
  %v3829 = vshrl.u32 %v3828, 7
  %v3830 = vsub.s32 0, %v3829
  %v3831 = vrot.slane %v27, %v3830
  %v3832 = vlaneseq
  %v3833 = vshrl.u32 %v3832, 7
  %v3834 = vsub.s32 1, %v3833
  %v3835 = vrot.slane %v27, %v3834
  %v3836 = vlaneseq
  %v3837 = vshrl.u32 %v3836, 7
  %v3838 = vsub.s32 2, %v3837
  %v3839 = vrot.slane %v27, %v3838
  %v3840 = vlaneseq
  %v3841 = vshrl.u32 %v3840, 7
  %v3842 = vsub.s32 3, %v3841
  %v3843 = vrot.slane %v27, %v3842
  %v3844 = vlaneseq
  %v3845 = vshrl.u32 %v3844, 7
  %v3846 = vsub.s32 4, %v3845
  %v3847 = vrot.slane %v27, %v3846
  %v3848 = vlaneseq
  %v3849 = vshrl.u32 %v3848, 7
  %v3850 = vsub.s32 5, %v3849
  %v3851 = vrot.slane %v27, %v3850
  %v3852 = vlaneseq
  %v3853 = vshrl.u32 %v3852, 7
  %v3854 = vsub.s32 6, %v3853
  %v3855 = vrot.slane %v27, %v3854
  %v3863 = vmul.f32 %v3799, %v3831
  %v3864 = vmul.f32 %v3800, %v3835
  %v3865 = vmul.f32 %v3801, %v3839
  %v3866 = vmul.f32 %v3802, %v3843
  %v3867 = vmul.f32 %v3803, %v3847
  %v3868 = vmul.f32 %v3804, %v3851
  %v3869 = vmul.f32 %v3805, %v3855
  %v3870 = vmul.f32 %v3806, %v3831
  %v3871 = vmul.f32 %v3807, %v3835
  %v3872 = vmul.f32 %v3808, %v3839
  %v3873 = vmul.f32 %v3809, %v3843
  %v3874 = vmul.f32 %v3810, %v3847
  %v3875 = vmul.f32 %v3811, %v3851
  %v3876 = vmul.f32 %v3812, %v3855
  %v3877 = vmul.f32 %v3813, %v3831
  %v3878 = vmul.f32 %v3814, %v3835
  %v3879 = vmul.f32 %v3815, %v3839
  %v3880 = vmul.f32 %v3816, %v3843
  %v3881 = vmul.f32 %v3817, %v3847
  %v3882 = vmul.f32 %v3818, %v3851
  %v3883 = vmul.f32 %v3819, %v3855
  %v3884 = vmul.f32 %v3820, %v3831
  %v3885 = vmul.f32 %v3821, %v3835
  %v3886 = vmul.f32 %v3822, %v3839
  %v3887 = vmul.f32 %v3823, %v3843
  %v3888 = vmul.f32 %v3824, %v3847
  %v3889 = vmul.f32 %v3825, %v3851
  %v3890 = vmul.f32 %v3826, %v3855
  %v3891 = vld [vmem:[%s3] sm:$0xff]
  %vm3892 = vcmask 261120
  %v3894 = vsel %vm3892, %v3891, 0
  %3896 = vmatprep.subr.mxu0 %v3864
  %3897 = vmatpush1.msra.mxu0 %v3863
  %3898 = vmatprep.subr.mxu0 %v3871
  %3899 = vmatpush1.msra.mxu0 %v3870
  %3900 = vmatprep.subr.mxu0 %v3878
  %3901 = vmatpush1.msra.mxu0 %v3877
  %3902 = vmatprep.subr.mxu0 %v3885
  %3903 = vmatpush1.msra.mxu0 %v3884
  %3904 = vmatprep.subr.mxu0 0.0
  %3905 = vmatpush1.msra.mxu0 0.0
  %3906 = vmatprep.subr.mxu0 0.0
  %3907 = vmatpush1.msra.mxu0 0.0
  %3908 = vmatprep.subr.mxu0 0.0
  %3909 = vmatpush1.msra.mxu0 0.0
  %3910 = vmatprep.subr.mxu0 0.0
  %3911 = vmatpush1.msra.mxu0 0.0
  %3912 = vmatprep.subr.mxu0 0.0
  %3913 = vmatpush1.msra.mxu0 0.0
  %3914 = vmatprep.subr.mxu0 0.0
  %3915 = vmatpush1.msra.mxu0 0.0
  %3916 = vmatprep.subr.mxu0 0.0
  %3917 = vmatpush1.msra.mxu0 0.0
  %3918 = vmatprep.subr.mxu0 0.0
  %3919 = vmatpush1.msra.mxu0 0.0
  %3920 = vmatprep.subr.mxu0 0.0
  %3921 = vmatpush1.msra.mxu0 0.0
  %3922 = vmatprep.subr.mxu0 0.0
  %3923 = vmatpush1.msra.mxu0 0.0
  %3924 = vmatprep.subr.mxu0 0.0
  %3925 = vmatpush1.msra.mxu0 0.0
  %3926 = vmatprep.subr.mxu0 0.0
  %3927 = vmatpush1.msra.mxu0 0.0
  %3928 = vmatprep.subr.mxu0 0.0
  %3929 = vmatpush1.msra.mxu0 0.0
  %3930 = vmatprep.subr.mxu0 0.0
  %3931 = vmatpush1.msra.mxu0 0.0
  %3932 = vmatprep.subr.mxu0 0.0
  %3933 = vmatpush1.msra.mxu0 0.0
  %3934 = vmatprep.subr.mxu0 0.0
  %3935 = vmatpush1.msra.mxu0 0.0
  %3936 = vmatprep.subr.mxu0 0.0
  %3937 = vmatpush1.msra.mxu0 0.0
  %3938 = vmatprep.subr.mxu0 0.0
  %3939 = vmatpush1.msra.mxu0 0.0
  %3940 = vmatprep.subr.mxu0 0.0
  %3941 = vmatpush1.msra.mxu0 0.0
  %3942 = vmatprep.subr.mxu0 0.0
  %3943 = vmatpush1.msra.mxu0 0.0
  %3944 = vmatprep.subr.mxu0 0.0
  %3945 = vmatpush1.msra.mxu0 0.0
  %3946 = vmatprep.subr.mxu0 0.0
  %3947 = vmatpush1.msra.mxu0 0.0
  %3948 = vmatprep.subr.mxu0 0.0
  %3949 = vmatpush1.msra.mxu0 0.0
  %3950 = vmatprep.subr.mxu0 0.0
  %3951 = vmatpush1.msra.mxu0 0.0
  %3952 = vmatprep.subr.mxu0 0.0
  %3953 = vmatpush1.msra.mxu0 0.0
  %3954 = vmatprep.subr.mxu0 0.0
  %3955 = vmatpush1.msra.mxu0 0.0
  %3956 = vmatprep.subr.mxu0 0.0
  %3957 = vmatpush1.msra.mxu0 0.0
  %3958 = vmatprep.subr.mxu0 0.0
  %3959 = vmatpush1.msra.mxu0 0.0
  %3960 = vmatprep.mubr.f32.mxu0 0.0
  %3961 = vmatmul.mubr.f32.gmra.mrb[0].mxu0 %v3894
  %v3962 = vpop.f32.mrb[0].mxu0
  %v3963 = vadd.f32 0.0, %v3962
  %v3964 = vpop.f32.mrb[0].mxu0
  %v3965 = vadd.f32 0.0, %v3964
  %3966 = vdwg.mxu0
  %3967 = vmatprep.subr.mxu0 %v3866
  %3968 = vmatpush1.msra.mxu0 %v3865
  %3969 = vmatprep.subr.mxu0 %v3873
  %3970 = vmatpush1.msra.mxu0 %v3872
  %3971 = vmatprep.subr.mxu0 %v3880
  %3972 = vmatpush1.msra.mxu0 %v3879
  %3973 = vmatprep.subr.mxu0 %v3887
  %3974 = vmatpush1.msra.mxu0 %v3886
  %3975 = vmatprep.subr.mxu0 0.0
  %3976 = vmatpush1.msra.mxu0 0.0
  %3977 = vmatprep.subr.mxu0 0.0
  %3978 = vmatpush1.msra.mxu0 0.0
  %3979 = vmatprep.subr.mxu0 0.0
  %3980 = vmatpush1.msra.mxu0 0.0
  %3981 = vmatprep.subr.mxu0 0.0
  %3982 = vmatpush1.msra.mxu0 0.0
  %3983 = vmatprep.subr.mxu0 0.0
  %3984 = vmatpush1.msra.mxu0 0.0
  %3985 = vmatprep.subr.mxu0 0.0
  %3986 = vmatpush1.msra.mxu0 0.0
  %3987 = vmatprep.subr.mxu0 0.0
  %3988 = vmatpush1.msra.mxu0 0.0
  %3989 = vmatprep.subr.mxu0 0.0
  %3990 = vmatpush1.msra.mxu0 0.0
  %3991 = vmatprep.subr.mxu0 0.0
  %3992 = vmatpush1.msra.mxu0 0.0
  %3993 = vmatprep.subr.mxu0 0.0
  %3994 = vmatpush1.msra.mxu0 0.0
  %3995 = vmatprep.subr.mxu0 0.0
  %3996 = vmatpush1.msra.mxu0 0.0
  %3997 = vmatprep.subr.mxu0 0.0
  %3998 = vmatpush1.msra.mxu0 0.0
  %3999 = vmatprep.subr.mxu0 0.0
  %4000 = vmatpush1.msra.mxu0 0.0
  %4001 = vmatprep.subr.mxu0 0.0
  %4002 = vmatpush1.msra.mxu0 0.0
  %4003 = vmatprep.subr.mxu0 0.0
  %4004 = vmatpush1.msra.mxu0 0.0
  %4005 = vmatprep.subr.mxu0 0.0
  %4006 = vmatpush1.msra.mxu0 0.0
  %4007 = vmatprep.subr.mxu0 0.0
  %4008 = vmatpush1.msra.mxu0 0.0
  %4009 = vmatprep.subr.mxu0 0.0
  %4010 = vmatpush1.msra.mxu0 0.0
  %4011 = vmatprep.subr.mxu0 0.0
  %4012 = vmatpush1.msra.mxu0 0.0
  %4013 = vmatprep.subr.mxu0 0.0
  %4014 = vmatpush1.msra.mxu0 0.0
  %4015 = vmatprep.subr.mxu0 0.0
  %4016 = vmatpush1.msra.mxu0 0.0
  %4017 = vmatprep.subr.mxu0 0.0
  %4018 = vmatpush1.msra.mxu0 0.0
  %4019 = vmatprep.subr.mxu0 0.0
  %4020 = vmatpush1.msra.mxu0 0.0
  %4021 = vmatprep.subr.mxu0 0.0
  %4022 = vmatpush1.msra.mxu0 0.0
  %4023 = vmatprep.subr.mxu0 0.0
  %4024 = vmatpush1.msra.mxu0 0.0
  %4025 = vmatprep.subr.mxu0 0.0
  %4026 = vmatpush1.msra.mxu0 0.0
  %4027 = vmatprep.subr.mxu0 0.0
  %4028 = vmatpush1.msra.mxu0 0.0
  %4029 = vmatprep.subr.mxu0 0.0
  %4030 = vmatpush1.msra.mxu0 0.0
  %4031 = vmatprep.mubr.f32.mxu0 0.0
  %4032 = vmatmul.mubr.f32.gmra.mrb[0].mxu0 %v3894
  %v4033 = vpop.f32.mrb[0].mxu0
  %v4034 = vadd.f32 0.0, %v4033
  %v4035 = vpop.f32.mrb[0].mxu0
  %v4036 = vadd.f32 0.0, %v4035
  %4037 = vdwg.mxu0
  %4038 = vmatprep.subr.mxu0 %v3868
  %4039 = vmatpush1.msra.mxu0 %v3867
  %4040 = vmatprep.subr.mxu0 %v3875
  %4041 = vmatpush1.msra.mxu0 %v3874
  %4042 = vmatprep.subr.mxu0 %v3882
  %4043 = vmatpush1.msra.mxu0 %v3881
  %4044 = vmatprep.subr.mxu0 %v3889
  %4045 = vmatpush1.msra.mxu0 %v3888
  %4046 = vmatprep.subr.mxu0 0.0
  %4047 = vmatpush1.msra.mxu0 0.0
  %4048 = vmatprep.subr.mxu0 0.0
  %4049 = vmatpush1.msra.mxu0 0.0
  %4050 = vmatprep.subr.mxu0 0.0
  %4051 = vmatpush1.msra.mxu0 0.0
  %4052 = vmatprep.subr.mxu0 0.0
  %4053 = vmatpush1.msra.mxu0 0.0
  %4054 = vmatprep.subr.mxu0 0.0
  %4055 = vmatpush1.msra.mxu0 0.0
  %4056 = vmatprep.subr.mxu0 0.0
  %4057 = vmatpush1.msra.mxu0 0.0
  %4058 = vmatprep.subr.mxu0 0.0
  %4059 = vmatpush1.msra.mxu0 0.0
  %4060 = vmatprep.subr.mxu0 0.0
  %4061 = vmatpush1.msra.mxu0 0.0
  %4062 = vmatprep.subr.mxu0 0.0
  %4063 = vmatpush1.msra.mxu0 0.0
  %4064 = vmatprep.subr.mxu0 0.0
  %4065 = vmatpush1.msra.mxu0 0.0
  %4066 = vmatprep.subr.mxu0 0.0
  %4067 = vmatpush1.msra.mxu0 0.0
  %4068 = vmatprep.subr.mxu0 0.0
  %4069 = vmatpush1.msra.mxu0 0.0
  %4070 = vmatprep.subr.mxu0 0.0
  %4071 = vmatpush1.msra.mxu0 0.0
  %4072 = vmatprep.subr.mxu0 0.0
  %4073 = vmatpush1.msra.mxu0 0.0
  %4074 = vmatprep.subr.mxu0 0.0
  %4075 = vmatpush1.msra.mxu0 0.0
  %4076 = vmatprep.subr.mxu0 0.0
  %4077 = vmatpush1.msra.mxu0 0.0
  %4078 = vmatprep.subr.mxu0 0.0
  %4079 = vmatpush1.msra.mxu0 0.0
  %4080 = vmatprep.subr.mxu0 0.0
  %4081 = vmatpush1.msra.mxu0 0.0
  %4082 = vmatprep.subr.mxu0 0.0
  %4083 = vmatpush1.msra.mxu0 0.0
  %4084 = vmatprep.subr.mxu0 0.0
  %4085 = vmatpush1.msra.mxu0 0.0
  %4086 = vmatprep.subr.mxu0 0.0
  %4087 = vmatpush1.msra.mxu0 0.0
  %4088 = vmatprep.subr.mxu0 0.0
  %4089 = vmatpush1.msra.mxu0 0.0
  %4090 = vmatprep.subr.mxu0 0.0
  %4091 = vmatpush1.msra.mxu0 0.0
  %4092 = vmatprep.subr.mxu0 0.0
  %4093 = vmatpush1.msra.mxu0 0.0
  %4094 = vmatprep.subr.mxu0 0.0
  %4095 = vmatpush1.msra.mxu0 0.0
  %4096 = vmatprep.subr.mxu0 0.0
  %4097 = vmatpush1.msra.mxu0 0.0
  %4098 = vmatprep.subr.mxu0 0.0
  %4099 = vmatpush1.msra.mxu0 0.0
  %4100 = vmatprep.subr.mxu0 0.0
  %4101 = vmatpush1.msra.mxu0 0.0
  %4102 = vmatprep.mubr.f32.mxu0 0.0
  %4103 = vmatmul.mubr.f32.gmra.mrb[0].mxu0 %v3894
  %v4104 = vpop.f32.mrb[0].mxu0
  %v4105 = vadd.f32 0.0, %v4104
  %v4106 = vpop.f32.mrb[0].mxu0
  %v4107 = vadd.f32 0.0, %v4106
  %4108 = vdwg.mxu0
  %4109 = vmatprep.subr.mxu0 0.0
  %4110 = vmatpush1.msra.mxu0 %v3869
  %4111 = vmatprep.subr.mxu0 0.0
  %4112 = vmatpush1.msra.mxu0 %v3876
  %4113 = vmatprep.subr.mxu0 0.0
  %4114 = vmatpush1.msra.mxu0 %v3883
  %4115 = vmatprep.subr.mxu0 0.0
  %4116 = vmatpush1.msra.mxu0 %v3890
  %4117 = vmatprep.subr.mxu0 0.0
  %4118 = vmatpush1.msra.mxu0 0.0
  %4119 = vmatprep.subr.mxu0 0.0
  %4120 = vmatpush1.msra.mxu0 0.0
  %4121 = vmatprep.subr.mxu0 0.0
  %4122 = vmatpush1.msra.mxu0 0.0
  %4123 = vmatprep.subr.mxu0 0.0
  %4124 = vmatpush1.msra.mxu0 0.0
  %4125 = vmatprep.subr.mxu0 0.0
  %4126 = vmatpush1.msra.mxu0 0.0
  %4127 = vmatprep.subr.mxu0 0.0
  %4128 = vmatpush1.msra.mxu0 0.0
  %4129 = vmatprep.subr.mxu0 0.0
  %4130 = vmatpush1.msra.mxu0 0.0
  %4131 = vmatprep.subr.mxu0 0.0
  %4132 = vmatpush1.msra.mxu0 0.0
  %4133 = vmatprep.subr.mxu0 0.0
  %4134 = vmatpush1.msra.mxu0 0.0
  %4135 = vmatprep.subr.mxu0 0.0
  %4136 = vmatpush1.msra.mxu0 0.0
  %4137 = vmatprep.subr.mxu0 0.0
  %4138 = vmatpush1.msra.mxu0 0.0
  %4139 = vmatprep.subr.mxu0 0.0
  %4140 = vmatpush1.msra.mxu0 0.0
  %4141 = vmatprep.subr.mxu0 0.0
  %4142 = vmatpush1.msra.mxu0 0.0
  %4143 = vmatprep.subr.mxu0 0.0
  %4144 = vmatpush1.msra.mxu0 0.0
  %4145 = vmatprep.subr.mxu0 0.0
  %4146 = vmatpush1.msra.mxu0 0.0
  %4147 = vmatprep.subr.mxu0 0.0
  %4148 = vmatpush1.msra.mxu0 0.0
  %4149 = vmatprep.subr.mxu0 0.0
  %4150 = vmatpush1.msra.mxu0 0.0
  %4151 = vmatprep.subr.mxu0 0.0
  %4152 = vmatpush1.msra.mxu0 0.0
  %4153 = vmatprep.subr.mxu0 0.0
  %4154 = vmatpush1.msra.mxu0 0.0
  %4155 = vmatprep.subr.mxu0 0.0
  %4156 = vmatpush1.msra.mxu0 0.0
  %4157 = vmatprep.subr.mxu0 0.0
  %4158 = vmatpush1.msra.mxu0 0.0
  %4159 = vmatprep.subr.mxu0 0.0
  %4160 = vmatpush1.msra.mxu0 0.0
  %4161 = vmatprep.subr.mxu0 0.0
  %4162 = vmatpush1.msra.mxu0 0.0
  %4163 = vmatprep.subr.mxu0 0.0
  %4164 = vmatpush1.msra.mxu0 0.0
  %4165 = vmatprep.subr.mxu0 0.0
  %4166 = vmatpush1.msra.mxu0 0.0
  %4167 = vmatprep.subr.mxu0 0.0
  %4168 = vmatpush1.msra.mxu0 0.0
  %4169 = vmatprep.subr.mxu0 0.0
  %4170 = vmatpush1.msra.mxu0 0.0
  %4171 = vmatprep.subr.mxu0 0.0
  %4172 = vmatpush1.msra.mxu0 0.0
  %4173 = vmatprep.mubr.f32.mxu0 0.0
  %4174 = vmatmul.mubr.f32.gmra.mrb[0].mxu0 %v3894
  %v4175 = vpop.f32.mrb[0].mxu0
  %v4176 = vadd.f32 0.0, %v4175
  %v4177 = vpop.f32.mrb[0].mxu0
  %4178 = vdwg.mxu0
  %4179 = vrot.lane.b32.xlu0 %v3963, 21
  %v4180 = vpop.permute.xlu0 %4179
  %4181 = vrot.lane.b32.xlu0 %v3965, 21
  %v4182 = vpop.permute.xlu0 %4181
  %4183 = vrot.lane.b32.xlu0 %v4034, 21
  %v4184 = vpop.permute.xlu0 %4183
  %4185 = vrot.lane.b32.xlu0 %v4036, 21
  %v4186 = vpop.permute.xlu0 %4185
  %4187 = vrot.lane.b32.xlu0 %v4105, 21
  %v4188 = vpop.permute.xlu0 %4187
  %4189 = vrot.lane.b32.xlu0 %v4107, 21
  %v4190 = vpop.permute.xlu0 %4189
  %4191 = vrot.lane.b32.xlu0 %v4176, 21
  %v4192 = vpop.permute.xlu0 %4191
  %v4193 = vsel %vm51, %v4190, %v4192
  %v4194 = vsel %vm51, %v4188, %v4190
  %v4195 = vsel %vm51, %v4186, %v4188
  %v4196 = vsel %vm51, %v4184, %v4186
  %v4197 = vsel %vm51, %v4182, %v4184
  %v4198 = vsel %vm51, %v4180, %v4182
  %v4199 = vsel %vm51, %v4192, %v4180
  %s4200 = scalar_lea.vmem %s3, 8
  %v4201 = vld [vmem:[%s4200] sm:$0xff]
  %v4203 = vsel %vm3892, %v4201, 0
  %4205 = vmatprep.subr.mxu0 %v3864
  %4206 = vmatpush1.msra.mxu0 %v3863
  %4207 = vmatprep.subr.mxu0 %v3871
  %4208 = vmatpush1.msra.mxu0 %v3870
  %4209 = vmatprep.subr.mxu0 %v3878
  %4210 = vmatpush1.msra.mxu0 %v3877
  %4211 = vmatprep.subr.mxu0 %v3885
  %4212 = vmatpush1.msra.mxu0 %v3884
  %4213 = vmatprep.subr.mxu0 0.0
  %4214 = vmatpush1.msra.mxu0 0.0
  %4215 = vmatprep.subr.mxu0 0.0
  %4216 = vmatpush1.msra.mxu0 0.0
  %4217 = vmatprep.subr.mxu0 0.0
  %4218 = vmatpush1.msra.mxu0 0.0
  %4219 = vmatprep.subr.mxu0 0.0
  %4220 = vmatpush1.msra.mxu0 0.0
  %4221 = vmatprep.subr.mxu0 0.0
  %4222 = vmatpush1.msra.mxu0 0.0
  %4223 = vmatprep.subr.mxu0 0.0
  %4224 = vmatpush1.msra.mxu0 0.0
  %4225 = vmatprep.subr.mxu0 0.0
  %4226 = vmatpush1.msra.mxu0 0.0
  %4227 = vmatprep.subr.mxu0 0.0
  %4228 = vmatpush1.msra.mxu0 0.0
  %4229 = vmatprep.subr.mxu0 0.0
  %4230 = vmatpush1.msra.mxu0 0.0
  %4231 = vmatprep.subr.mxu0 0.0
  %4232 = vmatpush1.msra.mxu0 0.0
  %4233 = vmatprep.subr.mxu0 0.0
  %4234 = vmatpush1.msra.mxu0 0.0
  %4235 = vmatprep.subr.mxu0 0.0
  %4236 = vmatpush1.msra.mxu0 0.0
  %4237 = vmatprep.subr.mxu0 0.0
  %4238 = vmatpush1.msra.mxu0 0.0
  %4239 = vmatprep.subr.mxu0 0.0
  %4240 = vmatpush1.msra.mxu0 0.0
  %4241 = vmatprep.subr.mxu0 0.0
  %4242 = vmatpush1.msra.mxu0 0.0
  %4243 = vmatprep.subr.mxu0 0.0
  %4244 = vmatpush1.msra.mxu0 0.0
  %4245 = vmatprep.subr.mxu0 0.0
  %4246 = vmatpush1.msra.mxu0 0.0
  %4247 = vmatprep.subr.mxu0 0.0
  %4248 = vmatpush1.msra.mxu0 0.0
  %4249 = vmatprep.subr.mxu0 0.0
  %4250 = vmatpush1.msra.mxu0 0.0
  %4251 = vmatprep.subr.mxu0 0.0
  %4252 = vmatpush1.msra.mxu0 0.0
  %4253 = vmatprep.subr.mxu0 0.0
  %4254 = vmatpush1.msra.mxu0 0.0
  %4255 = vmatprep.subr.mxu0 0.0
  %4256 = vmatpush1.msra.mxu0 0.0
  %4257 = vmatprep.subr.mxu0 0.0
  %4258 = vmatpush1.msra.mxu0 0.0
  %4259 = vmatprep.subr.mxu0 0.0
  %4260 = vmatpush1.msra.mxu0 0.0
  %4261 = vmatprep.subr.mxu0 0.0
  %4262 = vmatpush1.msra.mxu0 0.0
  %4263 = vmatprep.subr.mxu0 0.0
  %4264 = vmatpush1.msra.mxu0 0.0
  %4265 = vmatprep.subr.mxu0 0.0
  %4266 = vmatpush1.msra.mxu0 0.0
  %4267 = vmatprep.subr.mxu0 0.0
  %4268 = vmatpush1.msra.mxu0 0.0
  %4269 = vmatprep.mubr.f32.mxu0 0.0
  %4270 = vmatmul.mubr.f32.gmra.mrb[0].mxu0 %v4203
  %v4271 = vpop.f32.mrb[0].mxu0
  %v4272 = vadd.f32 0.0, %v4271
  %v4273 = vpop.f32.mrb[0].mxu0
  %v4274 = vadd.f32 0.0, %v4273
  %4275 = vdwg.mxu0
  %4276 = vmatprep.subr.mxu0 %v3866
  %4277 = vmatpush1.msra.mxu0 %v3865
  %4278 = vmatprep.subr.mxu0 %v3873
  %4279 = vmatpush1.msra.mxu0 %v3872
  %4280 = vmatprep.subr.mxu0 %v3880
  %4281 = vmatpush1.msra.mxu0 %v3879
  %4282 = vmatprep.subr.mxu0 %v3887
  %4283 = vmatpush1.msra.mxu0 %v3886
  %4284 = vmatprep.subr.mxu0 0.0
  %4285 = vmatpush1.msra.mxu0 0.0
  %4286 = vmatprep.subr.mxu0 0.0
  %4287 = vmatpush1.msra.mxu0 0.0
  %4288 = vmatprep.subr.mxu0 0.0
  %4289 = vmatpush1.msra.mxu0 0.0
  %4290 = vmatprep.subr.mxu0 0.0
  %4291 = vmatpush1.msra.mxu0 0.0
  %4292 = vmatprep.subr.mxu0 0.0
  %4293 = vmatpush1.msra.mxu0 0.0
  %4294 = vmatprep.subr.mxu0 0.0
  %4295 = vmatpush1.msra.mxu0 0.0
  %4296 = vmatprep.subr.mxu0 0.0
  %4297 = vmatpush1.msra.mxu0 0.0
  %4298 = vmatprep.subr.mxu0 0.0
  %4299 = vmatpush1.msra.mxu0 0.0
  %4300 = vmatprep.subr.mxu0 0.0
  %4301 = vmatpush1.msra.mxu0 0.0
  %4302 = vmatprep.subr.mxu0 0.0
  %4303 = vmatpush1.msra.mxu0 0.0
  %4304 = vmatprep.subr.mxu0 0.0
  %4305 = vmatpush1.msra.mxu0 0.0
  %4306 = vmatprep.subr.mxu0 0.0
  %4307 = vmatpush1.msra.mxu0 0.0
  %4308 = vmatprep.subr.mxu0 0.0
  %4309 = vmatpush1.msra.mxu0 0.0
  %4310 = vmatprep.subr.mxu0 0.0
  %4311 = vmatpush1.msra.mxu0 0.0
  %4312 = vmatprep.subr.mxu0 0.0
  %4313 = vmatpush1.msra.mxu0 0.0
  %4314 = vmatprep.subr.mxu0 0.0
  %4315 = vmatpush1.msra.mxu0 0.0
  %4316 = vmatprep.subr.mxu0 0.0
  %4317 = vmatpush1.msra.mxu0 0.0
  %4318 = vmatprep.subr.mxu0 0.0
  %4319 = vmatpush1.msra.mxu0 0.0
  %4320 = vmatprep.subr.mxu0 0.0
  %4321 = vmatpush1.msra.mxu0 0.0
  %4322 = vmatprep.subr.mxu0 0.0
  %4323 = vmatpush1.msra.mxu0 0.0
  %4324 = vmatprep.subr.mxu0 0.0
  %4325 = vmatpush1.msra.mxu0 0.0
  %4326 = vmatprep.subr.mxu0 0.0
  %4327 = vmatpush1.msra.mxu0 0.0
  %4328 = vmatprep.subr.mxu0 0.0
  %4329 = vmatpush1.msra.mxu0 0.0
  %4330 = vmatprep.subr.mxu0 0.0
  %4331 = vmatpush1.msra.mxu0 0.0
  %4332 = vmatprep.subr.mxu0 0.0
  %4333 = vmatpush1.msra.mxu0 0.0
  %4334 = vmatprep.subr.mxu0 0.0
  %4335 = vmatpush1.msra.mxu0 0.0
  %4336 = vmatprep.subr.mxu0 0.0
  %4337 = vmatpush1.msra.mxu0 0.0
  %4338 = vmatprep.subr.mxu0 0.0
  %4339 = vmatpush1.msra.mxu0 0.0
  %4340 = vmatprep.mubr.f32.mxu0 0.0
  %4341 = vmatmul.mubr.f32.gmra.mrb[0].mxu0 %v4203
  %v4342 = vpop.f32.mrb[0].mxu0
  %v4343 = vadd.f32 0.0, %v4342
  %v4344 = vpop.f32.mrb[0].mxu0
  %v4345 = vadd.f32 0.0, %v4344
  %4346 = vdwg.mxu0
  %4347 = vmatprep.subr.mxu0 %v3868
  %4348 = vmatpush1.msra.mxu0 %v3867
  %4349 = vmatprep.subr.mxu0 %v3875
  %4350 = vmatpush1.msra.mxu0 %v3874
  %4351 = vmatprep.subr.mxu0 %v3882
  %4352 = vmatpush1.msra.mxu0 %v3881
  %4353 = vmatprep.subr.mxu0 %v3889
  %4354 = vmatpush1.msra.mxu0 %v3888
  %4355 = vmatprep.subr.mxu0 0.0
  %4356 = vmatpush1.msra.mxu0 0.0
  %4357 = vmatprep.subr.mxu0 0.0
  %4358 = vmatpush1.msra.mxu0 0.0
  %4359 = vmatprep.subr.mxu0 0.0
  %4360 = vmatpush1.msra.mxu0 0.0
  %4361 = vmatprep.subr.mxu0 0.0
  %4362 = vmatpush1.msra.mxu0 0.0
  %4363 = vmatprep.subr.mxu0 0.0
  %4364 = vmatpush1.msra.mxu0 0.0
  %4365 = vmatprep.subr.mxu0 0.0
  %4366 = vmatpush1.msra.mxu0 0.0
  %4367 = vmatprep.subr.mxu0 0.0
  %4368 = vmatpush1.msra.mxu0 0.0
  %4369 = vmatprep.subr.mxu0 0.0
  %4370 = vmatpush1.msra.mxu0 0.0
  %4371 = vmatprep.subr.mxu0 0.0
  %4372 = vmatpush1.msra.mxu0 0.0
  %4373 = vmatprep.subr.mxu0 0.0
  %4374 = vmatpush1.msra.mxu0 0.0
  %4375 = vmatprep.subr.mxu0 0.0
  %4376 = vmatpush1.msra.mxu0 0.0
  %4377 = vmatprep.subr.mxu0 0.0
  %4378 = vmatpush1.msra.mxu0 0.0
  %4379 = vmatprep.subr.mxu0 0.0
  %4380 = vmatpush1.msra.mxu0 0.0
  %4381 = vmatprep.subr.mxu0 0.0
  %4382 = vmatpush1.msra.mxu0 0.0
  %4383 = vmatprep.subr.mxu0 0.0
  %4384 = vmatpush1.msra.mxu0 0.0
  %4385 = vmatprep.subr.mxu0 0.0
  %4386 = vmatpush1.msra.mxu0 0.0
  %4387 = vmatprep.subr.mxu0 0.0
  %4388 = vmatpush1.msra.mxu0 0.0
  %4389 = vmatprep.subr.mxu0 0.0
  %4390 = vmatpush1.msra.mxu0 0.0
  %4391 = vmatprep.subr.mxu0 0.0
  %4392 = vmatpush1.msra.mxu0 0.0
  %4393 = vmatprep.subr.mxu0 0.0
  %4394 = vmatpush1.msra.mxu0 0.0
  %4395 = vmatprep.subr.mxu0 0.0
  %4396 = vmatpush1.msra.mxu0 0.0
  %4397 = vmatprep.subr.mxu0 0.0
  %4398 = vmatpush1.msra.mxu0 0.0
  %4399 = vmatprep.subr.mxu0 0.0
  %4400 = vmatpush1.msra.mxu0 0.0
  %4401 = vmatprep.subr.mxu0 0.0
  %4402 = vmatpush1.msra.mxu0 0.0
  %4403 = vmatprep.subr.mxu0 0.0
  %4404 = vmatpush1.msra.mxu0 0.0
  %4405 = vmatprep.subr.mxu0 0.0
  %4406 = vmatpush1.msra.mxu0 0.0
  %4407 = vmatprep.subr.mxu0 0.0
  %4408 = vmatpush1.msra.mxu0 0.0
  %4409 = vmatprep.subr.mxu0 0.0
  %4410 = vmatpush1.msra.mxu0 0.0
  %4411 = vmatprep.mubr.f32.mxu0 0.0
  %4412 = vmatmul.mubr.f32.gmra.mrb[0].mxu0 %v4203
  %v4413 = vpop.f32.mrb[0].mxu0
  %v4414 = vadd.f32 0.0, %v4413
  %v4415 = vpop.f32.mrb[0].mxu0
  %v4416 = vadd.f32 0.0, %v4415
  %4417 = vdwg.mxu0
  %4418 = vmatprep.subr.mxu0 0.0
  %4419 = vmatpush1.msra.mxu0 %v3869
  %4420 = vmatprep.subr.mxu0 0.0
  %4421 = vmatpush1.msra.mxu0 %v3876
  %4422 = vmatprep.subr.mxu0 0.0
  %4423 = vmatpush1.msra.mxu0 %v3883
  %4424 = vmatprep.subr.mxu0 0.0
  %4425 = vmatpush1.msra.mxu0 %v3890
  %4426 = vmatprep.subr.mxu0 0.0
  %4427 = vmatpush1.msra.mxu0 0.0
  %4428 = vmatprep.subr.mxu0 0.0
  %4429 = vmatpush1.msra.mxu0 0.0
  %4430 = vmatprep.subr.mxu0 0.0
  %4431 = vmatpush1.msra.mxu0 0.0
  %4432 = vmatprep.subr.mxu0 0.0
  %4433 = vmatpush1.msra.mxu0 0.0
  %4434 = vmatprep.subr.mxu0 0.0
  %4435 = vmatpush1.msra.mxu0 0.0
  %4436 = vmatprep.subr.mxu0 0.0
  %4437 = vmatpush1.msra.mxu0 0.0
  %4438 = vmatprep.subr.mxu0 0.0
  %4439 = vmatpush1.msra.mxu0 0.0
  %4440 = vmatprep.subr.mxu0 0.0
  %4441 = vmatpush1.msra.mxu0 0.0
  %4442 = vmatprep.subr.mxu0 0.0
  %4443 = vmatpush1.msra.mxu0 0.0
  %4444 = vmatprep.subr.mxu0 0.0
  %4445 = vmatpush1.msra.mxu0 0.0
  %4446 = vmatprep.subr.mxu0 0.0
  %4447 = vmatpush1.msra.mxu0 0.0
  %4448 = vmatprep.subr.mxu0 0.0
  %4449 = vmatpush1.msra.mxu0 0.0
  %4450 = vmatprep.subr.mxu0 0.0
  %4451 = vmatpush1.msra.mxu0 0.0
  %4452 = vmatprep.subr.mxu0 0.0
  %4453 = vmatpush1.msra.mxu0 0.0
  %4454 = vmatprep.subr.mxu0 0.0
  %4455 = vmatpush1.msra.mxu0 0.0
  %4456 = vmatprep.subr.mxu0 0.0
  %4457 = vmatpush1.msra.mxu0 0.0
  %4458 = vmatprep.subr.mxu0 0.0
  %4459 = vmatpush1.msra.mxu0 0.0
  %4460 = vmatprep.subr.mxu0 0.0
  %4461 = vmatpush1.msra.mxu0 0.0
  %4462 = vmatprep.subr.mxu0 0.0
  %4463 = vmatpush1.msra.mxu0 0.0
  %4464 = vmatprep.subr.mxu0 0.0
  %4465 = vmatpush1.msra.mxu0 0.0
  %4466 = vmatprep.subr.mxu0 0.0
  %4467 = vmatpush1.msra.mxu0 0.0
  %4468 = vmatprep.subr.mxu0 0.0
  %4469 = vmatpush1.msra.mxu0 0.0
  %4470 = vmatprep.subr.mxu0 0.0
  %4471 = vmatpush1.msra.mxu0 0.0
  %4472 = vmatprep.subr.mxu0 0.0
  %4473 = vmatpush1.msra.mxu0 0.0
  %4474 = vmatprep.subr.mxu0 0.0
  %4475 = vmatpush1.msra.mxu0 0.0
  %4476 = vmatprep.subr.mxu0 0.0
  %4477 = vmatpush1.msra.mxu0 0.0
  %4478 = vmatprep.subr.mxu0 0.0
  %4479 = vmatpush1.msra.mxu0 0.0
  %4480 = vmatprep.subr.mxu0 0.0
  %4481 = vmatpush1.msra.mxu0 0.0
  %4482 = vmatprep.mubr.f32.mxu0 0.0
  %4483 = vmatmul.mubr.f32.gmra.mrb[0].mxu0 %v4203
  %v4484 = vpop.f32.mrb[0].mxu0
  %v4485 = vadd.f32 0.0, %v4484
  %v4486 = vpop.f32.mrb[0].mxu0
  %4487 = vdwg.mxu0
  %4488 = vrot.lane.b32.xlu0 %v4272, 20
  %v4489 = vpop.permute.xlu0 %4488
  %4490 = vrot.lane.b32.xlu0 %v4274, 20
  %v4491 = vpop.permute.xlu0 %4490
  %4492 = vrot.lane.b32.xlu0 %v4343, 20
  %v4493 = vpop.permute.xlu0 %4492
  %4494 = vrot.lane.b32.xlu0 %v4345, 20
  %v4495 = vpop.permute.xlu0 %4494
  %4496 = vrot.lane.b32.xlu0 %v4414, 20
  %v4497 = vpop.permute.xlu0 %4496
  %4498 = vrot.lane.b32.xlu0 %v4416, 20
  %v4499 = vpop.permute.xlu0 %4498
  %4500 = vrot.lane.b32.xlu0 %v4485, 20
  %v4501 = vpop.permute.xlu0 %4500
  %v4502 = vsel %vm77, %v4499, %v4501
  %v4503 = vsel %vm77, %v4497, %v4499
  %v4504 = vsel %vm77, %v4495, %v4497
  %v4505 = vsel %vm77, %v4493, %v4495
  %v4506 = vsel %vm77, %v4491, %v4493
  %v4507 = vsel %vm77, %v4489, %v4491
  %v4508 = vsel %vm77, %v4501, %v4489
  %v4509 = vadd.f32 %v4199, %v4508
  %v4510 = vadd.f32 %v4198, %v4507
  %v4511 = vadd.f32 %v4197, %v4506
  %v4512 = vadd.f32 %v4196, %v4505
  %v4513 = vadd.f32 %v4195, %v4504
  %v4514 = vadd.f32 %v4194, %v4503
  %v4515 = vadd.f32 %v4193, %v4502
  %s4516 = scalar_lea.vmem %s3, 16
  %v4517 = vld [vmem:[%s4516] sm:$0xff]
  %v4519 = vsel %vm3892, %v4517, 0
  %4521 = vmatprep.subr.mxu0 %v3864
  %4522 = vmatpush1.msra.mxu0 %v3863
  %4523 = vmatprep.subr.mxu0 %v3871
  %4524 = vmatpush1.msra.mxu0 %v3870
  %4525 = vmatprep.subr.mxu0 %v3878
  %4526 = vmatpush1.msra.mxu0 %v3877
  %4527 = vmatprep.subr.mxu0 %v3885
  %4528 = vmatpush1.msra.mxu0 %v3884
  %4529 = vmatprep.subr.mxu0 0.0
  %4530 = vmatpush1.msra.mxu0 0.0
  %4531 = vmatprep.subr.mxu0 0.0
  %4532 = vmatpush1.msra.mxu0 0.0
  %4533 = vmatprep.subr.mxu0 0.0
  %4534 = vmatpush1.msra.mxu0 0.0
  %4535 = vmatprep.subr.mxu0 0.0
  %4536 = vmatpush1.msra.mxu0 0.0
  %4537 = vmatprep.subr.mxu0 0.0
  %4538 = vmatpush1.msra.mxu0 0.0
  %4539 = vmatprep.subr.mxu0 0.0
  %4540 = vmatpush1.msra.mxu0 0.0
  %4541 = vmatprep.subr.mxu0 0.0
  %4542 = vmatpush1.msra.mxu0 0.0
  %4543 = vmatprep.subr.mxu0 0.0
  %4544 = vmatpush1.msra.mxu0 0.0
  %4545 = vmatprep.subr.mxu0 0.0
  %4546 = vmatpush1.msra.mxu0 0.0
  %4547 = vmatprep.subr.mxu0 0.0
  %4548 = vmatpush1.msra.mxu0 0.0
  %4549 = vmatprep.subr.mxu0 0.0
  %4550 = vmatpush1.msra.mxu0 0.0
  %4551 = vmatprep.subr.mxu0 0.0
  %4552 = vmatpush1.msra.mxu0 0.0
  %4553 = vmatprep.subr.mxu0 0.0
  %4554 = vmatpush1.msra.mxu0 0.0
  %4555 = vmatprep.subr.mxu0 0.0
  %4556 = vmatpush1.msra.mxu0 0.0
  %4557 = vmatprep.subr.mxu0 0.0
  %4558 = vmatpush1.msra.mxu0 0.0
  %4559 = vmatprep.subr.mxu0 0.0
  %4560 = vmatpush1.msra.mxu0 0.0
  %4561 = vmatprep.subr.mxu0 0.0
  %4562 = vmatpush1.msra.mxu0 0.0
  %4563 = vmatprep.subr.mxu0 0.0
  %4564 = vmatpush1.msra.mxu0 0.0
  %4565 = vmatprep.subr.mxu0 0.0
  %4566 = vmatpush1.msra.mxu0 0.0
  %4567 = vmatprep.subr.mxu0 0.0
  %4568 = vmatpush1.msra.mxu0 0.0
  %4569 = vmatprep.subr.mxu0 0.0
  %4570 = vmatpush1.msra.mxu0 0.0
  %4571 = vmatprep.subr.mxu0 0.0
  %4572 = vmatpush1.msra.mxu0 0.0
  %4573 = vmatprep.subr.mxu0 0.0
  %4574 = vmatpush1.msra.mxu0 0.0
  %4575 = vmatprep.subr.mxu0 0.0
  %4576 = vmatpush1.msra.mxu0 0.0
  %4577 = vmatprep.subr.mxu0 0.0
  %4578 = vmatpush1.msra.mxu0 0.0
  %4579 = vmatprep.subr.mxu0 0.0
  %4580 = vmatpush1.msra.mxu0 0.0
  %4581 = vmatprep.subr.mxu0 0.0
  %4582 = vmatpush1.msra.mxu0 0.0
  %4583 = vmatprep.subr.mxu0 0.0
  %4584 = vmatpush1.msra.mxu0 0.0
  %4585 = vmatprep.mubr.f32.mxu0 0.0
  %4586 = vmatmul.mubr.f32.gmra.mrb[0].mxu0 %v4519
  %v4587 = vpop.f32.mrb[0].mxu0
  %v4588 = vadd.f32 0.0, %v4587
  %v4589 = vpop.f32.mrb[0].mxu0
  %v4590 = vadd.f32 0.0, %v4589
  %4591 = vdwg.mxu0
  %4592 = vmatprep.subr.mxu0 %v3866
  %4593 = vmatpush1.msra.mxu0 %v3865
  %4594 = vmatprep.subr.mxu0 %v3873
  %4595 = vmatpush1.msra.mxu0 %v3872
  %4596 = vmatprep.subr.mxu0 %v3880
  %4597 = vmatpush1.msra.mxu0 %v3879
  %4598 = vmatprep.subr.mxu0 %v3887
  %4599 = vmatpush1.msra.mxu0 %v3886
  %4600 = vmatprep.subr.mxu0 0.0
  %4601 = vmatpush1.msra.mxu0 0.0
  %4602 = vmatprep.subr.mxu0 0.0
  %4603 = vmatpush1.msra.mxu0 0.0
  %4604 = vmatprep.subr.mxu0 0.0
  %4605 = vmatpush1.msra.mxu0 0.0
  %4606 = vmatprep.subr.mxu0 0.0
  %4607 = vmatpush1.msra.mxu0 0.0
  %4608 = vmatprep.subr.mxu0 0.0
  %4609 = vmatpush1.msra.mxu0 0.0
  %4610 = vmatprep.subr.mxu0 0.0
  %4611 = vmatpush1.msra.mxu0 0.0
  %4612 = vmatprep.subr.mxu0 0.0
  %4613 = vmatpush1.msra.mxu0 0.0
  %4614 = vmatprep.subr.mxu0 0.0
  %4615 = vmatpush1.msra.mxu0 0.0
  %4616 = vmatprep.subr.mxu0 0.0
  %4617 = vmatpush1.msra.mxu0 0.0
  %4618 = vmatprep.subr.mxu0 0.0
  %4619 = vmatpush1.msra.mxu0 0.0
  %4620 = vmatprep.subr.mxu0 0.0
  %4621 = vmatpush1.msra.mxu0 0.0
  %4622 = vmatprep.subr.mxu0 0.0
  %4623 = vmatpush1.msra.mxu0 0.0
  %4624 = vmatprep.subr.mxu0 0.0
  %4625 = vmatpush1.msra.mxu0 0.0
  %4626 = vmatprep.subr.mxu0 0.0
  %4627 = vmatpush1.msra.mxu0 0.0
  %4628 = vmatprep.subr.mxu0 0.0
  %4629 = vmatpush1.msra.mxu0 0.0
  %4630 = vmatprep.subr.mxu0 0.0
  %4631 = vmatpush1.msra.mxu0 0.0
  %4632 = vmatprep.subr.mxu0 0.0
  %4633 = vmatpush1.msra.mxu0 0.0
  %4634 = vmatprep.subr.mxu0 0.0
  %4635 = vmatpush1.msra.mxu0 0.0
  %4636 = vmatprep.subr.mxu0 0.0
  %4637 = vmatpush1.msra.mxu0 0.0
  %4638 = vmatprep.subr.mxu0 0.0
  %4639 = vmatpush1.msra.mxu0 0.0
  %4640 = vmatprep.subr.mxu0 0.0
  %4641 = vmatpush1.msra.mxu0 0.0
  %4642 = vmatprep.subr.mxu0 0.0
  %4643 = vmatpush1.msra.mxu0 0.0
  %4644 = vmatprep.subr.mxu0 0.0
  %4645 = vmatpush1.msra.mxu0 0.0
  %4646 = vmatprep.subr.mxu0 0.0
  %4647 = vmatpush1.msra.mxu0 0.0
  %4648 = vmatprep.subr.mxu0 0.0
  %4649 = vmatpush1.msra.mxu0 0.0
  %4650 = vmatprep.subr.mxu0 0.0
  %4651 = vmatpush1.msra.mxu0 0.0
  %4652 = vmatprep.subr.mxu0 0.0
  %4653 = vmatpush1.msra.mxu0 0.0
  %4654 = vmatprep.subr.mxu0 0.0
  %4655 = vmatpush1.msra.mxu0 0.0
  %4656 = vmatprep.mubr.f32.mxu0 0.0
  %4657 = vmatmul.mubr.f32.gmra.mrb[0].mxu0 %v4519
  %v4658 = vpop.f32.mrb[0].mxu0
  %v4659 = vadd.f32 0.0, %v4658
  %v4660 = vpop.f32.mrb[0].mxu0
  %v4661 = vadd.f32 0.0, %v4660
  %4662 = vdwg.mxu0
  %4663 = vmatprep.subr.mxu0 %v3868
  %4664 = vmatpush1.msra.mxu0 %v3867
  %4665 = vmatprep.subr.mxu0 %v3875
  %4666 = vmatpush1.msra.mxu0 %v3874
  %4667 = vmatprep.subr.mxu0 %v3882
  %4668 = vmatpush1.msra.mxu0 %v3881
  %4669 = vmatprep.subr.mxu0 %v3889
  %4670 = vmatpush1.msra.mxu0 %v3888
  %4671 = vmatprep.subr.mxu0 0.0
  %4672 = vmatpush1.msra.mxu0 0.0
  %4673 = vmatprep.subr.mxu0 0.0
  %4674 = vmatpush1.msra.mxu0 0.0
  %4675 = vmatprep.subr.mxu0 0.0
  %4676 = vmatpush1.msra.mxu0 0.0
  %4677 = vmatprep.subr.mxu0 0.0
  %4678 = vmatpush1.msra.mxu0 0.0
  %4679 = vmatprep.subr.mxu0 0.0
  %4680 = vmatpush1.msra.mxu0 0.0
  %4681 = vmatprep.subr.mxu0 0.0
  %4682 = vmatpush1.msra.mxu0 0.0
  %4683 = vmatprep.subr.mxu0 0.0
  %4684 = vmatpush1.msra.mxu0 0.0
  %4685 = vmatprep.subr.mxu0 0.0
  %4686 = vmatpush1.msra.mxu0 0.0
  %4687 = vmatprep.subr.mxu0 0.0
  %4688 = vmatpush1.msra.mxu0 0.0
  %4689 = vmatprep.subr.mxu0 0.0
  %4690 = vmatpush1.msra.mxu0 0.0
  %4691 = vmatprep.subr.mxu0 0.0
  %4692 = vmatpush1.msra.mxu0 0.0
  %4693 = vmatprep.subr.mxu0 0.0
  %4694 = vmatpush1.msra.mxu0 0.0
  %4695 = vmatprep.subr.mxu0 0.0
  %4696 = vmatpush1.msra.mxu0 0.0
  %4697 = vmatprep.subr.mxu0 0.0
  %4698 = vmatpush1.msra.mxu0 0.0
  %4699 = vmatprep.subr.mxu0 0.0
  %4700 = vmatpush1.msra.mxu0 0.0
  %4701 = vmatprep.subr.mxu0 0.0
  %4702 = vmatpush1.msra.mxu0 0.0
  %4703 = vmatprep.subr.mxu0 0.0
  %4704 = vmatpush1.msra.mxu0 0.0
  %4705 = vmatprep.subr.mxu0 0.0
  %4706 = vmatpush1.msra.mxu0 0.0
  %4707 = vmatprep.subr.mxu0 0.0
  %4708 = vmatpush1.msra.mxu0 0.0
  %4709 = vmatprep.subr.mxu0 0.0
  %4710 = vmatpush1.msra.mxu0 0.0
  %4711 = vmatprep.subr.mxu0 0.0
  %4712 = vmatpush1.msra.mxu0 0.0
  %4713 = vmatprep.subr.mxu0 0.0
  %4714 = vmatpush1.msra.mxu0 0.0
  %4715 = vmatprep.subr.mxu0 0.0
  %4716 = vmatpush1.msra.mxu0 0.0
  %4717 = vmatprep.subr.mxu0 0.0
  %4718 = vmatpush1.msra.mxu0 0.0
  %4719 = vmatprep.subr.mxu0 0.0
  %4720 = vmatpush1.msra.mxu0 0.0
  %4721 = vmatprep.subr.mxu0 0.0
  %4722 = vmatpush1.msra.mxu0 0.0
  %4723 = vmatprep.subr.mxu0 0.0
  %4724 = vmatpush1.msra.mxu0 0.0
  %4725 = vmatprep.subr.mxu0 0.0
  %4726 = vmatpush1.msra.mxu0 0.0
  %4727 = vmatprep.mubr.f32.mxu0 0.0
  %4728 = vmatmul.mubr.f32.gmra.mrb[0].mxu0 %v4519
  %v4729 = vpop.f32.mrb[0].mxu0
  %v4730 = vadd.f32 0.0, %v4729
  %v4731 = vpop.f32.mrb[0].mxu0
  %v4732 = vadd.f32 0.0, %v4731
  %4733 = vdwg.mxu0
  %4734 = vmatprep.subr.mxu0 0.0
  %4735 = vmatpush1.msra.mxu0 %v3869
  %4736 = vmatprep.subr.mxu0 0.0
  %4737 = vmatpush1.msra.mxu0 %v3876
  %4738 = vmatprep.subr.mxu0 0.0
  %4739 = vmatpush1.msra.mxu0 %v3883
  %4740 = vmatprep.subr.mxu0 0.0
  %4741 = vmatpush1.msra.mxu0 %v3890
  %4742 = vmatprep.subr.mxu0 0.0
  %4743 = vmatpush1.msra.mxu0 0.0
  %4744 = vmatprep.subr.mxu0 0.0
  %4745 = vmatpush1.msra.mxu0 0.0
  %4746 = vmatprep.subr.mxu0 0.0
  %4747 = vmatpush1.msra.mxu0 0.0
  %4748 = vmatprep.subr.mxu0 0.0
  %4749 = vmatpush1.msra.mxu0 0.0
  %4750 = vmatprep.subr.mxu0 0.0
  %4751 = vmatpush1.msra.mxu0 0.0
  %4752 = vmatprep.subr.mxu0 0.0
  %4753 = vmatpush1.msra.mxu0 0.0
  %4754 = vmatprep.subr.mxu0 0.0
  %4755 = vmatpush1.msra.mxu0 0.0
  %4756 = vmatprep.subr.mxu0 0.0
  %4757 = vmatpush1.msra.mxu0 0.0
  %4758 = vmatprep.subr.mxu0 0.0
  %4759 = vmatpush1.msra.mxu0 0.0
  %4760 = vmatprep.subr.mxu0 0.0
  %4761 = vmatpush1.msra.mxu0 0.0
  %4762 = vmatprep.subr.mxu0 0.0
  %4763 = vmatpush1.msra.mxu0 0.0
  %4764 = vmatprep.subr.mxu0 0.0
  %4765 = vmatpush1.msra.mxu0 0.0
  %4766 = vmatprep.subr.mxu0 0.0
  %4767 = vmatpush1.msra.mxu0 0.0
  %4768 = vmatprep.subr.mxu0 0.0
  %4769 = vmatpush1.msra.mxu0 0.0
  %4770 = vmatprep.subr.mxu0 0.0
  %4771 = vmatpush1.msra.mxu0 0.0
  %4772 = vmatprep.subr.mxu0 0.0
  %4773 = vmatpush1.msra.mxu0 0.0
  %4774 = vmatprep.subr.mxu0 0.0
  %4775 = vmatpush1.msra.mxu0 0.0
  %4776 = vmatprep.subr.mxu0 0.0
  %4777 = vmatpush1.msra.mxu0 0.0
  %4778 = vmatprep.subr.mxu0 0.0
  %4779 = vmatpush1.msra.mxu0 0.0
  %4780 = vmatprep.subr.mxu0 0.0
  %4781 = vmatpush1.msra.mxu0 0.0
  %4782 = vmatprep.subr.mxu0 0.0
  %4783 = vmatpush1.msra.mxu0 0.0
  %4784 = vmatprep.subr.mxu0 0.0
  %4785 = vmatpush1.msra.mxu0 0.0
  %4786 = vmatprep.subr.mxu0 0.0
  %4787 = vmatpush1.msra.mxu0 0.0
  %4788 = vmatprep.subr.mxu0 0.0
  %4789 = vmatpush1.msra.mxu0 0.0
  %4790 = vmatprep.subr.mxu0 0.0
  %4791 = vmatpush1.msra.mxu0 0.0
  %4792 = vmatprep.subr.mxu0 0.0
  %4793 = vmatpush1.msra.mxu0 0.0
  %4794 = vmatprep.subr.mxu0 0.0
  %4795 = vmatpush1.msra.mxu0 0.0
  %4796 = vmatprep.subr.mxu0 0.0
  %4797 = vmatpush1.msra.mxu0 0.0
  %4798 = vmatprep.mubr.f32.mxu0 0.0
  %4799 = vmatmul.mubr.f32.gmra.mrb[0].mxu0 %v4519
  %v4800 = vpop.f32.mrb[0].mxu0
  %v4801 = vadd.f32 0.0, %v4800
  %v4802 = vpop.f32.mrb[0].mxu0
  %4803 = vdwg.mxu0
  %4804 = vrot.lane.b32.xlu0 %v4588, 19
  %v4805 = vpop.permute.xlu0 %4804
  %4806 = vrot.lane.b32.xlu0 %v4590, 19
  %v4807 = vpop.permute.xlu0 %4806
  %4808 = vrot.lane.b32.xlu0 %v4659, 19
  %v4809 = vpop.permute.xlu0 %4808
  %4810 = vrot.lane.b32.xlu0 %v4661, 19
  %v4811 = vpop.permute.xlu0 %4810
  %4812 = vrot.lane.b32.xlu0 %v4730, 19
  %v4813 = vpop.permute.xlu0 %4812
  %4814 = vrot.lane.b32.xlu0 %v4732, 19
  %v4815 = vpop.permute.xlu0 %4814
  %4816 = vrot.lane.b32.xlu0 %v4801, 19
  %v4817 = vpop.permute.xlu0 %4816
  %v4818 = vsel %vm833, %v4815, %v4817
  %v4819 = vsel %vm833, %v4813, %v4815
  %v4820 = vsel %vm833, %v4811, %v4813
  %v4821 = vsel %vm833, %v4809, %v4811
  %v4822 = vsel %vm833, %v4807, %v4809
  %v4823 = vsel %vm833, %v4805, %v4807
  %v4824 = vsel %vm833, %v4817, %v4805
  %v4825 = vadd.f32 %v4509, %v4824
  %v4826 = vadd.f32 %v4510, %v4823
  %v4827 = vadd.f32 %v4511, %v4822
  %v4828 = vadd.f32 %v4512, %v4821
  %v4829 = vadd.f32 %v4513, %v4820
  %v4830 = vadd.f32 %v4514, %v4819
  %v4831 = vadd.f32 %v4515, %v4818
  %s4832 = scalar_lea.vmem %s3, 24
  %v4833 = vld [vmem:[%s4832] sm:$0xff]
  %v4835 = vsel %vm3892, %v4833, 0
  %4837 = vmatprep.subr.mxu0 %v3864
  %4838 = vmatpush1.msra.mxu0 %v3863
  %4839 = vmatprep.subr.mxu0 %v3871
  %4840 = vmatpush1.msra.mxu0 %v3870
  %4841 = vmatprep.subr.mxu0 %v3878
  %4842 = vmatpush1.msra.mxu0 %v3877
  %4843 = vmatprep.subr.mxu0 %v3885
  %4844 = vmatpush1.msra.mxu0 %v3884
  %4845 = vmatprep.subr.mxu0 0.0
  %4846 = vmatpush1.msra.mxu0 0.0
  %4847 = vmatprep.subr.mxu0 0.0
  %4848 = vmatpush1.msra.mxu0 0.0
  %4849 = vmatprep.subr.mxu0 0.0
  %4850 = vmatpush1.msra.mxu0 0.0
  %4851 = vmatprep.subr.mxu0 0.0
  %4852 = vmatpush1.msra.mxu0 0.0
  %4853 = vmatprep.subr.mxu0 0.0
  %4854 = vmatpush1.msra.mxu0 0.0
  %4855 = vmatprep.subr.mxu0 0.0
  %4856 = vmatpush1.msra.mxu0 0.0
  %4857 = vmatprep.subr.mxu0 0.0
  %4858 = vmatpush1.msra.mxu0 0.0
  %4859 = vmatprep.subr.mxu0 0.0
  %4860 = vmatpush1.msra.mxu0 0.0
  %4861 = vmatprep.subr.mxu0 0.0
  %4862 = vmatpush1.msra.mxu0 0.0
  %4863 = vmatprep.subr.mxu0 0.0
  %4864 = vmatpush1.msra.mxu0 0.0
  %4865 = vmatprep.subr.mxu0 0.0
  %4866 = vmatpush1.msra.mxu0 0.0
  %4867 = vmatprep.subr.mxu0 0.0
  %4868 = vmatpush1.msra.mxu0 0.0
  %4869 = vmatprep.subr.mxu0 0.0
  %4870 = vmatpush1.msra.mxu0 0.0
  %4871 = vmatprep.subr.mxu0 0.0
  %4872 = vmatpush1.msra.mxu0 0.0
  %4873 = vmatprep.subr.mxu0 0.0
  %4874 = vmatpush1.msra.mxu0 0.0
  %4875 = vmatprep.subr.mxu0 0.0
  %4876 = vmatpush1.msra.mxu0 0.0
  %4877 = vmatprep.subr.mxu0 0.0
  %4878 = vmatpush1.msra.mxu0 0.0
  %4879 = vmatprep.subr.mxu0 0.0
  %4880 = vmatpush1.msra.mxu0 0.0
  %4881 = vmatprep.subr.mxu0 0.0
  %4882 = vmatpush1.msra.mxu0 0.0
  %4883 = vmatprep.subr.mxu0 0.0
  %4884 = vmatpush1.msra.mxu0 0.0
  %4885 = vmatprep.subr.mxu0 0.0
  %4886 = vmatpush1.msra.mxu0 0.0
  %4887 = vmatprep.subr.mxu0 0.0
  %4888 = vmatpush1.msra.mxu0 0.0
  %4889 = vmatprep.subr.mxu0 0.0
  %4890 = vmatpush1.msra.mxu0 0.0
  %4891 = vmatprep.subr.mxu0 0.0
  %4892 = vmatpush1.msra.mxu0 0.0
  %4893 = vmatprep.subr.mxu0 0.0
  %4894 = vmatpush1.msra.mxu0 0.0
  %4895 = vmatprep.subr.mxu0 0.0
  %4896 = vmatpush1.msra.mxu0 0.0
  %4897 = vmatprep.subr.mxu0 0.0
  %4898 = vmatpush1.msra.mxu0 0.0
  %4899 = vmatprep.subr.mxu0 0.0
  %4900 = vmatpush1.msra.mxu0 0.0
  %4901 = vmatprep.mubr.f32.mxu0 0.0
  %4902 = vmatmul.mubr.f32.gmra.mrb[0].mxu0 %v4835
  %v4903 = vpop.f32.mrb[0].mxu0
  %v4904 = vadd.f32 0.0, %v4903
  %v4905 = vpop.f32.mrb[0].mxu0
  %v4906 = vadd.f32 0.0, %v4905
  %4907 = vdwg.mxu0
  %4908 = vmatprep.subr.mxu0 %v3866
  %4909 = vmatpush1.msra.mxu0 %v3865
  %4910 = vmatprep.subr.mxu0 %v3873
  %4911 = vmatpush1.msra.mxu0 %v3872
  %4912 = vmatprep.subr.mxu0 %v3880
  %4913 = vmatpush1.msra.mxu0 %v3879
  %4914 = vmatprep.subr.mxu0 %v3887
  %4915 = vmatpush1.msra.mxu0 %v3886
  %4916 = vmatprep.subr.mxu0 0.0
  %4917 = vmatpush1.msra.mxu0 0.0
  %4918 = vmatprep.subr.mxu0 0.0
  %4919 = vmatpush1.msra.mxu0 0.0
  %4920 = vmatprep.subr.mxu0 0.0
  %4921 = vmatpush1.msra.mxu0 0.0
  %4922 = vmatprep.subr.mxu0 0.0
  %4923 = vmatpush1.msra.mxu0 0.0
  %4924 = vmatprep.subr.mxu0 0.0
  %4925 = vmatpush1.msra.mxu0 0.0
  %4926 = vmatprep.subr.mxu0 0.0
  %4927 = vmatpush1.msra.mxu0 0.0
  %4928 = vmatprep.subr.mxu0 0.0
  %4929 = vmatpush1.msra.mxu0 0.0
  %4930 = vmatprep.subr.mxu0 0.0
  %4931 = vmatpush1.msra.mxu0 0.0
  %4932 = vmatprep.subr.mxu0 0.0
  %4933 = vmatpush1.msra.mxu0 0.0
  %4934 = vmatprep.subr.mxu0 0.0
  %4935 = vmatpush1.msra.mxu0 0.0
  %4936 = vmatprep.subr.mxu0 0.0
  %4937 = vmatpush1.msra.mxu0 0.0
  %4938 = vmatprep.subr.mxu0 0.0
  %4939 = vmatpush1.msra.mxu0 0.0
  %4940 = vmatprep.subr.mxu0 0.0
  %4941 = vmatpush1.msra.mxu0 0.0
  %4942 = vmatprep.subr.mxu0 0.0
  %4943 = vmatpush1.msra.mxu0 0.0
  %4944 = vmatprep.subr.mxu0 0.0
  %4945 = vmatpush1.msra.mxu0 0.0
  %4946 = vmatprep.subr.mxu0 0.0
  %4947 = vmatpush1.msra.mxu0 0.0
  %4948 = vmatprep.subr.mxu0 0.0
  %4949 = vmatpush1.msra.mxu0 0.0
  %4950 = vmatprep.subr.mxu0 0.0
  %4951 = vmatpush1.msra.mxu0 0.0
  %4952 = vmatprep.subr.mxu0 0.0
  %4953 = vmatpush1.msra.mxu0 0.0
  %4954 = vmatprep.subr.mxu0 0.0
  %4955 = vmatpush1.msra.mxu0 0.0
  %4956 = vmatprep.subr.mxu0 0.0
  %4957 = vmatpush1.msra.mxu0 0.0
  %4958 = vmatprep.subr.mxu0 0.0
  %4959 = vmatpush1.msra.mxu0 0.0
  %4960 = vmatprep.subr.mxu0 0.0
  %4961 = vmatpush1.msra.mxu0 0.0
  %4962 = vmatprep.subr.mxu0 0.0
  %4963 = vmatpush1.msra.mxu0 0.0
  %4964 = vmatprep.subr.mxu0 0.0
  %4965 = vmatpush1.msra.mxu0 0.0
  %4966 = vmatprep.subr.mxu0 0.0
  %4967 = vmatpush1.msra.mxu0 0.0
  %4968 = vmatprep.subr.mxu0 0.0
  %4969 = vmatpush1.msra.mxu0 0.0
  %4970 = vmatprep.subr.mxu0 0.0
  %4971 = vmatpush1.msra.mxu0 0.0
  %4972 = vmatprep.mubr.f32.mxu0 0.0
  %4973 = vmatmul.mubr.f32.gmra.mrb[0].mxu0 %v4835
  %v4974 = vpop.f32.mrb[0].mxu0
  %v4975 = vadd.f32 0.0, %v4974
  %v4976 = vpop.f32.mrb[0].mxu0
  %v4977 = vadd.f32 0.0, %v4976
  %4978 = vdwg.mxu0
  %4979 = vmatprep.subr.mxu0 %v3868
  %4980 = vmatpush1.msra.mxu0 %v3867
  %4981 = vmatprep.subr.mxu0 %v3875
  %4982 = vmatpush1.msra.mxu0 %v3874
  %4983 = vmatprep.subr.mxu0 %v3882
  %4984 = vmatpush1.msra.mxu0 %v3881
  %4985 = vmatprep.subr.mxu0 %v3889
  %4986 = vmatpush1.msra.mxu0 %v3888
  %4987 = vmatprep.subr.mxu0 0.0
  %4988 = vmatpush1.msra.mxu0 0.0
  %4989 = vmatprep.subr.mxu0 0.0
  %4990 = vmatpush1.msra.mxu0 0.0
  %4991 = vmatprep.subr.mxu0 0.0
  %4992 = vmatpush1.msra.mxu0 0.0
  %4993 = vmatprep.subr.mxu0 0.0
  %4994 = vmatpush1.msra.mxu0 0.0
  %4995 = vmatprep.subr.mxu0 0.0
  %4996 = vmatpush1.msra.mxu0 0.0
  %4997 = vmatprep.subr.mxu0 0.0
  %4998 = vmatpush1.msra.mxu0 0.0
  %4999 = vmatprep.subr.mxu0 0.0
  %5000 = vmatpush1.msra.mxu0 0.0
  %5001 = vmatprep.subr.mxu0 0.0
  %5002 = vmatpush1.msra.mxu0 0.0
  %5003 = vmatprep.subr.mxu0 0.0
  %5004 = vmatpush1.msra.mxu0 0.0
  %5005 = vmatprep.subr.mxu0 0.0
  %5006 = vmatpush1.msra.mxu0 0.0
  %5007 = vmatprep.subr.mxu0 0.0
  %5008 = vmatpush1.msra.mxu0 0.0
  %5009 = vmatprep.subr.mxu0 0.0
  %5010 = vmatpush1.msra.mxu0 0.0
  %5011 = vmatprep.subr.mxu0 0.0
  %5012 = vmatpush1.msra.mxu0 0.0
  %5013 = vmatprep.subr.mxu0 0.0
  %5014 = vmatpush1.msra.mxu0 0.0
  %5015 = vmatprep.subr.mxu0 0.0
  %5016 = vmatpush1.msra.mxu0 0.0
  %5017 = vmatprep.subr.mxu0 0.0
  %5018 = vmatpush1.msra.mxu0 0.0
  %5019 = vmatprep.subr.mxu0 0.0
  %5020 = vmatpush1.msra.mxu0 0.0
  %5021 = vmatprep.subr.mxu0 0.0
  %5022 = vmatpush1.msra.mxu0 0.0
  %5023 = vmatprep.subr.mxu0 0.0
  %5024 = vmatpush1.msra.mxu0 0.0
  %5025 = vmatprep.subr.mxu0 0.0
  %5026 = vmatpush1.msra.mxu0 0.0
  %5027 = vmatprep.subr.mxu0 0.0
  %5028 = vmatpush1.msra.mxu0 0.0
  %5029 = vmatprep.subr.mxu0 0.0
  %5030 = vmatpush1.msra.mxu0 0.0
  %5031 = vmatprep.subr.mxu0 0.0
  %5032 = vmatpush1.msra.mxu0 0.0
  %5033 = vmatprep.subr.mxu0 0.0
  %5034 = vmatpush1.msra.mxu0 0.0
  %5035 = vmatprep.subr.mxu0 0.0
  %5036 = vmatpush1.msra.mxu0 0.0
  %5037 = vmatprep.subr.mxu0 0.0
  %5038 = vmatpush1.msra.mxu0 0.0
  %5039 = vmatprep.subr.mxu0 0.0
  %5040 = vmatpush1.msra.mxu0 0.0
  %5041 = vmatprep.subr.mxu0 0.0
  %5042 = vmatpush1.msra.mxu0 0.0
  %5043 = vmatprep.mubr.f32.mxu0 0.0
  %5044 = vmatmul.mubr.f32.gmra.mrb[0].mxu0 %v4835
  %v5045 = vpop.f32.mrb[0].mxu0
  %v5046 = vadd.f32 0.0, %v5045
  %v5047 = vpop.f32.mrb[0].mxu0
  %v5048 = vadd.f32 0.0, %v5047
  %5049 = vdwg.mxu0
  %5050 = vmatprep.subr.mxu0 0.0
  %5051 = vmatpush1.msra.mxu0 %v3869
  %5052 = vmatprep.subr.mxu0 0.0
  %5053 = vmatpush1.msra.mxu0 %v3876
  %5054 = vmatprep.subr.mxu0 0.0
  %5055 = vmatpush1.msra.mxu0 %v3883
  %5056 = vmatprep.subr.mxu0 0.0
  %5057 = vmatpush1.msra.mxu0 %v3890
  %5058 = vmatprep.subr.mxu0 0.0
  %5059 = vmatpush1.msra.mxu0 0.0
  %5060 = vmatprep.subr.mxu0 0.0
  %5061 = vmatpush1.msra.mxu0 0.0
  %5062 = vmatprep.subr.mxu0 0.0
  %5063 = vmatpush1.msra.mxu0 0.0
  %5064 = vmatprep.subr.mxu0 0.0
  %5065 = vmatpush1.msra.mxu0 0.0
  %5066 = vmatprep.subr.mxu0 0.0
  %5067 = vmatpush1.msra.mxu0 0.0
  %5068 = vmatprep.subr.mxu0 0.0
  %5069 = vmatpush1.msra.mxu0 0.0
  %5070 = vmatprep.subr.mxu0 0.0
  %5071 = vmatpush1.msra.mxu0 0.0
  %5072 = vmatprep.subr.mxu0 0.0
  %5073 = vmatpush1.msra.mxu0 0.0
  %5074 = vmatprep.subr.mxu0 0.0
  %5075 = vmatpush1.msra.mxu0 0.0
  %5076 = vmatprep.subr.mxu0 0.0
  %5077 = vmatpush1.msra.mxu0 0.0
  %5078 = vmatprep.subr.mxu0 0.0
  %5079 = vmatpush1.msra.mxu0 0.0
  %5080 = vmatprep.subr.mxu0 0.0
  %5081 = vmatpush1.msra.mxu0 0.0
  %5082 = vmatprep.subr.mxu0 0.0
  %5083 = vmatpush1.msra.mxu0 0.0
  %5084 = vmatprep.subr.mxu0 0.0
  %5085 = vmatpush1.msra.mxu0 0.0
  %5086 = vmatprep.subr.mxu0 0.0
  %5087 = vmatpush1.msra.mxu0 0.0
  %5088 = vmatprep.subr.mxu0 0.0
  %5089 = vmatpush1.msra.mxu0 0.0
  %5090 = vmatprep.subr.mxu0 0.0
  %5091 = vmatpush1.msra.mxu0 0.0
  %5092 = vmatprep.subr.mxu0 0.0
  %5093 = vmatpush1.msra.mxu0 0.0
  %5094 = vmatprep.subr.mxu0 0.0
  %5095 = vmatpush1.msra.mxu0 0.0
  %5096 = vmatprep.subr.mxu0 0.0
  %5097 = vmatpush1.msra.mxu0 0.0
  %5098 = vmatprep.subr.mxu0 0.0
  %5099 = vmatpush1.msra.mxu0 0.0
  %5100 = vmatprep.subr.mxu0 0.0
  %5101 = vmatpush1.msra.mxu0 0.0
  %5102 = vmatprep.subr.mxu0 0.0
  %5103 = vmatpush1.msra.mxu0 0.0
  %5104 = vmatprep.subr.mxu0 0.0
  %5105 = vmatpush1.msra.mxu0 0.0
  %5106 = vmatprep.subr.mxu0 0.0
  %5107 = vmatpush1.msra.mxu0 0.0
  %5108 = vmatprep.subr.mxu0 0.0
  %5109 = vmatpush1.msra.mxu0 0.0
  %5110 = vmatprep.subr.mxu0 0.0
  %5111 = vmatpush1.msra.mxu0 0.0
  %5112 = vmatprep.subr.mxu0 0.0
  %5113 = vmatpush1.msra.mxu0 0.0
  %5114 = vmatprep.mubr.f32.mxu0 0.0
  %5115 = vmatmul.mubr.f32.gmra.mrb[0].mxu0 %v4835
  %v5116 = vpop.f32.mrb[0].mxu0
  %v5117 = vadd.f32 0.0, %v5116
  %v5118 = vpop.f32.mrb[0].mxu0
  %5119 = vdwg.mxu0
  %5120 = vrot.lane.b32.xlu0 %v4904, 1
  %v5121 = vpop.permute.xlu0 %5120
  %5122 = vrot.lane.b32.xlu0 %v4906, 1
  %v5123 = vpop.permute.xlu0 %5122
  %5124 = vrot.lane.b32.xlu0 %v4975, 1
  %v5125 = vpop.permute.xlu0 %5124
  %5126 = vrot.lane.b32.xlu0 %v4977, 1
  %v5127 = vpop.permute.xlu0 %5126
  %5128 = vrot.lane.b32.xlu0 %v5046, 1
  %v5129 = vpop.permute.xlu0 %5128
  %5130 = vrot.lane.b32.xlu0 %v5048, 1
  %v5131 = vpop.permute.xlu0 %5130
  %5132 = vrot.lane.b32.xlu0 %v5117, 1
  %v5133 = vpop.permute.xlu0 %5132
  %v5134 = vsel %vm1252, %v5131, %v5133
  %v5135 = vsel %vm1252, %v5129, %v5131
  %v5136 = vsel %vm1252, %v5127, %v5129
  %v5137 = vsel %vm1252, %v5125, %v5127
  %v5138 = vsel %vm1252, %v5123, %v5125
  %v5139 = vsel %vm1252, %v5121, %v5123
  %v5140 = vsel %vm1252, %v5133, %v5121
  %v5141 = vadd.f32 %v4825, %v5140
  %v5142 = vadd.f32 %v4826, %v5139
  %v5143 = vadd.f32 %v4827, %v5138
  %v5144 = vadd.f32 %v4828, %v5137
  %v5145 = vadd.f32 %v4829, %v5136
  %v5146 = vadd.f32 %v4830, %v5135
  %v5147 = vadd.f32 %v4831, %v5134
  %s5148 = scalar_lea.vmem %s3, 32
  %v5149 = vld [vmem:[%s5148] sm:$0xff]
  %v5151 = vsel %vm3892, %v5149, 0
  %5153 = vmatprep.subr.mxu0 %v3864
  %5154 = vmatpush1.msra.mxu0 %v3863
  %5155 = vmatprep.subr.mxu0 %v3871
  %5156 = vmatpush1.msra.mxu0 %v3870
  %5157 = vmatprep.subr.mxu0 %v3878
  %5158 = vmatpush1.msra.mxu0 %v3877
  %5159 = vmatprep.subr.mxu0 %v3885
  %5160 = vmatpush1.msra.mxu0 %v3884
  %5161 = vmatprep.subr.mxu0 0.0
  %5162 = vmatpush1.msra.mxu0 0.0
  %5163 = vmatprep.subr.mxu0 0.0
  %5164 = vmatpush1.msra.mxu0 0.0
  %5165 = vmatprep.subr.mxu0 0.0
  %5166 = vmatpush1.msra.mxu0 0.0
  %5167 = vmatprep.subr.mxu0 0.0
  %5168 = vmatpush1.msra.mxu0 0.0
  %5169 = vmatprep.subr.mxu0 0.0
  %5170 = vmatpush1.msra.mxu0 0.0
  %5171 = vmatprep.subr.mxu0 0.0
  %5172 = vmatpush1.msra.mxu0 0.0
  %5173 = vmatprep.subr.mxu0 0.0
  %5174 = vmatpush1.msra.mxu0 0.0
  %5175 = vmatprep.subr.mxu0 0.0
  %5176 = vmatpush1.msra.mxu0 0.0
  %5177 = vmatprep.subr.mxu0 0.0
  %5178 = vmatpush1.msra.mxu0 0.0
  %5179 = vmatprep.subr.mxu0 0.0
  %5180 = vmatpush1.msra.mxu0 0.0
  %5181 = vmatprep.subr.mxu0 0.0
  %5182 = vmatpush1.msra.mxu0 0.0
  %5183 = vmatprep.subr.mxu0 0.0
  %5184 = vmatpush1.msra.mxu0 0.0
  %5185 = vmatprep.subr.mxu0 0.0
  %5186 = vmatpush1.msra.mxu0 0.0
  %5187 = vmatprep.subr.mxu0 0.0
  %5188 = vmatpush1.msra.mxu0 0.0
  %5189 = vmatprep.subr.mxu0 0.0
  %5190 = vmatpush1.msra.mxu0 0.0
  %5191 = vmatprep.subr.mxu0 0.0
  %5192 = vmatpush1.msra.mxu0 0.0
  %5193 = vmatprep.subr.mxu0 0.0
  %5194 = vmatpush1.msra.mxu0 0.0
  %5195 = vmatprep.subr.mxu0 0.0
  %5196 = vmatpush1.msra.mxu0 0.0
  %5197 = vmatprep.subr.mxu0 0.0
  %5198 = vmatpush1.msra.mxu0 0.0
  %5199 = vmatprep.subr.mxu0 0.0
  %5200 = vmatpush1.msra.mxu0 0.0
  %5201 = vmatprep.subr.mxu0 0.0
  %5202 = vmatpush1.msra.mxu0 0.0
  %5203 = vmatprep.subr.mxu0 0.0
  %5204 = vmatpush1.msra.mxu0 0.0
  %5205 = vmatprep.subr.mxu0 0.0
  %5206 = vmatpush1.msra.mxu0 0.0
  %5207 = vmatprep.subr.mxu0 0.0
  %5208 = vmatpush1.msra.mxu0 0.0
  %5209 = vmatprep.subr.mxu0 0.0
  %5210 = vmatpush1.msra.mxu0 0.0
  %5211 = vmatprep.subr.mxu0 0.0
  %5212 = vmatpush1.msra.mxu0 0.0
  %5213 = vmatprep.subr.mxu0 0.0
  %5214 = vmatpush1.msra.mxu0 0.0
  %5215 = vmatprep.subr.mxu0 0.0
  %5216 = vmatpush1.msra.mxu0 0.0
  %5217 = vmatprep.mubr.f32.mxu0 0.0
  %5218 = vmatmul.mubr.f32.gmra.mrb[0].mxu0 %v5151
  %v5219 = vpop.f32.mrb[0].mxu0
  %v5220 = vadd.f32 0.0, %v5219
  %v5221 = vpop.f32.mrb[0].mxu0
  %v5222 = vadd.f32 0.0, %v5221
  %5223 = vdwg.mxu0
  %5224 = vmatprep.subr.mxu0 %v3866
  %5225 = vmatpush1.msra.mxu0 %v3865
  %5226 = vmatprep.subr.mxu0 %v3873
  %5227 = vmatpush1.msra.mxu0 %v3872
  %5228 = vmatprep.subr.mxu0 %v3880
  %5229 = vmatpush1.msra.mxu0 %v3879
  %5230 = vmatprep.subr.mxu0 %v3887
  %5231 = vmatpush1.msra.mxu0 %v3886
  %5232 = vmatprep.subr.mxu0 0.0
  %5233 = vmatpush1.msra.mxu0 0.0
  %5234 = vmatprep.subr.mxu0 0.0
  %5235 = vmatpush1.msra.mxu0 0.0
  %5236 = vmatprep.subr.mxu0 0.0
  %5237 = vmatpush1.msra.mxu0 0.0
  %5238 = vmatprep.subr.mxu0 0.0
  %5239 = vmatpush1.msra.mxu0 0.0
  %5240 = vmatprep.subr.mxu0 0.0
  %5241 = vmatpush1.msra.mxu0 0.0
  %5242 = vmatprep.subr.mxu0 0.0
  %5243 = vmatpush1.msra.mxu0 0.0
  %5244 = vmatprep.subr.mxu0 0.0
  %5245 = vmatpush1.msra.mxu0 0.0
  %5246 = vmatprep.subr.mxu0 0.0
  %5247 = vmatpush1.msra.mxu0 0.0
  %5248 = vmatprep.subr.mxu0 0.0
  %5249 = vmatpush1.msra.mxu0 0.0
  %5250 = vmatprep.subr.mxu0 0.0
  %5251 = vmatpush1.msra.mxu0 0.0
  %5252 = vmatprep.subr.mxu0 0.0
  %5253 = vmatpush1.msra.mxu0 0.0
  %5254 = vmatprep.subr.mxu0 0.0
  %5255 = vmatpush1.msra.mxu0 0.0
  %5256 = vmatprep.subr.mxu0 0.0
  %5257 = vmatpush1.msra.mxu0 0.0
  %5258 = vmatprep.subr.mxu0 0.0
  %5259 = vmatpush1.msra.mxu0 0.0
  %5260 = vmatprep.subr.mxu0 0.0
  %5261 = vmatpush1.msra.mxu0 0.0
  %5262 = vmatprep.subr.mxu0 0.0
  %5263 = vmatpush1.msra.mxu0 0.0
  %5264 = vmatprep.subr.mxu0 0.0
  %5265 = vmatpush1.msra.mxu0 0.0
  %5266 = vmatprep.subr.mxu0 0.0
  %5267 = vmatpush1.msra.mxu0 0.0
  %5268 = vmatprep.subr.mxu0 0.0
  %5269 = vmatpush1.msra.mxu0 0.0
  %5270 = vmatprep.subr.mxu0 0.0
  %5271 = vmatpush1.msra.mxu0 0.0
  %5272 = vmatprep.subr.mxu0 0.0
  %5273 = vmatpush1.msra.mxu0 0.0
  %5274 = vmatprep.subr.mxu0 0.0
  %5275 = vmatpush1.msra.mxu0 0.0
  %5276 = vmatprep.subr.mxu0 0.0
  %5277 = vmatpush1.msra.mxu0 0.0
  %5278 = vmatprep.subr.mxu0 0.0
  %5279 = vmatpush1.msra.mxu0 0.0
  %5280 = vmatprep.subr.mxu0 0.0
  %5281 = vmatpush1.msra.mxu0 0.0
  %5282 = vmatprep.subr.mxu0 0.0
  %5283 = vmatpush1.msra.mxu0 0.0
  %5284 = vmatprep.subr.mxu0 0.0
  %5285 = vmatpush1.msra.mxu0 0.0
  %5286 = vmatprep.subr.mxu0 0.0
  %5287 = vmatpush1.msra.mxu0 0.0
  %5288 = vmatprep.mubr.f32.mxu0 0.0
  %5289 = vmatmul.mubr.f32.gmra.mrb[0].mxu0 %v5151
  %v5290 = vpop.f32.mrb[0].mxu0
  %v5291 = vadd.f32 0.0, %v5290
  %v5292 = vpop.f32.mrb[0].mxu0
  %v5293 = vadd.f32 0.0, %v5292
  %5294 = vdwg.mxu0
  %5295 = vmatprep.subr.mxu0 %v3868
  %5296 = vmatpush1.msra.mxu0 %v3867
  %5297 = vmatprep.subr.mxu0 %v3875
  %5298 = vmatpush1.msra.mxu0 %v3874
  %5299 = vmatprep.subr.mxu0 %v3882
  %5300 = vmatpush1.msra.mxu0 %v3881
  %5301 = vmatprep.subr.mxu0 %v3889
  %5302 = vmatpush1.msra.mxu0 %v3888
  %5303 = vmatprep.subr.mxu0 0.0
  %5304 = vmatpush1.msra.mxu0 0.0
  %5305 = vmatprep.subr.mxu0 0.0
  %5306 = vmatpush1.msra.mxu0 0.0
  %5307 = vmatprep.subr.mxu0 0.0
  %5308 = vmatpush1.msra.mxu0 0.0
  %5309 = vmatprep.subr.mxu0 0.0
  %5310 = vmatpush1.msra.mxu0 0.0
  %5311 = vmatprep.subr.mxu0 0.0
  %5312 = vmatpush1.msra.mxu0 0.0
  %5313 = vmatprep.subr.mxu0 0.0
  %5314 = vmatpush1.msra.mxu0 0.0
  %5315 = vmatprep.subr.mxu0 0.0
  %5316 = vmatpush1.msra.mxu0 0.0
  %5317 = vmatprep.subr.mxu0 0.0
  %5318 = vmatpush1.msra.mxu0 0.0
  %5319 = vmatprep.subr.mxu0 0.0
  %5320 = vmatpush1.msra.mxu0 0.0
  %5321 = vmatprep.subr.mxu0 0.0
  %5322 = vmatpush1.msra.mxu0 0.0
  %5323 = vmatprep.subr.mxu0 0.0
  %5324 = vmatpush1.msra.mxu0 0.0
  %5325 = vmatprep.subr.mxu0 0.0
  %5326 = vmatpush1.msra.mxu0 0.0
  %5327 = vmatprep.subr.mxu0 0.0
  %5328 = vmatpush1.msra.mxu0 0.0
  %5329 = vmatprep.subr.mxu0 0.0
  %5330 = vmatpush1.msra.mxu0 0.0
  %5331 = vmatprep.subr.mxu0 0.0
  %5332 = vmatpush1.msra.mxu0 0.0
  %5333 = vmatprep.subr.mxu0 0.0
  %5334 = vmatpush1.msra.mxu0 0.0
  %5335 = vmatprep.subr.mxu0 0.0
  %5336 = vmatpush1.msra.mxu0 0.0
  %5337 = vmatprep.subr.mxu0 0.0
  %5338 = vmatpush1.msra.mxu0 0.0
  %5339 = vmatprep.subr.mxu0 0.0
  %5340 = vmatpush1.msra.mxu0 0.0
  %5341 = vmatprep.subr.mxu0 0.0
  %5342 = vmatpush1.msra.mxu0 0.0
  %5343 = vmatprep.subr.mxu0 0.0
  %5344 = vmatpush1.msra.mxu0 0.0
  %5345 = vmatprep.subr.mxu0 0.0
  %5346 = vmatpush1.msra.mxu0 0.0
  %5347 = vmatprep.subr.mxu0 0.0
  %5348 = vmatpush1.msra.mxu0 0.0
  %5349 = vmatprep.subr.mxu0 0.0
  %5350 = vmatpush1.msra.mxu0 0.0
  %5351 = vmatprep.subr.mxu0 0.0
  %5352 = vmatpush1.msra.mxu0 0.0
  %5353 = vmatprep.subr.mxu0 0.0
  %5354 = vmatpush1.msra.mxu0 0.0
  %5355 = vmatprep.subr.mxu0 0.0
  %5356 = vmatpush1.msra.mxu0 0.0
  %5357 = vmatprep.subr.mxu0 0.0
  %5358 = vmatpush1.msra.mxu0 0.0
  %5359 = vmatprep.mubr.f32.mxu0 0.0
  %5360 = vmatmul.mubr.f32.gmra.mrb[0].mxu0 %v5151
  %v5361 = vpop.f32.mrb[0].mxu0
  %v5362 = vadd.f32 0.0, %v5361
  %v5363 = vpop.f32.mrb[0].mxu0
  %v5364 = vadd.f32 0.0, %v5363
  %5365 = vdwg.mxu0
  %5366 = vmatprep.subr.mxu0 0.0
  %5367 = vmatpush1.msra.mxu0 %v3869
  %5368 = vmatprep.subr.mxu0 0.0
  %5369 = vmatpush1.msra.mxu0 %v3876
  %5370 = vmatprep.subr.mxu0 0.0
  %5371 = vmatpush1.msra.mxu0 %v3883
  %5372 = vmatprep.subr.mxu0 0.0
  %5373 = vmatpush1.msra.mxu0 %v3890
  %5374 = vmatprep.subr.mxu0 0.0
  %5375 = vmatpush1.msra.mxu0 0.0
  %5376 = vmatprep.subr.mxu0 0.0
  %5377 = vmatpush1.msra.mxu0 0.0
  %5378 = vmatprep.subr.mxu0 0.0
  %5379 = vmatpush1.msra.mxu0 0.0
  %5380 = vmatprep.subr.mxu0 0.0
  %5381 = vmatpush1.msra.mxu0 0.0
  %5382 = vmatprep.subr.mxu0 0.0
  %5383 = vmatpush1.msra.mxu0 0.0
  %5384 = vmatprep.subr.mxu0 0.0
  %5385 = vmatpush1.msra.mxu0 0.0
  %5386 = vmatprep.subr.mxu0 0.0
  %5387 = vmatpush1.msra.mxu0 0.0
  %5388 = vmatprep.subr.mxu0 0.0
  %5389 = vmatpush1.msra.mxu0 0.0
  %5390 = vmatprep.subr.mxu0 0.0
  %5391 = vmatpush1.msra.mxu0 0.0
  %5392 = vmatprep.subr.mxu0 0.0
  %5393 = vmatpush1.msra.mxu0 0.0
  %5394 = vmatprep.subr.mxu0 0.0
  %5395 = vmatpush1.msra.mxu0 0.0
  %5396 = vmatprep.subr.mxu0 0.0
  %5397 = vmatpush1.msra.mxu0 0.0
  %5398 = vmatprep.subr.mxu0 0.0
  %5399 = vmatpush1.msra.mxu0 0.0
  %5400 = vmatprep.subr.mxu0 0.0
  %5401 = vmatpush1.msra.mxu0 0.0
  %5402 = vmatprep.subr.mxu0 0.0
  %5403 = vmatpush1.msra.mxu0 0.0
  %5404 = vmatprep.subr.mxu0 0.0
  %5405 = vmatpush1.msra.mxu0 0.0
  %5406 = vmatprep.subr.mxu0 0.0
  %5407 = vmatpush1.msra.mxu0 0.0
  %5408 = vmatprep.subr.mxu0 0.0
  %5409 = vmatpush1.msra.mxu0 0.0
  %5410 = vmatprep.subr.mxu0 0.0
  %5411 = vmatpush1.msra.mxu0 0.0
  %5412 = vmatprep.subr.mxu0 0.0
  %5413 = vmatpush1.msra.mxu0 0.0
  %5414 = vmatprep.subr.mxu0 0.0
  %5415 = vmatpush1.msra.mxu0 0.0
  %5416 = vmatprep.subr.mxu0 0.0
  %5417 = vmatpush1.msra.mxu0 0.0
  %5418 = vmatprep.subr.mxu0 0.0
  %5419 = vmatpush1.msra.mxu0 0.0
  %5420 = vmatprep.subr.mxu0 0.0
  %5421 = vmatpush1.msra.mxu0 0.0
  %5422 = vmatprep.subr.mxu0 0.0
  %5423 = vmatpush1.msra.mxu0 0.0
  %5424 = vmatprep.subr.mxu0 0.0
  %5425 = vmatpush1.msra.mxu0 0.0
  %5426 = vmatprep.subr.mxu0 0.0
  %5427 = vmatpush1.msra.mxu0 0.0
  %5428 = vmatprep.subr.mxu0 0.0
  %5429 = vmatpush1.msra.mxu0 0.0
  %5430 = vmatprep.mubr.f32.mxu0 0.0
  %5431 = vmatmul.mubr.f32.gmra.mrb[0].mxu0 %v5151
  %v5432 = vpop.f32.mrb[0].mxu0
  %v5433 = vadd.f32 0.0, %v5432
  %v5434 = vpop.f32.mrb[0].mxu0
  %5435 = vdwg.mxu0
  %v5436 = vadd.f32 %v5141, %v5220
  %v5437 = vadd.f32 %v5142, %v5222
  %v5438 = vadd.f32 %v5143, %v5291
  %v5439 = vadd.f32 %v5144, %v5293
  %v5440 = vadd.f32 %v5145, %v5362
  %v5441 = vadd.f32 %v5146, %v5364
  %v5442 = vadd.f32 %v5147, %v5433
  %s5443 = scalar_lea.vmem %s3, 40
  %v5444 = vld [vmem:[%s5443] sm:$0xff]
  %v5446 = vsel %vm3892, %v5444, 0
  %5448 = vmatprep.subr.mxu0 %v3864
  %5449 = vmatpush1.msra.mxu0 %v3863
  %5450 = vmatprep.subr.mxu0 %v3871
  %5451 = vmatpush1.msra.mxu0 %v3870
  %5452 = vmatprep.subr.mxu0 %v3878
  %5453 = vmatpush1.msra.mxu0 %v3877
  %5454 = vmatprep.subr.mxu0 %v3885
  %5455 = vmatpush1.msra.mxu0 %v3884
  %5456 = vmatprep.subr.mxu0 0.0
  %5457 = vmatpush1.msra.mxu0 0.0
  %5458 = vmatprep.subr.mxu0 0.0
  %5459 = vmatpush1.msra.mxu0 0.0
  %5460 = vmatprep.subr.mxu0 0.0
  %5461 = vmatpush1.msra.mxu0 0.0
  %5462 = vmatprep.subr.mxu0 0.0
  %5463 = vmatpush1.msra.mxu0 0.0
  %5464 = vmatprep.subr.mxu0 0.0
  %5465 = vmatpush1.msra.mxu0 0.0
  %5466 = vmatprep.subr.mxu0 0.0
  %5467 = vmatpush1.msra.mxu0 0.0
  %5468 = vmatprep.subr.mxu0 0.0
  %5469 = vmatpush1.msra.mxu0 0.0
  %5470 = vmatprep.subr.mxu0 0.0
  %5471 = vmatpush1.msra.mxu0 0.0
  %5472 = vmatprep.subr.mxu0 0.0
  %5473 = vmatpush1.msra.mxu0 0.0
  %5474 = vmatprep.subr.mxu0 0.0
  %5475 = vmatpush1.msra.mxu0 0.0
  %5476 = vmatprep.subr.mxu0 0.0
  %5477 = vmatpush1.msra.mxu0 0.0
  %5478 = vmatprep.subr.mxu0 0.0
  %5479 = vmatpush1.msra.mxu0 0.0
  %5480 = vmatprep.subr.mxu0 0.0
  %5481 = vmatpush1.msra.mxu0 0.0
  %5482 = vmatprep.subr.mxu0 0.0
  %5483 = vmatpush1.msra.mxu0 0.0
  %5484 = vmatprep.subr.mxu0 0.0
  %5485 = vmatpush1.msra.mxu0 0.0
  %5486 = vmatprep.subr.mxu0 0.0
  %5487 = vmatpush1.msra.mxu0 0.0
  %5488 = vmatprep.subr.mxu0 0.0
  %5489 = vmatpush1.msra.mxu0 0.0
  %5490 = vmatprep.subr.mxu0 0.0
  %5491 = vmatpush1.msra.mxu0 0.0
  %5492 = vmatprep.subr.mxu0 0.0
  %5493 = vmatpush1.msra.mxu0 0.0
  %5494 = vmatprep.subr.mxu0 0.0
  %5495 = vmatpush1.msra.mxu0 0.0
  %5496 = vmatprep.subr.mxu0 0.0
  %5497 = vmatpush1.msra.mxu0 0.0
  %5498 = vmatprep.subr.mxu0 0.0
  %5499 = vmatpush1.msra.mxu0 0.0
  %5500 = vmatprep.subr.mxu0 0.0
  %5501 = vmatpush1.msra.mxu0 0.0
  %5502 = vmatprep.subr.mxu0 0.0
  %5503 = vmatpush1.msra.mxu0 0.0
  %5504 = vmatprep.subr.mxu0 0.0
  %5505 = vmatpush1.msra.mxu0 0.0
  %5506 = vmatprep.subr.mxu0 0.0
  %5507 = vmatpush1.msra.mxu0 0.0
  %5508 = vmatprep.subr.mxu0 0.0
  %5509 = vmatpush1.msra.mxu0 0.0
  %5510 = vmatprep.subr.mxu0 0.0
  %5511 = vmatpush1.msra.mxu0 0.0
  %5512 = vmatprep.mubr.f32.mxu0 0.0
  %5513 = vmatmul.mubr.f32.gmra.mrb[0].mxu0 %v5446
  %v5514 = vpop.f32.mrb[0].mxu0
  %v5515 = vadd.f32 0.0, %v5514
  %v5516 = vpop.f32.mrb[0].mxu0
  %v5517 = vadd.f32 0.0, %v5516
  %5518 = vdwg.mxu0
  %5519 = vmatprep.subr.mxu0 %v3866
  %5520 = vmatpush1.msra.mxu0 %v3865
  %5521 = vmatprep.subr.mxu0 %v3873
  %5522 = vmatpush1.msra.mxu0 %v3872
  %5523 = vmatprep.subr.mxu0 %v3880
  %5524 = vmatpush1.msra.mxu0 %v3879
  %5525 = vmatprep.subr.mxu0 %v3887
  %5526 = vmatpush1.msra.mxu0 %v3886
  %5527 = vmatprep.subr.mxu0 0.0
  %5528 = vmatpush1.msra.mxu0 0.0
  %5529 = vmatprep.subr.mxu0 0.0
  %5530 = vmatpush1.msra.mxu0 0.0
  %5531 = vmatprep.subr.mxu0 0.0
  %5532 = vmatpush1.msra.mxu0 0.0
  %5533 = vmatprep.subr.mxu0 0.0
  %5534 = vmatpush1.msra.mxu0 0.0
  %5535 = vmatprep.subr.mxu0 0.0
  %5536 = vmatpush1.msra.mxu0 0.0
  %5537 = vmatprep.subr.mxu0 0.0
  %5538 = vmatpush1.msra.mxu0 0.0
  %5539 = vmatprep.subr.mxu0 0.0
  %5540 = vmatpush1.msra.mxu0 0.0
  %5541 = vmatprep.subr.mxu0 0.0
  %5542 = vmatpush1.msra.mxu0 0.0
  %5543 = vmatprep.subr.mxu0 0.0
  %5544 = vmatpush1.msra.mxu0 0.0
  %5545 = vmatprep.subr.mxu0 0.0
  %5546 = vmatpush1.msra.mxu0 0.0
  %5547 = vmatprep.subr.mxu0 0.0
  %5548 = vmatpush1.msra.mxu0 0.0
  %5549 = vmatprep.subr.mxu0 0.0
  %5550 = vmatpush1.msra.mxu0 0.0
  %5551 = vmatprep.subr.mxu0 0.0
  %5552 = vmatpush1.msra.mxu0 0.0
  %5553 = vmatprep.subr.mxu0 0.0
  %5554 = vmatpush1.msra.mxu0 0.0
  %5555 = vmatprep.subr.mxu0 0.0
  %5556 = vmatpush1.msra.mxu0 0.0
  %5557 = vmatprep.subr.mxu0 0.0
  %5558 = vmatpush1.msra.mxu0 0.0
  %5559 = vmatprep.subr.mxu0 0.0
  %5560 = vmatpush1.msra.mxu0 0.0
  %5561 = vmatprep.subr.mxu0 0.0
  %5562 = vmatpush1.msra.mxu0 0.0
  %5563 = vmatprep.subr.mxu0 0.0
  %5564 = vmatpush1.msra.mxu0 0.0
  %5565 = vmatprep.subr.mxu0 0.0
  %5566 = vmatpush1.msra.mxu0 0.0
  %5567 = vmatprep.subr.mxu0 0.0
  %5568 = vmatpush1.msra.mxu0 0.0
  %5569 = vmatprep.subr.mxu0 0.0
  %5570 = vmatpush1.msra.mxu0 0.0
  %5571 = vmatprep.subr.mxu0 0.0
  %5572 = vmatpush1.msra.mxu0 0.0
  %5573 = vmatprep.subr.mxu0 0.0
  %5574 = vmatpush1.msra.mxu0 0.0
  %5575 = vmatprep.subr.mxu0 0.0
  %5576 = vmatpush1.msra.mxu0 0.0
  %5577 = vmatprep.subr.mxu0 0.0
  %5578 = vmatpush1.msra.mxu0 0.0
  %5579 = vmatprep.subr.mxu0 0.0
  %5580 = vmatpush1.msra.mxu0 0.0
  %5581 = vmatprep.subr.mxu0 0.0
  %5582 = vmatpush1.msra.mxu0 0.0
  %5583 = vmatprep.mubr.f32.mxu0 0.0
  %5584 = vmatmul.mubr.f32.gmra.mrb[0].mxu0 %v5446
  %v5585 = vpop.f32.mrb[0].mxu0
  %v5586 = vadd.f32 0.0, %v5585
  %v5587 = vpop.f32.mrb[0].mxu0
  %v5588 = vadd.f32 0.0, %v5587
  %5589 = vdwg.mxu0
  %5590 = vmatprep.subr.mxu0 %v3868
  %5591 = vmatpush1.msra.mxu0 %v3867
  %5592 = vmatprep.subr.mxu0 %v3875
  %5593 = vmatpush1.msra.mxu0 %v3874
  %5594 = vmatprep.subr.mxu0 %v3882
  %5595 = vmatpush1.msra.mxu0 %v3881
  %5596 = vmatprep.subr.mxu0 %v3889
  %5597 = vmatpush1.msra.mxu0 %v3888
  %5598 = vmatprep.subr.mxu0 0.0
  %5599 = vmatpush1.msra.mxu0 0.0
  %5600 = vmatprep.subr.mxu0 0.0
  %5601 = vmatpush1.msra.mxu0 0.0
  %5602 = vmatprep.subr.mxu0 0.0
  %5603 = vmatpush1.msra.mxu0 0.0
  %5604 = vmatprep.subr.mxu0 0.0
  %5605 = vmatpush1.msra.mxu0 0.0
  %5606 = vmatprep.subr.mxu0 0.0
  %5607 = vmatpush1.msra.mxu0 0.0
  %5608 = vmatprep.subr.mxu0 0.0
  %5609 = vmatpush1.msra.mxu0 0.0
  %5610 = vmatprep.subr.mxu0 0.0
  %5611 = vmatpush1.msra.mxu0 0.0
  %5612 = vmatprep.subr.mxu0 0.0
  %5613 = vmatpush1.msra.mxu0 0.0
  %5614 = vmatprep.subr.mxu0 0.0
  %5615 = vmatpush1.msra.mxu0 0.0
  %5616 = vmatprep.subr.mxu0 0.0
  %5617 = vmatpush1.msra.mxu0 0.0
  %5618 = vmatprep.subr.mxu0 0.0
  %5619 = vmatpush1.msra.mxu0 0.0
  %5620 = vmatprep.subr.mxu0 0.0
  %5621 = vmatpush1.msra.mxu0 0.0
  %5622 = vmatprep.subr.mxu0 0.0
  %5623 = vmatpush1.msra.mxu0 0.0
  %5624 = vmatprep.subr.mxu0 0.0
  %5625 = vmatpush1.msra.mxu0 0.0
  %5626 = vmatprep.subr.mxu0 0.0
  %5627 = vmatpush1.msra.mxu0 0.0
  %5628 = vmatprep.subr.mxu0 0.0
  %5629 = vmatpush1.msra.mxu0 0.0
  %5630 = vmatprep.subr.mxu0 0.0
  %5631 = vmatpush1.msra.mxu0 0.0
  %5632 = vmatprep.subr.mxu0 0.0
  %5633 = vmatpush1.msra.mxu0 0.0
  %5634 = vmatprep.subr.mxu0 0.0
  %5635 = vmatpush1.msra.mxu0 0.0
  %5636 = vmatprep.subr.mxu0 0.0
  %5637 = vmatpush1.msra.mxu0 0.0
  %5638 = vmatprep.subr.mxu0 0.0
  %5639 = vmatpush1.msra.mxu0 0.0
  %5640 = vmatprep.subr.mxu0 0.0
  %5641 = vmatpush1.msra.mxu0 0.0
  %5642 = vmatprep.subr.mxu0 0.0
  %5643 = vmatpush1.msra.mxu0 0.0
  %5644 = vmatprep.subr.mxu0 0.0
  %5645 = vmatpush1.msra.mxu0 0.0
  %5646 = vmatprep.subr.mxu0 0.0
  %5647 = vmatpush1.msra.mxu0 0.0
  %5648 = vmatprep.subr.mxu0 0.0
  %5649 = vmatpush1.msra.mxu0 0.0
  %5650 = vmatprep.subr.mxu0 0.0
  %5651 = vmatpush1.msra.mxu0 0.0
  %5652 = vmatprep.subr.mxu0 0.0
  %5653 = vmatpush1.msra.mxu0 0.0
  %5654 = vmatprep.mubr.f32.mxu0 0.0
  %5655 = vmatmul.mubr.f32.gmra.mrb[0].mxu0 %v5446
  %v5656 = vpop.f32.mrb[0].mxu0
  %v5657 = vadd.f32 0.0, %v5656
  %v5658 = vpop.f32.mrb[0].mxu0
  %v5659 = vadd.f32 0.0, %v5658
  %5660 = vdwg.mxu0
  %5661 = vmatprep.subr.mxu0 0.0
  %5662 = vmatpush1.msra.mxu0 %v3869
  %5663 = vmatprep.subr.mxu0 0.0
  %5664 = vmatpush1.msra.mxu0 %v3876
  %5665 = vmatprep.subr.mxu0 0.0
  %5666 = vmatpush1.msra.mxu0 %v3883
  %5667 = vmatprep.subr.mxu0 0.0
  %5668 = vmatpush1.msra.mxu0 %v3890
  %5669 = vmatprep.subr.mxu0 0.0
  %5670 = vmatpush1.msra.mxu0 0.0
  %5671 = vmatprep.subr.mxu0 0.0
  %5672 = vmatpush1.msra.mxu0 0.0
  %5673 = vmatprep.subr.mxu0 0.0
  %5674 = vmatpush1.msra.mxu0 0.0
  %5675 = vmatprep.subr.mxu0 0.0
  %5676 = vmatpush1.msra.mxu0 0.0
  %5677 = vmatprep.subr.mxu0 0.0
  %5678 = vmatpush1.msra.mxu0 0.0
  %5679 = vmatprep.subr.mxu0 0.0
  %5680 = vmatpush1.msra.mxu0 0.0
  %5681 = vmatprep.subr.mxu0 0.0
  %5682 = vmatpush1.msra.mxu0 0.0
  %5683 = vmatprep.subr.mxu0 0.0
  %5684 = vmatpush1.msra.mxu0 0.0
  %5685 = vmatprep.subr.mxu0 0.0
  %5686 = vmatpush1.msra.mxu0 0.0
  %5687 = vmatprep.subr.mxu0 0.0
  %5688 = vmatpush1.msra.mxu0 0.0
  %5689 = vmatprep.subr.mxu0 0.0
  %5690 = vmatpush1.msra.mxu0 0.0
  %5691 = vmatprep.subr.mxu0 0.0
  %5692 = vmatpush1.msra.mxu0 0.0
  %5693 = vmatprep.subr.mxu0 0.0
  %5694 = vmatpush1.msra.mxu0 0.0
  %5695 = vmatprep.subr.mxu0 0.0
  %5696 = vmatpush1.msra.mxu0 0.0
  %5697 = vmatprep.subr.mxu0 0.0
  %5698 = vmatpush1.msra.mxu0 0.0
  %5699 = vmatprep.subr.mxu0 0.0
  %5700 = vmatpush1.msra.mxu0 0.0
  %5701 = vmatprep.subr.mxu0 0.0
  %5702 = vmatpush1.msra.mxu0 0.0
  %5703 = vmatprep.subr.mxu0 0.0
  %5704 = vmatpush1.msra.mxu0 0.0
  %5705 = vmatprep.subr.mxu0 0.0
  %5706 = vmatpush1.msra.mxu0 0.0
  %5707 = vmatprep.subr.mxu0 0.0
  %5708 = vmatpush1.msra.mxu0 0.0
  %5709 = vmatprep.subr.mxu0 0.0
  %5710 = vmatpush1.msra.mxu0 0.0
  %5711 = vmatprep.subr.mxu0 0.0
  %5712 = vmatpush1.msra.mxu0 0.0
  %5713 = vmatprep.subr.mxu0 0.0
  %5714 = vmatpush1.msra.mxu0 0.0
  %5715 = vmatprep.subr.mxu0 0.0
  %5716 = vmatpush1.msra.mxu0 0.0
  %5717 = vmatprep.subr.mxu0 0.0
  %5718 = vmatpush1.msra.mxu0 0.0
  %5719 = vmatprep.subr.mxu0 0.0
  %5720 = vmatpush1.msra.mxu0 0.0
  %5721 = vmatprep.subr.mxu0 0.0
  %5722 = vmatpush1.msra.mxu0 0.0
  %5723 = vmatprep.subr.mxu0 0.0
  %5724 = vmatpush1.msra.mxu0 0.0
  %5725 = vmatprep.mubr.f32.mxu0 0.0
  %5726 = vmatmul.mubr.f32.gmra.mrb[0].mxu0 %v5446
  %v5727 = vpop.f32.mrb[0].mxu0
  %v5728 = vadd.f32 0.0, %v5727
  %v5729 = vpop.f32.mrb[0].mxu0
  %5730 = vdwg.mxu0
  %5731 = vrot.lane.b32.xlu0 %v5515, 127
  %v5732 = vpop.permute.xlu0 %5731
  %5733 = vrot.lane.b32.xlu0 %v5517, 127
  %v5734 = vpop.permute.xlu0 %5733
  %5735 = vrot.lane.b32.xlu0 %v5586, 127
  %v5736 = vpop.permute.xlu0 %5735
  %5737 = vrot.lane.b32.xlu0 %v5588, 127
  %v5738 = vpop.permute.xlu0 %5737
  %5739 = vrot.lane.b32.xlu0 %v5657, 127
  %v5740 = vpop.permute.xlu0 %5739
  %5741 = vrot.lane.b32.xlu0 %v5659, 127
  %v5742 = vpop.permute.xlu0 %5741
  %5743 = vrot.lane.b32.xlu0 %v5728, 127
  %v5744 = vpop.permute.xlu0 %5743
  %v5745 = vsel %vm2075, %v5742, %v5744
  %v5746 = vsel %vm2075, %v5740, %v5742
  %v5747 = vsel %vm2075, %v5738, %v5740
  %v5748 = vsel %vm2075, %v5736, %v5738
  %v5749 = vsel %vm2075, %v5734, %v5736
  %v5750 = vsel %vm2075, %v5732, %v5734
  %v5751 = vsel %vm2075, %v5744, %v5732
  %v5752 = vadd.f32 %v5436, %v5750
  %v5753 = vadd.f32 %v5437, %v5749
  %v5754 = vadd.f32 %v5438, %v5748
  %v5755 = vadd.f32 %v5439, %v5747
  %v5756 = vadd.f32 %v5440, %v5746
  %v5757 = vadd.f32 %v5441, %v5745
  %v5758 = vadd.f32 %v5442, %v5751
  %s5759 = scalar_lea.vmem %s3, 48
  %v5760 = vld [vmem:[%s5759] sm:$0xff]
  %v5762 = vsel %vm3892, %v5760, 0
  %5764 = vmatprep.subr.mxu0 %v3864
  %5765 = vmatpush1.msra.mxu0 %v3863
  %5766 = vmatprep.subr.mxu0 %v3871
  %5767 = vmatpush1.msra.mxu0 %v3870
  %5768 = vmatprep.subr.mxu0 %v3878
  %5769 = vmatpush1.msra.mxu0 %v3877
  %5770 = vmatprep.subr.mxu0 %v3885
  %5771 = vmatpush1.msra.mxu0 %v3884
  %5772 = vmatprep.subr.mxu0 0.0
  %5773 = vmatpush1.msra.mxu0 0.0
  %5774 = vmatprep.subr.mxu0 0.0
  %5775 = vmatpush1.msra.mxu0 0.0
  %5776 = vmatprep.subr.mxu0 0.0
  %5777 = vmatpush1.msra.mxu0 0.0
  %5778 = vmatprep.subr.mxu0 0.0
  %5779 = vmatpush1.msra.mxu0 0.0
  %5780 = vmatprep.subr.mxu0 0.0
  %5781 = vmatpush1.msra.mxu0 0.0
  %5782 = vmatprep.subr.mxu0 0.0
  %5783 = vmatpush1.msra.mxu0 0.0
  %5784 = vmatprep.subr.mxu0 0.0
  %5785 = vmatpush1.msra.mxu0 0.0
  %5786 = vmatprep.subr.mxu0 0.0
  %5787 = vmatpush1.msra.mxu0 0.0
  %5788 = vmatprep.subr.mxu0 0.0
  %5789 = vmatpush1.msra.mxu0 0.0
  %5790 = vmatprep.subr.mxu0 0.0
  %5791 = vmatpush1.msra.mxu0 0.0
  %5792 = vmatprep.subr.mxu0 0.0
  %5793 = vmatpush1.msra.mxu0 0.0
  %5794 = vmatprep.subr.mxu0 0.0
  %5795 = vmatpush1.msra.mxu0 0.0
  %5796 = vmatprep.subr.mxu0 0.0
  %5797 = vmatpush1.msra.mxu0 0.0
  %5798 = vmatprep.subr.mxu0 0.0
  %5799 = vmatpush1.msra.mxu0 0.0
  %5800 = vmatprep.subr.mxu0 0.0
  %5801 = vmatpush1.msra.mxu0 0.0
  %5802 = vmatprep.subr.mxu0 0.0
  %5803 = vmatpush1.msra.mxu0 0.0
  %5804 = vmatprep.subr.mxu0 0.0
  %5805 = vmatpush1.msra.mxu0 0.0
  %5806 = vmatprep.subr.mxu0 0.0
  %5807 = vmatpush1.msra.mxu0 0.0
  %5808 = vmatprep.subr.mxu0 0.0
  %5809 = vmatpush1.msra.mxu0 0.0
  %5810 = vmatprep.subr.mxu0 0.0
  %5811 = vmatpush1.msra.mxu0 0.0
  %5812 = vmatprep.subr.mxu0 0.0
  %5813 = vmatpush1.msra.mxu0 0.0
  %5814 = vmatprep.subr.mxu0 0.0
  %5815 = vmatpush1.msra.mxu0 0.0
  %5816 = vmatprep.subr.mxu0 0.0
  %5817 = vmatpush1.msra.mxu0 0.0
  %5818 = vmatprep.subr.mxu0 0.0
  %5819 = vmatpush1.msra.mxu0 0.0
  %5820 = vmatprep.subr.mxu0 0.0
  %5821 = vmatpush1.msra.mxu0 0.0
  %5822 = vmatprep.subr.mxu0 0.0
  %5823 = vmatpush1.msra.mxu0 0.0
  %5824 = vmatprep.subr.mxu0 0.0
  %5825 = vmatpush1.msra.mxu0 0.0
  %5826 = vmatprep.subr.mxu0 0.0
  %5827 = vmatpush1.msra.mxu0 0.0
  %5828 = vmatprep.mubr.f32.mxu0 0.0
  %5829 = vmatmul.mubr.f32.gmra.mrb[0].mxu0 %v5762
  %v5830 = vpop.f32.mrb[0].mxu0
  %v5831 = vadd.f32 0.0, %v5830
  %v5832 = vpop.f32.mrb[0].mxu0
  %v5833 = vadd.f32 0.0, %v5832
  %5834 = vdwg.mxu0
  %5835 = vmatprep.subr.mxu0 %v3866
  %5836 = vmatpush1.msra.mxu0 %v3865
  %5837 = vmatprep.subr.mxu0 %v3873
  %5838 = vmatpush1.msra.mxu0 %v3872
  %5839 = vmatprep.subr.mxu0 %v3880
  %5840 = vmatpush1.msra.mxu0 %v3879
  %5841 = vmatprep.subr.mxu0 %v3887
  %5842 = vmatpush1.msra.mxu0 %v3886
  %5843 = vmatprep.subr.mxu0 0.0
  %5844 = vmatpush1.msra.mxu0 0.0
  %5845 = vmatprep.subr.mxu0 0.0
  %5846 = vmatpush1.msra.mxu0 0.0
  %5847 = vmatprep.subr.mxu0 0.0
  %5848 = vmatpush1.msra.mxu0 0.0
  %5849 = vmatprep.subr.mxu0 0.0
  %5850 = vmatpush1.msra.mxu0 0.0
  %5851 = vmatprep.subr.mxu0 0.0
  %5852 = vmatpush1.msra.mxu0 0.0
  %5853 = vmatprep.subr.mxu0 0.0
  %5854 = vmatpush1.msra.mxu0 0.0
  %5855 = vmatprep.subr.mxu0 0.0
  %5856 = vmatpush1.msra.mxu0 0.0
  %5857 = vmatprep.subr.mxu0 0.0
  %5858 = vmatpush1.msra.mxu0 0.0
  %5859 = vmatprep.subr.mxu0 0.0
  %5860 = vmatpush1.msra.mxu0 0.0
  %5861 = vmatprep.subr.mxu0 0.0
  %5862 = vmatpush1.msra.mxu0 0.0
  %5863 = vmatprep.subr.mxu0 0.0
  %5864 = vmatpush1.msra.mxu0 0.0
  %5865 = vmatprep.subr.mxu0 0.0
  %5866 = vmatpush1.msra.mxu0 0.0
  %5867 = vmatprep.subr.mxu0 0.0
  %5868 = vmatpush1.msra.mxu0 0.0
  %5869 = vmatprep.subr.mxu0 0.0
  %5870 = vmatpush1.msra.mxu0 0.0
  %5871 = vmatprep.subr.mxu0 0.0
  %5872 = vmatpush1.msra.mxu0 0.0
  %5873 = vmatprep.subr.mxu0 0.0
  %5874 = vmatpush1.msra.mxu0 0.0
  %5875 = vmatprep.subr.mxu0 0.0
  %5876 = vmatpush1.msra.mxu0 0.0
  %5877 = vmatprep.subr.mxu0 0.0
  %5878 = vmatpush1.msra.mxu0 0.0
  %5879 = vmatprep.subr.mxu0 0.0
  %5880 = vmatpush1.msra.mxu0 0.0
  %5881 = vmatprep.subr.mxu0 0.0
  %5882 = vmatpush1.msra.mxu0 0.0
  %5883 = vmatprep.subr.mxu0 0.0
  %5884 = vmatpush1.msra.mxu0 0.0
  %5885 = vmatprep.subr.mxu0 0.0
  %5886 = vmatpush1.msra.mxu0 0.0
  %5887 = vmatprep.subr.mxu0 0.0
  %5888 = vmatpush1.msra.mxu0 0.0
  %5889 = vmatprep.subr.mxu0 0.0
  %5890 = vmatpush1.msra.mxu0 0.0
  %5891 = vmatprep.subr.mxu0 0.0
  %5892 = vmatpush1.msra.mxu0 0.0
  %5893 = vmatprep.subr.mxu0 0.0
  %5894 = vmatpush1.msra.mxu0 0.0
  %5895 = vmatprep.subr.mxu0 0.0
  %5896 = vmatpush1.msra.mxu0 0.0
  %5897 = vmatprep.subr.mxu0 0.0
  %5898 = vmatpush1.msra.mxu0 0.0
  %5899 = vmatprep.mubr.f32.mxu0 0.0
  %5900 = vmatmul.mubr.f32.gmra.mrb[0].mxu0 %v5762
  %v5901 = vpop.f32.mrb[0].mxu0
  %v5902 = vadd.f32 0.0, %v5901
  %v5903 = vpop.f32.mrb[0].mxu0
  %v5904 = vadd.f32 0.0, %v5903
  %5905 = vdwg.mxu0
  %5906 = vmatprep.subr.mxu0 %v3868
  %5907 = vmatpush1.msra.mxu0 %v3867
  %5908 = vmatprep.subr.mxu0 %v3875
  %5909 = vmatpush1.msra.mxu0 %v3874
  %5910 = vmatprep.subr.mxu0 %v3882
  %5911 = vmatpush1.msra.mxu0 %v3881
  %5912 = vmatprep.subr.mxu0 %v3889
  %5913 = vmatpush1.msra.mxu0 %v3888
  %5914 = vmatprep.subr.mxu0 0.0
  %5915 = vmatpush1.msra.mxu0 0.0
  %5916 = vmatprep.subr.mxu0 0.0
  %5917 = vmatpush1.msra.mxu0 0.0
  %5918 = vmatprep.subr.mxu0 0.0
  %5919 = vmatpush1.msra.mxu0 0.0
  %5920 = vmatprep.subr.mxu0 0.0
  %5921 = vmatpush1.msra.mxu0 0.0
  %5922 = vmatprep.subr.mxu0 0.0
  %5923 = vmatpush1.msra.mxu0 0.0
  %5924 = vmatprep.subr.mxu0 0.0
  %5925 = vmatpush1.msra.mxu0 0.0
  %5926 = vmatprep.subr.mxu0 0.0
  %5927 = vmatpush1.msra.mxu0 0.0
  %5928 = vmatprep.subr.mxu0 0.0
  %5929 = vmatpush1.msra.mxu0 0.0
  %5930 = vmatprep.subr.mxu0 0.0
  %5931 = vmatpush1.msra.mxu0 0.0
  %5932 = vmatprep.subr.mxu0 0.0
  %5933 = vmatpush1.msra.mxu0 0.0
  %5934 = vmatprep.subr.mxu0 0.0
  %5935 = vmatpush1.msra.mxu0 0.0
  %5936 = vmatprep.subr.mxu0 0.0
  %5937 = vmatpush1.msra.mxu0 0.0
  %5938 = vmatprep.subr.mxu0 0.0
  %5939 = vmatpush1.msra.mxu0 0.0
  %5940 = vmatprep.subr.mxu0 0.0
  %5941 = vmatpush1.msra.mxu0 0.0
  %5942 = vmatprep.subr.mxu0 0.0
  %5943 = vmatpush1.msra.mxu0 0.0
  %5944 = vmatprep.subr.mxu0 0.0
  %5945 = vmatpush1.msra.mxu0 0.0
  %5946 = vmatprep.subr.mxu0 0.0
  %5947 = vmatpush1.msra.mxu0 0.0
  %5948 = vmatprep.subr.mxu0 0.0
  %5949 = vmatpush1.msra.mxu0 0.0
  %5950 = vmatprep.subr.mxu0 0.0
  %5951 = vmatpush1.msra.mxu0 0.0
  %5952 = vmatprep.subr.mxu0 0.0
  %5953 = vmatpush1.msra.mxu0 0.0
  %5954 = vmatprep.subr.mxu0 0.0
  %5955 = vmatpush1.msra.mxu0 0.0
  %5956 = vmatprep.subr.mxu0 0.0
  %5957 = vmatpush1.msra.mxu0 0.0
  %5958 = vmatprep.subr.mxu0 0.0
  %5959 = vmatpush1.msra.mxu0 0.0
  %5960 = vmatprep.subr.mxu0 0.0
  %5961 = vmatpush1.msra.mxu0 0.0
  %5962 = vmatprep.subr.mxu0 0.0
  %5963 = vmatpush1.msra.mxu0 0.0
  %5964 = vmatprep.subr.mxu0 0.0
  %5965 = vmatpush1.msra.mxu0 0.0
  %5966 = vmatprep.subr.mxu0 0.0
  %5967 = vmatpush1.msra.mxu0 0.0
  %5968 = vmatprep.subr.mxu0 0.0
  %5969 = vmatpush1.msra.mxu0 0.0
  %5970 = vmatprep.mubr.f32.mxu0 0.0
  %5971 = vmatmul.mubr.f32.gmra.mrb[0].mxu0 %v5762
  %v5972 = vpop.f32.mrb[0].mxu0
  %v5973 = vadd.f32 0.0, %v5972
  %v5974 = vpop.f32.mrb[0].mxu0
  %v5975 = vadd.f32 0.0, %v5974
  %5976 = vdwg.mxu0
  %5977 = vmatprep.subr.mxu0 0.0
  %5978 = vmatpush1.msra.mxu0 %v3869
  %5979 = vmatprep.subr.mxu0 0.0
  %5980 = vmatpush1.msra.mxu0 %v3876
  %5981 = vmatprep.subr.mxu0 0.0
  %5982 = vmatpush1.msra.mxu0 %v3883
  %5983 = vmatprep.subr.mxu0 0.0
  %5984 = vmatpush1.msra.mxu0 %v3890
  %5985 = vmatprep.subr.mxu0 0.0
  %5986 = vmatpush1.msra.mxu0 0.0
  %5987 = vmatprep.subr.mxu0 0.0
  %5988 = vmatpush1.msra.mxu0 0.0
  %5989 = vmatprep.subr.mxu0 0.0
  %5990 = vmatpush1.msra.mxu0 0.0
  %5991 = vmatprep.subr.mxu0 0.0
  %5992 = vmatpush1.msra.mxu0 0.0
  %5993 = vmatprep.subr.mxu0 0.0
  %5994 = vmatpush1.msra.mxu0 0.0
  %5995 = vmatprep.subr.mxu0 0.0
  %5996 = vmatpush1.msra.mxu0 0.0
  %5997 = vmatprep.subr.mxu0 0.0
  %5998 = vmatpush1.msra.mxu0 0.0
  %5999 = vmatprep.subr.mxu0 0.0
  %6000 = vmatpush1.msra.mxu0 0.0
  %6001 = vmatprep.subr.mxu0 0.0
  %6002 = vmatpush1.msra.mxu0 0.0
  %6003 = vmatprep.subr.mxu0 0.0
  %6004 = vmatpush1.msra.mxu0 0.0
  %6005 = vmatprep.subr.mxu0 0.0
  %6006 = vmatpush1.msra.mxu0 0.0
  %6007 = vmatprep.subr.mxu0 0.0
  %6008 = vmatpush1.msra.mxu0 0.0
  %6009 = vmatprep.subr.mxu0 0.0
  %6010 = vmatpush1.msra.mxu0 0.0
  %6011 = vmatprep.subr.mxu0 0.0
  %6012 = vmatpush1.msra.mxu0 0.0
  %6013 = vmatprep.subr.mxu0 0.0
  %6014 = vmatpush1.msra.mxu0 0.0
  %6015 = vmatprep.subr.mxu0 0.0
  %6016 = vmatpush1.msra.mxu0 0.0
  %6017 = vmatprep.subr.mxu0 0.0
  %6018 = vmatpush1.msra.mxu0 0.0
  %6019 = vmatprep.subr.mxu0 0.0
  %6020 = vmatpush1.msra.mxu0 0.0
  %6021 = vmatprep.subr.mxu0 0.0
  %6022 = vmatpush1.msra.mxu0 0.0
  %6023 = vmatprep.subr.mxu0 0.0
  %6024 = vmatpush1.msra.mxu0 0.0
  %6025 = vmatprep.subr.mxu0 0.0
  %6026 = vmatpush1.msra.mxu0 0.0
  %6027 = vmatprep.subr.mxu0 0.0
  %6028 = vmatpush1.msra.mxu0 0.0
  %6029 = vmatprep.subr.mxu0 0.0
  %6030 = vmatpush1.msra.mxu0 0.0
  %6031 = vmatprep.subr.mxu0 0.0
  %6032 = vmatpush1.msra.mxu0 0.0
  %6033 = vmatprep.subr.mxu0 0.0
  %6034 = vmatpush1.msra.mxu0 0.0
  %6035 = vmatprep.subr.mxu0 0.0
  %6036 = vmatpush1.msra.mxu0 0.0
  %6037 = vmatprep.subr.mxu0 0.0
  %6038 = vmatpush1.msra.mxu0 0.0
  %6039 = vmatprep.subr.mxu0 0.0
  %6040 = vmatpush1.msra.mxu0 0.0
  %6041 = vmatprep.mubr.f32.mxu0 0.0
  %6042 = vmatmul.mubr.f32.gmra.mrb[0].mxu0 %v5762
  %v6043 = vpop.f32.mrb[0].mxu0
  %v6044 = vadd.f32 0.0, %v6043
  %v6045 = vpop.f32.mrb[0].mxu0
  %6046 = vdwg.mxu0
  %6047 = vrot.lane.b32.xlu0 %v5831, 109
  %v6048 = vpop.permute.xlu0 %6047
  %6049 = vrot.lane.b32.xlu0 %v5833, 109
  %v6050 = vpop.permute.xlu0 %6049
  %6051 = vrot.lane.b32.xlu0 %v5902, 109
  %v6052 = vpop.permute.xlu0 %6051
  %6053 = vrot.lane.b32.xlu0 %v5904, 109
  %v6054 = vpop.permute.xlu0 %6053
  %6055 = vrot.lane.b32.xlu0 %v5973, 109
  %v6056 = vpop.permute.xlu0 %6055
  %6057 = vrot.lane.b32.xlu0 %v5975, 109
  %v6058 = vpop.permute.xlu0 %6057
  %6059 = vrot.lane.b32.xlu0 %v6044, 109
  %v6060 = vpop.permute.xlu0 %6059
  %v6061 = vsel %vm2501, %v6058, %v6060
  %v6062 = vsel %vm2501, %v6056, %v6058
  %v6063 = vsel %vm2501, %v6054, %v6056
  %v6064 = vsel %vm2501, %v6052, %v6054
  %v6065 = vsel %vm2501, %v6050, %v6052
  %v6066 = vsel %vm2501, %v6048, %v6050
  %v6067 = vsel %vm2501, %v6060, %v6048
  %v6068 = vadd.f32 %v5752, %v6066
  %v6069 = vadd.f32 %v5753, %v6065
  %v6070 = vadd.f32 %v5754, %v6064
  %v6071 = vadd.f32 %v5755, %v6063
  %v6072 = vadd.f32 %v5756, %v6062
  %v6073 = vadd.f32 %v5757, %v6061
  %v6074 = vadd.f32 %v5758, %v6067
  %s6075 = scalar_lea.vmem %s3, 56
  %v6076 = vld [vmem:[%s6075] sm:$0xff]
  %v6078 = vsel %vm3892, %v6076, 0
  %6080 = vmatprep.subr.mxu0 %v3864
  %6081 = vmatpush1.msra.mxu0 %v3863
  %6082 = vmatprep.subr.mxu0 %v3871
  %6083 = vmatpush1.msra.mxu0 %v3870
  %6084 = vmatprep.subr.mxu0 %v3878
  %6085 = vmatpush1.msra.mxu0 %v3877
  %6086 = vmatprep.subr.mxu0 %v3885
  %6087 = vmatpush1.msra.mxu0 %v3884
  %6088 = vmatprep.subr.mxu0 0.0
  %6089 = vmatpush1.msra.mxu0 0.0
  %6090 = vmatprep.subr.mxu0 0.0
  %6091 = vmatpush1.msra.mxu0 0.0
  %6092 = vmatprep.subr.mxu0 0.0
  %6093 = vmatpush1.msra.mxu0 0.0
  %6094 = vmatprep.subr.mxu0 0.0
  %6095 = vmatpush1.msra.mxu0 0.0
  %6096 = vmatprep.subr.mxu0 0.0
  %6097 = vmatpush1.msra.mxu0 0.0
  %6098 = vmatprep.subr.mxu0 0.0
  %6099 = vmatpush1.msra.mxu0 0.0
  %6100 = vmatprep.subr.mxu0 0.0
  %6101 = vmatpush1.msra.mxu0 0.0
  %6102 = vmatprep.subr.mxu0 0.0
  %6103 = vmatpush1.msra.mxu0 0.0
  %6104 = vmatprep.subr.mxu0 0.0
  %6105 = vmatpush1.msra.mxu0 0.0
  %6106 = vmatprep.subr.mxu0 0.0
  %6107 = vmatpush1.msra.mxu0 0.0
  %6108 = vmatprep.subr.mxu0 0.0
  %6109 = vmatpush1.msra.mxu0 0.0
  %6110 = vmatprep.subr.mxu0 0.0
  %6111 = vmatpush1.msra.mxu0 0.0
  %6112 = vmatprep.subr.mxu0 0.0
  %6113 = vmatpush1.msra.mxu0 0.0
  %6114 = vmatprep.subr.mxu0 0.0
  %6115 = vmatpush1.msra.mxu0 0.0
  %6116 = vmatprep.subr.mxu0 0.0
  %6117 = vmatpush1.msra.mxu0 0.0
  %6118 = vmatprep.subr.mxu0 0.0
  %6119 = vmatpush1.msra.mxu0 0.0
  %6120 = vmatprep.subr.mxu0 0.0
  %6121 = vmatpush1.msra.mxu0 0.0
  %6122 = vmatprep.subr.mxu0 0.0
  %6123 = vmatpush1.msra.mxu0 0.0
  %6124 = vmatprep.subr.mxu0 0.0
  %6125 = vmatpush1.msra.mxu0 0.0
  %6126 = vmatprep.subr.mxu0 0.0
  %6127 = vmatpush1.msra.mxu0 0.0
  %6128 = vmatprep.subr.mxu0 0.0
  %6129 = vmatpush1.msra.mxu0 0.0
  %6130 = vmatprep.subr.mxu0 0.0
  %6131 = vmatpush1.msra.mxu0 0.0
  %6132 = vmatprep.subr.mxu0 0.0
  %6133 = vmatpush1.msra.mxu0 0.0
  %6134 = vmatprep.subr.mxu0 0.0
  %6135 = vmatpush1.msra.mxu0 0.0
  %6136 = vmatprep.subr.mxu0 0.0
  %6137 = vmatpush1.msra.mxu0 0.0
  %6138 = vmatprep.subr.mxu0 0.0
  %6139 = vmatpush1.msra.mxu0 0.0
  %6140 = vmatprep.subr.mxu0 0.0
  %6141 = vmatpush1.msra.mxu0 0.0
  %6142 = vmatprep.subr.mxu0 0.0
  %6143 = vmatpush1.msra.mxu0 0.0
  %6144 = vmatprep.mubr.f32.mxu0 0.0
  %6145 = vmatmul.mubr.f32.gmra.mrb[0].mxu0 %v6078
  %v6146 = vpop.f32.mrb[0].mxu0
  %v6147 = vadd.f32 0.0, %v6146
  %v6148 = vpop.f32.mrb[0].mxu0
  %v6149 = vadd.f32 0.0, %v6148
  %6150 = vdwg.mxu0
  %6151 = vmatprep.subr.mxu0 %v3866
  %6152 = vmatpush1.msra.mxu0 %v3865
  %6153 = vmatprep.subr.mxu0 %v3873
  %6154 = vmatpush1.msra.mxu0 %v3872
  %6155 = vmatprep.subr.mxu0 %v3880
  %6156 = vmatpush1.msra.mxu0 %v3879
  %6157 = vmatprep.subr.mxu0 %v3887
  %6158 = vmatpush1.msra.mxu0 %v3886
  %6159 = vmatprep.subr.mxu0 0.0
  %6160 = vmatpush1.msra.mxu0 0.0
  %6161 = vmatprep.subr.mxu0 0.0
  %6162 = vmatpush1.msra.mxu0 0.0
  %6163 = vmatprep.subr.mxu0 0.0
  %6164 = vmatpush1.msra.mxu0 0.0
  %6165 = vmatprep.subr.mxu0 0.0
  %6166 = vmatpush1.msra.mxu0 0.0
  %6167 = vmatprep.subr.mxu0 0.0
  %6168 = vmatpush1.msra.mxu0 0.0
  %6169 = vmatprep.subr.mxu0 0.0
  %6170 = vmatpush1.msra.mxu0 0.0
  %6171 = vmatprep.subr.mxu0 0.0
  %6172 = vmatpush1.msra.mxu0 0.0
  %6173 = vmatprep.subr.mxu0 0.0
  %6174 = vmatpush1.msra.mxu0 0.0
  %6175 = vmatprep.subr.mxu0 0.0
  %6176 = vmatpush1.msra.mxu0 0.0
  %6177 = vmatprep.subr.mxu0 0.0
  %6178 = vmatpush1.msra.mxu0 0.0
  %6179 = vmatprep.subr.mxu0 0.0
  %6180 = vmatpush1.msra.mxu0 0.0
  %6181 = vmatprep.subr.mxu0 0.0
  %6182 = vmatpush1.msra.mxu0 0.0
  %6183 = vmatprep.subr.mxu0 0.0
  %6184 = vmatpush1.msra.mxu0 0.0
  %6185 = vmatprep.subr.mxu0 0.0
  %6186 = vmatpush1.msra.mxu0 0.0
  %6187 = vmatprep.subr.mxu0 0.0
  %6188 = vmatpush1.msra.mxu0 0.0
  %6189 = vmatprep.subr.mxu0 0.0
  %6190 = vmatpush1.msra.mxu0 0.0
  %6191 = vmatprep.subr.mxu0 0.0
  %6192 = vmatpush1.msra.mxu0 0.0
  %6193 = vmatprep.subr.mxu0 0.0
  %6194 = vmatpush1.msra.mxu0 0.0
  %6195 = vmatprep.subr.mxu0 0.0
  %6196 = vmatpush1.msra.mxu0 0.0
  %6197 = vmatprep.subr.mxu0 0.0
  %6198 = vmatpush1.msra.mxu0 0.0
  %6199 = vmatprep.subr.mxu0 0.0
  %6200 = vmatpush1.msra.mxu0 0.0
  %6201 = vmatprep.subr.mxu0 0.0
  %6202 = vmatpush1.msra.mxu0 0.0
  %6203 = vmatprep.subr.mxu0 0.0
  %6204 = vmatpush1.msra.mxu0 0.0
  %6205 = vmatprep.subr.mxu0 0.0
  %6206 = vmatpush1.msra.mxu0 0.0
  %6207 = vmatprep.subr.mxu0 0.0
  %6208 = vmatpush1.msra.mxu0 0.0
  %6209 = vmatprep.subr.mxu0 0.0
  %6210 = vmatpush1.msra.mxu0 0.0
  %6211 = vmatprep.subr.mxu0 0.0
  %6212 = vmatpush1.msra.mxu0 0.0
  %6213 = vmatprep.subr.mxu0 0.0
  %6214 = vmatpush1.msra.mxu0 0.0
  %6215 = vmatprep.mubr.f32.mxu0 0.0
  %6216 = vmatmul.mubr.f32.gmra.mrb[0].mxu0 %v6078
  %v6217 = vpop.f32.mrb[0].mxu0
  %v6218 = vadd.f32 0.0, %v6217
  %v6219 = vpop.f32.mrb[0].mxu0
  %v6220 = vadd.f32 0.0, %v6219
  %6221 = vdwg.mxu0
  %6222 = vmatprep.subr.mxu0 %v3868
  %6223 = vmatpush1.msra.mxu0 %v3867
  %6224 = vmatprep.subr.mxu0 %v3875
  %6225 = vmatpush1.msra.mxu0 %v3874
  %6226 = vmatprep.subr.mxu0 %v3882
  %6227 = vmatpush1.msra.mxu0 %v3881
  %6228 = vmatprep.subr.mxu0 %v3889
  %6229 = vmatpush1.msra.mxu0 %v3888
  %6230 = vmatprep.subr.mxu0 0.0
  %6231 = vmatpush1.msra.mxu0 0.0
  %6232 = vmatprep.subr.mxu0 0.0
  %6233 = vmatpush1.msra.mxu0 0.0
  %6234 = vmatprep.subr.mxu0 0.0
  %6235 = vmatpush1.msra.mxu0 0.0
  %6236 = vmatprep.subr.mxu0 0.0
  %6237 = vmatpush1.msra.mxu0 0.0
  %6238 = vmatprep.subr.mxu0 0.0
  %6239 = vmatpush1.msra.mxu0 0.0
  %6240 = vmatprep.subr.mxu0 0.0
  %6241 = vmatpush1.msra.mxu0 0.0
  %6242 = vmatprep.subr.mxu0 0.0
  %6243 = vmatpush1.msra.mxu0 0.0
  %6244 = vmatprep.subr.mxu0 0.0
  %6245 = vmatpush1.msra.mxu0 0.0
  %6246 = vmatprep.subr.mxu0 0.0
  %6247 = vmatpush1.msra.mxu0 0.0
  %6248 = vmatprep.subr.mxu0 0.0
  %6249 = vmatpush1.msra.mxu0 0.0
  %6250 = vmatprep.subr.mxu0 0.0
  %6251 = vmatpush1.msra.mxu0 0.0
  %6252 = vmatprep.subr.mxu0 0.0
  %6253 = vmatpush1.msra.mxu0 0.0
  %6254 = vmatprep.subr.mxu0 0.0
  %6255 = vmatpush1.msra.mxu0 0.0
  %6256 = vmatprep.subr.mxu0 0.0
  %6257 = vmatpush1.msra.mxu0 0.0
  %6258 = vmatprep.subr.mxu0 0.0
  %6259 = vmatpush1.msra.mxu0 0.0
  %6260 = vmatprep.subr.mxu0 0.0
  %6261 = vmatpush1.msra.mxu0 0.0
  %6262 = vmatprep.subr.mxu0 0.0
  %6263 = vmatpush1.msra.mxu0 0.0
  %6264 = vmatprep.subr.mxu0 0.0
  %6265 = vmatpush1.msra.mxu0 0.0
  %6266 = vmatprep.subr.mxu0 0.0
  %6267 = vmatpush1.msra.mxu0 0.0
  %6268 = vmatprep.subr.mxu0 0.0
  %6269 = vmatpush1.msra.mxu0 0.0
  %6270 = vmatprep.subr.mxu0 0.0
  %6271 = vmatpush1.msra.mxu0 0.0
  %6272 = vmatprep.subr.mxu0 0.0
  %6273 = vmatpush1.msra.mxu0 0.0
  %6274 = vmatprep.subr.mxu0 0.0
  %6275 = vmatpush1.msra.mxu0 0.0
  %6276 = vmatprep.subr.mxu0 0.0
  %6277 = vmatpush1.msra.mxu0 0.0
  %6278 = vmatprep.subr.mxu0 0.0
  %6279 = vmatpush1.msra.mxu0 0.0
  %6280 = vmatprep.subr.mxu0 0.0
  %6281 = vmatpush1.msra.mxu0 0.0
  %6282 = vmatprep.subr.mxu0 0.0
  %6283 = vmatpush1.msra.mxu0 0.0
  %6284 = vmatprep.subr.mxu0 0.0
  %6285 = vmatpush1.msra.mxu0 0.0
  %6286 = vmatprep.mubr.f32.mxu0 0.0
  %6287 = vmatmul.mubr.f32.gmra.mrb[0].mxu0 %v6078
  %v6288 = vpop.f32.mrb[0].mxu0
  %v6289 = vadd.f32 0.0, %v6288
  %v6290 = vpop.f32.mrb[0].mxu0
  %v6291 = vadd.f32 0.0, %v6290
  %6292 = vdwg.mxu0
  %6293 = vmatprep.subr.mxu0 0.0
  %6294 = vmatpush1.msra.mxu0 %v3869
  %6295 = vmatprep.subr.mxu0 0.0
  %6296 = vmatpush1.msra.mxu0 %v3876
  %6297 = vmatprep.subr.mxu0 0.0
  %6298 = vmatpush1.msra.mxu0 %v3883
  %6299 = vmatprep.subr.mxu0 0.0
  %6300 = vmatpush1.msra.mxu0 %v3890
  %6301 = vmatprep.subr.mxu0 0.0
  %6302 = vmatpush1.msra.mxu0 0.0
  %6303 = vmatprep.subr.mxu0 0.0
  %6304 = vmatpush1.msra.mxu0 0.0
  %6305 = vmatprep.subr.mxu0 0.0
  %6306 = vmatpush1.msra.mxu0 0.0
  %6307 = vmatprep.subr.mxu0 0.0
  %6308 = vmatpush1.msra.mxu0 0.0
  %6309 = vmatprep.subr.mxu0 0.0
  %6310 = vmatpush1.msra.mxu0 0.0
  %6311 = vmatprep.subr.mxu0 0.0
  %6312 = vmatpush1.msra.mxu0 0.0
  %6313 = vmatprep.subr.mxu0 0.0
  %6314 = vmatpush1.msra.mxu0 0.0
  %6315 = vmatprep.subr.mxu0 0.0
  %6316 = vmatpush1.msra.mxu0 0.0
  %6317 = vmatprep.subr.mxu0 0.0
  %6318 = vmatpush1.msra.mxu0 0.0
  %6319 = vmatprep.subr.mxu0 0.0
  %6320 = vmatpush1.msra.mxu0 0.0
  %6321 = vmatprep.subr.mxu0 0.0
  %6322 = vmatpush1.msra.mxu0 0.0
  %6323 = vmatprep.subr.mxu0 0.0
  %6324 = vmatpush1.msra.mxu0 0.0
  %6325 = vmatprep.subr.mxu0 0.0
  %6326 = vmatpush1.msra.mxu0 0.0
  %6327 = vmatprep.subr.mxu0 0.0
  %6328 = vmatpush1.msra.mxu0 0.0
  %6329 = vmatprep.subr.mxu0 0.0
  %6330 = vmatpush1.msra.mxu0 0.0
  %6331 = vmatprep.subr.mxu0 0.0
  %6332 = vmatpush1.msra.mxu0 0.0
  %6333 = vmatprep.subr.mxu0 0.0
  %6334 = vmatpush1.msra.mxu0 0.0
  %6335 = vmatprep.subr.mxu0 0.0
  %6336 = vmatpush1.msra.mxu0 0.0
  %6337 = vmatprep.subr.mxu0 0.0
  %6338 = vmatpush1.msra.mxu0 0.0
  %6339 = vmatprep.subr.mxu0 0.0
  %6340 = vmatpush1.msra.mxu0 0.0
  %6341 = vmatprep.subr.mxu0 0.0
  %6342 = vmatpush1.msra.mxu0 0.0
  %6343 = vmatprep.subr.mxu0 0.0
  %6344 = vmatpush1.msra.mxu0 0.0
  %6345 = vmatprep.subr.mxu0 0.0
  %6346 = vmatpush1.msra.mxu0 0.0
  %6347 = vmatprep.subr.mxu0 0.0
  %6348 = vmatpush1.msra.mxu0 0.0
  %6349 = vmatprep.subr.mxu0 0.0
  %6350 = vmatpush1.msra.mxu0 0.0
  %6351 = vmatprep.subr.mxu0 0.0
  %6352 = vmatpush1.msra.mxu0 0.0
  %6353 = vmatprep.subr.mxu0 0.0
  %6354 = vmatpush1.msra.mxu0 0.0
  %6355 = vmatprep.subr.mxu0 0.0
  %6356 = vmatpush1.msra.mxu0 0.0
  %6357 = vmatprep.mubr.f32.mxu0 0.0
  %6358 = vmatmul.mubr.f32.gmra.mrb[0].mxu0 %v6078
  %v6359 = vpop.f32.mrb[0].mxu0
  %v6360 = vadd.f32 0.0, %v6359
  %v6361 = vpop.f32.mrb[0].mxu0
  %6362 = vdwg.mxu0
  %6363 = vrot.lane.b32.xlu0 %v6147, 108
  %v6364 = vpop.permute.xlu0 %6363
  %6365 = vrot.lane.b32.xlu0 %v6149, 108
  %v6366 = vpop.permute.xlu0 %6365
  %6367 = vrot.lane.b32.xlu0 %v6218, 108
  %v6368 = vpop.permute.xlu0 %6367
  %6369 = vrot.lane.b32.xlu0 %v6220, 108
  %v6370 = vpop.permute.xlu0 %6369
  %6371 = vrot.lane.b32.xlu0 %v6289, 108
  %v6372 = vpop.permute.xlu0 %6371
  %6373 = vrot.lane.b32.xlu0 %v6291, 108
  %v6374 = vpop.permute.xlu0 %6373
  %6375 = vrot.lane.b32.xlu0 %v6360, 108
  %v6376 = vpop.permute.xlu0 %6375
  %v6377 = vsel %vm2920, %v6374, %v6376
  %v6378 = vsel %vm2920, %v6372, %v6374
  %v6379 = vsel %vm2920, %v6370, %v6372
  %v6380 = vsel %vm2920, %v6368, %v6370
  %v6381 = vsel %vm2920, %v6366, %v6368
  %v6382 = vsel %vm2920, %v6364, %v6366
  %v6383 = vsel %vm2920, %v6376, %v6364
  %v6384 = vadd.f32 %v6068, %v6382
  %v6385 = vadd.f32 %v6069, %v6381
  %v6386 = vadd.f32 %v6070, %v6380
  %v6387 = vadd.f32 %v6071, %v6379
  %v6388 = vadd.f32 %v6072, %v6378
  %v6389 = vadd.f32 %v6073, %v6377
  %v6390 = vadd.f32 %v6074, %v6383
  %s6391 = scalar_lea.vmem %s3, 64
  %v6392 = vld [vmem:[%s6391] sm:$0xff]
  %v6394 = vsel %vm3892, %v6392, 0
  %6396 = vmatprep.subr.mxu0 %v3864
  %6397 = vmatpush1.msra.mxu0 %v3863
  %6398 = vmatprep.subr.mxu0 %v3871
  %6399 = vmatpush1.msra.mxu0 %v3870
  %6400 = vmatprep.subr.mxu0 %v3878
  %6401 = vmatpush1.msra.mxu0 %v3877
  %6402 = vmatprep.subr.mxu0 %v3885
  %6403 = vmatpush1.msra.mxu0 %v3884
  %6404 = vmatprep.subr.mxu0 0.0
  %6405 = vmatpush1.msra.mxu0 0.0
  %6406 = vmatprep.subr.mxu0 0.0
  %6407 = vmatpush1.msra.mxu0 0.0
  %6408 = vmatprep.subr.mxu0 0.0
  %6409 = vmatpush1.msra.mxu0 0.0
  %6410 = vmatprep.subr.mxu0 0.0
  %6411 = vmatpush1.msra.mxu0 0.0
  %6412 = vmatprep.subr.mxu0 0.0
  %6413 = vmatpush1.msra.mxu0 0.0
  %6414 = vmatprep.subr.mxu0 0.0
  %6415 = vmatpush1.msra.mxu0 0.0
  %6416 = vmatprep.subr.mxu0 0.0
  %6417 = vmatpush1.msra.mxu0 0.0
  %6418 = vmatprep.subr.mxu0 0.0
  %6419 = vmatpush1.msra.mxu0 0.0
  %6420 = vmatprep.subr.mxu0 0.0
  %6421 = vmatpush1.msra.mxu0 0.0
  %6422 = vmatprep.subr.mxu0 0.0
  %6423 = vmatpush1.msra.mxu0 0.0
  %6424 = vmatprep.subr.mxu0 0.0
  %6425 = vmatpush1.msra.mxu0 0.0
  %6426 = vmatprep.subr.mxu0 0.0
  %6427 = vmatpush1.msra.mxu0 0.0
  %6428 = vmatprep.subr.mxu0 0.0
  %6429 = vmatpush1.msra.mxu0 0.0
  %6430 = vmatprep.subr.mxu0 0.0
  %6431 = vmatpush1.msra.mxu0 0.0
  %6432 = vmatprep.subr.mxu0 0.0
  %6433 = vmatpush1.msra.mxu0 0.0
  %6434 = vmatprep.subr.mxu0 0.0
  %6435 = vmatpush1.msra.mxu0 0.0
  %6436 = vmatprep.subr.mxu0 0.0
  %6437 = vmatpush1.msra.mxu0 0.0
  %6438 = vmatprep.subr.mxu0 0.0
  %6439 = vmatpush1.msra.mxu0 0.0
  %6440 = vmatprep.subr.mxu0 0.0
  %6441 = vmatpush1.msra.mxu0 0.0
  %6442 = vmatprep.subr.mxu0 0.0
  %6443 = vmatpush1.msra.mxu0 0.0
  %6444 = vmatprep.subr.mxu0 0.0
  %6445 = vmatpush1.msra.mxu0 0.0
  %6446 = vmatprep.subr.mxu0 0.0
  %6447 = vmatpush1.msra.mxu0 0.0
  %6448 = vmatprep.subr.mxu0 0.0
  %6449 = vmatpush1.msra.mxu0 0.0
  %6450 = vmatprep.subr.mxu0 0.0
  %6451 = vmatpush1.msra.mxu0 0.0
  %6452 = vmatprep.subr.mxu0 0.0
  %6453 = vmatpush1.msra.mxu0 0.0
  %6454 = vmatprep.subr.mxu0 0.0
  %6455 = vmatpush1.msra.mxu0 0.0
  %6456 = vmatprep.subr.mxu0 0.0
  %6457 = vmatpush1.msra.mxu0 0.0
  %6458 = vmatprep.subr.mxu0 0.0
  %6459 = vmatpush1.msra.mxu0 0.0
  %6460 = vmatprep.mubr.f32.mxu0 0.0
  %6461 = vmatmul.mubr.f32.gmra.mrb[0].mxu0 %v6394
  %v6462 = vpop.f32.mrb[0].mxu0
  %v6463 = vadd.f32 0.0, %v6462
  %v6464 = vpop.f32.mrb[0].mxu0
  %v6465 = vadd.f32 0.0, %v6464
  %6466 = vdwg.mxu0
  %6467 = vmatprep.subr.mxu0 %v3866
  %6468 = vmatpush1.msra.mxu0 %v3865
  %6469 = vmatprep.subr.mxu0 %v3873
  %6470 = vmatpush1.msra.mxu0 %v3872
  %6471 = vmatprep.subr.mxu0 %v3880
  %6472 = vmatpush1.msra.mxu0 %v3879
  %6473 = vmatprep.subr.mxu0 %v3887
  %6474 = vmatpush1.msra.mxu0 %v3886
  %6475 = vmatprep.subr.mxu0 0.0
  %6476 = vmatpush1.msra.mxu0 0.0
  %6477 = vmatprep.subr.mxu0 0.0
  %6478 = vmatpush1.msra.mxu0 0.0
  %6479 = vmatprep.subr.mxu0 0.0
  %6480 = vmatpush1.msra.mxu0 0.0
  %6481 = vmatprep.subr.mxu0 0.0
  %6482 = vmatpush1.msra.mxu0 0.0
  %6483 = vmatprep.subr.mxu0 0.0
  %6484 = vmatpush1.msra.mxu0 0.0
  %6485 = vmatprep.subr.mxu0 0.0
  %6486 = vmatpush1.msra.mxu0 0.0
  %6487 = vmatprep.subr.mxu0 0.0
  %6488 = vmatpush1.msra.mxu0 0.0
  %6489 = vmatprep.subr.mxu0 0.0
  %6490 = vmatpush1.msra.mxu0 0.0
  %6491 = vmatprep.subr.mxu0 0.0
  %6492 = vmatpush1.msra.mxu0 0.0
  %6493 = vmatprep.subr.mxu0 0.0
  %6494 = vmatpush1.msra.mxu0 0.0
  %6495 = vmatprep.subr.mxu0 0.0
  %6496 = vmatpush1.msra.mxu0 0.0
  %6497 = vmatprep.subr.mxu0 0.0
  %6498 = vmatpush1.msra.mxu0 0.0
  %6499 = vmatprep.subr.mxu0 0.0
  %6500 = vmatpush1.msra.mxu0 0.0
  %6501 = vmatprep.subr.mxu0 0.0
  %6502 = vmatpush1.msra.mxu0 0.0
  %6503 = vmatprep.subr.mxu0 0.0
  %6504 = vmatpush1.msra.mxu0 0.0
  %6505 = vmatprep.subr.mxu0 0.0
  %6506 = vmatpush1.msra.mxu0 0.0
  %6507 = vmatprep.subr.mxu0 0.0
  %6508 = vmatpush1.msra.mxu0 0.0
  %6509 = vmatprep.subr.mxu0 0.0
  %6510 = vmatpush1.msra.mxu0 0.0
  %6511 = vmatprep.subr.mxu0 0.0
  %6512 = vmatpush1.msra.mxu0 0.0
  %6513 = vmatprep.subr.mxu0 0.0
  %6514 = vmatpush1.msra.mxu0 0.0
  %6515 = vmatprep.subr.mxu0 0.0
  %6516 = vmatpush1.msra.mxu0 0.0
  %6517 = vmatprep.subr.mxu0 0.0
  %6518 = vmatpush1.msra.mxu0 0.0
  %6519 = vmatprep.subr.mxu0 0.0
  %6520 = vmatpush1.msra.mxu0 0.0
  %6521 = vmatprep.subr.mxu0 0.0
  %6522 = vmatpush1.msra.mxu0 0.0
  %6523 = vmatprep.subr.mxu0 0.0
  %6524 = vmatpush1.msra.mxu0 0.0
  %6525 = vmatprep.subr.mxu0 0.0
  %6526 = vmatpush1.msra.mxu0 0.0
  %6527 = vmatprep.subr.mxu0 0.0
  %6528 = vmatpush1.msra.mxu0 0.0
  %6529 = vmatprep.subr.mxu0 0.0
  %6530 = vmatpush1.msra.mxu0 0.0
  %6531 = vmatprep.mubr.f32.mxu0 0.0
  %6532 = vmatmul.mubr.f32.gmra.mrb[0].mxu0 %v6394
  %v6533 = vpop.f32.mrb[0].mxu0
  %v6534 = vadd.f32 0.0, %v6533
  %v6535 = vpop.f32.mrb[0].mxu0
  %v6536 = vadd.f32 0.0, %v6535
  %6537 = vdwg.mxu0
  %6538 = vmatprep.subr.mxu0 %v3868
  %6539 = vmatpush1.msra.mxu0 %v3867
  %6540 = vmatprep.subr.mxu0 %v3875
  %6541 = vmatpush1.msra.mxu0 %v3874
  %6542 = vmatprep.subr.mxu0 %v3882
  %6543 = vmatpush1.msra.mxu0 %v3881
  %6544 = vmatprep.subr.mxu0 %v3889
  %6545 = vmatpush1.msra.mxu0 %v3888
  %6546 = vmatprep.subr.mxu0 0.0
  %6547 = vmatpush1.msra.mxu0 0.0
  %6548 = vmatprep.subr.mxu0 0.0
  %6549 = vmatpush1.msra.mxu0 0.0
  %6550 = vmatprep.subr.mxu0 0.0
  %6551 = vmatpush1.msra.mxu0 0.0
  %6552 = vmatprep.subr.mxu0 0.0
  %6553 = vmatpush1.msra.mxu0 0.0
  %6554 = vmatprep.subr.mxu0 0.0
  %6555 = vmatpush1.msra.mxu0 0.0
  %6556 = vmatprep.subr.mxu0 0.0
  %6557 = vmatpush1.msra.mxu0 0.0
  %6558 = vmatprep.subr.mxu0 0.0
  %6559 = vmatpush1.msra.mxu0 0.0
  %6560 = vmatprep.subr.mxu0 0.0
  %6561 = vmatpush1.msra.mxu0 0.0
  %6562 = vmatprep.subr.mxu0 0.0
  %6563 = vmatpush1.msra.mxu0 0.0
  %6564 = vmatprep.subr.mxu0 0.0
  %6565 = vmatpush1.msra.mxu0 0.0
  %6566 = vmatprep.subr.mxu0 0.0
  %6567 = vmatpush1.msra.mxu0 0.0
  %6568 = vmatprep.subr.mxu0 0.0
  %6569 = vmatpush1.msra.mxu0 0.0
  %6570 = vmatprep.subr.mxu0 0.0
  %6571 = vmatpush1.msra.mxu0 0.0
  %6572 = vmatprep.subr.mxu0 0.0
  %6573 = vmatpush1.msra.mxu0 0.0
  %6574 = vmatprep.subr.mxu0 0.0
  %6575 = vmatpush1.msra.mxu0 0.0
  %6576 = vmatprep.subr.mxu0 0.0
  %6577 = vmatpush1.msra.mxu0 0.0
  %6578 = vmatprep.subr.mxu0 0.0
  %6579 = vmatpush1.msra.mxu0 0.0
  %6580 = vmatprep.subr.mxu0 0.0
  %6581 = vmatpush1.msra.mxu0 0.0
  %6582 = vmatprep.subr.mxu0 0.0
  %6583 = vmatpush1.msra.mxu0 0.0
  %6584 = vmatprep.subr.mxu0 0.0
  %6585 = vmatpush1.msra.mxu0 0.0
  %6586 = vmatprep.subr.mxu0 0.0
  %6587 = vmatpush1.msra.mxu0 0.0
  %6588 = vmatprep.subr.mxu0 0.0
  %6589 = vmatpush1.msra.mxu0 0.0
  %6590 = vmatprep.subr.mxu0 0.0
  %6591 = vmatpush1.msra.mxu0 0.0
  %6592 = vmatprep.subr.mxu0 0.0
  %6593 = vmatpush1.msra.mxu0 0.0
  %6594 = vmatprep.subr.mxu0 0.0
  %6595 = vmatpush1.msra.mxu0 0.0
  %6596 = vmatprep.subr.mxu0 0.0
  %6597 = vmatpush1.msra.mxu0 0.0
  %6598 = vmatprep.subr.mxu0 0.0
  %6599 = vmatpush1.msra.mxu0 0.0
  %6600 = vmatprep.subr.mxu0 0.0
  %6601 = vmatpush1.msra.mxu0 0.0
  %6602 = vmatprep.mubr.f32.mxu0 0.0
  %6603 = vmatmul.mubr.f32.gmra.mrb[0].mxu0 %v6394
  %v6604 = vpop.f32.mrb[0].mxu0
  %v6605 = vadd.f32 0.0, %v6604
  %v6606 = vpop.f32.mrb[0].mxu0
  %v6607 = vadd.f32 0.0, %v6606
  %6608 = vdwg.mxu0
  %6609 = vmatprep.subr.mxu0 0.0
  %6610 = vmatpush1.msra.mxu0 %v3869
  %6611 = vmatprep.subr.mxu0 0.0
  %6612 = vmatpush1.msra.mxu0 %v3876
  %6613 = vmatprep.subr.mxu0 0.0
  %6614 = vmatpush1.msra.mxu0 %v3883
  %6615 = vmatprep.subr.mxu0 0.0
  %6616 = vmatpush1.msra.mxu0 %v3890
  %6617 = vmatprep.subr.mxu0 0.0
  %6618 = vmatpush1.msra.mxu0 0.0
  %6619 = vmatprep.subr.mxu0 0.0
  %6620 = vmatpush1.msra.mxu0 0.0
  %6621 = vmatprep.subr.mxu0 0.0
  %6622 = vmatpush1.msra.mxu0 0.0
  %6623 = vmatprep.subr.mxu0 0.0
  %6624 = vmatpush1.msra.mxu0 0.0
  %6625 = vmatprep.subr.mxu0 0.0
  %6626 = vmatpush1.msra.mxu0 0.0
  %6627 = vmatprep.subr.mxu0 0.0
  %6628 = vmatpush1.msra.mxu0 0.0
  %6629 = vmatprep.subr.mxu0 0.0
  %6630 = vmatpush1.msra.mxu0 0.0
  %6631 = vmatprep.subr.mxu0 0.0
  %6632 = vmatpush1.msra.mxu0 0.0
  %6633 = vmatprep.subr.mxu0 0.0
  %6634 = vmatpush1.msra.mxu0 0.0
  %6635 = vmatprep.subr.mxu0 0.0
  %6636 = vmatpush1.msra.mxu0 0.0
  %6637 = vmatprep.subr.mxu0 0.0
  %6638 = vmatpush1.msra.mxu0 0.0
  %6639 = vmatprep.subr.mxu0 0.0
  %6640 = vmatpush1.msra.mxu0 0.0
  %6641 = vmatprep.subr.mxu0 0.0
  %6642 = vmatpush1.msra.mxu0 0.0
  %6643 = vmatprep.subr.mxu0 0.0
  %6644 = vmatpush1.msra.mxu0 0.0
  %6645 = vmatprep.subr.mxu0 0.0
  %6646 = vmatpush1.msra.mxu0 0.0
  %6647 = vmatprep.subr.mxu0 0.0
  %6648 = vmatpush1.msra.mxu0 0.0
  %6649 = vmatprep.subr.mxu0 0.0
  %6650 = vmatpush1.msra.mxu0 0.0
  %6651 = vmatprep.subr.mxu0 0.0
  %6652 = vmatpush1.msra.mxu0 0.0
  %6653 = vmatprep.subr.mxu0 0.0
  %6654 = vmatpush1.msra.mxu0 0.0
  %6655 = vmatprep.subr.mxu0 0.0
  %6656 = vmatpush1.msra.mxu0 0.0
  %6657 = vmatprep.subr.mxu0 0.0
  %6658 = vmatpush1.msra.mxu0 0.0
  %6659 = vmatprep.subr.mxu0 0.0
  %6660 = vmatpush1.msra.mxu0 0.0
  %6661 = vmatprep.subr.mxu0 0.0
  %6662 = vmatpush1.msra.mxu0 0.0
  %6663 = vmatprep.subr.mxu0 0.0
  %6664 = vmatpush1.msra.mxu0 0.0
  %6665 = vmatprep.subr.mxu0 0.0
  %6666 = vmatpush1.msra.mxu0 0.0
  %6667 = vmatprep.subr.mxu0 0.0
  %6668 = vmatpush1.msra.mxu0 0.0
  %6669 = vmatprep.subr.mxu0 0.0
  %6670 = vmatpush1.msra.mxu0 0.0
  %6671 = vmatprep.subr.mxu0 0.0
  %6672 = vmatpush1.msra.mxu0 0.0
  %6673 = vmatprep.mubr.f32.mxu0 0.0
  %6674 = vmatmul.mubr.f32.gmra.mrb[0].mxu0 %v6394
  %v6675 = vpop.f32.mrb[0].mxu0
  %v6676 = vadd.f32 0.0, %v6675
  %v6677 = vpop.f32.mrb[0].mxu0
  %6678 = vdwg.mxu0
  %6679 = vrot.lane.b32.xlu0 %v6463, 107
  %v6680 = vpop.permute.xlu0 %6679
  %6681 = vrot.lane.b32.xlu0 %v6465, 107
  %v6682 = vpop.permute.xlu0 %6681
  %6683 = vrot.lane.b32.xlu0 %v6534, 107
  %v6684 = vpop.permute.xlu0 %6683
  %6685 = vrot.lane.b32.xlu0 %v6536, 107
  %v6686 = vpop.permute.xlu0 %6685
  %6687 = vrot.lane.b32.xlu0 %v6605, 107
  %v6688 = vpop.permute.xlu0 %6687
  %6689 = vrot.lane.b32.xlu0 %v6607, 107
  %v6690 = vpop.permute.xlu0 %6689
  %6691 = vrot.lane.b32.xlu0 %v6676, 107
  %v6692 = vpop.permute.xlu0 %6691
  %v6693 = vsel %vm3346, %v6690, %v6692
  %v6694 = vsel %vm3346, %v6688, %v6690
  %v6695 = vsel %vm3346, %v6686, %v6688
  %v6696 = vsel %vm3346, %v6684, %v6686
  %v6697 = vsel %vm3346, %v6682, %v6684
  %v6698 = vsel %vm3346, %v6680, %v6682
  %v6699 = vsel %vm3346, %v6692, %v6680
  %v6700 = vadd.f32 %v6384, %v6698
  %v6701 = vadd.f32 %v6385, %v6697
  %v6702 = vadd.f32 %v6386, %v6696
  %v6703 = vadd.f32 %v6387, %v6695
  %v6704 = vadd.f32 %v6388, %v6694
  %v6705 = vadd.f32 %v6389, %v6693
  %v6706 = vadd.f32 %v6390, %v6699
  %6708 = vset.pattern.permute.xlu0 0
  %6709 = vperm.xlu0 %6708, %v32
  %v6710 = vpop.permute.xlu0 %6709
  %v6712 = vadd.f32 %v6700, %v6710
  %v6713 = vadd.f32 %v6701, %v6710
  %v6714 = vadd.f32 %v6702, %v6710
  %v6715 = vadd.f32 %v6703, %v6710
  %v6716 = vadd.f32 %v6704, %v6710
  %v6717 = vadd.f32 %v6705, %v6710
  %v6718 = vadd.f32 %v6706, %v6710
  %6720 = vset.pattern.permute.xlu0 0
  %6721 = vperm.xlu0 %6720, %v33
  %v6722 = vpop.permute.xlu0 %6721
  %v6724 = vmul.f32 %v6722, %v3325
  %v6725 = vmul.f32 %v6722, %v3326
  %v6726 = vmul.f32 %v6722, %v3327
  %v6727 = vmul.f32 %v6722, %v3328
  %v6728 = vmul.f32 %v6722, %v3329
  %v6729 = vmul.f32 %v6722, %v3330
  %v6730 = vmul.f32 %v6722, %v3331
  %v6731 = vadd.f32 %v6712, %v6724
  %v6732 = vadd.f32 %v6713, %v6725
  %v6733 = vadd.f32 %v6714, %v6726
  %v6734 = vadd.f32 %v6715, %v6727
  %v6735 = vadd.f32 %v6716, %v6728
  %v6736 = vadd.f32 %v6717, %v6729
  %v6737 = vadd.f32 %v6718, %v6730
  %6739 = vset.pattern.permute.xlu0 0
  %6740 = vperm.xlu0 %6739, %v34
  %v6741 = vpop.permute.xlu0 %6740
  %v6743 = vmul.f32 %v6741, %v20
  %v6744 = vmul.f32 %v6741, %v21
  %v6745 = vmul.f32 %v6741, %v22
  %v6746 = vmul.f32 %v6741, %v23
  %v6747 = vmul.f32 %v6741, %v24
  %v6748 = vmul.f32 %v6741, %v25
  %v6749 = vmul.f32 %v6741, %v26
  %v6750 = vadd.f32 %v6731, %v6743
  %v6751 = vadd.f32 %v6732, %v6744
  %v6752 = vadd.f32 %v6733, %v6745
  %v6753 = vadd.f32 %v6734, %v6746
  %v6754 = vadd.f32 %v6735, %v6747
  %v6755 = vadd.f32 %v6736, %v6748
  %v6756 = vadd.f32 %v6737, %v6749
  %6757 = vst [vmem:[%s5] sm:$0xff] %v6750
  %6758 = vst [vmem:[%s5 + $0x8] sm:$0xff] %v6751
  %6759 = vst [vmem:[%s5 + $0x10] sm:$0xff] %v6752
  %6760 = vst [vmem:[%s5 + $0x18] sm:$0xff] %v6753
  %6761 = vst [vmem:[%s5 + $0x20] sm:$0xff] %v6754
  %6762 = vst [vmem:[%s5 + $0x28] sm:$0xff] %v6755
  %6763 = vst [vmem:[%s5 + $0x30] sm:$0xff] %v6756
  // Predicated region
  $region22: #{forecaster.1} parent=0 // pred_check
    _
  $region23: #{forecaster.1} parent=0 // pred_check_branch
    %6765 = sbr.rel (0) target = $region25
  $region24: #{forecaster.1} parent=0 // pred_region
    _
  $region25: #{forecaster.1} parent=0 // pred_fallthru
    _
  // Predicated region
  $region26: #{forecaster.1} parent=0 // pred_check
    _
  $region27: #{forecaster.1} parent=0 // pred_check_branch
    %6767 = sbr.rel (0) target = $region29
  $region28: #{forecaster.1} parent=0 // pred_region
    _
  $region29: #{forecaster.1} parent=0 // pred_fallthru
    _

</llo_original>
